<compile_context>
chip_gen: v5e
topology: v5e:2x2
jax: 0.10.0
libtpu: 0.0.40
codegen_flags: <defaults>
</compile_context>

<pallas_src>
import math
import jax
import jax.numpy as jnp
from jax import lax
from jax.experimental import pallas as pl
from jax.experimental.pallas import tpu as pltpu

D_MODEL = 768
N_HEADS = 12
D_K = D_MODEL // N_HEADS      # 64
N_PAIRS = N_HEADS // 2        # 6 aligned 128-lane head pairs


# ---------------------------------------------------------------------------
# Fused kernel: projections + 12-head attention + output projection.
# One (batch-pack, query-tile) block per grid step.
# ---------------------------------------------------------------------------
def mha_fused_kernel(q_in_ref, k_in_ref, v_in_ref,
                     wq_ref, bq_ref, wk_ref, bk_ref, wv_ref, bv_ref,
                     wo_ref, bo_ref, o_ref, ctx_ref):
    Bt, Tq, D = q_in_ref.shape
    S = k_in_ref.shape[1]

    # ---- Q/K/V projections: bf16 operands, f32 MXU accumulation -------------
    # Leading dims flattened so the MXU sees Bt*rows of work per matmul.
    xq = q_in_ref[...].reshape(Bt * Tq, D).astype(jnp.bfloat16)
    xk = k_in_ref[...].reshape(Bt * S, D).astype(jnp.bfloat16)
    xv = v_in_ref[...].reshape(Bt * S, D).astype(jnp.bfloat16)

    # NOTE: 1/sqrt(d_k) is already folded into wq/bq by prepare_params().
    q = (jnp.dot(xq, wq_ref[...], preferred_element_type=jnp.float32)
         + bq_ref[...]).astype(jnp.bfloat16)
    k = (jnp.dot(xk, wk_ref[...], preferred_element_type=jnp.float32)
         + bk_ref[...]).astype(jnp.bfloat16)
    v = (jnp.dot(xv, wv_ref[...], preferred_element_type=jnp.float32)
         + bv_ref[...]).astype(jnp.bfloat16)

    # ---- attention core: packed batch x aligned 128-lane head pairs ---------
    for b in range(Bt):
        qb = q[b * Tq:(b + 1) * Tq, :]
        kb = k[b * S:(b + 1) * S, :]
        vb = v[b * S:(b + 1) * S, :]
        for pair in range(N_PAIRS):
            lo = pair * 2 * D_K                      # multiple of 128 -> aligned slice
            qp = qb[:, lo:lo + 2 * D_K]              # (Tq, 128)
            kp = kb[:, lo:lo + 2 * D_K]              # (S, 128)
            vp = vb[:, lo:lo + 2 * D_K]              # (S, 128)
            outs = []
            for h in range(2):                       # split the pair in-register
                hs = slice(h * D_K, (h + 1) * D_K)
                qh, kh, vh = qp[:, hs], kp[:, hs], vp[:, hs]
                # scores = qh @ kh.T (contract d_k dims directly, no explicit K.T)
                s = lax.dot_general(qh, kh, (((1,), (1,)), ((), ())),
                                    preferred_element_type=jnp.float32)   # (Tq, S)
                # numerically-stable softmax along keys; EUP reciprocal
                m = jnp.max(s, axis=-1, keepdims=True)
                e = jnp.exp(s - m)
                denom = jnp.sum(e, axis=-1, keepdims=True)
                p = (e * pl.reciprocal(denom, approx=True)).astype(jnp.bfloat16)
                outs.append(jnp.dot(p, vh, preferred_element_type=jnp.float32))
            # one full 128-lane, vreg-aligned store per head pair
            ctx_ref[b * Tq:(b + 1) * Tq, lo:lo + 2 * D_K] = (
                jnp.concatenate(outs, axis=-1).astype(jnp.bfloat16))

    # ---- output projection ---------------------------------------------------
    out = (jnp.dot(ctx_ref[...], wo_ref[...], preferred_element_type=jnp.float32)
           + bo_ref[...])
    o_ref[...] = out.reshape(Bt, Tq, D).astype(o_ref.dtype)


# ---------------------------------------------------------------------------
# Wrapper
# ---------------------------------------------------------------------------
def _pick_batch_tile(B, S):
    """Largest divisor of B keeping per-step rows <= ~512 (amortizes grid overhead)."""
    best = 1
    for cand in range(1, B + 1):
        if B % cand == 0 and cand * S <= max(512, S):
            best = cand
    return best


def prepare_params(params):
    """One-time transform: fold 1/sqrt(d_k) into W_q/b_q; cast weights to bf16."""
    scale = 1.0 / math.sqrt(D_K)
    return {
        "wq_w": (params["wq_w"] * scale).astype(jnp.bfloat16),
        "wq_b": params["wq_b"] * scale,               # biases stay f32
        "wk_w": params["wk_w"].astype(jnp.bfloat16),
        "wk_b": params["wk_b"],
        "wv_w": params["wv_w"].astype(jnp.bfloat16),
        "wv_b": params["wv_b"],
        "wo_w": params["wo_w"].astype(jnp.bfloat16),
        "wo_b": params["wo_b"],
    }


def multi_head_attention(prep, Q, K, V):
    """Q, K, V: (B, S, D_MODEL) -> (B, S, D_MODEL). mask=None path."""
    B, S, D = Q.shape
    assert D == D_MODEL

    Bt = _pick_batch_tile(B, S)
    Tq = S if S <= 512 else 256    # query-tile axis caps per-step VMEM for long S
    grid = (B // Bt, pl.cdiv(S, Tq))

    q_spec = pl.BlockSpec((Bt, Tq, D), lambda b, qt: (b, qt, 0))
    kv_spec = pl.BlockSpec((Bt, S, D), lambda b, qt: (b, 0, 0))
    # Constant index_map -> weights/biases stay VMEM-resident across all grid steps.
    # TODO(synk): pipeline_mode=pl.Buffered(1) would drop their double buffer (~4.5 MiB
    # bf16) for extra v7x headroom once single-buffered constant blocks are supported
    # everywhere; for long S, switch the q-tile axis to a flash-style online softmax.
    w_spec = pl.BlockSpec((D, D), lambda b, qt: (0, 0))
    b_spec = pl.BlockSpec((1, D), lambda b, qt: (0, 0))
    o_spec = pl.BlockSpec((Bt, Tq, D), lambda b, qt: (b, qt, 0))

    return pl.pallas_call(
        mha_fused_kernel,
        out_shape=jax.ShapeDtypeStruct((B, S, D), Q.dtype),
        grid_spec=pltpu.PrefetchScalarGridSpec(
            num_scalar_prefetch=0,
            grid=grid,
            in_specs=[q_spec, kv_spec, kv_spec,
                      w_spec, b_spec,   # Wq, bq (pre-scaled)
                      w_spec, b_spec,   # Wk, bk
                      w_spec, b_spec,   # Wv, bv
                      w_spec, b_spec],  # Wo, bo
            out_specs=o_spec,
            scratch_shapes=[pltpu.VMEM((Bt * Tq, D), jnp.bfloat16)],  # merged-head ctx
        ),
        compiler_params=pltpu.CompilerParams(
            dimension_semantics=("parallel", "parallel"),
            vmem_limit_bytes=48 * 1024 * 1024,
        ),
    )(Q, K, V,
      prep["wq_w"], prep["wq_b"],
      prep["wk_w"], prep["wk_b"],
      prep["wv_w"], prep["wv_b"],
      prep["wo_w"], prep["wo_b"])


# ---------------------------------------------------------------------------
# Params / reference / test harness
# ---------------------------------------------------------------------------
def init_params(key):
    keys = jax.random.split(key, 8)
    scale = 1.0 / math.sqrt(D_MODEL)
    params = {}
    for i, n in enumerate(["wq", "wk", "wv", "wo"]):
        params[n + "_w"] = (jax.random.normal(keys[2 * i], (D_MODEL, D_MODEL),
                                              jnp.float32) * scale)
        params[n + "_b"] = (jax.random.normal(keys[2 * i + 1], (1, D_MODEL),
                                              jnp.float32) * 0.01)
    return params


def ref_forward(params, Q, K, V):
    B, S, _ = Q.shape

    def lin(x, w, b):
        return x @ w + b

    def split(x):
        return x.reshape(B, S, N_HEADS, D_K).transpose(0, 2, 1, 3)

    q = split(lin(Q, params["wq_w"], params["wq_b"]))
    k = split(lin(K, params["wk_w"], params["wk_b"]))
    v = split(lin(V, params["wv_w"], params["wv_b"]))
    s = (q @ k.transpose(0, 1, 3, 2)) / math.sqrt(D_K)
    p = jax.nn.softmax(s, axis=-1)
    o = (p @ v).transpose(0, 2, 1, 3).reshape(B, S, D_MODEL)
    return lin(o, params["wo_w"], params["wo_b"])


if __name__ == "__main__":
    B, S = 2, 8
    key = jax.random.PRNGKey(0)
    kp, kq, kk, kv = jax.random.split(key, 4)

    params = init_params(kp)
    prep = prepare_params(params)
    Q = jax.random.normal(kq, (B, S, D_MODEL), jnp.float32)
    K = jax.random.normal(kk, (B, S, D_MODEL), jnp.float32)
    V = jax.random.normal(kv, (B, S, D_MODEL), jnp.float32)

    out = jax.block_until_ready(multi_head_attention(prep, Q, K, V))

    ref = ref_forward(params, Q, K, V)
    # bf16 MXU operands (with f32 accumulation) vs. the pure-f32 reference -> looser
    # tolerance than the f32-only variant, per the review's correctness note.
    assert jnp.allclose(out, ref, atol=7.5e-2, rtol=7.5e-2), "mismatch vs reference"

    print("KERNEL_OK")
</pallas_src>

<mosaic_0001>
module attributes {stable_mosaic.version = 11 : i64} {
  func.func @mha_fused_kernel(%arg0: i32, %arg1: i32, %arg2: memref<2x8x768xf32, #tpu.memory_space<vmem>>, %arg3: memref<2x8x768xf32, #tpu.memory_space<vmem>>, %arg4: memref<2x8x768xf32, #tpu.memory_space<vmem>>, %arg5: memref<768x768xbf16, #tpu.memory_space<vmem>>, %arg6: memref<1x768xf32, #tpu.memory_space<vmem>>, %arg7: memref<768x768xbf16, #tpu.memory_space<vmem>>, %arg8: memref<1x768xf32, #tpu.memory_space<vmem>>, %arg9: memref<768x768xbf16, #tpu.memory_space<vmem>>, %arg10: memref<1x768xf32, #tpu.memory_space<vmem>>, %arg11: memref<768x768xbf16, #tpu.memory_space<vmem>>, %arg12: memref<1x768xf32, #tpu.memory_space<vmem>>, %arg13: memref<2x8x768xf32, #tpu.memory_space<vmem>>, %arg14: memref<16x768xbf16, #tpu.memory_space<vmem>>) attributes {dimension_semantics = [#tpu.dimension_semantics<parallel>, #tpu.dimension_semantics<parallel>], iteration_bounds = array<i64: 1, 1>, scalar_prefetch = 0 : i64, scratch_operands = 1 : i64, tpu.core_type = #tpu.core_type<tc>, window_params = [{transform_indices = @transform_0, window_bounds = array<i64: 2, 8, 768>}, {transform_indices = @transform_1, window_bounds = array<i64: 2, 8, 768>}, {transform_indices = @transform_2, window_bounds = array<i64: 2, 8, 768>}, {pipeline_mode = #tpu.pipeline_mode<synchronous>, transform_indices = @transform_3, window_bounds = array<i64: 768, 768>}, {pipeline_mode = #tpu.pipeline_mode<synchronous>, transform_indices = @transform_4, window_bounds = array<i64: 1, 768>}, {pipeline_mode = #tpu.pipeline_mode<synchronous>, transform_indices = @transform_5, window_bounds = array<i64: 768, 768>}, {pipeline_mode = #tpu.pipeline_mode<synchronous>, transform_indices = @transform_6, window_bounds = array<i64: 1, 768>}, {pipeline_mode = #tpu.pipeline_mode<synchronous>, transform_indices = @transform_7, window_bounds = array<i64: 768, 768>}, {pipeline_mode = #tpu.pipeline_mode<synchronous>, transform_indices = @transform_8, window_bounds = array<i64: 1, 768>}, {pipeline_mode = #tpu.pipeline_mode<synchronous>, transform_indices = @transform_9, window_bounds = array<i64: 768, 768>}, {pipeline_mode = #tpu.pipeline_mode<synchronous>, transform_indices = @transform_10, window_bounds = array<i64: 1, 768>}, {transform_indices = @transform_11, window_bounds = array<i64: 2, 8, 768>}]} {
    %c0 = arith.constant 0 : index
    %c0_0 = arith.constant 0 : index
    %c0_1 = arith.constant 0 : index
    %0 = vector.load %arg2[%c0, %c0_0, %c0_1] : memref<2x8x768xf32, #tpu.memory_space<vmem>>, vector<2x8x768xf32>
    %1 = vector.shape_cast %0 : vector<2x8x768xf32> to vector<16x768xf32>
    %2 = arith.truncf %1 : vector<16x768xf32> to vector<16x768xbf16>
    %c0_2 = arith.constant 0 : index
    %c0_3 = arith.constant 0 : index
    %c0_4 = arith.constant 0 : index
    %3 = vector.load %arg3[%c0_2, %c0_3, %c0_4] : memref<2x8x768xf32, #tpu.memory_space<vmem>>, vector<2x8x768xf32>
    %4 = vector.shape_cast %3 : vector<2x8x768xf32> to vector<16x768xf32>
    %5 = arith.truncf %4 : vector<16x768xf32> to vector<16x768xbf16>
    %c0_5 = arith.constant 0 : index
    %c0_6 = arith.constant 0 : index
    %c0_7 = arith.constant 0 : index
    %6 = vector.load %arg4[%c0_5, %c0_6, %c0_7] : memref<2x8x768xf32, #tpu.memory_space<vmem>>, vector<2x8x768xf32>
    %7 = vector.shape_cast %6 : vector<2x8x768xf32> to vector<16x768xf32>
    %8 = arith.truncf %7 : vector<16x768xf32> to vector<16x768xbf16>
    %c0_8 = arith.constant 0 : index
    %c0_9 = arith.constant 0 : index
    %9 = vector.load %arg5[%c0_8, %c0_9] : memref<768x768xbf16, #tpu.memory_space<vmem>>, vector<768x768xbf16>
    %cst = arith.constant dense<0.000000e+00> : vector<16x768xf32>
    %10 = tpu.matmul %2, %9, %cst {dimension_numbers = #tpu.dot_dimension_numbers<[1], [0], [0], [1], [0, 0, 1, 1], [], []>} : vector<16x768xbf16>, vector<768x768xbf16>, vector<16x768xf32> -> vector<16x768xf32>
    %c0_10 = arith.constant 0 : index
    %c0_11 = arith.constant 0 : index
    %11 = vector.load %arg6[%c0_10, %c0_11] : memref<1x768xf32, #tpu.memory_space<vmem>>, vector<1x768xf32>
    %12 = vector.broadcast %11 : vector<1x768xf32> to vector<16x768xf32>
    %13 = arith.addf %10, %12 : vector<16x768xf32>
    %14 = arith.truncf %13 : vector<16x768xf32> to vector<16x768xbf16>
    %c0_12 = arith.constant 0 : index
    %c0_13 = arith.constant 0 : index
    %15 = vector.load %arg7[%c0_12, %c0_13] : memref<768x768xbf16, #tpu.memory_space<vmem>>, vector<768x768xbf16>
    %cst_14 = arith.constant dense<0.000000e+00> : vector<16x768xf32>
    %16 = tpu.matmul %5, %15, %cst_14 {dimension_numbers = #tpu.dot_dimension_numbers<[1], [0], [0], [1], [0, 0, 1, 1], [], []>} : vector<16x768xbf16>, vector<768x768xbf16>, vector<16x768xf32> -> vector<16x768xf32>
    %c0_15 = arith.constant 0 : index
    %c0_16 = arith.constant 0 : index
    %17 = vector.load %arg8[%c0_15, %c0_16] : memref<1x768xf32, #tpu.memory_space<vmem>>, vector<1x768xf32>
    %18 = vector.broadcast %17 : vector<1x768xf32> to vector<16x768xf32>
    %19 = arith.addf %16, %18 : vector<16x768xf32>
    %20 = arith.truncf %19 : vector<16x768xf32> to vector<16x768xbf16>
    %c0_17 = arith.constant 0 : index
    %c0_18 = arith.constant 0 : index
    %21 = vector.load %arg9[%c0_17, %c0_18] : memref<768x768xbf16, #tpu.memory_space<vmem>>, vector<768x768xbf16>
    %cst_19 = arith.constant dense<0.000000e+00> : vector<16x768xf32>
    %22 = tpu.matmul %8, %21, %cst_19 {dimension_numbers = #tpu.dot_dimension_numbers<[1], [0], [0], [1], [0, 0, 1, 1], [], []>} : vector<16x768xbf16>, vector<768x768xbf16>, vector<16x768xf32> -> vector<16x768xf32>
    %c0_20 = arith.constant 0 : index
    %c0_21 = arith.constant 0 : index
    %23 = vector.load %arg10[%c0_20, %c0_21] : memref<1x768xf32, #tpu.memory_space<vmem>>, vector<1x768xf32>
    %24 = vector.broadcast %23 : vector<1x768xf32> to vector<16x768xf32>
    %25 = arith.addf %22, %24 : vector<16x768xf32>
    %26 = arith.truncf %25 : vector<16x768xf32> to vector<16x768xbf16>
    %27 = vector.extract_strided_slice %14 {offsets = [0, 0], sizes = [8, 768], strides = [1, 1]} : vector<16x768xbf16> to vector<8x768xbf16>
    %28 = vector.extract_strided_slice %20 {offsets = [0, 0], sizes = [8, 768], strides = [1, 1]} : vector<16x768xbf16> to vector<8x768xbf16>
    %29 = vector.extract_strided_slice %26 {offsets = [0, 0], sizes = [8, 768], strides = [1, 1]} : vector<16x768xbf16> to vector<8x768xbf16>
    %30 = vector.extract_strided_slice %27 {offsets = [0, 0], sizes = [8, 128], strides = [1, 1]} : vector<8x768xbf16> to vector<8x128xbf16>
    %31 = vector.extract_strided_slice %28 {offsets = [0, 0], sizes = [8, 128], strides = [1, 1]} : vector<8x768xbf16> to vector<8x128xbf16>
    %32 = vector.extract_strided_slice %29 {offsets = [0, 0], sizes = [8, 128], strides = [1, 1]} : vector<8x768xbf16> to vector<8x128xbf16>
    %33 = vector.extract_strided_slice %30 {offsets = [0, 0], sizes = [8, 64], strides = [1, 1]} : vector<8x128xbf16> to vector<8x64xbf16>
    %34 = vector.extract_strided_slice %31 {offsets = [0, 0], sizes = [8, 64], strides = [1, 1]} : vector<8x128xbf16> to vector<8x64xbf16>
    %35 = vector.extract_strided_slice %32 {offsets = [0, 0], sizes = [8, 64], strides = [1, 1]} : vector<8x128xbf16> to vector<8x64xbf16>
    %cst_22 = arith.constant dense<0.000000e+00> : vector<8x8xf32>
    %36 = tpu.matmul %33, %34, %cst_22 {dimension_numbers = #tpu.dot_dimension_numbers<[1], [1], [0], [0], [0, 0, 1, 0], [], []>} : vector<8x64xbf16>, vector<8x64xbf16>, vector<8x8xf32> -> vector<8x8xf32>
    %cst_23 = arith.constant dense<0xFF800000> : vector<8xf32>
    %37 = vector.multi_reduction <maximumf>, %36, %cst_23 [1] : vector<8x8xf32> to vector<8xf32>
    %38 = vector.shape_cast %37 : vector<8xf32> to vector<8x1xf32>
    %39 = vector.broadcast %38 : vector<8x1xf32> to vector<8x8xf32>
    %40 = arith.subf %36, %39 : vector<8x8xf32>
    %41 = math.exp %40 : vector<8x8xf32>
    %cst_24 = arith.constant dense<0.000000e+00> : vector<8xf32>
    %42 = vector.multi_reduction <add>, %41, %cst_24 [1] : vector<8x8xf32> to vector<8xf32>
    %43 = vector.shape_cast %42 : vector<8xf32> to vector<8x1xf32>
    %44 = tpu.reciprocal %43 {approx = true} : vector<8x1xf32> -> vector<8x1xf32>
    %45 = vector.broadcast %44 : vector<8x1xf32> to vector<8x8xf32>
    %46 = arith.mulf %41, %45 : vector<8x8xf32>
    %47 = arith.truncf %46 : vector<8x8xf32> to vector<8x8xbf16>
    %cst_25 = arith.constant dense<0.000000e+00> : vector<8x64xf32>
    %48 = tpu.matmul %47, %35, %cst_25 {dimension_numbers = #tpu.dot_dimension_numbers<[1], [0], [0], [1], [0, 0, 1, 1], [], []>} : vector<8x8xbf16>, vector<8x64xbf16>, vector<8x64xf32> -> vector<8x64xf32>
    %49 = vector.extract_strided_slice %30 {offsets = [0, 64], sizes = [8, 64], strides = [1, 1]} : vector<8x128xbf16> to vector<8x64xbf16>
    %50 = vector.extract_strided_slice %31 {offsets = [0, 64], sizes = [8, 64], strides = [1, 1]} : vector<8x128xbf16> to vector<8x64xbf16>
    %51 = vector.extract_strided_slice %32 {offsets = [0, 64], sizes = [8, 64], strides = [1, 1]} : vector<8x128xbf16> to vector<8x64xbf16>
    %cst_26 = arith.constant dense<0.000000e+00> : vector<8x8xf32>
    %52 = tpu.matmul %49, %50, %cst_26 {dimension_numbers = #tpu.dot_dimension_numbers<[1], [1], [0], [0], [0, 0, 1, 0], [], []>} : vector<8x64xbf16>, vector<8x64xbf16>, vector<8x8xf32> -> vector<8x8xf32>
    %cst_27 = arith.constant dense<0xFF800000> : vector<8xf32>
    %53 = vector.multi_reduction <maximumf>, %52, %cst_27 [1] : vector<8x8xf32> to vector<8xf32>
    %54 = vector.shape_cast %53 : vector<8xf32> to vector<8x1xf32>
    %55 = vector.broadcast %54 : vector<8x1xf32> to vector<8x8xf32>
    %56 = arith.subf %52, %55 : vector<8x8xf32>
    %57 = math.exp %56 : vector<8x8xf32>
    %cst_28 = arith.constant dense<0.000000e+00> : vector<8xf32>
    %58 = vector.multi_reduction <add>, %57, %cst_28 [1] : vector<8x8xf32> to vector<8xf32>
    %59 = vector.shape_cast %58 : vector<8xf32> to vector<8x1xf32>
    %60 = tpu.reciprocal %59 {approx = true} : vector<8x1xf32> -> vector<8x1xf32>
    %61 = vector.broadcast %60 : vector<8x1xf32> to vector<8x8xf32>
    %62 = arith.mulf %57, %61 : vector<8x8xf32>
    %63 = arith.truncf %62 : vector<8x8xf32> to vector<8x8xbf16>
    %cst_29 = arith.constant dense<0.000000e+00> : vector<8x64xf32>
    %64 = tpu.matmul %63, %51, %cst_29 {dimension_numbers = #tpu.dot_dimension_numbers<[1], [0], [0], [1], [0, 0, 1, 1], [], []>} : vector<8x8xbf16>, vector<8x64xbf16>, vector<8x64xf32> -> vector<8x64xf32>
    %65 = tpu.concatenate %48, %64 in 1 : vector<8x64xf32>, vector<8x64xf32> -> vector<8x128xf32>
    %66 = arith.truncf %65 : vector<8x128xf32> to vector<8x128xbf16>
    %c0_30 = arith.constant 0 : index
    %c0_31 = arith.constant 0 : index
    %67 = vector.load %arg14[%c0_30, %c0_31] : memref<16x768xbf16, #tpu.memory_space<vmem>>, vector<8x128xbf16>
    tpu.vector_store %arg14[%c0_30, %c0_31], %66 {strides = array<i32>} : memref<16x768xbf16, #tpu.memory_space<vmem>>, vector<8x128xbf16>,
    %68 = vector.extract_strided_slice %27 {offsets = [0, 128], sizes = [8, 128], strides = [1, 1]} : vector<8x768xbf16> to vector<8x128xbf16>
    %69 = vector.extract_strided_slice %28 {offsets = [0, 128], sizes = [8, 128], strides = [1, 1]} : vector<8x768xbf16> to vector<8x128xbf16>
    %70 = vector.extract_strided_slice %29 {offsets = [0, 128], sizes = [8, 128], strides = [1, 1]} : vector<8x768xbf16> to vector<8x128xbf16>
    %71 = vector.extract_strided_slice %68 {offsets = [0, 0], sizes = [8, 64], strides = [1, 1]} : vector<8x128xbf16> to vector<8x64xbf16>
    %72 = vector.extract_strided_slice %69 {offsets = [0, 0], sizes = [8, 64], strides = [1, 1]} : vector<8x128xbf16> to vector<8x64xbf16>
    %73 = vector.extract_strided_slice %70 {offsets = [0, 0], sizes = [8, 64], strides = [1, 1]} : vector<8x128xbf16> to vector<8x64xbf16>
    %cst_32 = arith.constant dense<0.000000e+00> : vector<8x8xf32>
    %74 = tpu.matmul %71, %72, %cst_32 {dimension_numbers = #tpu.dot_dimension_numbers<[1], [1], [0], [0], [0, 0, 1, 0], [], []>} : vector<8x64xbf16>, vector<8x64xbf16>, vector<8x8xf32> -> vector<8x8xf32>
    %cst_33 = arith.constant dense<0xFF800000> : vector<8xf32>
    %75 = vector.multi_reduction <maximumf>, %74, %cst_33 [1] : vector<8x8xf32> to vector<8xf32>
    %76 = vector.shape_cast %75 : vector<8xf32> to vector<8x1xf32>
    %77 = vector.broadcast %76 : vector<8x1xf32> to vector<8x8xf32>
    %78 = arith.subf %74, %77 : vector<8x8xf32>
    %79 = math.exp %78 : vector<8x8xf32>
    %cst_34 = arith.constant dense<0.000000e+00> : vector<8xf32>
    %80 = vector.multi_reduction <add>, %79, %cst_34 [1] : vector<8x8xf32> to vector<8xf32>
    %81 = vector.shape_cast %80 : vector<8xf32> to vector<8x1xf32>
    %82 = tpu.reciprocal %81 {approx = true} : vector<8x1xf32> -> vector<8x1xf32>
    %83 = vector.broadcast %82 : vector<8x1xf32> to vector<8x8xf32>
    %84 = arith.mulf %79, %83 : vector<8x8xf32>
    %85 = arith.truncf %84 : vector<8x8xf32> to vector<8x8xbf16>
    %cst_35 = arith.constant dense<0.000000e+00> : vector<8x64xf32>
    %86 = tpu.matmul %85, %73, %cst_35 {dimension_numbers = #tpu.dot_dimension_numbers<[1], [0], [0], [1], [0, 0, 1, 1], [], []>} : vector<8x8xbf16>, vector<8x64xbf16>, vector<8x64xf32> -> vector<8x64xf32>
    %87 = vector.extract_strided_slice %68 {offsets = [0, 64], sizes = [8, 64], strides = [1, 1]} : vector<8x128xbf16> to vector<8x64xbf16>
    %88 = vector.extract_strided_slice %69 {offsets = [0, 64], sizes = [8, 64], strides = [1, 1]} : vector<8x128xbf16> to vector<8x64xbf16>
    %89 = vector.extract_strided_slice %70 {offsets = [0, 64], sizes = [8, 64], strides = [1, 1]} : vector<8x128xbf16> to vector<8x64xbf16>
    %cst_36 = arith.constant dense<0.000000e+00> : vector<8x8xf32>
    %90 = tpu.matmul %87, %88, %cst_36 {dimension_numbers = #tpu.dot_dimension_numbers<[1], [1], [0], [0], [0, 0, 1, 0], [], []>} : vector<8x64xbf16>, vector<8x64xbf16>, vector<8x8xf32> -> vector<8x8xf32>
    %cst_37 = arith.constant dense<0xFF800000> : vector<8xf32>
    %91 = vector.multi_reduction <maximumf>, %90, %cst_37 [1] : vector<8x8xf32> to vector<8xf32>
    %92 = vector.shape_cast %91 : vector<8xf32> to vector<8x1xf32>
    %93 = vector.broadcast %92 : vector<8x1xf32> to vector<8x8xf32>
    %94 = arith.subf %90, %93 : vector<8x8xf32>
    %95 = math.exp %94 : vector<8x8xf32>
    %cst_38 = arith.constant dense<0.000000e+00> : vector<8xf32>
    %96 = vector.multi_reduction <add>, %95, %cst_38 [1] : vector<8x8xf32> to vector<8xf32>
    %97 = vector.shape_cast %96 : vector<8xf32> to vector<8x1xf32>
    %98 = tpu.reciprocal %97 {approx = true} : vector<8x1xf32> -> vector<8x1xf32>
    %99 = vector.broadcast %98 : vector<8x1xf32> to vector<8x8xf32>
    %100 = arith.mulf %95, %99 : vector<8x8xf32>
    %101 = arith.truncf %100 : vector<8x8xf32> to vector<8x8xbf16>
    %cst_39 = arith.constant dense<0.000000e+00> : vector<8x64xf32>
    %102 = tpu.matmul %101, %89, %cst_39 {dimension_numbers = #tpu.dot_dimension_numbers<[1], [0], [0], [1], [0, 0, 1, 1], [], []>} : vector<8x8xbf16>, vector<8x64xbf16>, vector<8x64xf32> -> vector<8x64xf32>
    %103 = tpu.concatenate %86, %102 in 1 : vector<8x64xf32>, vector<8x64xf32> -> vector<8x128xf32>
    %104 = arith.truncf %103 : vector<8x128xf32> to vector<8x128xbf16>
    %c0_40 = arith.constant 0 : index
    %c128 = arith.constant 128 : index
    %105 = vector.load %arg14[%c0_40, %c128] : memref<16x768xbf16, #tpu.memory_space<vmem>>, vector<8x128xbf16>
    tpu.vector_store %arg14[%c0_40, %c128], %104 {strides = array<i32>} : memref<16x768xbf16, #tpu.memory_space<vmem>>, vector<8x128xbf16>,
    %106 = vector.extract_strided_slice %27 {offsets = [0, 256], sizes = [8, 128], strides = [1, 1]} : vector<8x768xbf16> to vector<8x128xbf16>
    %107 = vector.extract_strided_slice %28 {offsets = [0, 256], sizes = [8, 128], strides = [1, 1]} : vector<8x768xbf16> to vector<8x128xbf16>
    %108 = vector.extract_strided_slice %29 {offsets = [0, 256], sizes = [8, 128], strides = [1, 1]} : vector<8x768xbf16> to vector<8x128xbf16>
    %109 = vector.extract_strided_slice %106 {offsets = [0, 0], sizes = [8, 64], strides = [1, 1]} : vector<8x128xbf16> to vector<8x64xbf16>
    %110 = vector.extract_strided_slice %107 {offsets = [0, 0], sizes = [8, 64], strides = [1, 1]} : vector<8x128xbf16> to vector<8x64xbf16>
    %111 = vector.extract_strided_slice %108 {offsets = [0, 0], sizes = [8, 64], strides = [1, 1]} : vector<8x128xbf16> to vector<8x64xbf16>
    %cst_41 = arith.constant dense<0.000000e+00> : vector<8x8xf32>
    %112 = tpu.matmul %109, %110, %cst_41 {dimension_numbers = #tpu.dot_dimension_numbers<[1], [1], [0], [0], [0, 0, 1, 0], [], []>} : vector<8x64xbf16>, vector<8x64xbf16>, vector<8x8xf32> -> vector<8x8xf32>
    %cst_42 = arith.constant dense<0xFF800000> : vector<8xf32>
    %113 = vector.multi_reduction <maximumf>, %112, %cst_42 [1] : vector<8x8xf32> to vector<8xf32>
    %114 = vector.shape_cast %113 : vector<8xf32> to vector<8x1xf32>
    %115 = vector.broadcast %114 : vector<8x1xf32> to vector<8x8xf32>
    %116 = arith.subf %112, %115 : vector<8x8xf32>
    %117 = math.exp %116 : vector<8x8xf32>
    %cst_43 = arith.constant dense<0.000000e+00> : vector<8xf32>
    %118 = vector.multi_reduction <add>, %117, %cst_43 [1] : vector<8x8xf32> to vector<8xf32>
    %119 = vector.shape_cast %118 : vector<8xf32> to vector<8x1xf32>
    %120 = tpu.reciprocal %119 {approx = true} : vector<8x1xf32> -> vector<8x1xf32>
    %121 = vector.broadcast %120 : vector<8x1xf32> to vector<8x8xf32>
    %122 = arith.mulf %117, %121 : vector<8x8xf32>
    %123 = arith.truncf %122 : vector<8x8xf32> to vector<8x8xbf16>
    %cst_44 = arith.constant dense<0.000000e+00> : vector<8x64xf32>
    %124 = tpu.matmul %123, %111, %cst_44 {dimension_numbers = #tpu.dot_dimension_numbers<[1], [0], [0], [1], [0, 0, 1, 1], [], []>} : vector<8x8xbf16>, vector<8x64xbf16>, vector<8x64xf32> -> vector<8x64xf32>
    %125 = vector.extract_strided_slice %106 {offsets = [0, 64], sizes = [8, 64], strides = [1, 1]} : vector<8x128xbf16> to vector<8x64xbf16>
    %126 = vector.extract_strided_slice %107 {offsets = [0, 64], sizes = [8, 64], strides = [1, 1]} : vector<8x128xbf16> to vector<8x64xbf16>
    %127 = vector.extract_strided_slice %108 {offsets = [0, 64], sizes = [8, 64], strides = [1, 1]} : vector<8x128xbf16> to vector<8x64xbf16>
    %cst_45 = arith.constant dense<0.000000e+00> : vector<8x8xf32>
    %128 = tpu.matmul %125, %126, %cst_45 {dimension_numbers = #tpu.dot_dimension_numbers<[1], [1], [0], [0], [0, 0, 1, 0], [], []>} : vector<8x64xbf16>, vector<8x64xbf16>, vector<8x8xf32> -> vector<8x8xf32>
    %cst_46 = arith.constant dense<0xFF800000> : vector<8xf32>
    %129 = vector.multi_reduction <maximumf>, %128, %cst_46 [1] : vector<8x8xf32> to vector<8xf32>
    %130 = vector.shape_cast %129 : vector<8xf32> to vector<8x1xf32>
    %131 = vector.broadcast %130 : vector<8x1xf32> to vector<8x8xf32>
    %132 = arith.subf %128, %131 : vector<8x8xf32>
    %133 = math.exp %132 : vector<8x8xf32>
    %cst_47 = arith.constant dense<0.000000e+00> : vector<8xf32>
    %134 = vector.multi_reduction <add>, %133, %cst_47 [1] : vector<8x8xf32> to vector<8xf32>
    %135 = vector.shape_cast %134 : vector<8xf32> to vector<8x1xf32>
    %136 = tpu.reciprocal %135 {approx = true} : vector<8x1xf32> -> vector<8x1xf32>
    %137 = vector.broadcast %136 : vector<8x1xf32> to vector<8x8xf32>
    %138 = arith.mulf %133, %137 : vector<8x8xf32>
    %139 = arith.truncf %138 : vector<8x8xf32> to vector<8x8xbf16>
    %cst_48 = arith.constant dense<0.000000e+00> : vector<8x64xf32>
    %140 = tpu.matmul %139, %127, %cst_48 {dimension_numbers = #tpu.dot_dimension_numbers<[1], [0], [0], [1], [0, 0, 1, 1], [], []>} : vector<8x8xbf16>, vector<8x64xbf16>, vector<8x64xf32> -> vector<8x64xf32>
    %141 = tpu.concatenate %124, %140 in 1 : vector<8x64xf32>, vector<8x64xf32> -> vector<8x128xf32>
    %142 = arith.truncf %141 : vector<8x128xf32> to vector<8x128xbf16>
    %c0_49 = arith.constant 0 : index
    %c256 = arith.constant 256 : index
    %143 = vector.load %arg14[%c0_49, %c256] : memref<16x768xbf16, #tpu.memory_space<vmem>>, vector<8x128xbf16>
    tpu.vector_store %arg14[%c0_49, %c256], %142 {strides = array<i32>} : memref<16x768xbf16, #tpu.memory_space<vmem>>, vector<8x128xbf16>,
    %144 = vector.extract_strided_slice %27 {offsets = [0, 384], sizes = [8, 128], strides = [1, 1]} : vector<8x768xbf16> to vector<8x128xbf16>
    %145 = vector.extract_strided_slice %28 {offsets = [0, 384], sizes = [8, 128], strides = [1, 1]} : vector<8x768xbf16> to vector<8x128xbf16>
    %146 = vector.extract_strided_slice %29 {offsets = [0, 384], sizes = [8, 128], strides = [1, 1]} : vector<8x768xbf16> to vector<8x128xbf16>
    %147 = vector.extract_strided_slice %144 {offsets = [0, 0], sizes = [8, 64], strides = [1, 1]} : vector<8x128xbf16> to vector<8x64xbf16>
    %148 = vector.extract_strided_slice %145 {offsets = [0, 0], sizes = [8, 64], strides = [1, 1]} : vector<8x128xbf16> to vector<8x64xbf16>
    %149 = vector.extract_strided_slice %146 {offsets = [0, 0], sizes = [8, 64], strides = [1, 1]} : vector<8x128xbf16> to vector<8x64xbf16>
    %cst_50 = arith.constant dense<0.000000e+00> : vector<8x8xf32>
    %150 = tpu.matmul %147, %148, %cst_50 {dimension_numbers = #tpu.dot_dimension_numbers<[1], [1], [0], [0], [0, 0, 1, 0], [], []>} : vector<8x64xbf16>, vector<8x64xbf16>, vector<8x8xf32> -> vector<8x8xf32>
    %cst_51 = arith.constant dense<0xFF800000> : vector<8xf32>
    %151 = vector.multi_reduction <maximumf>, %150, %cst_51 [1] : vector<8x8xf32> to vector<8xf32>
    %152 = vector.shape_cast %151 : vector<8xf32> to vector<8x1xf32>
    %153 = vector.broadcast %152 : vector<8x1xf32> to vector<8x8xf32>
    %154 = arith.subf %150, %153 : vector<8x8xf32>
    %155 = math.exp %154 : vector<8x8xf32>
    %cst_52 = arith.constant dense<0.000000e+00> : vector<8xf32>
    %156 = vector.multi_reduction <add>, %155, %cst_52 [1] : vector<8x8xf32> to vector<8xf32>
    %157 = vector.shape_cast %156 : vector<8xf32> to vector<8x1xf32>
    %158 = tpu.reciprocal %157 {approx = true} : vector<8x1xf32> -> vector<8x1xf32>
    %159 = vector.broadcast %158 : vector<8x1xf32> to vector<8x8xf32>
    %160 = arith.mulf %155, %159 : vector<8x8xf32>
    %161 = arith.truncf %160 : vector<8x8xf32> to vector<8x8xbf16>
    %cst_53 = arith.constant dense<0.000000e+00> : vector<8x64xf32>
    %162 = tpu.matmul %161, %149, %cst_53 {dimension_numbers = #tpu.dot_dimension_numbers<[1], [0], [0], [1], [0, 0, 1, 1], [], []>} : vector<8x8xbf16>, vector<8x64xbf16>, vector<8x64xf32> -> vector<8x64xf32>
    %163 = vector.extract_strided_slice %144 {offsets = [0, 64], sizes = [8, 64], strides = [1, 1]} : vector<8x128xbf16> to vector<8x64xbf16>
    %164 = vector.extract_strided_slice %145 {offsets = [0, 64], sizes = [8, 64], strides = [1, 1]} : vector<8x128xbf16> to vector<8x64xbf16>
    %165 = vector.extract_strided_slice %146 {offsets = [0, 64], sizes = [8, 64], strides = [1, 1]} : vector<8x128xbf16> to vector<8x64xbf16>
    %cst_54 = arith.constant dense<0.000000e+00> : vector<8x8xf32>
    %166 = tpu.matmul %163, %164, %cst_54 {dimension_numbers = #tpu.dot_dimension_numbers<[1], [1], [0], [0], [0, 0, 1, 0], [], []>} : vector<8x64xbf16>, vector<8x64xbf16>, vector<8x8xf32> -> vector<8x8xf32>
    %cst_55 = arith.constant dense<0xFF800000> : vector<8xf32>
    %167 = vector.multi_reduction <maximumf>, %166, %cst_55 [1] : vector<8x8xf32> to vector<8xf32>
    %168 = vector.shape_cast %167 : vector<8xf32> to vector<8x1xf32>
    %169 = vector.broadcast %168 : vector<8x1xf32> to vector<8x8xf32>
    %170 = arith.subf %166, %169 : vector<8x8xf32>
    %171 = math.exp %170 : vector<8x8xf32>
    %cst_56 = arith.constant dense<0.000000e+00> : vector<8xf32>
    %172 = vector.multi_reduction <add>, %171, %cst_56 [1] : vector<8x8xf32> to vector<8xf32>
    %173 = vector.shape_cast %172 : vector<8xf32> to vector<8x1xf32>
    %174 = tpu.reciprocal %173 {approx = true} : vector<8x1xf32> -> vector<8x1xf32>
    %175 = vector.broadcast %174 : vector<8x1xf32> to vector<8x8xf32>
    %176 = arith.mulf %171, %175 : vector<8x8xf32>
    %177 = arith.truncf %176 : vector<8x8xf32> to vector<8x8xbf16>
    %cst_57 = arith.constant dense<0.000000e+00> : vector<8x64xf32>
    %178 = tpu.matmul %177, %165, %cst_57 {dimension_numbers = #tpu.dot_dimension_numbers<[1], [0], [0], [1], [0, 0, 1, 1], [], []>} : vector<8x8xbf16>, vector<8x64xbf16>, vector<8x64xf32> -> vector<8x64xf32>
    %179 = tpu.concatenate %162, %178 in 1 : vector<8x64xf32>, vector<8x64xf32> -> vector<8x128xf32>
    %180 = arith.truncf %179 : vector<8x128xf32> to vector<8x128xbf16>
    %c0_58 = arith.constant 0 : index
    %c384 = arith.constant 384 : index
    %181 = vector.load %arg14[%c0_58, %c384] : memref<16x768xbf16, #tpu.memory_space<vmem>>, vector<8x128xbf16>
    tpu.vector_store %arg14[%c0_58, %c384], %180 {strides = array<i32>} : memref<16x768xbf16, #tpu.memory_space<vmem>>, vector<8x128xbf16>,
    %182 = vector.extract_strided_slice %27 {offsets = [0, 512], sizes = [8, 128], strides = [1, 1]} : vector<8x768xbf16> to vector<8x128xbf16>
    %183 = vector.extract_strided_slice %28 {offsets = [0, 512], sizes = [8, 128], strides = [1, 1]} : vector<8x768xbf16> to vector<8x128xbf16>
    %184 = vector.extract_strided_slice %29 {offsets = [0, 512], sizes = [8, 128], strides = [1, 1]} : vector<8x768xbf16> to vector<8x128xbf16>
    %185 = vector.extract_strided_slice %182 {offsets = [0, 0], sizes = [8, 64], strides = [1, 1]} : vector<8x128xbf16> to vector<8x64xbf16>
    %186 = vector.extract_strided_slice %183 {offsets = [0, 0], sizes = [8, 64], strides = [1, 1]} : vector<8x128xbf16> to vector<8x64xbf16>
    %187 = vector.extract_strided_slice %184 {offsets = [0, 0], sizes = [8, 64], strides = [1, 1]} : vector<8x128xbf16> to vector<8x64xbf16>
    %cst_59 = arith.constant dense<0.000000e+00> : vector<8x8xf32>
    %188 = tpu.matmul %185, %186, %cst_59 {dimension_numbers = #tpu.dot_dimension_numbers<[1], [1], [0], [0], [0, 0, 1, 0], [], []>} : vector<8x64xbf16>, vector<8x64xbf16>, vector<8x8xf32> -> vector<8x8xf32>
    %cst_60 = arith.constant dense<0xFF800000> : vector<8xf32>
    %189 = vector.multi_reduction <maximumf>, %188, %cst_60 [1] : vector<8x8xf32> to vector<8xf32>
    %190 = vector.shape_cast %189 : vector<8xf32> to vector<8x1xf32>
    %191 = vector.broadcast %190 : vector<8x1xf32> to vector<8x8xf32>
    %192 = arith.subf %188, %191 : vector<8x8xf32>
    %193 = math.exp %192 : vector<8x8xf32>
    %cst_61 = arith.constant dense<0.000000e+00> : vector<8xf32>
    %194 = vector.multi_reduction <add>, %193, %cst_61 [1] : vector<8x8xf32> to vector<8xf32>
    %195 = vector.shape_cast %194 : vector<8xf32> to vector<8x1xf32>
    %196 = tpu.reciprocal %195 {approx = true} : vector<8x1xf32> -> vector<8x1xf32>
    %197 = vector.broadcast %196 : vector<8x1xf32> to vector<8x8xf32>
    %198 = arith.mulf %193, %197 : vector<8x8xf32>
    %199 = arith.truncf %198 : vector<8x8xf32> to vector<8x8xbf16>
    %cst_62 = arith.constant dense<0.000000e+00> : vector<8x64xf32>
    %200 = tpu.matmul %199, %187, %cst_62 {dimension_numbers = #tpu.dot_dimension_numbers<[1], [0], [0], [1], [0, 0, 1, 1], [], []>} : vector<8x8xbf16>, vector<8x64xbf16>, vector<8x64xf32> -> vector<8x64xf32>
    %201 = vector.extract_strided_slice %182 {offsets = [0, 64], sizes = [8, 64], strides = [1, 1]} : vector<8x128xbf16> to vector<8x64xbf16>
    %202 = vector.extract_strided_slice %183 {offsets = [0, 64], sizes = [8, 64], strides = [1, 1]} : vector<8x128xbf16> to vector<8x64xbf16>
    %203 = vector.extract_strided_slice %184 {offsets = [0, 64], sizes = [8, 64], strides = [1, 1]} : vector<8x128xbf16> to vector<8x64xbf16>
    %cst_63 = arith.constant dense<0.000000e+00> : vector<8x8xf32>
    %204 = tpu.matmul %201, %202, %cst_63 {dimension_numbers = #tpu.dot_dimension_numbers<[1], [1], [0], [0], [0, 0, 1, 0], [], []>} : vector<8x64xbf16>, vector<8x64xbf16>, vector<8x8xf32> -> vector<8x8xf32>
    %cst_64 = arith.constant dense<0xFF800000> : vector<8xf32>
    %205 = vector.multi_reduction <maximumf>, %204, %cst_64 [1] : vector<8x8xf32> to vector<8xf32>
    %206 = vector.shape_cast %205 : vector<8xf32> to vector<8x1xf32>
    %207 = vector.broadcast %206 : vector<8x1xf32> to vector<8x8xf32>
    %208 = arith.subf %204, %207 : vector<8x8xf32>
    %209 = math.exp %208 : vector<8x8xf32>
    %cst_65 = arith.constant dense<0.000000e+00> : vector<8xf32>
    %210 = vector.multi_reduction <add>, %209, %cst_65 [1] : vector<8x8xf32> to vector<8xf32>
    %211 = vector.shape_cast %210 : vector<8xf32> to vector<8x1xf32>
    %212 = tpu.reciprocal %211 {approx = true} : vector<8x1xf32> -> vector<8x1xf32>
    %213 = vector.broadcast %212 : vector<8x1xf32> to vector<8x8xf32>
    %214 = arith.mulf %209, %213 : vector<8x8xf32>
    %215 = arith.truncf %214 : vector<8x8xf32> to vector<8x8xbf16>
    %cst_66 = arith.constant dense<0.000000e+00> : vector<8x64xf32>
    %216 = tpu.matmul %215, %203, %cst_66 {dimension_numbers = #tpu.dot_dimension_numbers<[1], [0], [0], [1], [0, 0, 1, 1], [], []>} : vector<8x8xbf16>, vector<8x64xbf16>, vector<8x64xf32> -> vector<8x64xf32>
    %217 = tpu.concatenate %200, %216 in 1 : vector<8x64xf32>, vector<8x64xf32> -> vector<8x128xf32>
    %218 = arith.truncf %217 : vector<8x128xf32> to vector<8x128xbf16>
    %c0_67 = arith.constant 0 : index
    %c512 = arith.constant 512 : index
    %219 = vector.load %arg14[%c0_67, %c512] : memref<16x768xbf16, #tpu.memory_space<vmem>>, vector<8x128xbf16>
    tpu.vector_store %arg14[%c0_67, %c512], %218 {strides = array<i32>} : memref<16x768xbf16, #tpu.memory_space<vmem>>, vector<8x128xbf16>,
    %220 = vector.extract_strided_slice %27 {offsets = [0, 640], sizes = [8, 128], strides = [1, 1]} : vector<8x768xbf16> to vector<8x128xbf16>
    %221 = vector.extract_strided_slice %28 {offsets = [0, 640], sizes = [8, 128], strides = [1, 1]} : vector<8x768xbf16> to vector<8x128xbf16>
    %222 = vector.extract_strided_slice %29 {offsets = [0, 640], sizes = [8, 128], strides = [1, 1]} : vector<8x768xbf16> to vector<8x128xbf16>
    %223 = vector.extract_strided_slice %220 {offsets = [0, 0], sizes = [8, 64], strides = [1, 1]} : vector<8x128xbf16> to vector<8x64xbf16>
    %224 = vector.extract_strided_slice %221 {offsets = [0, 0], sizes = [8, 64], strides = [1, 1]} : vector<8x128xbf16> to vector<8x64xbf16>
    %225 = vector.extract_strided_slice %222 {offsets = [0, 0], sizes = [8, 64], strides = [1, 1]} : vector<8x128xbf16> to vector<8x64xbf16>
    %cst_68 = arith.constant dense<0.000000e+00> : vector<8x8xf32>
    %226 = tpu.matmul %223, %224, %cst_68 {dimension_numbers = #tpu.dot_dimension_numbers<[1], [1], [0], [0], [0, 0, 1, 0], [], []>} : vector<8x64xbf16>, vector<8x64xbf16>, vector<8x8xf32> -> vector<8x8xf32>
    %cst_69 = arith.constant dense<0xFF800000> : vector<8xf32>
    %227 = vector.multi_reduction <maximumf>, %226, %cst_69 [1] : vector<8x8xf32> to vector<8xf32>
    %228 = vector.shape_cast %227 : vector<8xf32> to vector<8x1xf32>
    %229 = vector.broadcast %228 : vector<8x1xf32> to vector<8x8xf32>
    %230 = arith.subf %226, %229 : vector<8x8xf32>
    %231 = math.exp %230 : vector<8x8xf32>
    %cst_70 = arith.constant dense<0.000000e+00> : vector<8xf32>
    %232 = vector.multi_reduction <add>, %231, %cst_70 [1] : vector<8x8xf32> to vector<8xf32>
    %233 = vector.shape_cast %232 : vector<8xf32> to vector<8x1xf32>
    %234 = tpu.reciprocal %233 {approx = true} : vector<8x1xf32> -> vector<8x1xf32>
    %235 = vector.broadcast %234 : vector<8x1xf32> to vector<8x8xf32>
    %236 = arith.mulf %231, %235 : vector<8x8xf32>
    %237 = arith.truncf %236 : vector<8x8xf32> to vector<8x8xbf16>
    %cst_71 = arith.constant dense<0.000000e+00> : vector<8x64xf32>
    %238 = tpu.matmul %237, %225, %cst_71 {dimension_numbers = #tpu.dot_dimension_numbers<[1], [0], [0], [1], [0, 0, 1, 1], [], []>} : vector<8x8xbf16>, vector<8x64xbf16>, vector<8x64xf32> -> vector<8x64xf32>
    %239 = vector.extract_strided_slice %220 {offsets = [0, 64], sizes = [8, 64], strides = [1, 1]} : vector<8x128xbf16> to vector<8x64xbf16>
    %240 = vector.extract_strided_slice %221 {offsets = [0, 64], sizes = [8, 64], strides = [1, 1]} : vector<8x128xbf16> to vector<8x64xbf16>
    %241 = vector.extract_strided_slice %222 {offsets = [0, 64], sizes = [8, 64], strides = [1, 1]} : vector<8x128xbf16> to vector<8x64xbf16>
    %cst_72 = arith.constant dense<0.000000e+00> : vector<8x8xf32>
    %242 = tpu.matmul %239, %240, %cst_72 {dimension_numbers = #tpu.dot_dimension_numbers<[1], [1], [0], [0], [0, 0, 1, 0], [], []>} : vector<8x64xbf16>, vector<8x64xbf16>, vector<8x8xf32> -> vector<8x8xf32>
    %cst_73 = arith.constant dense<0xFF800000> : vector<8xf32>
    %243 = vector.multi_reduction <maximumf>, %242, %cst_73 [1] : vector<8x8xf32> to vector<8xf32>
    %244 = vector.shape_cast %243 : vector<8xf32> to vector<8x1xf32>
    %245 = vector.broadcast %244 : vector<8x1xf32> to vector<8x8xf32>
    %246 = arith.subf %242, %245 : vector<8x8xf32>
    %247 = math.exp %246 : vector<8x8xf32>
    %cst_74 = arith.constant dense<0.000000e+00> : vector<8xf32>
    %248 = vector.multi_reduction <add>, %247, %cst_74 [1] : vector<8x8xf32> to vector<8xf32>
    %249 = vector.shape_cast %248 : vector<8xf32> to vector<8x1xf32>
    %250 = tpu.reciprocal %249 {approx = true} : vector<8x1xf32> -> vector<8x1xf32>
    %251 = vector.broadcast %250 : vector<8x1xf32> to vector<8x8xf32>
    %252 = arith.mulf %247, %251 : vector<8x8xf32>
    %253 = arith.truncf %252 : vector<8x8xf32> to vector<8x8xbf16>
    %cst_75 = arith.constant dense<0.000000e+00> : vector<8x64xf32>
    %254 = tpu.matmul %253, %241, %cst_75 {dimension_numbers = #tpu.dot_dimension_numbers<[1], [0], [0], [1], [0, 0, 1, 1], [], []>} : vector<8x8xbf16>, vector<8x64xbf16>, vector<8x64xf32> -> vector<8x64xf32>
    %255 = tpu.concatenate %238, %254 in 1 : vector<8x64xf32>, vector<8x64xf32> -> vector<8x128xf32>
    %256 = arith.truncf %255 : vector<8x128xf32> to vector<8x128xbf16>
    %c0_76 = arith.constant 0 : index
    %c640 = arith.constant 640 : index
    %257 = vector.load %arg14[%c0_76, %c640] : memref<16x768xbf16, #tpu.memory_space<vmem>>, vector<8x128xbf16>
    tpu.vector_store %arg14[%c0_76, %c640], %256 {strides = array<i32>} : memref<16x768xbf16, #tpu.memory_space<vmem>>, vector<8x128xbf16>,
    %258 = vector.extract_strided_slice %14 {offsets = [8, 0], sizes = [8, 768], strides = [1, 1]} : vector<16x768xbf16> to vector<8x768xbf16>
    %259 = vector.extract_strided_slice %20 {offsets = [8, 0], sizes = [8, 768], strides = [1, 1]} : vector<16x768xbf16> to vector<8x768xbf16>
    %260 = vector.extract_strided_slice %26 {offsets = [8, 0], sizes = [8, 768], strides = [1, 1]} : vector<16x768xbf16> to vector<8x768xbf16>
    %261 = vector.extract_strided_slice %258 {offsets = [0, 0], sizes = [8, 128], strides = [1, 1]} : vector<8x768xbf16> to vector<8x128xbf16>
    %262 = vector.extract_strided_slice %259 {offsets = [0, 0], sizes = [8, 128], strides = [1, 1]} : vector<8x768xbf16> to vector<8x128xbf16>
    %263 = vector.extract_strided_slice %260 {offsets = [0, 0], sizes = [8, 128], strides = [1, 1]} : vector<8x768xbf16> to vector<8x128xbf16>
    %264 = vector.extract_strided_slice %261 {offsets = [0, 0], sizes = [8, 64], strides = [1, 1]} : vector<8x128xbf16> to vector<8x64xbf16>
    %265 = vector.extract_strided_slice %262 {offsets = [0, 0], sizes = [8, 64], strides = [1, 1]} : vector<8x128xbf16> to vector<8x64xbf16>
    %266 = vector.extract_strided_slice %263 {offsets = [0, 0], sizes = [8, 64], strides = [1, 1]} : vector<8x128xbf16> to vector<8x64xbf16>
    %cst_77 = arith.constant dense<0.000000e+00> : vector<8x8xf32>
    %267 = tpu.matmul %264, %265, %cst_77 {dimension_numbers = #tpu.dot_dimension_numbers<[1], [1], [0], [0], [0, 0, 1, 0], [], []>} : vector<8x64xbf16>, vector<8x64xbf16>, vector<8x8xf32> -> vector<8x8xf32>
    %cst_78 = arith.constant dense<0xFF800000> : vector<8xf32>
    %268 = vector.multi_reduction <maximumf>, %267, %cst_78 [1] : vector<8x8xf32> to vector<8xf32>
    %269 = vector.shape_cast %268 : vector<8xf32> to vector<8x1xf32>
    %270 = vector.broadcast %269 : vector<8x1xf32> to vector<8x8xf32>
    %271 = arith.subf %267, %270 : vector<8x8xf32>
    %272 = math.exp %271 : vector<8x8xf32>
    %cst_79 = arith.constant dense<0.000000e+00> : vector<8xf32>
    %273 = vector.multi_reduction <add>, %272, %cst_79 [1] : vector<8x8xf32> to vector<8xf32>
    %274 = vector.shape_cast %273 : vector<8xf32> to vector<8x1xf32>
    %275 = tpu.reciprocal %274 {approx = true} : vector<8x1xf32> -> vector<8x1xf32>
    %276 = vector.broadcast %275 : vector<8x1xf32> to vector<8x8xf32>
    %277 = arith.mulf %272, %276 : vector<8x8xf32>
    %278 = arith.truncf %277 : vector<8x8xf32> to vector<8x8xbf16>
    %cst_80 = arith.constant dense<0.000000e+00> : vector<8x64xf32>
    %279 = tpu.matmul %278, %266, %cst_80 {dimension_numbers = #tpu.dot_dimension_numbers<[1], [0], [0], [1], [0, 0, 1, 1], [], []>} : vector<8x8xbf16>, vector<8x64xbf16>, vector<8x64xf32> -> vector<8x64xf32>
    %280 = vector.extract_strided_slice %261 {offsets = [0, 64], sizes = [8, 64], strides = [1, 1]} : vector<8x128xbf16> to vector<8x64xbf16>
    %281 = vector.extract_strided_slice %262 {offsets = [0, 64], sizes = [8, 64], strides = [1, 1]} : vector<8x128xbf16> to vector<8x64xbf16>
    %282 = vector.extract_strided_slice %263 {offsets = [0, 64], sizes = [8, 64], strides = [1, 1]} : vector<8x128xbf16> to vector<8x64xbf16>
    %cst_81 = arith.constant dense<0.000000e+00> : vector<8x8xf32>
    %283 = tpu.matmul %280, %281, %cst_81 {dimension_numbers = #tpu.dot_dimension_numbers<[1], [1], [0], [0], [0, 0, 1, 0], [], []>} : vector<8x64xbf16>, vector<8x64xbf16>, vector<8x8xf32> -> vector<8x8xf32>
    %cst_82 = arith.constant dense<0xFF800000> : vector<8xf32>
    %284 = vector.multi_reduction <maximumf>, %283, %cst_82 [1] : vector<8x8xf32> to vector<8xf32>
    %285 = vector.shape_cast %284 : vector<8xf32> to vector<8x1xf32>
    %286 = vector.broadcast %285 : vector<8x1xf32> to vector<8x8xf32>
    %287 = arith.subf %283, %286 : vector<8x8xf32>
    %288 = math.exp %287 : vector<8x8xf32>
    %cst_83 = arith.constant dense<0.000000e+00> : vector<8xf32>
    %289 = vector.multi_reduction <add>, %288, %cst_83 [1] : vector<8x8xf32> to vector<8xf32>
    %290 = vector.shape_cast %289 : vector<8xf32> to vector<8x1xf32>
    %291 = tpu.reciprocal %290 {approx = true} : vector<8x1xf32> -> vector<8x1xf32>
    %292 = vector.broadcast %291 : vector<8x1xf32> to vector<8x8xf32>
    %293 = arith.mulf %288, %292 : vector<8x8xf32>
    %294 = arith.truncf %293 : vector<8x8xf32> to vector<8x8xbf16>
    %cst_84 = arith.constant dense<0.000000e+00> : vector<8x64xf32>
    %295 = tpu.matmul %294, %282, %cst_84 {dimension_numbers = #tpu.dot_dimension_numbers<[1], [0], [0], [1], [0, 0, 1, 1], [], []>} : vector<8x8xbf16>, vector<8x64xbf16>, vector<8x64xf32> -> vector<8x64xf32>
    %296 = tpu.concatenate %279, %295 in 1 : vector<8x64xf32>, vector<8x64xf32> -> vector<8x128xf32>
    %297 = arith.truncf %296 : vector<8x128xf32> to vector<8x128xbf16>
    %c8 = arith.constant 8 : index
    %c0_85 = arith.constant 0 : index
    %298 = vector.load %arg14[%c8, %c0_85] : memref<16x768xbf16, #tpu.memory_space<vmem>>, vector<8x128xbf16>
    tpu.vector_store %arg14[%c8, %c0_85], %297 {strides = array<i32>} : memref<16x768xbf16, #tpu.memory_space<vmem>>, vector<8x128xbf16>,
    %299 = vector.extract_strided_slice %258 {offsets = [0, 128], sizes = [8, 128], strides = [1, 1]} : vector<8x768xbf16> to vector<8x128xbf16>
    %300 = vector.extract_strided_slice %259 {offsets = [0, 128], sizes = [8, 128], strides = [1, 1]} : vector<8x768xbf16> to vector<8x128xbf16>
    %301 = vector.extract_strided_slice %260 {offsets = [0, 128], sizes = [8, 128], strides = [1, 1]} : vector<8x768xbf16> to vector<8x128xbf16>
    %302 = vector.extract_strided_slice %299 {offsets = [0, 0], sizes = [8, 64], strides = [1, 1]} : vector<8x128xbf16> to vector<8x64xbf16>
    %303 = vector.extract_strided_slice %300 {offsets = [0, 0], sizes = [8, 64], strides = [1, 1]} : vector<8x128xbf16> to vector<8x64xbf16>
    %304 = vector.extract_strided_slice %301 {offsets = [0, 0], sizes = [8, 64], strides = [1, 1]} : vector<8x128xbf16> to vector<8x64xbf16>
    %cst_86 = arith.constant dense<0.000000e+00> : vector<8x8xf32>
    %305 = tpu.matmul %302, %303, %cst_86 {dimension_numbers = #tpu.dot_dimension_numbers<[1], [1], [0], [0], [0, 0, 1, 0], [], []>} : vector<8x64xbf16>, vector<8x64xbf16>, vector<8x8xf32> -> vector<8x8xf32>
    %cst_87 = arith.constant dense<0xFF800000> : vector<8xf32>
    %306 = vector.multi_reduction <maximumf>, %305, %cst_87 [1] : vector<8x8xf32> to vector<8xf32>
    %307 = vector.shape_cast %306 : vector<8xf32> to vector<8x1xf32>
    %308 = vector.broadcast %307 : vector<8x1xf32> to vector<8x8xf32>
    %309 = arith.subf %305, %308 : vector<8x8xf32>
    %310 = math.exp %309 : vector<8x8xf32>
    %cst_88 = arith.constant dense<0.000000e+00> : vector<8xf32>
    %311 = vector.multi_reduction <add>, %310, %cst_88 [1] : vector<8x8xf32> to vector<8xf32>
    %312 = vector.shape_cast %311 : vector<8xf32> to vector<8x1xf32>
    %313 = tpu.reciprocal %312 {approx = true} : vector<8x1xf32> -> vector<8x1xf32>
    %314 = vector.broadcast %313 : vector<8x1xf32> to vector<8x8xf32>
    %315 = arith.mulf %310, %314 : vector<8x8xf32>
    %316 = arith.truncf %315 : vector<8x8xf32> to vector<8x8xbf16>
    %cst_89 = arith.constant dense<0.000000e+00> : vector<8x64xf32>
    %317 = tpu.matmul %316, %304, %cst_89 {dimension_numbers = #tpu.dot_dimension_numbers<[1], [0], [0], [1], [0, 0, 1, 1], [], []>} : vector<8x8xbf16>, vector<8x64xbf16>, vector<8x64xf32> -> vector<8x64xf32>
    %318 = vector.extract_strided_slice %299 {offsets = [0, 64], sizes = [8, 64], strides = [1, 1]} : vector<8x128xbf16> to vector<8x64xbf16>
    %319 = vector.extract_strided_slice %300 {offsets = [0, 64], sizes = [8, 64], strides = [1, 1]} : vector<8x128xbf16> to vector<8x64xbf16>
    %320 = vector.extract_strided_slice %301 {offsets = [0, 64], sizes = [8, 64], strides = [1, 1]} : vector<8x128xbf16> to vector<8x64xbf16>
    %cst_90 = arith.constant dense<0.000000e+00> : vector<8x8xf32>
    %321 = tpu.matmul %318, %319, %cst_90 {dimension_numbers = #tpu.dot_dimension_numbers<[1], [1], [0], [0], [0, 0, 1, 0], [], []>} : vector<8x64xbf16>, vector<8x64xbf16>, vector<8x8xf32> -> vector<8x8xf32>
    %cst_91 = arith.constant dense<0xFF800000> : vector<8xf32>
    %322 = vector.multi_reduction <maximumf>, %321, %cst_91 [1] : vector<8x8xf32> to vector<8xf32>
    %323 = vector.shape_cast %322 : vector<8xf32> to vector<8x1xf32>
    %324 = vector.broadcast %323 : vector<8x1xf32> to vector<8x8xf32>
    %325 = arith.subf %321, %324 : vector<8x8xf32>
    %326 = math.exp %325 : vector<8x8xf32>
    %cst_92 = arith.constant dense<0.000000e+00> : vector<8xf32>
    %327 = vector.multi_reduction <add>, %326, %cst_92 [1] : vector<8x8xf32> to vector<8xf32>
    %328 = vector.shape_cast %327 : vector<8xf32> to vector<8x1xf32>
    %329 = tpu.reciprocal %328 {approx = true} : vector<8x1xf32> -> vector<8x1xf32>
    %330 = vector.broadcast %329 : vector<8x1xf32> to vector<8x8xf32>
    %331 = arith.mulf %326, %330 : vector<8x8xf32>
    %332 = arith.truncf %331 : vector<8x8xf32> to vector<8x8xbf16>
    %cst_93 = arith.constant dense<0.000000e+00> : vector<8x64xf32>
    %333 = tpu.matmul %332, %320, %cst_93 {dimension_numbers = #tpu.dot_dimension_numbers<[1], [0], [0], [1], [0, 0, 1, 1], [], []>} : vector<8x8xbf16>, vector<8x64xbf16>, vector<8x64xf32> -> vector<8x64xf32>
    %334 = tpu.concatenate %317, %333 in 1 : vector<8x64xf32>, vector<8x64xf32> -> vector<8x128xf32>
    %335 = arith.truncf %334 : vector<8x128xf32> to vector<8x128xbf16>
    %c8_94 = arith.constant 8 : index
    %c128_95 = arith.constant 128 : index
    %336 = vector.load %arg14[%c8_94, %c128_95] : memref<16x768xbf16, #tpu.memory_space<vmem>>, vector<8x128xbf16>
    tpu.vector_store %arg14[%c8_94, %c128_95], %335 {strides = array<i32>} : memref<16x768xbf16, #tpu.memory_space<vmem>>, vector<8x128xbf16>,
    %337 = vector.extract_strided_slice %258 {offsets = [0, 256], sizes = [8, 128], strides = [1, 1]} : vector<8x768xbf16> to vector<8x128xbf16>
    %338 = vector.extract_strided_slice %259 {offsets = [0, 256], sizes = [8, 128], strides = [1, 1]} : vector<8x768xbf16> to vector<8x128xbf16>
    %339 = vector.extract_strided_slice %260 {offsets = [0, 256], sizes = [8, 128], strides = [1, 1]} : vector<8x768xbf16> to vector<8x128xbf16>
    %340 = vector.extract_strided_slice %337 {offsets = [0, 0], sizes = [8, 64], strides = [1, 1]} : vector<8x128xbf16> to vector<8x64xbf16>
    %341 = vector.extract_strided_slice %338 {offsets = [0, 0], sizes = [8, 64], strides = [1, 1]} : vector<8x128xbf16> to vector<8x64xbf16>
    %342 = vector.extract_strided_slice %339 {offsets = [0, 0], sizes = [8, 64], strides = [1, 1]} : vector<8x128xbf16> to vector<8x64xbf16>
    %cst_96 = arith.constant dense<0.000000e+00> : vector<8x8xf32>
    %343 = tpu.matmul %340, %341, %cst_96 {dimension_numbers = #tpu.dot_dimension_numbers<[1], [1], [0], [0], [0, 0, 1, 0], [], []>} : vector<8x64xbf16>, vector<8x64xbf16>, vector<8x8xf32> -> vector<8x8xf32>
    %cst_97 = arith.constant dense<0xFF800000> : vector<8xf32>
    %344 = vector.multi_reduction <maximumf>, %343, %cst_97 [1] : vector<8x8xf32> to vector<8xf32>
    %345 = vector.shape_cast %344 : vector<8xf32> to vector<8x1xf32>
    %346 = vector.broadcast %345 : vector<8x1xf32> to vector<8x8xf32>
    %347 = arith.subf %343, %346 : vector<8x8xf32>
    %348 = math.exp %347 : vector<8x8xf32>
    %cst_98 = arith.constant dense<0.000000e+00> : vector<8xf32>
    %349 = vector.multi_reduction <add>, %348, %cst_98 [1] : vector<8x8xf32> to vector<8xf32>
    %350 = vector.shape_cast %349 : vector<8xf32> to vector<8x1xf32>
    %351 = tpu.reciprocal %350 {approx = true} : vector<8x1xf32> -> vector<8x1xf32>
    %352 = vector.broadcast %351 : vector<8x1xf32> to vector<8x8xf32>
    %353 = arith.mulf %348, %352 : vector<8x8xf32>
    %354 = arith.truncf %353 : vector<8x8xf32> to vector<8x8xbf16>
    %cst_99 = arith.constant dense<0.000000e+00> : vector<8x64xf32>
    %355 = tpu.matmul %354, %342, %cst_99 {dimension_numbers = #tpu.dot_dimension_numbers<[1], [0], [0], [1], [0, 0, 1, 1], [], []>} : vector<8x8xbf16>, vector<8x64xbf16>, vector<8x64xf32> -> vector<8x64xf32>
    %356 = vector.extract_strided_slice %337 {offsets = [0, 64], sizes = [8, 64], strides = [1, 1]} : vector<8x128xbf16> to vector<8x64xbf16>
    %357 = vector.extract_strided_slice %338 {offsets = [0, 64], sizes = [8, 64], strides = [1, 1]} : vector<8x128xbf16> to vector<8x64xbf16>
    %358 = vector.extract_strided_slice %339 {offsets = [0, 64], sizes = [8, 64], strides = [1, 1]} : vector<8x128xbf16> to vector<8x64xbf16>
    %cst_100 = arith.constant dense<0.000000e+00> : vector<8x8xf32>
    %359 = tpu.matmul %356, %357, %cst_100 {dimension_numbers = #tpu.dot_dimension_numbers<[1], [1], [0], [0], [0, 0, 1, 0], [], []>} : vector<8x64xbf16>, vector<8x64xbf16>, vector<8x8xf32> -> vector<8x8xf32>
    %cst_101 = arith.constant dense<0xFF800000> : vector<8xf32>
    %360 = vector.multi_reduction <maximumf>, %359, %cst_101 [1] : vector<8x8xf32> to vector<8xf32>
    %361 = vector.shape_cast %360 : vector<8xf32> to vector<8x1xf32>
    %362 = vector.broadcast %361 : vector<8x1xf32> to vector<8x8xf32>
    %363 = arith.subf %359, %362 : vector<8x8xf32>
    %364 = math.exp %363 : vector<8x8xf32>
    %cst_102 = arith.constant dense<0.000000e+00> : vector<8xf32>
    %365 = vector.multi_reduction <add>, %364, %cst_102 [1] : vector<8x8xf32> to vector<8xf32>
    %366 = vector.shape_cast %365 : vector<8xf32> to vector<8x1xf32>
    %367 = tpu.reciprocal %366 {approx = true} : vector<8x1xf32> -> vector<8x1xf32>
    %368 = vector.broadcast %367 : vector<8x1xf32> to vector<8x8xf32>
    %369 = arith.mulf %364, %368 : vector<8x8xf32>
    %370 = arith.truncf %369 : vector<8x8xf32> to vector<8x8xbf16>
    %cst_103 = arith.constant dense<0.000000e+00> : vector<8x64xf32>
    %371 = tpu.matmul %370, %358, %cst_103 {dimension_numbers = #tpu.dot_dimension_numbers<[1], [0], [0], [1], [0, 0, 1, 1], [], []>} : vector<8x8xbf16>, vector<8x64xbf16>, vector<8x64xf32> -> vector<8x64xf32>
    %372 = tpu.concatenate %355, %371 in 1 : vector<8x64xf32>, vector<8x64xf32> -> vector<8x128xf32>
    %373 = arith.truncf %372 : vector<8x128xf32> to vector<8x128xbf16>
    %c8_104 = arith.constant 8 : index
    %c256_105 = arith.constant 256 : index
    %374 = vector.load %arg14[%c8_104, %c256_105] : memref<16x768xbf16, #tpu.memory_space<vmem>>, vector<8x128xbf16>
    tpu.vector_store %arg14[%c8_104, %c256_105], %373 {strides = array<i32>} : memref<16x768xbf16, #tpu.memory_space<vmem>>, vector<8x128xbf16>,
    %375 = vector.extract_strided_slice %258 {offsets = [0, 384], sizes = [8, 128], strides = [1, 1]} : vector<8x768xbf16> to vector<8x128xbf16>
    %376 = vector.extract_strided_slice %259 {offsets = [0, 384], sizes = [8, 128], strides = [1, 1]} : vector<8x768xbf16> to vector<8x128xbf16>
    %377 = vector.extract_strided_slice %260 {offsets = [0, 384], sizes = [8, 128], strides = [1, 1]} : vector<8x768xbf16> to vector<8x128xbf16>
    %378 = vector.extract_strided_slice %375 {offsets = [0, 0], sizes = [8, 64], strides = [1, 1]} : vector<8x128xbf16> to vector<8x64xbf16>
    %379 = vector.extract_strided_slice %376 {offsets = [0, 0], sizes = [8, 64], strides = [1, 1]} : vector<8x128xbf16> to vector<8x64xbf16>
    %380 = vector.extract_strided_slice %377 {offsets = [0, 0], sizes = [8, 64], strides = [1, 1]} : vector<8x128xbf16> to vector<8x64xbf16>
    %cst_106 = arith.constant dense<0.000000e+00> : vector<8x8xf32>
    %381 = tpu.matmul %378, %379, %cst_106 {dimension_numbers = #tpu.dot_dimension_numbers<[1], [1], [0], [0], [0, 0, 1, 0], [], []>} : vector<8x64xbf16>, vector<8x64xbf16>, vector<8x8xf32> -> vector<8x8xf32>
    %cst_107 = arith.constant dense<0xFF800000> : vector<8xf32>
    %382 = vector.multi_reduction <maximumf>, %381, %cst_107 [1] : vector<8x8xf32> to vector<8xf32>
    %383 = vector.shape_cast %382 : vector<8xf32> to vector<8x1xf32>
    %384 = vector.broadcast %383 : vector<8x1xf32> to vector<8x8xf32>
    %385 = arith.subf %381, %384 : vector<8x8xf32>
    %386 = math.exp %385 : vector<8x8xf32>
    %cst_108 = arith.constant dense<0.000000e+00> : vector<8xf32>
    %387 = vector.multi_reduction <add>, %386, %cst_108 [1] : vector<8x8xf32> to vector<8xf32>
    %388 = vector.shape_cast %387 : vector<8xf32> to vector<8x1xf32>
    %389 = tpu.reciprocal %388 {approx = true} : vector<8x1xf32> -> vector<8x1xf32>
    %390 = vector.broadcast %389 : vector<8x1xf32> to vector<8x8xf32>
    %391 = arith.mulf %386, %390 : vector<8x8xf32>
    %392 = arith.truncf %391 : vector<8x8xf32> to vector<8x8xbf16>
    %cst_109 = arith.constant dense<0.000000e+00> : vector<8x64xf32>
    %393 = tpu.matmul %392, %380, %cst_109 {dimension_numbers = #tpu.dot_dimension_numbers<[1], [0], [0], [1], [0, 0, 1, 1], [], []>} : vector<8x8xbf16>, vector<8x64xbf16>, vector<8x64xf32> -> vector<8x64xf32>
    %394 = vector.extract_strided_slice %375 {offsets = [0, 64], sizes = [8, 64], strides = [1, 1]} : vector<8x128xbf16> to vector<8x64xbf16>
    %395 = vector.extract_strided_slice %376 {offsets = [0, 64], sizes = [8, 64], strides = [1, 1]} : vector<8x128xbf16> to vector<8x64xbf16>
    %396 = vector.extract_strided_slice %377 {offsets = [0, 64], sizes = [8, 64], strides = [1, 1]} : vector<8x128xbf16> to vector<8x64xbf16>
    %cst_110 = arith.constant dense<0.000000e+00> : vector<8x8xf32>
    %397 = tpu.matmul %394, %395, %cst_110 {dimension_numbers = #tpu.dot_dimension_numbers<[1], [1], [0], [0], [0, 0, 1, 0], [], []>} : vector<8x64xbf16>, vector<8x64xbf16>, vector<8x8xf32> -> vector<8x8xf32>
    %cst_111 = arith.constant dense<0xFF800000> : vector<8xf32>
    %398 = vector.multi_reduction <maximumf>, %397, %cst_111 [1] : vector<8x8xf32> to vector<8xf32>
    %399 = vector.shape_cast %398 : vector<8xf32> to vector<8x1xf32>
    %400 = vector.broadcast %399 : vector<8x1xf32> to vector<8x8xf32>
    %401 = arith.subf %397, %400 : vector<8x8xf32>
    %402 = math.exp %401 : vector<8x8xf32>
    %cst_112 = arith.constant dense<0.000000e+00> : vector<8xf32>
    %403 = vector.multi_reduction <add>, %402, %cst_112 [1] : vector<8x8xf32> to vector<8xf32>
    %404 = vector.shape_cast %403 : vector<8xf32> to vector<8x1xf32>
    %405 = tpu.reciprocal %404 {approx = true} : vector<8x1xf32> -> vector<8x1xf32>
    %406 = vector.broadcast %405 : vector<8x1xf32> to vector<8x8xf32>
    %407 = arith.mulf %402, %406 : vector<8x8xf32>
    %408 = arith.truncf %407 : vector<8x8xf32> to vector<8x8xbf16>
    %cst_113 = arith.constant dense<0.000000e+00> : vector<8x64xf32>
    %409 = tpu.matmul %408, %396, %cst_113 {dimension_numbers = #tpu.dot_dimension_numbers<[1], [0], [0], [1], [0, 0, 1, 1], [], []>} : vector<8x8xbf16>, vector<8x64xbf16>, vector<8x64xf32> -> vector<8x64xf32>
    %410 = tpu.concatenate %393, %409 in 1 : vector<8x64xf32>, vector<8x64xf32> -> vector<8x128xf32>
    %411 = arith.truncf %410 : vector<8x128xf32> to vector<8x128xbf16>
    %c8_114 = arith.constant 8 : index
    %c384_115 = arith.constant 384 : index
    %412 = vector.load %arg14[%c8_114, %c384_115] : memref<16x768xbf16, #tpu.memory_space<vmem>>, vector<8x128xbf16>
    tpu.vector_store %arg14[%c8_114, %c384_115], %411 {strides = array<i32>} : memref<16x768xbf16, #tpu.memory_space<vmem>>, vector<8x128xbf16>,
    %413 = vector.extract_strided_slice %258 {offsets = [0, 512], sizes = [8, 128], strides = [1, 1]} : vector<8x768xbf16> to vector<8x128xbf16>
    %414 = vector.extract_strided_slice %259 {offsets = [0, 512], sizes = [8, 128], strides = [1, 1]} : vector<8x768xbf16> to vector<8x128xbf16>
    %415 = vector.extract_strided_slice %260 {offsets = [0, 512], sizes = [8, 128], strides = [1, 1]} : vector<8x768xbf16> to vector<8x128xbf16>
    %416 = vector.extract_strided_slice %413 {offsets = [0, 0], sizes = [8, 64], strides = [1, 1]} : vector<8x128xbf16> to vector<8x64xbf16>
    %417 = vector.extract_strided_slice %414 {offsets = [0, 0], sizes = [8, 64], strides = [1, 1]} : vector<8x128xbf16> to vector<8x64xbf16>
    %418 = vector.extract_strided_slice %415 {offsets = [0, 0], sizes = [8, 64], strides = [1, 1]} : vector<8x128xbf16> to vector<8x64xbf16>
    %cst_116 = arith.constant dense<0.000000e+00> : vector<8x8xf32>
    %419 = tpu.matmul %416, %417, %cst_116 {dimension_numbers = #tpu.dot_dimension_numbers<[1], [1], [0], [0], [0, 0, 1, 0], [], []>} : vector<8x64xbf16>, vector<8x64xbf16>, vector<8x8xf32> -> vector<8x8xf32>
    %cst_117 = arith.constant dense<0xFF800000> : vector<8xf32>
    %420 = vector.multi_reduction <maximumf>, %419, %cst_117 [1] : vector<8x8xf32> to vector<8xf32>
    %421 = vector.shape_cast %420 : vector<8xf32> to vector<8x1xf32>
    %422 = vector.broadcast %421 : vector<8x1xf32> to vector<8x8xf32>
    %423 = arith.subf %419, %422 : vector<8x8xf32>
    %424 = math.exp %423 : vector<8x8xf32>
    %cst_118 = arith.constant dense<0.000000e+00> : vector<8xf32>
    %425 = vector.multi_reduction <add>, %424, %cst_118 [1] : vector<8x8xf32> to vector<8xf32>
    %426 = vector.shape_cast %425 : vector<8xf32> to vector<8x1xf32>
    %427 = tpu.reciprocal %426 {approx = true} : vector<8x1xf32> -> vector<8x1xf32>
    %428 = vector.broadcast %427 : vector<8x1xf32> to vector<8x8xf32>
    %429 = arith.mulf %424, %428 : vector<8x8xf32>
    %430 = arith.truncf %429 : vector<8x8xf32> to vector<8x8xbf16>
    %cst_119 = arith.constant dense<0.000000e+00> : vector<8x64xf32>
    %431 = tpu.matmul %430, %418, %cst_119 {dimension_numbers = #tpu.dot_dimension_numbers<[1], [0], [0], [1], [0, 0, 1, 1], [], []>} : vector<8x8xbf16>, vector<8x64xbf16>, vector<8x64xf32> -> vector<8x64xf32>
    %432 = vector.extract_strided_slice %413 {offsets = [0, 64], sizes = [8, 64], strides = [1, 1]} : vector<8x128xbf16> to vector<8x64xbf16>
    %433 = vector.extract_strided_slice %414 {offsets = [0, 64], sizes = [8, 64], strides = [1, 1]} : vector<8x128xbf16> to vector<8x64xbf16>
    %434 = vector.extract_strided_slice %415 {offsets = [0, 64], sizes = [8, 64], strides = [1, 1]} : vector<8x128xbf16> to vector<8x64xbf16>
    %cst_120 = arith.constant dense<0.000000e+00> : vector<8x8xf32>
    %435 = tpu.matmul %432, %433, %cst_120 {dimension_numbers = #tpu.dot_dimension_numbers<[1], [1], [0], [0], [0, 0, 1, 0], [], []>} : vector<8x64xbf16>, vector<8x64xbf16>, vector<8x8xf32> -> vector<8x8xf32>
    %cst_121 = arith.constant dense<0xFF800000> : vector<8xf32>
    %436 = vector.multi_reduction <maximumf>, %435, %cst_121 [1] : vector<8x8xf32> to vector<8xf32>
    %437 = vector.shape_cast %436 : vector<8xf32> to vector<8x1xf32>
    %438 = vector.broadcast %437 : vector<8x1xf32> to vector<8x8xf32>
    %439 = arith.subf %435, %438 : vector<8x8xf32>
    %440 = math.exp %439 : vector<8x8xf32>
    %cst_122 = arith.constant dense<0.000000e+00> : vector<8xf32>
    %441 = vector.multi_reduction <add>, %440, %cst_122 [1] : vector<8x8xf32> to vector<8xf32>
    %442 = vector.shape_cast %441 : vector<8xf32> to vector<8x1xf32>
    %443 = tpu.reciprocal %442 {approx = true} : vector<8x1xf32> -> vector<8x1xf32>
    %444 = vector.broadcast %443 : vector<8x1xf32> to vector<8x8xf32>
    %445 = arith.mulf %440, %444 : vector<8x8xf32>
    %446 = arith.truncf %445 : vector<8x8xf32> to vector<8x8xbf16>
    %cst_123 = arith.constant dense<0.000000e+00> : vector<8x64xf32>
    %447 = tpu.matmul %446, %434, %cst_123 {dimension_numbers = #tpu.dot_dimension_numbers<[1], [0], [0], [1], [0, 0, 1, 1], [], []>} : vector<8x8xbf16>, vector<8x64xbf16>, vector<8x64xf32> -> vector<8x64xf32>
    %448 = tpu.concatenate %431, %447 in 1 : vector<8x64xf32>, vector<8x64xf32> -> vector<8x128xf32>
    %449 = arith.truncf %448 : vector<8x128xf32> to vector<8x128xbf16>
    %c8_124 = arith.constant 8 : index
    %c512_125 = arith.constant 512 : index
    %450 = vector.load %arg14[%c8_124, %c512_125] : memref<16x768xbf16, #tpu.memory_space<vmem>>, vector<8x128xbf16>
    tpu.vector_store %arg14[%c8_124, %c512_125], %449 {strides = array<i32>} : memref<16x768xbf16, #tpu.memory_space<vmem>>, vector<8x128xbf16>,
    %451 = vector.extract_strided_slice %258 {offsets = [0, 640], sizes = [8, 128], strides = [1, 1]} : vector<8x768xbf16> to vector<8x128xbf16>
    %452 = vector.extract_strided_slice %259 {offsets = [0, 640], sizes = [8, 128], strides = [1, 1]} : vector<8x768xbf16> to vector<8x128xbf16>
    %453 = vector.extract_strided_slice %260 {offsets = [0, 640], sizes = [8, 128], strides = [1, 1]} : vector<8x768xbf16> to vector<8x128xbf16>
    %454 = vector.extract_strided_slice %451 {offsets = [0, 0], sizes = [8, 64], strides = [1, 1]} : vector<8x128xbf16> to vector<8x64xbf16>
    %455 = vector.extract_strided_slice %452 {offsets = [0, 0], sizes = [8, 64], strides = [1, 1]} : vector<8x128xbf16> to vector<8x64xbf16>
    %456 = vector.extract_strided_slice %453 {offsets = [0, 0], sizes = [8, 64], strides = [1, 1]} : vector<8x128xbf16> to vector<8x64xbf16>
    %cst_126 = arith.constant dense<0.000000e+00> : vector<8x8xf32>
    %457 = tpu.matmul %454, %455, %cst_126 {dimension_numbers = #tpu.dot_dimension_numbers<[1], [1], [0], [0], [0, 0, 1, 0], [], []>} : vector<8x64xbf16>, vector<8x64xbf16>, vector<8x8xf32> -> vector<8x8xf32>
    %cst_127 = arith.constant dense<0xFF800000> : vector<8xf32>
    %458 = vector.multi_reduction <maximumf>, %457, %cst_127 [1] : vector<8x8xf32> to vector<8xf32>
    %459 = vector.shape_cast %458 : vector<8xf32> to vector<8x1xf32>
    %460 = vector.broadcast %459 : vector<8x1xf32> to vector<8x8xf32>
    %461 = arith.subf %457, %460 : vector<8x8xf32>
    %462 = math.exp %461 : vector<8x8xf32>
    %cst_128 = arith.constant dense<0.000000e+00> : vector<8xf32>
    %463 = vector.multi_reduction <add>, %462, %cst_128 [1] : vector<8x8xf32> to vector<8xf32>
    %464 = vector.shape_cast %463 : vector<8xf32> to vector<8x1xf32>
    %465 = tpu.reciprocal %464 {approx = true} : vector<8x1xf32> -> vector<8x1xf32>
    %466 = vector.broadcast %465 : vector<8x1xf32> to vector<8x8xf32>
    %467 = arith.mulf %462, %466 : vector<8x8xf32>
    %468 = arith.truncf %467 : vector<8x8xf32> to vector<8x8xbf16>
    %cst_129 = arith.constant dense<0.000000e+00> : vector<8x64xf32>
    %469 = tpu.matmul %468, %456, %cst_129 {dimension_numbers = #tpu.dot_dimension_numbers<[1], [0], [0], [1], [0, 0, 1, 1], [], []>} : vector<8x8xbf16>, vector<8x64xbf16>, vector<8x64xf32> -> vector<8x64xf32>
    %470 = vector.extract_strided_slice %451 {offsets = [0, 64], sizes = [8, 64], strides = [1, 1]} : vector<8x128xbf16> to vector<8x64xbf16>
    %471 = vector.extract_strided_slice %452 {offsets = [0, 64], sizes = [8, 64], strides = [1, 1]} : vector<8x128xbf16> to vector<8x64xbf16>
    %472 = vector.extract_strided_slice %453 {offsets = [0, 64], sizes = [8, 64], strides = [1, 1]} : vector<8x128xbf16> to vector<8x64xbf16>
    %cst_130 = arith.constant dense<0.000000e+00> : vector<8x8xf32>
    %473 = tpu.matmul %470, %471, %cst_130 {dimension_numbers = #tpu.dot_dimension_numbers<[1], [1], [0], [0], [0, 0, 1, 0], [], []>} : vector<8x64xbf16>, vector<8x64xbf16>, vector<8x8xf32> -> vector<8x8xf32>
    %cst_131 = arith.constant dense<0xFF800000> : vector<8xf32>
    %474 = vector.multi_reduction <maximumf>, %473, %cst_131 [1] : vector<8x8xf32> to vector<8xf32>
    %475 = vector.shape_cast %474 : vector<8xf32> to vector<8x1xf32>
    %476 = vector.broadcast %475 : vector<8x1xf32> to vector<8x8xf32>
    %477 = arith.subf %473, %476 : vector<8x8xf32>
    %478 = math.exp %477 : vector<8x8xf32>
    %cst_132 = arith.constant dense<0.000000e+00> : vector<8xf32>
    %479 = vector.multi_reduction <add>, %478, %cst_132 [1] : vector<8x8xf32> to vector<8xf32>
    %480 = vector.shape_cast %479 : vector<8xf32> to vector<8x1xf32>
    %481 = tpu.reciprocal %480 {approx = true} : vector<8x1xf32> -> vector<8x1xf32>
    %482 = vector.broadcast %481 : vector<8x1xf32> to vector<8x8xf32>
    %483 = arith.mulf %478, %482 : vector<8x8xf32>
    %484 = arith.truncf %483 : vector<8x8xf32> to vector<8x8xbf16>
    %cst_133 = arith.constant dense<0.000000e+00> : vector<8x64xf32>
    %485 = tpu.matmul %484, %472, %cst_133 {dimension_numbers = #tpu.dot_dimension_numbers<[1], [0], [0], [1], [0, 0, 1, 1], [], []>} : vector<8x8xbf16>, vector<8x64xbf16>, vector<8x64xf32> -> vector<8x64xf32>
    %486 = tpu.concatenate %469, %485 in 1 : vector<8x64xf32>, vector<8x64xf32> -> vector<8x128xf32>
    %487 = arith.truncf %486 : vector<8x128xf32> to vector<8x128xbf16>
    %c8_134 = arith.constant 8 : index
    %c640_135 = arith.constant 640 : index
    %488 = vector.load %arg14[%c8_134, %c640_135] : memref<16x768xbf16, #tpu.memory_space<vmem>>, vector<8x128xbf16>
    tpu.vector_store %arg14[%c8_134, %c640_135], %487 {strides = array<i32>} : memref<16x768xbf16, #tpu.memory_space<vmem>>, vector<8x128xbf16>,
    %c0_136 = arith.constant 0 : index
    %c0_137 = arith.constant 0 : index
    %489 = vector.load %arg14[%c0_136, %c0_137] : memref<16x768xbf16, #tpu.memory_space<vmem>>, vector<16x768xbf16>
    %c0_138 = arith.constant 0 : index
    %c0_139 = arith.constant 0 : index
    %490 = vector.load %arg11[%c0_138, %c0_139] : memref<768x768xbf16, #tpu.memory_space<vmem>>, vector<768x768xbf16>
    %cst_140 = arith.constant dense<0.000000e+00> : vector<16x768xf32>
    %491 = tpu.matmul %489, %490, %cst_140 {dimension_numbers = #tpu.dot_dimension_numbers<[1], [0], [0], [1], [0, 0, 1, 1], [], []>} : vector<16x768xbf16>, vector<768x768xbf16>, vector<16x768xf32> -> vector<16x768xf32>
    %c0_141 = arith.constant 0 : index
    %c0_142 = arith.constant 0 : index
    %492 = vector.load %arg12[%c0_141, %c0_142] : memref<1x768xf32, #tpu.memory_space<vmem>>, vector<1x768xf32>
    %493 = vector.broadcast %492 : vector<1x768xf32> to vector<16x768xf32>
    %494 = arith.addf %491, %493 : vector<16x768xf32>
    %495 = vector.shape_cast %494 : vector<16x768xf32> to vector<2x8x768xf32>
    %c0_143 = arith.constant 0 : index
    %c0_144 = arith.constant 0 : index
    %c0_145 = arith.constant 0 : index
    %496 = vector.load %arg13[%c0_143, %c0_144, %c0_145] : memref<2x8x768xf32, #tpu.memory_space<vmem>>, vector<2x8x768xf32>
    tpu.vector_store %arg13[%c0_143, %c0_144, %c0_145], %495 {strides = array<i32>} : memref<2x8x768xf32, #tpu.memory_space<vmem>>, vector<2x8x768xf32>,
    return
  }
  func.func @transform_0(%arg0: i32, %arg1: i32) -> (i32, i32, i32) {
    %c0_i32 = arith.constant 0 : i32
    %c0_i32_0 = arith.constant 0 : i32
    return %arg0, %arg1, %c0_i32 : i32, i32, i32
  }
  func.func @transform_1(%arg0: i32, %arg1: i32) -> (i32, i32, i32) {
    %c0_i32 = arith.constant 0 : i32
    %c0_i32_0 = arith.constant 0 : i32
    %c0_i32_1 = arith.constant 0 : i32
    return %arg0, %c0_i32, %c0_i32_0 : i32, i32, i32
  }
  func.func @transform_2(%arg0: i32, %arg1: i32) -> (i32, i32, i32) {
    %c0_i32 = arith.constant 0 : i32
    %c0_i32_0 = arith.constant 0 : i32
    %c0_i32_1 = arith.constant 0 : i32
    return %arg0, %c0_i32, %c0_i32_0 : i32, i32, i32
  }
  func.func @transform_3(%arg0: i32, %arg1: i32) -> (i32, i32) {
    %c0_i32 = arith.constant 0 : i32
    %c0_i32_0 = arith.constant 0 : i32
    %c0_i32_1 = arith.constant 0 : i32
    return %c0_i32, %c0_i32_0 : i32, i32
  }
  func.func @transform_4(%arg0: i32, %arg1: i32) -> (i32, i32) {
    %c0_i32 = arith.constant 0 : i32
    %c0_i32_0 = arith.constant 0 : i32
    %c0_i32_1 = arith.constant 0 : i32
    return %c0_i32, %c0_i32_0 : i32, i32
  }
  func.func @transform_5(%arg0: i32, %arg1: i32) -> (i32, i32) {
    %c0_i32 = arith.constant 0 : i32
    %c0_i32_0 = arith.constant 0 : i32
    %c0_i32_1 = arith.constant 0 : i32
    return %c0_i32, %c0_i32_0 : i32, i32
  }
  func.func @transform_6(%arg0: i32, %arg1: i32) -> (i32, i32) {
    %c0_i32 = arith.constant 0 : i32
    %c0_i32_0 = arith.constant 0 : i32
    %c0_i32_1 = arith.constant 0 : i32
    return %c0_i32, %c0_i32_0 : i32, i32
  }
  func.func @transform_7(%arg0: i32, %arg1: i32) -> (i32, i32) {
    %c0_i32 = arith.constant 0 : i32
    %c0_i32_0 = arith.constant 0 : i32
    %c0_i32_1 = arith.constant 0 : i32
    return %c0_i32, %c0_i32_0 : i32, i32
  }
  func.func @transform_8(%arg0: i32, %arg1: i32) -> (i32, i32) {
    %c0_i32 = arith.constant 0 : i32
    %c0_i32_0 = arith.constant 0 : i32
    %c0_i32_1 = arith.constant 0 : i32
    return %c0_i32, %c0_i32_0 : i32, i32
  }
  func.func @transform_9(%arg0: i32, %arg1: i32) -> (i32, i32) {
    %c0_i32 = arith.constant 0 : i32
    %c0_i32_0 = arith.constant 0 : i32
    %c0_i32_1 = arith.constant 0 : i32
    return %c0_i32, %c0_i32_0 : i32, i32
  }
  func.func @transform_10(%arg0: i32, %arg1: i32) -> (i32, i32) {
    %c0_i32 = arith.constant 0 : i32
    %c0_i32_0 = arith.constant 0 : i32
    %c0_i32_1 = arith.constant 0 : i32
    return %c0_i32, %c0_i32_0 : i32, i32
  }
  func.func @transform_11(%arg0: i32, %arg1: i32) -> (i32, i32, i32) {
    %c0_i32 = arith.constant 0 : i32
    %c0_i32_0 = arith.constant 0 : i32
    return %arg0, %arg1, %c0_i32 : i32, i32, i32
  }
}

</mosaic_0001>

<llo_original>
// kernel: tpu_custom_call.1
$region0: #{tpu_custom_call.1}
  #allocation0 [shape = 'u32[]', space=smem, size = 0x4, offset = 0x4, fixed_abs, tag = 'smem constant byte address 0x4 - core index']
  #allocation1 [shape = 'u32[72,128]{1,0:T(1,128)}', space=vmem, size = 0x9000, scoped, tag = 'internal scratch']
  #allocation2 [shape = 'bf16[16,768]{1,0:T(8,128)(2,1)}', space=vmem, size = 0x6000, scoped, tag = 'scratch operand']
  %s0 = inlined_call_operand.hbm [shape: f32[2,8,768], index: 0, kind: input, shape index: {}]
  %s1 = inlined_call_operand.hbm [shape: f32[2,8,768], index: 1, kind: input, shape index: {}]
  %s2 = inlined_call_operand.hbm [shape: f32[2,8,768], index: 2, kind: input, shape index: {}]
  %s3 = inlined_call_operand.hbm [shape: bf16[768,768], index: 3, kind: input, shape index: {}]
  %s4 = inlined_call_operand.hbm [shape: f32[1,768], index: 4, kind: input, shape index: {}]
  %s5 = inlined_call_operand.hbm [shape: bf16[768,768], index: 5, kind: input, shape index: {}]
  %s6 = inlined_call_operand.hbm [shape: f32[1,768], index: 6, kind: input, shape index: {}]
  %s7 = inlined_call_operand.hbm [shape: bf16[768,768], index: 7, kind: input, shape index: {}]
  %s8 = inlined_call_operand.hbm [shape: f32[1,768], index: 8, kind: input, shape index: {}]
  %s9 = inlined_call_operand.hbm [shape: bf16[768,768], index: 9, kind: input, shape index: {}]
  %s10 = inlined_call_operand.hbm [shape: f32[1,768], index: 10, kind: input, shape index: {}]
  %s11 = inlined_call_operand.hbm [shape: f32[2,8,768], index: 11, kind: output, shape index: {}]
  %s12 = sld [smem:[#allocation0]]
  $region98: #{tpu_custom_call.1} parent=0
    _
  %s14 = ssub.s32 1, %s12
  %s15 = scalar_select 0, %s14, %s12
  $region1: #{tpu_custom_call.1} parent=0
    #allocation3 [shape = 'u8[49152]{0}', space=vmem, size = 0xc000, scoped, tag = 'input window, operand 0, single buffered']
    #allocation4 [shape = 's32[1]{0}', space=sflag, size = 0x4, scoped, tag = 'scoped memory for tpu_custom_call.1']
    #allocation5 [shape = 's32[1]{0}', space=sflag, size = 0x4, scoped, tag = 'scoped memory for tpu_custom_call.1']
    #allocation6 [shape = 'u8[49152]{0}', space=vmem, size = 0xc000, scoped, tag = 'input window, operand 1, single buffered']
    #allocation7 [shape = 's32[1]{0}', space=sflag, size = 0x4, scoped, tag = 'scoped memory for tpu_custom_call.1']
    #allocation8 [shape = 'u8[49152]{0}', space=vmem, size = 0xc000, scoped, tag = 'input window, operand 2, single buffered']
    #allocation9 [shape = 'u8[1179648]{0}', space=vmem, size = 0x120000, scoped, tag = 'input window, operand 3, single buffered']
    #allocation10 [shape = 's32[1]{0}', space=sflag, size = 0x4, scoped, tag = 'scoped memory for tpu_custom_call.1']
    #allocation11 [shape = 'u8[3072]{0}', space=vmem, size = 0xc00, scoped, tag = 'input window, operand 4, single buffered']
    #allocation12 [shape = 'u8[1179648]{0}', space=vmem, size = 0x120000, scoped, tag = 'input window, operand 5, single buffered']
    #allocation13 [shape = 's32[1]{0}', space=sflag, size = 0x4, scoped, tag = 'scoped memory for tpu_custom_call.1']
    #allocation14 [shape = 'u8[3072]{0}', space=vmem, size = 0xc00, scoped, tag = 'input window, operand 6, single buffered']
    #allocation15 [shape = 'u8[1179648]{0}', space=vmem, size = 0x120000, scoped, tag = 'input window, operand 7, single buffered']
    #allocation16 [shape = 's32[1]{0}', space=sflag, size = 0x4, scoped, tag = 'scoped memory for tpu_custom_call.1']
    #allocation17 [shape = 'u8[3072]{0}', space=vmem, size = 0xc00, scoped, tag = 'input window, operand 8, single buffered']
    #allocation18 [shape = 'u8[1179648]{0}', space=vmem, size = 0x120000, scoped, tag = 'input window, operand 9, single buffered']
    #allocation19 [shape = 's32[1]{0}', space=sflag, size = 0x4, scoped, tag = 'scoped memory for tpu_custom_call.1']
    #allocation20 [shape = 'u8[3072]{0}', space=vmem, size = 0xc00, scoped, tag = 'input window, operand 10, single buffered']
    #allocation21 [shape = 'u8[49152]{0}', space=vmem, size = 0xc000, scoped, tag = 'output window, operand 0, single buffered']
    %16 = vsyncpa [#allocation4], 0
    %17 = vsyncpa [#allocation7], 0
    %18 = vsyncpa [#allocation10], 0
    %19 = vsyncpa [#allocation13], 0
    %20 = vsyncpa [#allocation16], 0
    %21 = vsyncpa [#allocation19], 0
    %22 = vsyncpa [#allocation5], 0
    // Predicated region
    $region2: #{tpu_custom_call.1} parent=1 // pred_check
      _
    $region3: #{tpu_custom_call.1} parent=1 // pred_check_branch
      %24 = sbr.rel (0) target = $region5
    $region4: #{tpu_custom_call.1} parent=1 // pred_region
      %26 = vsyncadd [#allocation4], 0
      %s27 = sshll.u32 %s0, 4
      %s28 = int_to_ptr.hbm [resolvable:$true] %s27
      %s29 = sshll.u32 [#allocation3], 4
      %s30 = int_to_ptr.vmem [resolvable:$true] %s29
      %35 = dma.hbm_to_vmem [thread:$0]  %s28, 1536, %s30, [#allocation4], 768, 768, 48
    $region5: #{tpu_custom_call.1} parent=1 // pred_fallthru
      _
    // Predicated region
    $region6: #{tpu_custom_call.1} parent=1 // pred_check
      _
    $region7: #{tpu_custom_call.1} parent=1 // pred_check_branch
      %37 = sbr.rel (0) target = $region9
    $region8: #{tpu_custom_call.1} parent=1 // pred_region
      %39 = vsyncadd [#allocation7], 0
      %s40 = sshll.u32 %s1, 4
      %s41 = int_to_ptr.hbm [resolvable:$true] %s40
      %s42 = sshll.u32 [#allocation6], 4
      %s43 = int_to_ptr.vmem [resolvable:$true] %s42
      %48 = dma.hbm_to_vmem [thread:$0]  %s41, 1536, %s43, [#allocation7], 768, 768, 48
    $region9: #{tpu_custom_call.1} parent=1 // pred_fallthru
      _
    // Predicated region
    $region10: #{tpu_custom_call.1} parent=1 // pred_check
      _
    $region11: #{tpu_custom_call.1} parent=1 // pred_check_branch
      %50 = sbr.rel (0) target = $region13
    $region12: #{tpu_custom_call.1} parent=1 // pred_region
      %52 = vsyncadd [#allocation7], 0
      %s53 = sshll.u32 %s2, 4
      %s54 = int_to_ptr.hbm [resolvable:$true] %s53
      %s55 = sshll.u32 [#allocation8], 4
      %s56 = int_to_ptr.vmem [resolvable:$true] %s55
      %61 = dma.hbm_to_vmem [thread:$0]  %s54, 1536, %s56, [#allocation7], 768, 768, 48
    $region13: #{tpu_custom_call.1} parent=1 // pred_fallthru
      _
    // Predicated region
    $region14: #{tpu_custom_call.1} parent=1 // pred_check
      _
    $region15: #{tpu_custom_call.1} parent=1 // pred_check_branch
      %63 = sbr.rel (0) target = $region17
    $region16: #{tpu_custom_call.1} parent=1 // pred_region
      %65 = vsyncadd [#allocation10], 0
      %s66 = sshll.u32 %s3, 4
      %s67 = int_to_ptr.hbm [resolvable:$true] %s66
      %s68 = sshll.u32 [#allocation9], 4
      %s69 = int_to_ptr.vmem [resolvable:$true] %s68
      %74 = dma.hbm_to_vmem [thread:$0]  %s67, 36864, %s69, [#allocation10], 384, 384, 24
    $region17: #{tpu_custom_call.1} parent=1 // pred_fallthru
      _
    // Predicated region
    $region18: #{tpu_custom_call.1} parent=1 // pred_check
      _
    $region19: #{tpu_custom_call.1} parent=1 // pred_check_branch
      %76 = sbr.rel (0) target = $region21
    $region20: #{tpu_custom_call.1} parent=1 // pred_region
      %78 = vsyncadd [#allocation10], 0
      %s80 = sshll.u32 %s4, 4
      %s81 = int_to_ptr.hbm [resolvable:$true] %s80
      %s82 = sshll.u32 [#allocation11], 4
      %s83 = int_to_ptr.vmem [resolvable:$true] %s82
      %85 = dma.hbm_to_vmem [thread:$0]  %s81, 96, %s83, [#allocation10]
    $region21: #{tpu_custom_call.1} parent=1 // pred_fallthru
      _
    // Predicated region
    $region22: #{tpu_custom_call.1} parent=1 // pred_check
      _
    $region23: #{tpu_custom_call.1} parent=1 // pred_check_branch
      %87 = sbr.rel (0) target = $region25
    $region24: #{tpu_custom_call.1} parent=1 // pred_region
      %89 = vsyncadd [#allocation13], 0
      %s90 = sshll.u32 %s5, 4
      %s91 = int_to_ptr.hbm [resolvable:$true] %s90
      %s92 = sshll.u32 [#allocation12], 4
      %s93 = int_to_ptr.vmem [resolvable:$true] %s92
      %98 = dma.hbm_to_vmem [thread:$0]  %s91, 36864, %s93, [#allocation13], 384, 384, 24
    $region25: #{tpu_custom_call.1} parent=1 // pred_fallthru
      _
    // Predicated region
    $region26: #{tpu_custom_call.1} parent=1 // pred_check
      _
    $region27: #{tpu_custom_call.1} parent=1 // pred_check_branch
      %100 = sbr.rel (0) target = $region29
    $region28: #{tpu_custom_call.1} parent=1 // pred_region
      %102 = vsyncadd [#allocation13], 0
      %s104 = sshll.u32 %s6, 4
      %s105 = int_to_ptr.hbm [resolvable:$true] %s104
      %s106 = sshll.u32 [#allocation14], 4
      %s107 = int_to_ptr.vmem [resolvable:$true] %s106
      %109 = dma.hbm_to_vmem [thread:$0]  %s105, 96, %s107, [#allocation13]
    $region29: #{tpu_custom_call.1} parent=1 // pred_fallthru
      _
    // Predicated region
    $region30: #{tpu_custom_call.1} parent=1 // pred_check
      _
    $region31: #{tpu_custom_call.1} parent=1 // pred_check_branch
      %111 = sbr.rel (0) target = $region33
    $region32: #{tpu_custom_call.1} parent=1 // pred_region
      %113 = vsyncadd [#allocation16], 0
      %s114 = sshll.u32 %s7, 4
      %s115 = int_to_ptr.hbm [resolvable:$true] %s114
      %s116 = sshll.u32 [#allocation15], 4
      %s117 = int_to_ptr.vmem [resolvable:$true] %s116
      %122 = dma.hbm_to_vmem [thread:$0]  %s115, 36864, %s117, [#allocation16], 384, 384, 24
    $region33: #{tpu_custom_call.1} parent=1 // pred_fallthru
      _
    // Predicated region
    $region34: #{tpu_custom_call.1} parent=1 // pred_check
      _
    $region35: #{tpu_custom_call.1} parent=1 // pred_check_branch
      %124 = sbr.rel (0) target = $region37
    $region36: #{tpu_custom_call.1} parent=1 // pred_region
      %126 = vsyncadd [#allocation16], 0
      %s128 = sshll.u32 %s8, 4
      %s129 = int_to_ptr.hbm [resolvable:$true] %s128
      %s130 = sshll.u32 [#allocation17], 4
      %s131 = int_to_ptr.vmem [resolvable:$true] %s130
      %133 = dma.hbm_to_vmem [thread:$0]  %s129, 96, %s131, [#allocation16]
    $region37: #{tpu_custom_call.1} parent=1 // pred_fallthru
      _
    // Predicated region
    $region38: #{tpu_custom_call.1} parent=1 // pred_check
      _
    $region39: #{tpu_custom_call.1} parent=1 // pred_check_branch
      %135 = sbr.rel (0) target = $region41
    $region40: #{tpu_custom_call.1} parent=1 // pred_region
      %137 = vsyncadd [#allocation19], 0
      %s138 = sshll.u32 %s9, 4
      %s139 = int_to_ptr.hbm [resolvable:$true] %s138
      %s140 = sshll.u32 [#allocation18], 4
      %s141 = int_to_ptr.vmem [resolvable:$true] %s140
      %146 = dma.hbm_to_vmem [thread:$0]  %s139, 36864, %s141, [#allocation19], 384, 384, 24
    $region41: #{tpu_custom_call.1} parent=1 // pred_fallthru
      _
    // Predicated region
    $region42: #{tpu_custom_call.1} parent=1 // pred_check
      _
    $region43: #{tpu_custom_call.1} parent=1 // pred_check_branch
      %148 = sbr.rel (0) target = $region45
    $region44: #{tpu_custom_call.1} parent=1 // pred_region
      %150 = vsyncadd [#allocation19], 0
      %s152 = sshll.u32 %s10, 4
      %s153 = int_to_ptr.hbm [resolvable:$true] %s152
      %s154 = sshll.u32 [#allocation20], 4
      %s155 = int_to_ptr.vmem [resolvable:$true] %s154
      %157 = dma.hbm_to_vmem [thread:$0]  %s153, 96, %s155, [#allocation19]
    $region45: #{tpu_custom_call.1} parent=1 // pred_fallthru
      _
    // Predicated region
    $region46: #{tpu_custom_call.1} parent=1 // pred_check
      _
    $region47: #{tpu_custom_call.1} parent=1 // pred_check_branch
      %159 = sbr.rel (0) target = $region49
    $region48: #{tpu_custom_call.1} parent=1 // pred_region
      %161 = dma.done [#allocation4], 1536
    $region49: #{tpu_custom_call.1} parent=1 // pred_fallthru
      _
    // Predicated region
    $region50: #{tpu_custom_call.1} parent=1 // pred_check
      _
    $region51: #{tpu_custom_call.1} parent=1 // pred_check_branch
      %163 = sbr.rel (0) target = $region53
    $region52: #{tpu_custom_call.1} parent=1 // pred_region
      %165 = dma.done [#allocation7], 1536
    $region53: #{tpu_custom_call.1} parent=1 // pred_fallthru
      _
    // Predicated region
    $region54: #{tpu_custom_call.1} parent=1 // pred_check
      _
    $region55: #{tpu_custom_call.1} parent=1 // pred_check_branch
      %167 = sbr.rel (0) target = $region57
    $region56: #{tpu_custom_call.1} parent=1 // pred_region
      %169 = dma.done [#allocation7], 1536
    $region57: #{tpu_custom_call.1} parent=1 // pred_fallthru
      _
    // Predicated region
    $region58: #{tpu_custom_call.1} parent=1 // pred_check
      _
    $region59: #{tpu_custom_call.1} parent=1 // pred_check_branch
      %171 = sbr.rel (0) target = $region61
    $region60: #{tpu_custom_call.1} parent=1 // pred_region
      %173 = dma.done [#allocation10], 36864
    $region61: #{tpu_custom_call.1} parent=1 // pred_fallthru
      _
    // Predicated region
    $region62: #{tpu_custom_call.1} parent=1 // pred_check
      _
    $region63: #{tpu_custom_call.1} parent=1 // pred_check_branch
      %175 = sbr.rel (0) target = $region65
    $region64: #{tpu_custom_call.1} parent=1 // pred_region
      %177 = dma.done [#allocation10], 96
    $region65: #{tpu_custom_call.1} parent=1 // pred_fallthru
      _
    // Predicated region
    $region66: #{tpu_custom_call.1} parent=1 // pred_check
      _
    $region67: #{tpu_custom_call.1} parent=1 // pred_check_branch
      %179 = sbr.rel (0) target = $region69
    $region68: #{tpu_custom_call.1} parent=1 // pred_region
      %181 = dma.done [#allocation13], 36864
    $region69: #{tpu_custom_call.1} parent=1 // pred_fallthru
      _
    // Predicated region
    $region70: #{tpu_custom_call.1} parent=1 // pred_check
      _
    $region71: #{tpu_custom_call.1} parent=1 // pred_check_branch
      %183 = sbr.rel (0) target = $region73
    $region72: #{tpu_custom_call.1} parent=1 // pred_region
      %185 = dma.done [#allocation13], 96
    $region73: #{tpu_custom_call.1} parent=1 // pred_fallthru
      _
    // Predicated region
    $region74: #{tpu_custom_call.1} parent=1 // pred_check
      _
    $region75: #{tpu_custom_call.1} parent=1 // pred_check_branch
      %187 = sbr.rel (0) target = $region77
    $region76: #{tpu_custom_call.1} parent=1 // pred_region
      %189 = dma.done [#allocation16], 36864
    $region77: #{tpu_custom_call.1} parent=1 // pred_fallthru
      _
    // Predicated region
    $region78: #{tpu_custom_call.1} parent=1 // pred_check
      _
    $region79: #{tpu_custom_call.1} parent=1 // pred_check_branch
      %191 = sbr.rel (0) target = $region81
    $region80: #{tpu_custom_call.1} parent=1 // pred_region
      %193 = dma.done [#allocation16], 96
    $region81: #{tpu_custom_call.1} parent=1 // pred_fallthru
      _
    // Predicated region
    $region82: #{tpu_custom_call.1} parent=1 // pred_check
      _
    $region83: #{tpu_custom_call.1} parent=1 // pred_check_branch
      %195 = sbr.rel (0) target = $region85
    $region84: #{tpu_custom_call.1} parent=1 // pred_region
      %197 = dma.done [#allocation19], 36864
    $region85: #{tpu_custom_call.1} parent=1 // pred_fallthru
      _
    // Predicated region
    $region86: #{tpu_custom_call.1} parent=1 // pred_check
      _
    $region87: #{tpu_custom_call.1} parent=1 // pred_check_branch
      %199 = sbr.rel (0) target = $region89
    $region88: #{tpu_custom_call.1} parent=1 // pred_region
      %201 = dma.done [#allocation19], 96
    $region89: #{tpu_custom_call.1} parent=1 // pred_fallthru
      _
    %v203 = vld [vmem:[#allocation3] sm:$0xff]
    %v204 = vld [vmem:[#allocation3 + $0x8] sm:$0xff]
    %v205 = vld [vmem:[#allocation3 + $0x10] sm:$0xff]
    %v206 = vld [vmem:[#allocation3 + $0x18] sm:$0xff]
    %v207 = vld [vmem:[#allocation3 + $0x20] sm:$0xff]
    %v208 = vld [vmem:[#allocation3 + $0x28] sm:$0xff]
    %v209 = vld [vmem:[#allocation3 + $0x30] sm:$0xff]
    %v210 = vld [vmem:[#allocation3 + $0x38] sm:$0xff]
    %v211 = vld [vmem:[#allocation3 + $0x40] sm:$0xff]
    %v212 = vld [vmem:[#allocation3 + $0x48] sm:$0xff]
    %v213 = vld [vmem:[#allocation3 + $0x50] sm:$0xff]
    %v214 = vld [vmem:[#allocation3 + $0x58] sm:$0xff]
    %v215 = vpack.c.bf16 %v209, %v203
    %v216 = vpack.c.bf16 %v210, %v204
    %v217 = vpack.c.bf16 %v211, %v205
    %v218 = vpack.c.bf16 %v212, %v206
    %v219 = vpack.c.bf16 %v213, %v207
    %v220 = vpack.c.bf16 %v214, %v208
    %v221 = vld [vmem:[#allocation6] sm:$0xff]
    %v222 = vld [vmem:[#allocation6 + $0x8] sm:$0xff]
    %v223 = vld [vmem:[#allocation6 + $0x10] sm:$0xff]
    %v224 = vld [vmem:[#allocation6 + $0x18] sm:$0xff]
    %v225 = vld [vmem:[#allocation6 + $0x20] sm:$0xff]
    %v226 = vld [vmem:[#allocation6 + $0x28] sm:$0xff]
    %v227 = vld [vmem:[#allocation6 + $0x30] sm:$0xff]
    %v228 = vld [vmem:[#allocation6 + $0x38] sm:$0xff]
    %v229 = vld [vmem:[#allocation6 + $0x40] sm:$0xff]
    %v230 = vld [vmem:[#allocation6 + $0x48] sm:$0xff]
    %v231 = vld [vmem:[#allocation6 + $0x50] sm:$0xff]
    %v232 = vld [vmem:[#allocation6 + $0x58] sm:$0xff]
    %v233 = vpack.c.bf16 %v227, %v221
    %v234 = vpack.c.bf16 %v228, %v222
    %v235 = vpack.c.bf16 %v229, %v223
    %v236 = vpack.c.bf16 %v230, %v224
    %v237 = vpack.c.bf16 %v231, %v225
    %v238 = vpack.c.bf16 %v232, %v226
    %v239 = vld [vmem:[#allocation8] sm:$0xff]
    %v240 = vld [vmem:[#allocation8 + $0x8] sm:$0xff]
    %v241 = vld [vmem:[#allocation8 + $0x10] sm:$0xff]
    %v242 = vld [vmem:[#allocation8 + $0x18] sm:$0xff]
    %v243 = vld [vmem:[#allocation8 + $0x20] sm:$0xff]
    %v244 = vld [vmem:[#allocation8 + $0x28] sm:$0xff]
    %v245 = vld [vmem:[#allocation8 + $0x30] sm:$0xff]
    %v246 = vld [vmem:[#allocation8 + $0x38] sm:$0xff]
    %v247 = vld [vmem:[#allocation8 + $0x40] sm:$0xff]
    %v248 = vld [vmem:[#allocation8 + $0x48] sm:$0xff]
    %v249 = vld [vmem:[#allocation8 + $0x50] sm:$0xff]
    %v250 = vld [vmem:[#allocation8 + $0x58] sm:$0xff]
    %v251 = vpack.c.bf16 %v245, %v239
    %v252 = vpack.c.bf16 %v246, %v240
    %v253 = vpack.c.bf16 %v247, %v241
    %v254 = vpack.c.bf16 %v248, %v242
    %v255 = vpack.c.bf16 %v249, %v243
    %v256 = vpack.c.bf16 %v250, %v244
    %v257 = vld [vmem:[#allocation9] sm:$0xff]
    %v258 = vld [vmem:[#allocation9 + $0x8] sm:$0xff]
    %v259 = vld [vmem:[#allocation9 + $0x10] sm:$0xff]
    %v260 = vld [vmem:[#allocation9 + $0x18] sm:$0xff]
    %v261 = vld [vmem:[#allocation9 + $0x20] sm:$0xff]
    %v262 = vld [vmem:[#allocation9 + $0x28] sm:$0xff]
    %v263 = vld [vmem:[#allocation9 + $0x30] sm:$0xff]
    %v264 = vld [vmem:[#allocation9 + $0x38] sm:$0xff]
    %v265 = vld [vmem:[#allocation9 + $0x40] sm:$0xff]
    %v266 = vld [vmem:[#allocation9 + $0x48] sm:$0xff]
    %v267 = vld [vmem:[#allocation9 + $0x50] sm:$0xff]
    %v268 = vld [vmem:[#allocation9 + $0x58] sm:$0xff]
    %v269 = vld [vmem:[#allocation9 + $0x60] sm:$0xff]
    %v270 = vld [vmem:[#allocation9 + $0x68] sm:$0xff]
    %v271 = vld [vmem:[#allocation9 + $0x70] sm:$0xff]
    %v272 = vld [vmem:[#allocation9 + $0x78] sm:$0xff]
    %v273 = vld [vmem:[#allocation9 + $0x80] sm:$0xff]
    %v274 = vld [vmem:[#allocation9 + $0x88] sm:$0xff]
    %v275 = vld [vmem:[#allocation9 + $0x90] sm:$0xff]
    %v276 = vld [vmem:[#allocation9 + $0x98] sm:$0xff]
    %v277 = vld [vmem:[#allocation9 + $0xa0] sm:$0xff]
    %v278 = vld [vmem:[#allocation9 + $0xa8] sm:$0xff]
    %v279 = vld [vmem:[#allocation9 + $0xb0] sm:$0xff]
    %v280 = vld [vmem:[#allocation9 + $0xb8] sm:$0xff]
    %v281 = vld [vmem:[#allocation9 + $0xc0] sm:$0xff]
    %v282 = vld [vmem:[#allocation9 + $0xc8] sm:$0xff]
    %v283 = vld [vmem:[#allocation9 + $0xd0] sm:$0xff]
    %v284 = vld [vmem:[#allocation9 + $0xd8] sm:$0xff]
    %v285 = vld [vmem:[#allocation9 + $0xe0] sm:$0xff]
    %v286 = vld [vmem:[#allocation9 + $0xe8] sm:$0xff]
    %v287 = vld [vmem:[#allocation9 + $0xf0] sm:$0xff]
    %v288 = vld [vmem:[#allocation9 + $0xf8] sm:$0xff]
    %v289 = vld [vmem:[#allocation9 + $0x100] sm:$0xff]
    %v290 = vld [vmem:[#allocation9 + $0x108] sm:$0xff]
    %v291 = vld [vmem:[#allocation9 + $0x110] sm:$0xff]
    %v292 = vld [vmem:[#allocation9 + $0x118] sm:$0xff]
    %v293 = vld [vmem:[#allocation9 + $0x120] sm:$0xff]
    %v294 = vld [vmem:[#allocation9 + $0x128] sm:$0xff]
    %v295 = vld [vmem:[#allocation9 + $0x130] sm:$0xff]
    %v296 = vld [vmem:[#allocation9 + $0x138] sm:$0xff]
    %v297 = vld [vmem:[#allocation9 + $0x140] sm:$0xff]
    %v298 = vld [vmem:[#allocation9 + $0x148] sm:$0xff]
    %v299 = vld [vmem:[#allocation9 + $0x150] sm:$0xff]
    %v300 = vld [vmem:[#allocation9 + $0x158] sm:$0xff]
    %v301 = vld [vmem:[#allocation9 + $0x160] sm:$0xff]
    %v302 = vld [vmem:[#allocation9 + $0x168] sm:$0xff]
    %v303 = vld [vmem:[#allocation9 + $0x170] sm:$0xff]
    %v304 = vld [vmem:[#allocation9 + $0x178] sm:$0xff]
    %v305 = vld [vmem:[#allocation9 + $0x180] sm:$0xff]
    %v306 = vld [vmem:[#allocation9 + $0x188] sm:$0xff]
    %v307 = vld [vmem:[#allocation9 + $0x190] sm:$0xff]
    %v308 = vld [vmem:[#allocation9 + $0x198] sm:$0xff]
    %v309 = vld [vmem:[#allocation9 + $0x1a0] sm:$0xff]
    %v310 = vld [vmem:[#allocation9 + $0x1a8] sm:$0xff]
    %v311 = vld [vmem:[#allocation9 + $0x1b0] sm:$0xff]
    %v312 = vld [vmem:[#allocation9 + $0x1b8] sm:$0xff]
    %v313 = vld [vmem:[#allocation9 + $0x1c0] sm:$0xff]
    %v314 = vld [vmem:[#allocation9 + $0x1c8] sm:$0xff]
    %v315 = vld [vmem:[#allocation9 + $0x1d0] sm:$0xff]
    %v316 = vld [vmem:[#allocation9 + $0x1d8] sm:$0xff]
    %v317 = vld [vmem:[#allocation9 + $0x1e0] sm:$0xff]
    %v318 = vld [vmem:[#allocation9 + $0x1e8] sm:$0xff]
    %v319 = vld [vmem:[#allocation9 + $0x1f0] sm:$0xff]
    %v320 = vld [vmem:[#allocation9 + $0x1f8] sm:$0xff]
    %v321 = vld [vmem:[#allocation9 + $0x200] sm:$0xff]
    %v322 = vld [vmem:[#allocation9 + $0x208] sm:$0xff]
    %v323 = vld [vmem:[#allocation9 + $0x210] sm:$0xff]
    %v324 = vld [vmem:[#allocation9 + $0x218] sm:$0xff]
    %v325 = vld [vmem:[#allocation9 + $0x220] sm:$0xff]
    %v326 = vld [vmem:[#allocation9 + $0x228] sm:$0xff]
    %v327 = vld [vmem:[#allocation9 + $0x230] sm:$0xff]
    %v328 = vld [vmem:[#allocation9 + $0x238] sm:$0xff]
    %v329 = vld [vmem:[#allocation9 + $0x240] sm:$0xff]
    %v330 = vld [vmem:[#allocation9 + $0x248] sm:$0xff]
    %v331 = vld [vmem:[#allocation9 + $0x250] sm:$0xff]
    %v332 = vld [vmem:[#allocation9 + $0x258] sm:$0xff]
    %v333 = vld [vmem:[#allocation9 + $0x260] sm:$0xff]
    %v334 = vld [vmem:[#allocation9 + $0x268] sm:$0xff]
    %v335 = vld [vmem:[#allocation9 + $0x270] sm:$0xff]
    %v336 = vld [vmem:[#allocation9 + $0x278] sm:$0xff]
    %v337 = vld [vmem:[#allocation9 + $0x280] sm:$0xff]
    %v338 = vld [vmem:[#allocation9 + $0x288] sm:$0xff]
    %v339 = vld [vmem:[#allocation9 + $0x290] sm:$0xff]
    %v340 = vld [vmem:[#allocation9 + $0x298] sm:$0xff]
    %v341 = vld [vmem:[#allocation9 + $0x2a0] sm:$0xff]
    %v342 = vld [vmem:[#allocation9 + $0x2a8] sm:$0xff]
    %v343 = vld [vmem:[#allocation9 + $0x2b0] sm:$0xff]
    %v344 = vld [vmem:[#allocation9 + $0x2b8] sm:$0xff]
    %v345 = vld [vmem:[#allocation9 + $0x2c0] sm:$0xff]
    %v346 = vld [vmem:[#allocation9 + $0x2c8] sm:$0xff]
    %v347 = vld [vmem:[#allocation9 + $0x2d0] sm:$0xff]
    %v348 = vld [vmem:[#allocation9 + $0x2d8] sm:$0xff]
    %v349 = vld [vmem:[#allocation9 + $0x2e0] sm:$0xff]
    %v350 = vld [vmem:[#allocation9 + $0x2e8] sm:$0xff]
    %v351 = vld [vmem:[#allocation9 + $0x2f0] sm:$0xff]
    %v352 = vld [vmem:[#allocation9 + $0x2f8] sm:$0xff]
    %v353 = vld [vmem:[#allocation9 + $0x300] sm:$0xff]
    %v354 = vld [vmem:[#allocation9 + $0x308] sm:$0xff]
    %v355 = vld [vmem:[#allocation9 + $0x310] sm:$0xff]
    %v356 = vld [vmem:[#allocation9 + $0x318] sm:$0xff]
    %v357 = vld [vmem:[#allocation9 + $0x320] sm:$0xff]
    %v358 = vld [vmem:[#allocation9 + $0x328] sm:$0xff]
    %v359 = vld [vmem:[#allocation9 + $0x330] sm:$0xff]
    %v360 = vld [vmem:[#allocation9 + $0x338] sm:$0xff]
    %v361 = vld [vmem:[#allocation9 + $0x340] sm:$0xff]
    %v362 = vld [vmem:[#allocation9 + $0x348] sm:$0xff]
    %v363 = vld [vmem:[#allocation9 + $0x350] sm:$0xff]
    %v364 = vld [vmem:[#allocation9 + $0x358] sm:$0xff]
    %v365 = vld [vmem:[#allocation9 + $0x360] sm:$0xff]
    %v366 = vld [vmem:[#allocation9 + $0x368] sm:$0xff]
    %v367 = vld [vmem:[#allocation9 + $0x370] sm:$0xff]
    %v368 = vld [vmem:[#allocation9 + $0x378] sm:$0xff]
    %v369 = vld [vmem:[#allocation9 + $0x380] sm:$0xff]
    %v370 = vld [vmem:[#allocation9 + $0x388] sm:$0xff]
    %v371 = vld [vmem:[#allocation9 + $0x390] sm:$0xff]
    %v372 = vld [vmem:[#allocation9 + $0x398] sm:$0xff]
    %v373 = vld [vmem:[#allocation9 + $0x3a0] sm:$0xff]
    %v374 = vld [vmem:[#allocation9 + $0x3a8] sm:$0xff]
    %v375 = vld [vmem:[#allocation9 + $0x3b0] sm:$0xff]
    %v376 = vld [vmem:[#allocation9 + $0x3b8] sm:$0xff]
    %v377 = vld [vmem:[#allocation9 + $0x3c0] sm:$0xff]
    %v378 = vld [vmem:[#allocation9 + $0x3c8] sm:$0xff]
    %v379 = vld [vmem:[#allocation9 + $0x3d0] sm:$0xff]
    %v380 = vld [vmem:[#allocation9 + $0x3d8] sm:$0xff]
    %v381 = vld [vmem:[#allocation9 + $0x3e0] sm:$0xff]
    %v382 = vld [vmem:[#allocation9 + $0x3e8] sm:$0xff]
    %v383 = vld [vmem:[#allocation9 + $0x3f0] sm:$0xff]
    %v384 = vld [vmem:[#allocation9 + $0x3f8] sm:$0xff]
    %v385 = vld [vmem:[#allocation9 + $0x400] sm:$0xff]
    %v386 = vld [vmem:[#allocation9 + $0x408] sm:$0xff]
    %v387 = vld [vmem:[#allocation9 + $0x410] sm:$0xff]
    %v388 = vld [vmem:[#allocation9 + $0x418] sm:$0xff]
    %v389 = vld [vmem:[#allocation9 + $0x420] sm:$0xff]
    %v390 = vld [vmem:[#allocation9 + $0x428] sm:$0xff]
    %v391 = vld [vmem:[#allocation9 + $0x430] sm:$0xff]
    %v392 = vld [vmem:[#allocation9 + $0x438] sm:$0xff]
    %v393 = vld [vmem:[#allocation9 + $0x440] sm:$0xff]
    %v394 = vld [vmem:[#allocation9 + $0x448] sm:$0xff]
    %v395 = vld [vmem:[#allocation9 + $0x450] sm:$0xff]
    %v396 = vld [vmem:[#allocation9 + $0x458] sm:$0xff]
    %v397 = vld [vmem:[#allocation9 + $0x460] sm:$0xff]
    %v398 = vld [vmem:[#allocation9 + $0x468] sm:$0xff]
    %v399 = vld [vmem:[#allocation9 + $0x470] sm:$0xff]
    %v400 = vld [vmem:[#allocation9 + $0x478] sm:$0xff]
    %v401 = vld [vmem:[#allocation9 + $0x480] sm:$0xff]
    %v402 = vld [vmem:[#allocation9 + $0x488] sm:$0xff]
    %v403 = vld [vmem:[#allocation9 + $0x490] sm:$0xff]
    %v404 = vld [vmem:[#allocation9 + $0x498] sm:$0xff]
    %v405 = vld [vmem:[#allocation9 + $0x4a0] sm:$0xff]
    %v406 = vld [vmem:[#allocation9 + $0x4a8] sm:$0xff]
    %v407 = vld [vmem:[#allocation9 + $0x4b0] sm:$0xff]
    %v408 = vld [vmem:[#allocation9 + $0x4b8] sm:$0xff]
    %v409 = vld [vmem:[#allocation9 + $0x4c0] sm:$0xff]
    %v410 = vld [vmem:[#allocation9 + $0x4c8] sm:$0xff]
    %v411 = vld [vmem:[#allocation9 + $0x4d0] sm:$0xff]
    %v412 = vld [vmem:[#allocation9 + $0x4d8] sm:$0xff]
    %v413 = vld [vmem:[#allocation9 + $0x4e0] sm:$0xff]
    %v414 = vld [vmem:[#allocation9 + $0x4e8] sm:$0xff]
    %v415 = vld [vmem:[#allocation9 + $0x4f0] sm:$0xff]
    %v416 = vld [vmem:[#allocation9 + $0x4f8] sm:$0xff]
    %v417 = vld [vmem:[#allocation9 + $0x500] sm:$0xff]
    %v418 = vld [vmem:[#allocation9 + $0x508] sm:$0xff]
    %v419 = vld [vmem:[#allocation9 + $0x510] sm:$0xff]
    %v420 = vld [vmem:[#allocation9 + $0x518] sm:$0xff]
    %v421 = vld [vmem:[#allocation9 + $0x520] sm:$0xff]
    %v422 = vld [vmem:[#allocation9 + $0x528] sm:$0xff]
    %v423 = vld [vmem:[#allocation9 + $0x530] sm:$0xff]
    %v424 = vld [vmem:[#allocation9 + $0x538] sm:$0xff]
    %v425 = vld [vmem:[#allocation9 + $0x540] sm:$0xff]
    %v426 = vld [vmem:[#allocation9 + $0x548] sm:$0xff]
    %v427 = vld [vmem:[#allocation9 + $0x550] sm:$0xff]
    %v428 = vld [vmem:[#allocation9 + $0x558] sm:$0xff]
    %v429 = vld [vmem:[#allocation9 + $0x560] sm:$0xff]
    %v430 = vld [vmem:[#allocation9 + $0x568] sm:$0xff]
    %v431 = vld [vmem:[#allocation9 + $0x570] sm:$0xff]
    %v432 = vld [vmem:[#allocation9 + $0x578] sm:$0xff]
    %v433 = vld [vmem:[#allocation9 + $0x580] sm:$0xff]
    %v434 = vld [vmem:[#allocation9 + $0x588] sm:$0xff]
    %v435 = vld [vmem:[#allocation9 + $0x590] sm:$0xff]
    %v436 = vld [vmem:[#allocation9 + $0x598] sm:$0xff]
    %v437 = vld [vmem:[#allocation9 + $0x5a0] sm:$0xff]
    %v438 = vld [vmem:[#allocation9 + $0x5a8] sm:$0xff]
    %v439 = vld [vmem:[#allocation9 + $0x5b0] sm:$0xff]
    %v440 = vld [vmem:[#allocation9 + $0x5b8] sm:$0xff]
    %v441 = vld [vmem:[#allocation9 + $0x5c0] sm:$0xff]
    %v442 = vld [vmem:[#allocation9 + $0x5c8] sm:$0xff]
    %v443 = vld [vmem:[#allocation9 + $0x5d0] sm:$0xff]
    %v444 = vld [vmem:[#allocation9 + $0x5d8] sm:$0xff]
    %v445 = vld [vmem:[#allocation9 + $0x5e0] sm:$0xff]
    %v446 = vld [vmem:[#allocation9 + $0x5e8] sm:$0xff]
    %v447 = vld [vmem:[#allocation9 + $0x5f0] sm:$0xff]
    %v448 = vld [vmem:[#allocation9 + $0x5f8] sm:$0xff]
    %v449 = vld [vmem:[#allocation9 + $0x600] sm:$0xff]
    %v450 = vld [vmem:[#allocation9 + $0x608] sm:$0xff]
    %v451 = vld [vmem:[#allocation9 + $0x610] sm:$0xff]
    %v452 = vld [vmem:[#allocation9 + $0x618] sm:$0xff]
    %v453 = vld [vmem:[#allocation9 + $0x620] sm:$0xff]
    %v454 = vld [vmem:[#allocation9 + $0x628] sm:$0xff]
    %v455 = vld [vmem:[#allocation9 + $0x630] sm:$0xff]
    %v456 = vld [vmem:[#allocation9 + $0x638] sm:$0xff]
    %v457 = vld [vmem:[#allocation9 + $0x640] sm:$0xff]
    %v458 = vld [vmem:[#allocation9 + $0x648] sm:$0xff]
    %v459 = vld [vmem:[#allocation9 + $0x650] sm:$0xff]
    %v460 = vld [vmem:[#allocation9 + $0x658] sm:$0xff]
    %v461 = vld [vmem:[#allocation9 + $0x660] sm:$0xff]
    %v462 = vld [vmem:[#allocation9 + $0x668] sm:$0xff]
    %v463 = vld [vmem:[#allocation9 + $0x670] sm:$0xff]
    %v464 = vld [vmem:[#allocation9 + $0x678] sm:$0xff]
    %v465 = vld [vmem:[#allocation9 + $0x680] sm:$0xff]
    %v466 = vld [vmem:[#allocation9 + $0x688] sm:$0xff]
    %v467 = vld [vmem:[#allocation9 + $0x690] sm:$0xff]
    %v468 = vld [vmem:[#allocation9 + $0x698] sm:$0xff]
    %v469 = vld [vmem:[#allocation9 + $0x6a0] sm:$0xff]
    %v470 = vld [vmem:[#allocation9 + $0x6a8] sm:$0xff]
    %v471 = vld [vmem:[#allocation9 + $0x6b0] sm:$0xff]
    %v472 = vld [vmem:[#allocation9 + $0x6b8] sm:$0xff]
    %v473 = vld [vmem:[#allocation9 + $0x6c0] sm:$0xff]
    %v474 = vld [vmem:[#allocation9 + $0x6c8] sm:$0xff]
    %v475 = vld [vmem:[#allocation9 + $0x6d0] sm:$0xff]
    %v476 = vld [vmem:[#allocation9 + $0x6d8] sm:$0xff]
    %v477 = vld [vmem:[#allocation9 + $0x6e0] sm:$0xff]
    %v478 = vld [vmem:[#allocation9 + $0x6e8] sm:$0xff]
    %v479 = vld [vmem:[#allocation9 + $0x6f0] sm:$0xff]
    %v480 = vld [vmem:[#allocation9 + $0x6f8] sm:$0xff]
    %v481 = vld [vmem:[#allocation9 + $0x700] sm:$0xff]
    %v482 = vld [vmem:[#allocation9 + $0x708] sm:$0xff]
    %v483 = vld [vmem:[#allocation9 + $0x710] sm:$0xff]
    %v484 = vld [vmem:[#allocation9 + $0x718] sm:$0xff]
    %v485 = vld [vmem:[#allocation9 + $0x720] sm:$0xff]
    %v486 = vld [vmem:[#allocation9 + $0x728] sm:$0xff]
    %v487 = vld [vmem:[#allocation9 + $0x730] sm:$0xff]
    %v488 = vld [vmem:[#allocation9 + $0x738] sm:$0xff]
    %v489 = vld [vmem:[#allocation9 + $0x740] sm:$0xff]
    %v490 = vld [vmem:[#allocation9 + $0x748] sm:$0xff]
    %v491 = vld [vmem:[#allocation9 + $0x750] sm:$0xff]
    %v492 = vld [vmem:[#allocation9 + $0x758] sm:$0xff]
    %v493 = vld [vmem:[#allocation9 + $0x760] sm:$0xff]
    %v494 = vld [vmem:[#allocation9 + $0x768] sm:$0xff]
    %v495 = vld [vmem:[#allocation9 + $0x770] sm:$0xff]
    %v496 = vld [vmem:[#allocation9 + $0x778] sm:$0xff]
    %v497 = vld [vmem:[#allocation9 + $0x780] sm:$0xff]
    %v498 = vld [vmem:[#allocation9 + $0x788] sm:$0xff]
    %v499 = vld [vmem:[#allocation9 + $0x790] sm:$0xff]
    %v500 = vld [vmem:[#allocation9 + $0x798] sm:$0xff]
    %v501 = vld [vmem:[#allocation9 + $0x7a0] sm:$0xff]
    %v502 = vld [vmem:[#allocation9 + $0x7a8] sm:$0xff]
    %v503 = vld [vmem:[#allocation9 + $0x7b0] sm:$0xff]
    %v504 = vld [vmem:[#allocation9 + $0x7b8] sm:$0xff]
    %v505 = vld [vmem:[#allocation9 + $0x7c0] sm:$0xff]
    %v506 = vld [vmem:[#allocation9 + $0x7c8] sm:$0xff]
    %v507 = vld [vmem:[#allocation9 + $0x7d0] sm:$0xff]
    %v508 = vld [vmem:[#allocation9 + $0x7d8] sm:$0xff]
    %v509 = vld [vmem:[#allocation9 + $0x7e0] sm:$0xff]
    %v510 = vld [vmem:[#allocation9 + $0x7e8] sm:$0xff]
    %v511 = vld [vmem:[#allocation9 + $0x7f0] sm:$0xff]
    %v512 = vld [vmem:[#allocation9 + $0x7f8] sm:$0xff]
    %v513 = vld [vmem:[#allocation9 + $0x800] sm:$0xff]
    %v514 = vld [vmem:[#allocation9 + $0x808] sm:$0xff]
    %v515 = vld [vmem:[#allocation9 + $0x810] sm:$0xff]
    %v516 = vld [vmem:[#allocation9 + $0x818] sm:$0xff]
    %v517 = vld [vmem:[#allocation9 + $0x820] sm:$0xff]
    %v518 = vld [vmem:[#allocation9 + $0x828] sm:$0xff]
    %v519 = vld [vmem:[#allocation9 + $0x830] sm:$0xff]
    %v520 = vld [vmem:[#allocation9 + $0x838] sm:$0xff]
    %v521 = vld [vmem:[#allocation9 + $0x840] sm:$0xff]
    %v522 = vld [vmem:[#allocation9 + $0x848] sm:$0xff]
    %v523 = vld [vmem:[#allocation9 + $0x850] sm:$0xff]
    %v524 = vld [vmem:[#allocation9 + $0x858] sm:$0xff]
    %v525 = vld [vmem:[#allocation9 + $0x860] sm:$0xff]
    %v526 = vld [vmem:[#allocation9 + $0x868] sm:$0xff]
    %v527 = vld [vmem:[#allocation9 + $0x870] sm:$0xff]
    %v528 = vld [vmem:[#allocation9 + $0x878] sm:$0xff]
    %v529 = vld [vmem:[#allocation9 + $0x880] sm:$0xff]
    %v530 = vld [vmem:[#allocation9 + $0x888] sm:$0xff]
    %v531 = vld [vmem:[#allocation9 + $0x890] sm:$0xff]
    %v532 = vld [vmem:[#allocation9 + $0x898] sm:$0xff]
    %v533 = vld [vmem:[#allocation9 + $0x8a0] sm:$0xff]
    %v534 = vld [vmem:[#allocation9 + $0x8a8] sm:$0xff]
    %v535 = vld [vmem:[#allocation9 + $0x8b0] sm:$0xff]
    %v536 = vld [vmem:[#allocation9 + $0x8b8] sm:$0xff]
    %v537 = vld [vmem:[#allocation9 + $0x8c0] sm:$0xff]
    %v538 = vld [vmem:[#allocation9 + $0x8c8] sm:$0xff]
    %v539 = vld [vmem:[#allocation9 + $0x8d0] sm:$0xff]
    %v540 = vld [vmem:[#allocation9 + $0x8d8] sm:$0xff]
    %v541 = vld [vmem:[#allocation9 + $0x8e0] sm:$0xff]
    %v542 = vld [vmem:[#allocation9 + $0x8e8] sm:$0xff]
    %v543 = vld [vmem:[#allocation9 + $0x8f0] sm:$0xff]
    %v544 = vld [vmem:[#allocation9 + $0x8f8] sm:$0xff]
    %v545 = vld [vmem:[#allocation11] sm:$0x3f]
    %v547 = vperm.slane %v545, 0
    %v548 = vperm.slane %v545, 1
    %v549 = vperm.slane %v545, 2
    %v550 = vperm.slane %v545, 3
    %v551 = vperm.slane %v545, 4
    %v552 = vperm.slane %v545, 5
    %v847 = vunpack.c.l.b16 %v257
    %v848 = vunpack.c.h.b16 %v257
    %v849 = vunpack.c.l.b16 %v258
    %v850 = vunpack.c.h.b16 %v258
    %v851 = vunpack.c.l.b16 %v259
    %v852 = vunpack.c.h.b16 %v259
    %v853 = vunpack.c.l.b16 %v260
    %v854 = vunpack.c.h.b16 %v260
    %v855 = vunpack.c.l.b16 %v261
    %v856 = vunpack.c.h.b16 %v261
    %v857 = vunpack.c.l.b16 %v262
    %v858 = vunpack.c.h.b16 %v262
    %v859 = vunpack.c.l.b16 %v263
    %v860 = vunpack.c.h.b16 %v263
    %v861 = vunpack.c.l.b16 %v264
    %v862 = vunpack.c.h.b16 %v264
    %v863 = vunpack.c.l.b16 %v265
    %v864 = vunpack.c.h.b16 %v265
    %v865 = vunpack.c.l.b16 %v266
    %v866 = vunpack.c.h.b16 %v266
    %v867 = vunpack.c.l.b16 %v267
    %v868 = vunpack.c.h.b16 %v267
    %v869 = vunpack.c.l.b16 %v268
    %v870 = vunpack.c.h.b16 %v268
    %v871 = vunpack.c.l.b16 %v269
    %v872 = vunpack.c.h.b16 %v269
    %v873 = vunpack.c.l.b16 %v270
    %v874 = vunpack.c.h.b16 %v270
    %v875 = vunpack.c.l.b16 %v271
    %v876 = vunpack.c.h.b16 %v271
    %v877 = vunpack.c.l.b16 %v272
    %v878 = vunpack.c.h.b16 %v272
    %v879 = vunpack.c.l.b16 %v273
    %v880 = vunpack.c.h.b16 %v273
    %v881 = vunpack.c.l.b16 %v274
    %v882 = vunpack.c.h.b16 %v274
    %v883 = vunpack.c.l.b16 %v275
    %v884 = vunpack.c.h.b16 %v275
    %v885 = vunpack.c.l.b16 %v276
    %v886 = vunpack.c.h.b16 %v276
    %v887 = vunpack.c.l.b16 %v277
    %v888 = vunpack.c.h.b16 %v277
    %v889 = vunpack.c.l.b16 %v278
    %v890 = vunpack.c.h.b16 %v278
    %v891 = vunpack.c.l.b16 %v279
    %v892 = vunpack.c.h.b16 %v279
    %v893 = vunpack.c.l.b16 %v280
    %v894 = vunpack.c.h.b16 %v280
    %v895 = vunpack.c.l.b16 %v281
    %v896 = vunpack.c.h.b16 %v281
    %v897 = vunpack.c.l.b16 %v282
    %v898 = vunpack.c.h.b16 %v282
    %v899 = vunpack.c.l.b16 %v283
    %v900 = vunpack.c.h.b16 %v283
    %v901 = vunpack.c.l.b16 %v284
    %v902 = vunpack.c.h.b16 %v284
    %v903 = vunpack.c.l.b16 %v285
    %v904 = vunpack.c.h.b16 %v285
    %v905 = vunpack.c.l.b16 %v286
    %v906 = vunpack.c.h.b16 %v286
    %v907 = vunpack.c.l.b16 %v287
    %v908 = vunpack.c.h.b16 %v287
    %v909 = vunpack.c.l.b16 %v288
    %v910 = vunpack.c.h.b16 %v288
    %v911 = vunpack.c.l.b16 %v289
    %v912 = vunpack.c.h.b16 %v289
    %v913 = vunpack.c.l.b16 %v290
    %v914 = vunpack.c.h.b16 %v290
    %v915 = vunpack.c.l.b16 %v291
    %v916 = vunpack.c.h.b16 %v291
    %v917 = vunpack.c.l.b16 %v292
    %v918 = vunpack.c.h.b16 %v292
    %v919 = vunpack.c.l.b16 %v293
    %v920 = vunpack.c.h.b16 %v293
    %v921 = vunpack.c.l.b16 %v294
    %v922 = vunpack.c.h.b16 %v294
    %v923 = vunpack.c.l.b16 %v295
    %v924 = vunpack.c.h.b16 %v295
    %v925 = vunpack.c.l.b16 %v296
    %v926 = vunpack.c.h.b16 %v296
    %v927 = vunpack.c.l.b16 %v297
    %v928 = vunpack.c.h.b16 %v297
    %v929 = vunpack.c.l.b16 %v298
    %v930 = vunpack.c.h.b16 %v298
    %v931 = vunpack.c.l.b16 %v299
    %v932 = vunpack.c.h.b16 %v299
    %v933 = vunpack.c.l.b16 %v300
    %v934 = vunpack.c.h.b16 %v300
    %v935 = vunpack.c.l.b16 %v301
    %v936 = vunpack.c.h.b16 %v301
    %v937 = vunpack.c.l.b16 %v302
    %v938 = vunpack.c.h.b16 %v302
    %v939 = vunpack.c.l.b16 %v303
    %v940 = vunpack.c.h.b16 %v303
    %v941 = vunpack.c.l.b16 %v304
    %v942 = vunpack.c.h.b16 %v304
    %v943 = vunpack.c.l.b16 %v305
    %v944 = vunpack.c.h.b16 %v305
    %v945 = vunpack.c.l.b16 %v306
    %v946 = vunpack.c.h.b16 %v306
    %v947 = vunpack.c.l.b16 %v307
    %v948 = vunpack.c.h.b16 %v307
    %v949 = vunpack.c.l.b16 %v308
    %v950 = vunpack.c.h.b16 %v308
    %v951 = vunpack.c.l.b16 %v309
    %v952 = vunpack.c.h.b16 %v309
    %v953 = vunpack.c.l.b16 %v310
    %v954 = vunpack.c.h.b16 %v310
    %v955 = vunpack.c.l.b16 %v311
    %v956 = vunpack.c.h.b16 %v311
    %v957 = vunpack.c.l.b16 %v312
    %v958 = vunpack.c.h.b16 %v312
    %v959 = vunpack.c.l.b16 %v313
    %v960 = vunpack.c.h.b16 %v313
    %v961 = vunpack.c.l.b16 %v314
    %v962 = vunpack.c.h.b16 %v314
    %v963 = vunpack.c.l.b16 %v315
    %v964 = vunpack.c.h.b16 %v315
    %v965 = vunpack.c.l.b16 %v316
    %v966 = vunpack.c.h.b16 %v316
    %v967 = vunpack.c.l.b16 %v317
    %v968 = vunpack.c.h.b16 %v317
    %v969 = vunpack.c.l.b16 %v318
    %v970 = vunpack.c.h.b16 %v318
    %v971 = vunpack.c.l.b16 %v319
    %v972 = vunpack.c.h.b16 %v319
    %v973 = vunpack.c.l.b16 %v320
    %v974 = vunpack.c.h.b16 %v320
    %v975 = vunpack.c.l.b16 %v321
    %v976 = vunpack.c.h.b16 %v321
    %v977 = vunpack.c.l.b16 %v322
    %v978 = vunpack.c.h.b16 %v322
    %v979 = vunpack.c.l.b16 %v323
    %v980 = vunpack.c.h.b16 %v323
    %v981 = vunpack.c.l.b16 %v324
    %v982 = vunpack.c.h.b16 %v324
    %v983 = vunpack.c.l.b16 %v325
    %v984 = vunpack.c.h.b16 %v325
    %v985 = vunpack.c.l.b16 %v326
    %v986 = vunpack.c.h.b16 %v326
    %v987 = vunpack.c.l.b16 %v327
    %v988 = vunpack.c.h.b16 %v327
    %v989 = vunpack.c.l.b16 %v328
    %v990 = vunpack.c.h.b16 %v328
    %v991 = vunpack.c.l.b16 %v329
    %v992 = vunpack.c.h.b16 %v329
    %v993 = vunpack.c.l.b16 %v330
    %v994 = vunpack.c.h.b16 %v330
    %v995 = vunpack.c.l.b16 %v331
    %v996 = vunpack.c.h.b16 %v331
    %v997 = vunpack.c.l.b16 %v332
    %v998 = vunpack.c.h.b16 %v332
    %v999 = vunpack.c.l.b16 %v333
    %v1000 = vunpack.c.h.b16 %v333
    %v1001 = vunpack.c.l.b16 %v334
    %v1002 = vunpack.c.h.b16 %v334
    %v1003 = vunpack.c.l.b16 %v335
    %v1004 = vunpack.c.h.b16 %v335
    %v1005 = vunpack.c.l.b16 %v336
    %v1006 = vunpack.c.h.b16 %v336
    %v1007 = vunpack.c.l.b16 %v337
    %v1008 = vunpack.c.h.b16 %v337
    %v1009 = vunpack.c.l.b16 %v338
    %v1010 = vunpack.c.h.b16 %v338
    %v1011 = vunpack.c.l.b16 %v339
    %v1012 = vunpack.c.h.b16 %v339
    %v1013 = vunpack.c.l.b16 %v340
    %v1014 = vunpack.c.h.b16 %v340
    %v1015 = vunpack.c.l.b16 %v341
    %v1016 = vunpack.c.h.b16 %v341
    %v1017 = vunpack.c.l.b16 %v342
    %v1018 = vunpack.c.h.b16 %v342
    %v1019 = vunpack.c.l.b16 %v343
    %v1020 = vunpack.c.h.b16 %v343
    %v1021 = vunpack.c.l.b16 %v344
    %v1022 = vunpack.c.h.b16 %v344
    %v1023 = vunpack.c.l.b16 %v345
    %v1024 = vunpack.c.h.b16 %v345
    %v1025 = vunpack.c.l.b16 %v346
    %v1026 = vunpack.c.h.b16 %v346
    %v1027 = vunpack.c.l.b16 %v347
    %v1028 = vunpack.c.h.b16 %v347
    %v1029 = vunpack.c.l.b16 %v348
    %v1030 = vunpack.c.h.b16 %v348
    %v1031 = vunpack.c.l.b16 %v349
    %v1032 = vunpack.c.h.b16 %v349
    %v1033 = vunpack.c.l.b16 %v350
    %v1034 = vunpack.c.h.b16 %v350
    %v1035 = vunpack.c.l.b16 %v351
    %v1036 = vunpack.c.h.b16 %v351
    %v1037 = vunpack.c.l.b16 %v352
    %v1038 = vunpack.c.h.b16 %v352
    %v1039 = vunpack.c.l.b16 %v353
    %v1040 = vunpack.c.h.b16 %v353
    %v1041 = vunpack.c.l.b16 %v354
    %v1042 = vunpack.c.h.b16 %v354
    %v1043 = vunpack.c.l.b16 %v355
    %v1044 = vunpack.c.h.b16 %v355
    %v1045 = vunpack.c.l.b16 %v356
    %v1046 = vunpack.c.h.b16 %v356
    %v1047 = vunpack.c.l.b16 %v357
    %v1048 = vunpack.c.h.b16 %v357
    %v1049 = vunpack.c.l.b16 %v358
    %v1050 = vunpack.c.h.b16 %v358
    %v1051 = vunpack.c.l.b16 %v359
    %v1052 = vunpack.c.h.b16 %v359
    %v1053 = vunpack.c.l.b16 %v360
    %v1054 = vunpack.c.h.b16 %v360
    %v1055 = vunpack.c.l.b16 %v361
    %v1056 = vunpack.c.h.b16 %v361
    %v1057 = vunpack.c.l.b16 %v362
    %v1058 = vunpack.c.h.b16 %v362
    %v1059 = vunpack.c.l.b16 %v363
    %v1060 = vunpack.c.h.b16 %v363
    %v1061 = vunpack.c.l.b16 %v364
    %v1062 = vunpack.c.h.b16 %v364
    %v1063 = vunpack.c.l.b16 %v365
    %v1064 = vunpack.c.h.b16 %v365
    %v1065 = vunpack.c.l.b16 %v366
    %v1066 = vunpack.c.h.b16 %v366
    %v1067 = vunpack.c.l.b16 %v367
    %v1068 = vunpack.c.h.b16 %v367
    %v1069 = vunpack.c.l.b16 %v368
    %v1070 = vunpack.c.h.b16 %v368
    %v1071 = vunpack.c.l.b16 %v369
    %v1072 = vunpack.c.h.b16 %v369
    %v1073 = vunpack.c.l.b16 %v370
    %v1074 = vunpack.c.h.b16 %v370
    %v1075 = vunpack.c.l.b16 %v371
    %v1076 = vunpack.c.h.b16 %v371
    %v1077 = vunpack.c.l.b16 %v372
    %v1078 = vunpack.c.h.b16 %v372
    %v1079 = vunpack.c.l.b16 %v373
    %v1080 = vunpack.c.h.b16 %v373
    %v1081 = vunpack.c.l.b16 %v374
    %v1082 = vunpack.c.h.b16 %v374
    %v1083 = vunpack.c.l.b16 %v375
    %v1084 = vunpack.c.h.b16 %v375
    %v1085 = vunpack.c.l.b16 %v376
    %v1086 = vunpack.c.h.b16 %v376
    %v1087 = vunpack.c.l.b16 %v377
    %v1088 = vunpack.c.h.b16 %v377
    %v1089 = vunpack.c.l.b16 %v378
    %v1090 = vunpack.c.h.b16 %v378
    %v1091 = vunpack.c.l.b16 %v379
    %v1092 = vunpack.c.h.b16 %v379
    %v1093 = vunpack.c.l.b16 %v380
    %v1094 = vunpack.c.h.b16 %v380
    %v1095 = vunpack.c.l.b16 %v381
    %v1096 = vunpack.c.h.b16 %v381
    %v1097 = vunpack.c.l.b16 %v382
    %v1098 = vunpack.c.h.b16 %v382
    %v1099 = vunpack.c.l.b16 %v383
    %v1100 = vunpack.c.h.b16 %v383
    %v1101 = vunpack.c.l.b16 %v384
    %v1102 = vunpack.c.h.b16 %v384
    %v1103 = vunpack.c.l.b16 %v385
    %v1104 = vunpack.c.h.b16 %v385
    %v1105 = vunpack.c.l.b16 %v386
    %v1106 = vunpack.c.h.b16 %v386
    %v1107 = vunpack.c.l.b16 %v387
    %v1108 = vunpack.c.h.b16 %v387
    %v1109 = vunpack.c.l.b16 %v388
    %v1110 = vunpack.c.h.b16 %v388
    %v1111 = vunpack.c.l.b16 %v389
    %v1112 = vunpack.c.h.b16 %v389
    %v1113 = vunpack.c.l.b16 %v390
    %v1114 = vunpack.c.h.b16 %v390
    %v1115 = vunpack.c.l.b16 %v391
    %v1116 = vunpack.c.h.b16 %v391
    %v1117 = vunpack.c.l.b16 %v392
    %v1118 = vunpack.c.h.b16 %v392
    %v1119 = vunpack.c.l.b16 %v393
    %v1120 = vunpack.c.h.b16 %v393
    %v1121 = vunpack.c.l.b16 %v394
    %v1122 = vunpack.c.h.b16 %v394
    %v1123 = vunpack.c.l.b16 %v395
    %v1124 = vunpack.c.h.b16 %v395
    %v1125 = vunpack.c.l.b16 %v396
    %v1126 = vunpack.c.h.b16 %v396
    %v1127 = vunpack.c.l.b16 %v397
    %v1128 = vunpack.c.h.b16 %v397
    %v1129 = vunpack.c.l.b16 %v398
    %v1130 = vunpack.c.h.b16 %v398
    %v1131 = vunpack.c.l.b16 %v399
    %v1132 = vunpack.c.h.b16 %v399
    %v1133 = vunpack.c.l.b16 %v400
    %v1134 = vunpack.c.h.b16 %v400
    %v1135 = vunpack.c.l.b16 %v401
    %v1136 = vunpack.c.h.b16 %v401
    %v1137 = vunpack.c.l.b16 %v402
    %v1138 = vunpack.c.h.b16 %v402
    %v1139 = vunpack.c.l.b16 %v403
    %v1140 = vunpack.c.h.b16 %v403
    %v1141 = vunpack.c.l.b16 %v404
    %v1142 = vunpack.c.h.b16 %v404
    %v1143 = vunpack.c.l.b16 %v405
    %v1144 = vunpack.c.h.b16 %v405
    %v1145 = vunpack.c.l.b16 %v406
    %v1146 = vunpack.c.h.b16 %v406
    %v1147 = vunpack.c.l.b16 %v407
    %v1148 = vunpack.c.h.b16 %v407
    %v1149 = vunpack.c.l.b16 %v408
    %v1150 = vunpack.c.h.b16 %v408
    %v1151 = vunpack.c.l.b16 %v409
    %v1152 = vunpack.c.h.b16 %v409
    %v1153 = vunpack.c.l.b16 %v410
    %v1154 = vunpack.c.h.b16 %v410
    %v1155 = vunpack.c.l.b16 %v411
    %v1156 = vunpack.c.h.b16 %v411
    %v1157 = vunpack.c.l.b16 %v412
    %v1158 = vunpack.c.h.b16 %v412
    %v1159 = vunpack.c.l.b16 %v413
    %v1160 = vunpack.c.h.b16 %v413
    %v1161 = vunpack.c.l.b16 %v414
    %v1162 = vunpack.c.h.b16 %v414
    %v1163 = vunpack.c.l.b16 %v415
    %v1164 = vunpack.c.h.b16 %v415
    %v1165 = vunpack.c.l.b16 %v416
    %v1166 = vunpack.c.h.b16 %v416
    %v1167 = vunpack.c.l.b16 %v417
    %v1168 = vunpack.c.h.b16 %v417
    %v1169 = vunpack.c.l.b16 %v418
    %v1170 = vunpack.c.h.b16 %v418
    %v1171 = vunpack.c.l.b16 %v419
    %v1172 = vunpack.c.h.b16 %v419
    %v1173 = vunpack.c.l.b16 %v420
    %v1174 = vunpack.c.h.b16 %v420
    %v1175 = vunpack.c.l.b16 %v421
    %v1176 = vunpack.c.h.b16 %v421
    %v1177 = vunpack.c.l.b16 %v422
    %v1178 = vunpack.c.h.b16 %v422
    %v1179 = vunpack.c.l.b16 %v423
    %v1180 = vunpack.c.h.b16 %v423
    %v1181 = vunpack.c.l.b16 %v424
    %v1182 = vunpack.c.h.b16 %v424
    %v1183 = vunpack.c.l.b16 %v425
    %v1184 = vunpack.c.h.b16 %v425
    %v1185 = vunpack.c.l.b16 %v426
    %v1186 = vunpack.c.h.b16 %v426
    %v1187 = vunpack.c.l.b16 %v427
    %v1188 = vunpack.c.h.b16 %v427
    %v1189 = vunpack.c.l.b16 %v428
    %v1190 = vunpack.c.h.b16 %v428
    %v1191 = vunpack.c.l.b16 %v429
    %v1192 = vunpack.c.h.b16 %v429
    %v1193 = vunpack.c.l.b16 %v430
    %v1194 = vunpack.c.h.b16 %v430
    %v1195 = vunpack.c.l.b16 %v431
    %v1196 = vunpack.c.h.b16 %v431
    %v1197 = vunpack.c.l.b16 %v432
    %v1198 = vunpack.c.h.b16 %v432
    %v1199 = vunpack.c.l.b16 %v433
    %v1200 = vunpack.c.h.b16 %v433
    %v1201 = vunpack.c.l.b16 %v434
    %v1202 = vunpack.c.h.b16 %v434
    %v1203 = vunpack.c.l.b16 %v435
    %v1204 = vunpack.c.h.b16 %v435
    %v1205 = vunpack.c.l.b16 %v436
    %v1206 = vunpack.c.h.b16 %v436
    %v1207 = vunpack.c.l.b16 %v437
    %v1208 = vunpack.c.h.b16 %v437
    %v1209 = vunpack.c.l.b16 %v438
    %v1210 = vunpack.c.h.b16 %v438
    %v1211 = vunpack.c.l.b16 %v439
    %v1212 = vunpack.c.h.b16 %v439
    %v1213 = vunpack.c.l.b16 %v440
    %v1214 = vunpack.c.h.b16 %v440
    %v1215 = vunpack.c.l.b16 %v441
    %v1216 = vunpack.c.h.b16 %v441
    %v1217 = vunpack.c.l.b16 %v442
    %v1218 = vunpack.c.h.b16 %v442
    %v1219 = vunpack.c.l.b16 %v443
    %v1220 = vunpack.c.h.b16 %v443
    %v1221 = vunpack.c.l.b16 %v444
    %v1222 = vunpack.c.h.b16 %v444
    %v1223 = vunpack.c.l.b16 %v445
    %v1224 = vunpack.c.h.b16 %v445
    %v1225 = vunpack.c.l.b16 %v446
    %v1226 = vunpack.c.h.b16 %v446
    %v1227 = vunpack.c.l.b16 %v447
    %v1228 = vunpack.c.h.b16 %v447
    %v1229 = vunpack.c.l.b16 %v448
    %v1230 = vunpack.c.h.b16 %v448
    %v1231 = vunpack.c.l.b16 %v449
    %v1232 = vunpack.c.h.b16 %v449
    %v1233 = vunpack.c.l.b16 %v450
    %v1234 = vunpack.c.h.b16 %v450
    %v1235 = vunpack.c.l.b16 %v451
    %v1236 = vunpack.c.h.b16 %v451
    %v1237 = vunpack.c.l.b16 %v452
    %v1238 = vunpack.c.h.b16 %v452
    %v1239 = vunpack.c.l.b16 %v453
    %v1240 = vunpack.c.h.b16 %v453
    %v1241 = vunpack.c.l.b16 %v454
    %v1242 = vunpack.c.h.b16 %v454
    %v1243 = vunpack.c.l.b16 %v455
    %v1244 = vunpack.c.h.b16 %v455
    %v1245 = vunpack.c.l.b16 %v456
    %v1246 = vunpack.c.h.b16 %v456
    %v1247 = vunpack.c.l.b16 %v457
    %v1248 = vunpack.c.h.b16 %v457
    %v1249 = vunpack.c.l.b16 %v458
    %v1250 = vunpack.c.h.b16 %v458
    %v1251 = vunpack.c.l.b16 %v459
    %v1252 = vunpack.c.h.b16 %v459
    %v1253 = vunpack.c.l.b16 %v460
    %v1254 = vunpack.c.h.b16 %v460
    %v1255 = vunpack.c.l.b16 %v461
    %v1256 = vunpack.c.h.b16 %v461
    %v1257 = vunpack.c.l.b16 %v462
    %v1258 = vunpack.c.h.b16 %v462
    %v1259 = vunpack.c.l.b16 %v463
    %v1260 = vunpack.c.h.b16 %v463
    %v1261 = vunpack.c.l.b16 %v464
    %v1262 = vunpack.c.h.b16 %v464
    %v1263 = vunpack.c.l.b16 %v465
    %v1264 = vunpack.c.h.b16 %v465
    %v1265 = vunpack.c.l.b16 %v466
    %v1266 = vunpack.c.h.b16 %v466
    %v1267 = vunpack.c.l.b16 %v467
    %v1268 = vunpack.c.h.b16 %v467
    %v1269 = vunpack.c.l.b16 %v468
    %v1270 = vunpack.c.h.b16 %v468
    %v1271 = vunpack.c.l.b16 %v469
    %v1272 = vunpack.c.h.b16 %v469
    %v1273 = vunpack.c.l.b16 %v470
    %v1274 = vunpack.c.h.b16 %v470
    %v1275 = vunpack.c.l.b16 %v471
    %v1276 = vunpack.c.h.b16 %v471
    %v1277 = vunpack.c.l.b16 %v472
    %v1278 = vunpack.c.h.b16 %v472
    %v1279 = vunpack.c.l.b16 %v473
    %v1280 = vunpack.c.h.b16 %v473
    %v1281 = vunpack.c.l.b16 %v474
    %v1282 = vunpack.c.h.b16 %v474
    %v1283 = vunpack.c.l.b16 %v475
    %v1284 = vunpack.c.h.b16 %v475
    %v1285 = vunpack.c.l.b16 %v476
    %v1286 = vunpack.c.h.b16 %v476
    %v1287 = vunpack.c.l.b16 %v477
    %v1288 = vunpack.c.h.b16 %v477
    %v1289 = vunpack.c.l.b16 %v478
    %v1290 = vunpack.c.h.b16 %v478
    %v1291 = vunpack.c.l.b16 %v479
    %v1292 = vunpack.c.h.b16 %v479
    %v1293 = vunpack.c.l.b16 %v480
    %v1294 = vunpack.c.h.b16 %v480
    %v1295 = vunpack.c.l.b16 %v481
    %v1296 = vunpack.c.h.b16 %v481
    %v1297 = vunpack.c.l.b16 %v482
    %v1298 = vunpack.c.h.b16 %v482
    %v1299 = vunpack.c.l.b16 %v483
    %v1300 = vunpack.c.h.b16 %v483
    %v1301 = vunpack.c.l.b16 %v484
    %v1302 = vunpack.c.h.b16 %v484
    %v1303 = vunpack.c.l.b16 %v485
    %v1304 = vunpack.c.h.b16 %v485
    %v1305 = vunpack.c.l.b16 %v486
    %v1306 = vunpack.c.h.b16 %v486
    %v1307 = vunpack.c.l.b16 %v487
    %v1308 = vunpack.c.h.b16 %v487
    %v1309 = vunpack.c.l.b16 %v488
    %v1310 = vunpack.c.h.b16 %v488
    %v1311 = vunpack.c.l.b16 %v489
    %v1312 = vunpack.c.h.b16 %v489
    %v1313 = vunpack.c.l.b16 %v490
    %v1314 = vunpack.c.h.b16 %v490
    %v1315 = vunpack.c.l.b16 %v491
    %v1316 = vunpack.c.h.b16 %v491
    %v1317 = vunpack.c.l.b16 %v492
    %v1318 = vunpack.c.h.b16 %v492
    %v1319 = vunpack.c.l.b16 %v493
    %v1320 = vunpack.c.h.b16 %v493
    %v1321 = vunpack.c.l.b16 %v494
    %v1322 = vunpack.c.h.b16 %v494
    %v1323 = vunpack.c.l.b16 %v495
    %v1324 = vunpack.c.h.b16 %v495
    %v1325 = vunpack.c.l.b16 %v496
    %v1326 = vunpack.c.h.b16 %v496
    %v1327 = vunpack.c.l.b16 %v497
    %v1328 = vunpack.c.h.b16 %v497
    %v1329 = vunpack.c.l.b16 %v498
    %v1330 = vunpack.c.h.b16 %v498
    %v1331 = vunpack.c.l.b16 %v499
    %v1332 = vunpack.c.h.b16 %v499
    %v1333 = vunpack.c.l.b16 %v500
    %v1334 = vunpack.c.h.b16 %v500
    %v1335 = vunpack.c.l.b16 %v501
    %v1336 = vunpack.c.h.b16 %v501
    %v1337 = vunpack.c.l.b16 %v502
    %v1338 = vunpack.c.h.b16 %v502
    %v1339 = vunpack.c.l.b16 %v503
    %v1340 = vunpack.c.h.b16 %v503
    %v1341 = vunpack.c.l.b16 %v504
    %v1342 = vunpack.c.h.b16 %v504
    %v1343 = vunpack.c.l.b16 %v505
    %v1344 = vunpack.c.h.b16 %v505
    %v1345 = vunpack.c.l.b16 %v506
    %v1346 = vunpack.c.h.b16 %v506
    %v1347 = vunpack.c.l.b16 %v507
    %v1348 = vunpack.c.h.b16 %v507
    %v1349 = vunpack.c.l.b16 %v508
    %v1350 = vunpack.c.h.b16 %v508
    %v1351 = vunpack.c.l.b16 %v509
    %v1352 = vunpack.c.h.b16 %v509
    %v1353 = vunpack.c.l.b16 %v510
    %v1354 = vunpack.c.h.b16 %v510
    %v1355 = vunpack.c.l.b16 %v511
    %v1356 = vunpack.c.h.b16 %v511
    %v1357 = vunpack.c.l.b16 %v512
    %v1358 = vunpack.c.h.b16 %v512
    %v1359 = vunpack.c.l.b16 %v513
    %v1360 = vunpack.c.h.b16 %v513
    %v1361 = vunpack.c.l.b16 %v514
    %v1362 = vunpack.c.h.b16 %v514
    %v1363 = vunpack.c.l.b16 %v515
    %v1364 = vunpack.c.h.b16 %v515
    %v1365 = vunpack.c.l.b16 %v516
    %v1366 = vunpack.c.h.b16 %v516
    %v1367 = vunpack.c.l.b16 %v517
    %v1368 = vunpack.c.h.b16 %v517
    %v1369 = vunpack.c.l.b16 %v518
    %v1370 = vunpack.c.h.b16 %v518
    %v1371 = vunpack.c.l.b16 %v519
    %v1372 = vunpack.c.h.b16 %v519
    %v1373 = vunpack.c.l.b16 %v520
    %v1374 = vunpack.c.h.b16 %v520
    %v1375 = vunpack.c.l.b16 %v521
    %v1376 = vunpack.c.h.b16 %v521
    %v1377 = vunpack.c.l.b16 %v522
    %v1378 = vunpack.c.h.b16 %v522
    %v1379 = vunpack.c.l.b16 %v523
    %v1380 = vunpack.c.h.b16 %v523
    %v1381 = vunpack.c.l.b16 %v524
    %v1382 = vunpack.c.h.b16 %v524
    %v1383 = vunpack.c.l.b16 %v525
    %v1384 = vunpack.c.h.b16 %v525
    %v1385 = vunpack.c.l.b16 %v526
    %v1386 = vunpack.c.h.b16 %v526
    %v1387 = vunpack.c.l.b16 %v527
    %v1388 = vunpack.c.h.b16 %v527
    %v1389 = vunpack.c.l.b16 %v528
    %v1390 = vunpack.c.h.b16 %v528
    %v1391 = vunpack.c.l.b16 %v529
    %v1392 = vunpack.c.h.b16 %v529
    %v1393 = vunpack.c.l.b16 %v530
    %v1394 = vunpack.c.h.b16 %v530
    %v1395 = vunpack.c.l.b16 %v531
    %v1396 = vunpack.c.h.b16 %v531
    %v1397 = vunpack.c.l.b16 %v532
    %v1398 = vunpack.c.h.b16 %v532
    %v1399 = vunpack.c.l.b16 %v533
    %v1400 = vunpack.c.h.b16 %v533
    %v1401 = vunpack.c.l.b16 %v534
    %v1402 = vunpack.c.h.b16 %v534
    %v1403 = vunpack.c.l.b16 %v535
    %v1404 = vunpack.c.h.b16 %v535
    %v1405 = vunpack.c.l.b16 %v536
    %v1406 = vunpack.c.h.b16 %v536
    %v1407 = vunpack.c.l.b16 %v537
    %v1408 = vunpack.c.h.b16 %v537
    %v1409 = vunpack.c.l.b16 %v538
    %v1410 = vunpack.c.h.b16 %v538
    %v1411 = vunpack.c.l.b16 %v539
    %v1412 = vunpack.c.h.b16 %v539
    %v1413 = vunpack.c.l.b16 %v540
    %v1414 = vunpack.c.h.b16 %v540
    %v1415 = vunpack.c.l.b16 %v541
    %v1416 = vunpack.c.h.b16 %v541
    %v1417 = vunpack.c.l.b16 %v542
    %v1418 = vunpack.c.h.b16 %v542
    %v1419 = vunpack.c.l.b16 %v543
    %v1420 = vunpack.c.h.b16 %v543
    %v1421 = vunpack.c.l.b16 %v544
    %v1422 = vunpack.c.h.b16 %v544
    %v1423 = vpack.c.b16 %v853, %v847
    %v1424 = vpack.c.b16 %v854, %v848
    %v1425 = vpack.c.b16 %v855, %v849
    %v1426 = vpack.c.b16 %v856, %v850
    %v1427 = vpack.c.b16 %v857, %v851
    %v1428 = vpack.c.b16 %v858, %v852
    %v1429 = vpack.c.b16 %v865, %v859
    %v1430 = vpack.c.b16 %v866, %v860
    %v1431 = vpack.c.b16 %v867, %v861
    %v1432 = vpack.c.b16 %v868, %v862
    %v1433 = vpack.c.b16 %v869, %v863
    %v1434 = vpack.c.b16 %v870, %v864
    %v1435 = vpack.c.b16 %v877, %v871
    %v1436 = vpack.c.b16 %v878, %v872
    %v1437 = vpack.c.b16 %v879, %v873
    %v1438 = vpack.c.b16 %v880, %v874
    %v1439 = vpack.c.b16 %v881, %v875
    %v1440 = vpack.c.b16 %v882, %v876
    %v1441 = vpack.c.b16 %v889, %v883
    %v1442 = vpack.c.b16 %v890, %v884
    %v1443 = vpack.c.b16 %v891, %v885
    %v1444 = vpack.c.b16 %v892, %v886
    %v1445 = vpack.c.b16 %v893, %v887
    %v1446 = vpack.c.b16 %v894, %v888
    %v1447 = vpack.c.b16 %v901, %v895
    %v1448 = vpack.c.b16 %v902, %v896
    %v1449 = vpack.c.b16 %v903, %v897
    %v1450 = vpack.c.b16 %v904, %v898
    %v1451 = vpack.c.b16 %v905, %v899
    %v1452 = vpack.c.b16 %v906, %v900
    %v1453 = vpack.c.b16 %v913, %v907
    %v1454 = vpack.c.b16 %v914, %v908
    %v1455 = vpack.c.b16 %v915, %v909
    %v1456 = vpack.c.b16 %v916, %v910
    %v1457 = vpack.c.b16 %v917, %v911
    %v1458 = vpack.c.b16 %v918, %v912
    %v1459 = vpack.c.b16 %v925, %v919
    %v1460 = vpack.c.b16 %v926, %v920
    %v1461 = vpack.c.b16 %v927, %v921
    %v1462 = vpack.c.b16 %v928, %v922
    %v1463 = vpack.c.b16 %v929, %v923
    %v1464 = vpack.c.b16 %v930, %v924
    %v1465 = vpack.c.b16 %v937, %v931
    %v1466 = vpack.c.b16 %v938, %v932
    %v1467 = vpack.c.b16 %v939, %v933
    %v1468 = vpack.c.b16 %v940, %v934
    %v1469 = vpack.c.b16 %v941, %v935
    %v1470 = vpack.c.b16 %v942, %v936
    %v1471 = vpack.c.b16 %v949, %v943
    %v1472 = vpack.c.b16 %v950, %v944
    %v1473 = vpack.c.b16 %v951, %v945
    %v1474 = vpack.c.b16 %v952, %v946
    %v1475 = vpack.c.b16 %v953, %v947
    %v1476 = vpack.c.b16 %v954, %v948
    %v1477 = vpack.c.b16 %v961, %v955
    %v1478 = vpack.c.b16 %v962, %v956
    %v1479 = vpack.c.b16 %v963, %v957
    %v1480 = vpack.c.b16 %v964, %v958
    %v1481 = vpack.c.b16 %v965, %v959
    %v1482 = vpack.c.b16 %v966, %v960
    %v1483 = vpack.c.b16 %v973, %v967
    %v1484 = vpack.c.b16 %v974, %v968
    %v1485 = vpack.c.b16 %v975, %v969
    %v1486 = vpack.c.b16 %v976, %v970
    %v1487 = vpack.c.b16 %v977, %v971
    %v1488 = vpack.c.b16 %v978, %v972
    %v1489 = vpack.c.b16 %v985, %v979
    %v1490 = vpack.c.b16 %v986, %v980
    %v1491 = vpack.c.b16 %v987, %v981
    %v1492 = vpack.c.b16 %v988, %v982
    %v1493 = vpack.c.b16 %v989, %v983
    %v1494 = vpack.c.b16 %v990, %v984
    %v1495 = vpack.c.b16 %v997, %v991
    %v1496 = vpack.c.b16 %v998, %v992
    %v1497 = vpack.c.b16 %v999, %v993
    %v1498 = vpack.c.b16 %v1000, %v994
    %v1499 = vpack.c.b16 %v1001, %v995
    %v1500 = vpack.c.b16 %v1002, %v996
    %v1501 = vpack.c.b16 %v1009, %v1003
    %v1502 = vpack.c.b16 %v1010, %v1004
    %v1503 = vpack.c.b16 %v1011, %v1005
    %v1504 = vpack.c.b16 %v1012, %v1006
    %v1505 = vpack.c.b16 %v1013, %v1007
    %v1506 = vpack.c.b16 %v1014, %v1008
    %v1507 = vpack.c.b16 %v1021, %v1015
    %v1508 = vpack.c.b16 %v1022, %v1016
    %v1509 = vpack.c.b16 %v1023, %v1017
    %v1510 = vpack.c.b16 %v1024, %v1018
    %v1511 = vpack.c.b16 %v1025, %v1019
    %v1512 = vpack.c.b16 %v1026, %v1020
    %v1513 = vpack.c.b16 %v1033, %v1027
    %v1514 = vpack.c.b16 %v1034, %v1028
    %v1515 = vpack.c.b16 %v1035, %v1029
    %v1516 = vpack.c.b16 %v1036, %v1030
    %v1517 = vpack.c.b16 %v1037, %v1031
    %v1518 = vpack.c.b16 %v1038, %v1032
    %v1519 = vpack.c.b16 %v1045, %v1039
    %v1520 = vpack.c.b16 %v1046, %v1040
    %v1521 = vpack.c.b16 %v1047, %v1041
    %v1522 = vpack.c.b16 %v1048, %v1042
    %v1523 = vpack.c.b16 %v1049, %v1043
    %v1524 = vpack.c.b16 %v1050, %v1044
    %v1525 = vpack.c.b16 %v1057, %v1051
    %v1526 = vpack.c.b16 %v1058, %v1052
    %v1527 = vpack.c.b16 %v1059, %v1053
    %v1528 = vpack.c.b16 %v1060, %v1054
    %v1529 = vpack.c.b16 %v1061, %v1055
    %v1530 = vpack.c.b16 %v1062, %v1056
    %v1531 = vpack.c.b16 %v1069, %v1063
    %v1532 = vpack.c.b16 %v1070, %v1064
    %v1533 = vpack.c.b16 %v1071, %v1065
    %v1534 = vpack.c.b16 %v1072, %v1066
    %v1535 = vpack.c.b16 %v1073, %v1067
    %v1536 = vpack.c.b16 %v1074, %v1068
    %v1537 = vpack.c.b16 %v1081, %v1075
    %v1538 = vpack.c.b16 %v1082, %v1076
    %v1539 = vpack.c.b16 %v1083, %v1077
    %v1540 = vpack.c.b16 %v1084, %v1078
    %v1541 = vpack.c.b16 %v1085, %v1079
    %v1542 = vpack.c.b16 %v1086, %v1080
    %v1543 = vpack.c.b16 %v1093, %v1087
    %v1544 = vpack.c.b16 %v1094, %v1088
    %v1545 = vpack.c.b16 %v1095, %v1089
    %v1546 = vpack.c.b16 %v1096, %v1090
    %v1547 = vpack.c.b16 %v1097, %v1091
    %v1548 = vpack.c.b16 %v1098, %v1092
    %v1549 = vpack.c.b16 %v1105, %v1099
    %v1550 = vpack.c.b16 %v1106, %v1100
    %v1551 = vpack.c.b16 %v1107, %v1101
    %v1552 = vpack.c.b16 %v1108, %v1102
    %v1553 = vpack.c.b16 %v1109, %v1103
    %v1554 = vpack.c.b16 %v1110, %v1104
    %v1555 = vpack.c.b16 %v1117, %v1111
    %v1556 = vpack.c.b16 %v1118, %v1112
    %v1557 = vpack.c.b16 %v1119, %v1113
    %v1558 = vpack.c.b16 %v1120, %v1114
    %v1559 = vpack.c.b16 %v1121, %v1115
    %v1560 = vpack.c.b16 %v1122, %v1116
    %v1561 = vpack.c.b16 %v1129, %v1123
    %v1562 = vpack.c.b16 %v1130, %v1124
    %v1563 = vpack.c.b16 %v1131, %v1125
    %v1564 = vpack.c.b16 %v1132, %v1126
    %v1565 = vpack.c.b16 %v1133, %v1127
    %v1566 = vpack.c.b16 %v1134, %v1128
    %v1567 = vpack.c.b16 %v1141, %v1135
    %v1568 = vpack.c.b16 %v1142, %v1136
    %v1569 = vpack.c.b16 %v1143, %v1137
    %v1570 = vpack.c.b16 %v1144, %v1138
    %v1571 = vpack.c.b16 %v1145, %v1139
    %v1572 = vpack.c.b16 %v1146, %v1140
    %v1573 = vpack.c.b16 %v1153, %v1147
    %v1574 = vpack.c.b16 %v1154, %v1148
    %v1575 = vpack.c.b16 %v1155, %v1149
    %v1576 = vpack.c.b16 %v1156, %v1150
    %v1577 = vpack.c.b16 %v1157, %v1151
    %v1578 = vpack.c.b16 %v1158, %v1152
    %v1579 = vpack.c.b16 %v1165, %v1159
    %v1580 = vpack.c.b16 %v1166, %v1160
    %v1581 = vpack.c.b16 %v1167, %v1161
    %v1582 = vpack.c.b16 %v1168, %v1162
    %v1583 = vpack.c.b16 %v1169, %v1163
    %v1584 = vpack.c.b16 %v1170, %v1164
    %v1585 = vpack.c.b16 %v1177, %v1171
    %v1586 = vpack.c.b16 %v1178, %v1172
    %v1587 = vpack.c.b16 %v1179, %v1173
    %v1588 = vpack.c.b16 %v1180, %v1174
    %v1589 = vpack.c.b16 %v1181, %v1175
    %v1590 = vpack.c.b16 %v1182, %v1176
    %v1591 = vpack.c.b16 %v1189, %v1183
    %v1592 = vpack.c.b16 %v1190, %v1184
    %v1593 = vpack.c.b16 %v1191, %v1185
    %v1594 = vpack.c.b16 %v1192, %v1186
    %v1595 = vpack.c.b16 %v1193, %v1187
    %v1596 = vpack.c.b16 %v1194, %v1188
    %v1597 = vpack.c.b16 %v1201, %v1195
    %v1598 = vpack.c.b16 %v1202, %v1196
    %v1599 = vpack.c.b16 %v1203, %v1197
    %v1600 = vpack.c.b16 %v1204, %v1198
    %v1601 = vpack.c.b16 %v1205, %v1199
    %v1602 = vpack.c.b16 %v1206, %v1200
    %v1603 = vpack.c.b16 %v1213, %v1207
    %v1604 = vpack.c.b16 %v1214, %v1208
    %v1605 = vpack.c.b16 %v1215, %v1209
    %v1606 = vpack.c.b16 %v1216, %v1210
    %v1607 = vpack.c.b16 %v1217, %v1211
    %v1608 = vpack.c.b16 %v1218, %v1212
    %v1609 = vpack.c.b16 %v1225, %v1219
    %v1610 = vpack.c.b16 %v1226, %v1220
    %v1611 = vpack.c.b16 %v1227, %v1221
    %v1612 = vpack.c.b16 %v1228, %v1222
    %v1613 = vpack.c.b16 %v1229, %v1223
    %v1614 = vpack.c.b16 %v1230, %v1224
    %v1615 = vpack.c.b16 %v1237, %v1231
    %v1616 = vpack.c.b16 %v1238, %v1232
    %v1617 = vpack.c.b16 %v1239, %v1233
    %v1618 = vpack.c.b16 %v1240, %v1234
    %v1619 = vpack.c.b16 %v1241, %v1235
    %v1620 = vpack.c.b16 %v1242, %v1236
    %v1621 = vpack.c.b16 %v1249, %v1243
    %v1622 = vpack.c.b16 %v1250, %v1244
    %v1623 = vpack.c.b16 %v1251, %v1245
    %v1624 = vpack.c.b16 %v1252, %v1246
    %v1625 = vpack.c.b16 %v1253, %v1247
    %v1626 = vpack.c.b16 %v1254, %v1248
    %v1627 = vpack.c.b16 %v1261, %v1255
    %v1628 = vpack.c.b16 %v1262, %v1256
    %v1629 = vpack.c.b16 %v1263, %v1257
    %v1630 = vpack.c.b16 %v1264, %v1258
    %v1631 = vpack.c.b16 %v1265, %v1259
    %v1632 = vpack.c.b16 %v1266, %v1260
    %v1633 = vpack.c.b16 %v1273, %v1267
    %v1634 = vpack.c.b16 %v1274, %v1268
    %v1635 = vpack.c.b16 %v1275, %v1269
    %v1636 = vpack.c.b16 %v1276, %v1270
    %v1637 = vpack.c.b16 %v1277, %v1271
    %v1638 = vpack.c.b16 %v1278, %v1272
    %v1639 = vpack.c.b16 %v1285, %v1279
    %v1640 = vpack.c.b16 %v1286, %v1280
    %v1641 = vpack.c.b16 %v1287, %v1281
    %v1642 = vpack.c.b16 %v1288, %v1282
    %v1643 = vpack.c.b16 %v1289, %v1283
    %v1644 = vpack.c.b16 %v1290, %v1284
    %v1645 = vpack.c.b16 %v1297, %v1291
    %v1646 = vpack.c.b16 %v1298, %v1292
    %v1647 = vpack.c.b16 %v1299, %v1293
    %v1648 = vpack.c.b16 %v1300, %v1294
    %v1649 = vpack.c.b16 %v1301, %v1295
    %v1650 = vpack.c.b16 %v1302, %v1296
    %v1651 = vpack.c.b16 %v1309, %v1303
    %v1652 = vpack.c.b16 %v1310, %v1304
    %v1653 = vpack.c.b16 %v1311, %v1305
    %v1654 = vpack.c.b16 %v1312, %v1306
    %v1655 = vpack.c.b16 %v1313, %v1307
    %v1656 = vpack.c.b16 %v1314, %v1308
    %v1657 = vpack.c.b16 %v1321, %v1315
    %v1658 = vpack.c.b16 %v1322, %v1316
    %v1659 = vpack.c.b16 %v1323, %v1317
    %v1660 = vpack.c.b16 %v1324, %v1318
    %v1661 = vpack.c.b16 %v1325, %v1319
    %v1662 = vpack.c.b16 %v1326, %v1320
    %v1663 = vpack.c.b16 %v1333, %v1327
    %v1664 = vpack.c.b16 %v1334, %v1328
    %v1665 = vpack.c.b16 %v1335, %v1329
    %v1666 = vpack.c.b16 %v1336, %v1330
    %v1667 = vpack.c.b16 %v1337, %v1331
    %v1668 = vpack.c.b16 %v1338, %v1332
    %v1669 = vpack.c.b16 %v1345, %v1339
    %v1670 = vpack.c.b16 %v1346, %v1340
    %v1671 = vpack.c.b16 %v1347, %v1341
    %v1672 = vpack.c.b16 %v1348, %v1342
    %v1673 = vpack.c.b16 %v1349, %v1343
    %v1674 = vpack.c.b16 %v1350, %v1344
    %v1675 = vpack.c.b16 %v1357, %v1351
    %v1676 = vpack.c.b16 %v1358, %v1352
    %v1677 = vpack.c.b16 %v1359, %v1353
    %v1678 = vpack.c.b16 %v1360, %v1354
    %v1679 = vpack.c.b16 %v1361, %v1355
    %v1680 = vpack.c.b16 %v1362, %v1356
    %v1681 = vpack.c.b16 %v1369, %v1363
    %v1682 = vpack.c.b16 %v1370, %v1364
    %v1683 = vpack.c.b16 %v1371, %v1365
    %v1684 = vpack.c.b16 %v1372, %v1366
    %v1685 = vpack.c.b16 %v1373, %v1367
    %v1686 = vpack.c.b16 %v1374, %v1368
    %v1687 = vpack.c.b16 %v1381, %v1375
    %v1688 = vpack.c.b16 %v1382, %v1376
    %v1689 = vpack.c.b16 %v1383, %v1377
    %v1690 = vpack.c.b16 %v1384, %v1378
    %v1691 = vpack.c.b16 %v1385, %v1379
    %v1692 = vpack.c.b16 %v1386, %v1380
    %v1693 = vpack.c.b16 %v1393, %v1387
    %v1694 = vpack.c.b16 %v1394, %v1388
    %v1695 = vpack.c.b16 %v1395, %v1389
    %v1696 = vpack.c.b16 %v1396, %v1390
    %v1697 = vpack.c.b16 %v1397, %v1391
    %v1698 = vpack.c.b16 %v1398, %v1392
    %v1699 = vpack.c.b16 %v1405, %v1399
    %v1700 = vpack.c.b16 %v1406, %v1400
    %v1701 = vpack.c.b16 %v1407, %v1401
    %v1702 = vpack.c.b16 %v1408, %v1402
    %v1703 = vpack.c.b16 %v1409, %v1403
    %v1704 = vpack.c.b16 %v1410, %v1404
    %v1705 = vpack.c.b16 %v1417, %v1411
    %v1706 = vpack.c.b16 %v1418, %v1412
    %v1707 = vpack.c.b16 %v1419, %v1413
    %v1708 = vpack.c.b16 %v1420, %v1414
    %v1709 = vpack.c.b16 %v1421, %v1415
    %v1710 = vpack.c.b16 %v1422, %v1416
    %1999 = vmatpush.bf16.msra.mxu0 %v1465
    %2000 = vmatpush.bf16.msra.mxu0 %v1459
    %2001 = vmatpush.bf16.msra.mxu0 %v1453
    %2002 = vmatpush.bf16.msra.mxu0 %v1447
    %2003 = vmatpush.bf16.msra.mxu0 %v1441
    %2004 = vmatpush.bf16.msra.mxu0 %v1435
    %2005 = vmatpush.bf16.msra.mxu0 %v1429
    %2006 = vmatpush.bf16.msra.mxu0 %v1423
    %2007 = vmatmul.bf16.gmra.mxu0 %v215
    %v2008 = vpop.f32.mrf.mxu0
    %v2009 = vadd.f32 %v547, %v2008
    %v2010 = vpop.f32.mrf.mxu0
    %v2011 = vadd.f32 %v547, %v2010
    %2012 = vdwg.mxu0
    %2013 = vmatpush.bf16.msra.mxu0 %v1513
    %2014 = vmatpush.bf16.msra.mxu0 %v1507
    %2015 = vmatpush.bf16.msra.mxu0 %v1501
    %2016 = vmatpush.bf16.msra.mxu0 %v1495
    %2017 = vmatpush.bf16.msra.mxu0 %v1489
    %2018 = vmatpush.bf16.msra.mxu0 %v1483
    %2019 = vmatpush.bf16.msra.mxu0 %v1477
    %2020 = vmatpush.bf16.msra.mxu0 %v1471
    %2021 = vmatmul.bf16.gmra.mxu0 %v216
    %v2022 = vpop.f32.mrf.mxu0
    %v2023 = vadd.f32 %v2009, %v2022
    %v2024 = vpop.f32.mrf.mxu0
    %v2025 = vadd.f32 %v2011, %v2024
    %2026 = vdwg.mxu0
    %2027 = vmatpush.bf16.msra.mxu0 %v1561
    %2028 = vmatpush.bf16.msra.mxu0 %v1555
    %2029 = vmatpush.bf16.msra.mxu0 %v1549
    %2030 = vmatpush.bf16.msra.mxu0 %v1543
    %2031 = vmatpush.bf16.msra.mxu0 %v1537
    %2032 = vmatpush.bf16.msra.mxu0 %v1531
    %2033 = vmatpush.bf16.msra.mxu0 %v1525
    %2034 = vmatpush.bf16.msra.mxu0 %v1519
    %2035 = vmatmul.bf16.gmra.mxu0 %v217
    %v2036 = vpop.f32.mrf.mxu0
    %v2037 = vadd.f32 %v2023, %v2036
    %v2038 = vpop.f32.mrf.mxu0
    %v2039 = vadd.f32 %v2025, %v2038
    %2040 = vdwg.mxu0
    %2041 = vmatpush.bf16.msra.mxu0 %v1609
    %2042 = vmatpush.bf16.msra.mxu0 %v1603
    %2043 = vmatpush.bf16.msra.mxu0 %v1597
    %2044 = vmatpush.bf16.msra.mxu0 %v1591
    %2045 = vmatpush.bf16.msra.mxu0 %v1585
    %2046 = vmatpush.bf16.msra.mxu0 %v1579
    %2047 = vmatpush.bf16.msra.mxu0 %v1573
    %2048 = vmatpush.bf16.msra.mxu0 %v1567
    %2049 = vmatmul.bf16.gmra.mxu0 %v218
    %v2050 = vpop.f32.mrf.mxu0
    %v2051 = vadd.f32 %v2037, %v2050
    %v2052 = vpop.f32.mrf.mxu0
    %v2053 = vadd.f32 %v2039, %v2052
    %2054 = vdwg.mxu0
    %2055 = vmatpush.bf16.msra.mxu0 %v1657
    %2056 = vmatpush.bf16.msra.mxu0 %v1651
    %2057 = vmatpush.bf16.msra.mxu0 %v1645
    %2058 = vmatpush.bf16.msra.mxu0 %v1639
    %2059 = vmatpush.bf16.msra.mxu0 %v1633
    %2060 = vmatpush.bf16.msra.mxu0 %v1627
    %2061 = vmatpush.bf16.msra.mxu0 %v1621
    %2062 = vmatpush.bf16.msra.mxu0 %v1615
    %2063 = vmatmul.bf16.gmra.mxu0 %v219
    %v2064 = vpop.f32.mrf.mxu0
    %v2065 = vadd.f32 %v2051, %v2064
    %v2066 = vpop.f32.mrf.mxu0
    %v2067 = vadd.f32 %v2053, %v2066
    %2068 = vdwg.mxu0
    %2069 = vmatpush.bf16.msra.mxu0 %v1705
    %2070 = vmatpush.bf16.msra.mxu0 %v1699
    %2071 = vmatpush.bf16.msra.mxu0 %v1693
    %2072 = vmatpush.bf16.msra.mxu0 %v1687
    %2073 = vmatpush.bf16.msra.mxu0 %v1681
    %2074 = vmatpush.bf16.msra.mxu0 %v1675
    %2075 = vmatpush.bf16.msra.mxu0 %v1669
    %2076 = vmatpush.bf16.msra.mxu0 %v1663
    %2077 = vmatmul.bf16.gmra.mxu0 %v220
    %v2078 = vpop.f32.mrf.mxu0
    %v2079 = vadd.f32 %v2065, %v2078
    %v2080 = vpop.f32.mrf.mxu0
    %v2081 = vadd.f32 %v2067, %v2080
    %2082 = vdwg.mxu0
    %2083 = vmatpush.bf16.msra.mxu0 %v1466
    %2084 = vmatpush.bf16.msra.mxu0 %v1460
    %2085 = vmatpush.bf16.msra.mxu0 %v1454
    %2086 = vmatpush.bf16.msra.mxu0 %v1448
    %2087 = vmatpush.bf16.msra.mxu0 %v1442
    %2088 = vmatpush.bf16.msra.mxu0 %v1436
    %2089 = vmatpush.bf16.msra.mxu0 %v1430
    %2090 = vmatpush.bf16.msra.mxu0 %v1424
    %2091 = vmatmul.bf16.gmra.mxu0 %v215
    %v2092 = vpop.f32.mrf.mxu0
    %v2093 = vadd.f32 %v548, %v2092
    %v2094 = vpop.f32.mrf.mxu0
    %v2095 = vadd.f32 %v548, %v2094
    %2096 = vdwg.mxu0
    %2097 = vmatpush.bf16.msra.mxu0 %v1514
    %2098 = vmatpush.bf16.msra.mxu0 %v1508
    %2099 = vmatpush.bf16.msra.mxu0 %v1502
    %2100 = vmatpush.bf16.msra.mxu0 %v1496
    %2101 = vmatpush.bf16.msra.mxu0 %v1490
    %2102 = vmatpush.bf16.msra.mxu0 %v1484
    %2103 = vmatpush.bf16.msra.mxu0 %v1478
    %2104 = vmatpush.bf16.msra.mxu0 %v1472
    %2105 = vmatmul.bf16.gmra.mxu0 %v216
    %v2106 = vpop.f32.mrf.mxu0
    %v2107 = vadd.f32 %v2093, %v2106
    %v2108 = vpop.f32.mrf.mxu0
    %v2109 = vadd.f32 %v2095, %v2108
    %2110 = vdwg.mxu0
    %2111 = vmatpush.bf16.msra.mxu0 %v1562
    %2112 = vmatpush.bf16.msra.mxu0 %v1556
    %2113 = vmatpush.bf16.msra.mxu0 %v1550
    %2114 = vmatpush.bf16.msra.mxu0 %v1544
    %2115 = vmatpush.bf16.msra.mxu0 %v1538
    %2116 = vmatpush.bf16.msra.mxu0 %v1532
    %2117 = vmatpush.bf16.msra.mxu0 %v1526
    %2118 = vmatpush.bf16.msra.mxu0 %v1520
    %2119 = vmatmul.bf16.gmra.mxu0 %v217
    %v2120 = vpop.f32.mrf.mxu0
    %v2121 = vadd.f32 %v2107, %v2120
    %v2122 = vpop.f32.mrf.mxu0
    %v2123 = vadd.f32 %v2109, %v2122
    %2124 = vdwg.mxu0
    %2125 = vmatpush.bf16.msra.mxu0 %v1610
    %2126 = vmatpush.bf16.msra.mxu0 %v1604
    %2127 = vmatpush.bf16.msra.mxu0 %v1598
    %2128 = vmatpush.bf16.msra.mxu0 %v1592
    %2129 = vmatpush.bf16.msra.mxu0 %v1586
    %2130 = vmatpush.bf16.msra.mxu0 %v1580
    %2131 = vmatpush.bf16.msra.mxu0 %v1574
    %2132 = vmatpush.bf16.msra.mxu0 %v1568
    %2133 = vmatmul.bf16.gmra.mxu0 %v218
    %v2134 = vpop.f32.mrf.mxu0
    %v2135 = vadd.f32 %v2121, %v2134
    %v2136 = vpop.f32.mrf.mxu0
    %v2137 = vadd.f32 %v2123, %v2136
    %2138 = vdwg.mxu0
    %2139 = vmatpush.bf16.msra.mxu0 %v1658
    %2140 = vmatpush.bf16.msra.mxu0 %v1652
    %2141 = vmatpush.bf16.msra.mxu0 %v1646
    %2142 = vmatpush.bf16.msra.mxu0 %v1640
    %2143 = vmatpush.bf16.msra.mxu0 %v1634
    %2144 = vmatpush.bf16.msra.mxu0 %v1628
    %2145 = vmatpush.bf16.msra.mxu0 %v1622
    %2146 = vmatpush.bf16.msra.mxu0 %v1616
    %2147 = vmatmul.bf16.gmra.mxu0 %v219
    %v2148 = vpop.f32.mrf.mxu0
    %v2149 = vadd.f32 %v2135, %v2148
    %v2150 = vpop.f32.mrf.mxu0
    %v2151 = vadd.f32 %v2137, %v2150
    %2152 = vdwg.mxu0
    %2153 = vmatpush.bf16.msra.mxu0 %v1706
    %2154 = vmatpush.bf16.msra.mxu0 %v1700
    %2155 = vmatpush.bf16.msra.mxu0 %v1694
    %2156 = vmatpush.bf16.msra.mxu0 %v1688
    %2157 = vmatpush.bf16.msra.mxu0 %v1682
    %2158 = vmatpush.bf16.msra.mxu0 %v1676
    %2159 = vmatpush.bf16.msra.mxu0 %v1670
    %2160 = vmatpush.bf16.msra.mxu0 %v1664
    %2161 = vmatmul.bf16.gmra.mxu0 %v220
    %v2162 = vpop.f32.mrf.mxu0
    %v2163 = vadd.f32 %v2149, %v2162
    %v2164 = vpop.f32.mrf.mxu0
    %v2165 = vadd.f32 %v2151, %v2164
    %2166 = vdwg.mxu0
    %2167 = vmatpush.bf16.msra.mxu0 %v1467
    %2168 = vmatpush.bf16.msra.mxu0 %v1461
    %2169 = vmatpush.bf16.msra.mxu0 %v1455
    %2170 = vmatpush.bf16.msra.mxu0 %v1449
    %2171 = vmatpush.bf16.msra.mxu0 %v1443
    %2172 = vmatpush.bf16.msra.mxu0 %v1437
    %2173 = vmatpush.bf16.msra.mxu0 %v1431
    %2174 = vmatpush.bf16.msra.mxu0 %v1425
    %2175 = vmatmul.bf16.gmra.mxu0 %v215
    %v2176 = vpop.f32.mrf.mxu0
    %v2177 = vadd.f32 %v549, %v2176
    %v2178 = vpop.f32.mrf.mxu0
    %v2179 = vadd.f32 %v549, %v2178
    %2180 = vdwg.mxu0
    %2181 = vmatpush.bf16.msra.mxu0 %v1515
    %2182 = vmatpush.bf16.msra.mxu0 %v1509
    %2183 = vmatpush.bf16.msra.mxu0 %v1503
    %2184 = vmatpush.bf16.msra.mxu0 %v1497
    %2185 = vmatpush.bf16.msra.mxu0 %v1491
    %2186 = vmatpush.bf16.msra.mxu0 %v1485
    %2187 = vmatpush.bf16.msra.mxu0 %v1479
    %2188 = vmatpush.bf16.msra.mxu0 %v1473
    %2189 = vmatmul.bf16.gmra.mxu0 %v216
    %v2190 = vpop.f32.mrf.mxu0
    %v2191 = vadd.f32 %v2177, %v2190
    %v2192 = vpop.f32.mrf.mxu0
    %v2193 = vadd.f32 %v2179, %v2192
    %2194 = vdwg.mxu0
    %2195 = vmatpush.bf16.msra.mxu0 %v1563
    %2196 = vmatpush.bf16.msra.mxu0 %v1557
    %2197 = vmatpush.bf16.msra.mxu0 %v1551
    %2198 = vmatpush.bf16.msra.mxu0 %v1545
    %2199 = vmatpush.bf16.msra.mxu0 %v1539
    %2200 = vmatpush.bf16.msra.mxu0 %v1533
    %2201 = vmatpush.bf16.msra.mxu0 %v1527
    %2202 = vmatpush.bf16.msra.mxu0 %v1521
    %2203 = vmatmul.bf16.gmra.mxu0 %v217
    %v2204 = vpop.f32.mrf.mxu0
    %v2205 = vadd.f32 %v2191, %v2204
    %v2206 = vpop.f32.mrf.mxu0
    %v2207 = vadd.f32 %v2193, %v2206
    %2208 = vdwg.mxu0
    %2209 = vmatpush.bf16.msra.mxu0 %v1611
    %2210 = vmatpush.bf16.msra.mxu0 %v1605
    %2211 = vmatpush.bf16.msra.mxu0 %v1599
    %2212 = vmatpush.bf16.msra.mxu0 %v1593
    %2213 = vmatpush.bf16.msra.mxu0 %v1587
    %2214 = vmatpush.bf16.msra.mxu0 %v1581
    %2215 = vmatpush.bf16.msra.mxu0 %v1575
    %2216 = vmatpush.bf16.msra.mxu0 %v1569
    %2217 = vmatmul.bf16.gmra.mxu0 %v218
    %v2218 = vpop.f32.mrf.mxu0
    %v2219 = vadd.f32 %v2205, %v2218
    %v2220 = vpop.f32.mrf.mxu0
    %v2221 = vadd.f32 %v2207, %v2220
    %2222 = vdwg.mxu0
    %2223 = vmatpush.bf16.msra.mxu0 %v1659
    %2224 = vmatpush.bf16.msra.mxu0 %v1653
    %2225 = vmatpush.bf16.msra.mxu0 %v1647
    %2226 = vmatpush.bf16.msra.mxu0 %v1641
    %2227 = vmatpush.bf16.msra.mxu0 %v1635
    %2228 = vmatpush.bf16.msra.mxu0 %v1629
    %2229 = vmatpush.bf16.msra.mxu0 %v1623
    %2230 = vmatpush.bf16.msra.mxu0 %v1617
    %2231 = vmatmul.bf16.gmra.mxu0 %v219
    %v2232 = vpop.f32.mrf.mxu0
    %v2233 = vadd.f32 %v2219, %v2232
    %v2234 = vpop.f32.mrf.mxu0
    %v2235 = vadd.f32 %v2221, %v2234
    %2236 = vdwg.mxu0
    %2237 = vmatpush.bf16.msra.mxu0 %v1707
    %2238 = vmatpush.bf16.msra.mxu0 %v1701
    %2239 = vmatpush.bf16.msra.mxu0 %v1695
    %2240 = vmatpush.bf16.msra.mxu0 %v1689
    %2241 = vmatpush.bf16.msra.mxu0 %v1683
    %2242 = vmatpush.bf16.msra.mxu0 %v1677
    %2243 = vmatpush.bf16.msra.mxu0 %v1671
    %2244 = vmatpush.bf16.msra.mxu0 %v1665
    %2245 = vmatmul.bf16.gmra.mxu0 %v220
    %v2246 = vpop.f32.mrf.mxu0
    %v2247 = vadd.f32 %v2233, %v2246
    %v2248 = vpop.f32.mrf.mxu0
    %v2249 = vadd.f32 %v2235, %v2248
    %2250 = vdwg.mxu0
    %2251 = vmatpush.bf16.msra.mxu0 %v1468
    %2252 = vmatpush.bf16.msra.mxu0 %v1462
    %2253 = vmatpush.bf16.msra.mxu0 %v1456
    %2254 = vmatpush.bf16.msra.mxu0 %v1450
    %2255 = vmatpush.bf16.msra.mxu0 %v1444
    %2256 = vmatpush.bf16.msra.mxu0 %v1438
    %2257 = vmatpush.bf16.msra.mxu0 %v1432
    %2258 = vmatpush.bf16.msra.mxu0 %v1426
    %2259 = vmatmul.bf16.gmra.mxu0 %v215
    %v2260 = vpop.f32.mrf.mxu0
    %v2261 = vadd.f32 %v550, %v2260
    %v2262 = vpop.f32.mrf.mxu0
    %v2263 = vadd.f32 %v550, %v2262
    %2264 = vdwg.mxu0
    %2265 = vmatpush.bf16.msra.mxu0 %v1516
    %2266 = vmatpush.bf16.msra.mxu0 %v1510
    %2267 = vmatpush.bf16.msra.mxu0 %v1504
    %2268 = vmatpush.bf16.msra.mxu0 %v1498
    %2269 = vmatpush.bf16.msra.mxu0 %v1492
    %2270 = vmatpush.bf16.msra.mxu0 %v1486
    %2271 = vmatpush.bf16.msra.mxu0 %v1480
    %2272 = vmatpush.bf16.msra.mxu0 %v1474
    %2273 = vmatmul.bf16.gmra.mxu0 %v216
    %v2274 = vpop.f32.mrf.mxu0
    %v2275 = vadd.f32 %v2261, %v2274
    %v2276 = vpop.f32.mrf.mxu0
    %v2277 = vadd.f32 %v2263, %v2276
    %2278 = vdwg.mxu0
    %2279 = vmatpush.bf16.msra.mxu0 %v1564
    %2280 = vmatpush.bf16.msra.mxu0 %v1558
    %2281 = vmatpush.bf16.msra.mxu0 %v1552
    %2282 = vmatpush.bf16.msra.mxu0 %v1546
    %2283 = vmatpush.bf16.msra.mxu0 %v1540
    %2284 = vmatpush.bf16.msra.mxu0 %v1534
    %2285 = vmatpush.bf16.msra.mxu0 %v1528
    %2286 = vmatpush.bf16.msra.mxu0 %v1522
    %2287 = vmatmul.bf16.gmra.mxu0 %v217
    %v2288 = vpop.f32.mrf.mxu0
    %v2289 = vadd.f32 %v2275, %v2288
    %v2290 = vpop.f32.mrf.mxu0
    %v2291 = vadd.f32 %v2277, %v2290
    %2292 = vdwg.mxu0
    %2293 = vmatpush.bf16.msra.mxu0 %v1612
    %2294 = vmatpush.bf16.msra.mxu0 %v1606
    %2295 = vmatpush.bf16.msra.mxu0 %v1600
    %2296 = vmatpush.bf16.msra.mxu0 %v1594
    %2297 = vmatpush.bf16.msra.mxu0 %v1588
    %2298 = vmatpush.bf16.msra.mxu0 %v1582
    %2299 = vmatpush.bf16.msra.mxu0 %v1576
    %2300 = vmatpush.bf16.msra.mxu0 %v1570
    %2301 = vmatmul.bf16.gmra.mxu0 %v218
    %v2302 = vpop.f32.mrf.mxu0
    %v2303 = vadd.f32 %v2289, %v2302
    %v2304 = vpop.f32.mrf.mxu0
    %v2305 = vadd.f32 %v2291, %v2304
    %2306 = vdwg.mxu0
    %2307 = vmatpush.bf16.msra.mxu0 %v1660
    %2308 = vmatpush.bf16.msra.mxu0 %v1654
    %2309 = vmatpush.bf16.msra.mxu0 %v1648
    %2310 = vmatpush.bf16.msra.mxu0 %v1642
    %2311 = vmatpush.bf16.msra.mxu0 %v1636
    %2312 = vmatpush.bf16.msra.mxu0 %v1630
    %2313 = vmatpush.bf16.msra.mxu0 %v1624
    %2314 = vmatpush.bf16.msra.mxu0 %v1618
    %2315 = vmatmul.bf16.gmra.mxu0 %v219
    %v2316 = vpop.f32.mrf.mxu0
    %v2317 = vadd.f32 %v2303, %v2316
    %v2318 = vpop.f32.mrf.mxu0
    %v2319 = vadd.f32 %v2305, %v2318
    %2320 = vdwg.mxu0
    %2321 = vmatpush.bf16.msra.mxu0 %v1708
    %2322 = vmatpush.bf16.msra.mxu0 %v1702
    %2323 = vmatpush.bf16.msra.mxu0 %v1696
    %2324 = vmatpush.bf16.msra.mxu0 %v1690
    %2325 = vmatpush.bf16.msra.mxu0 %v1684
    %2326 = vmatpush.bf16.msra.mxu0 %v1678
    %2327 = vmatpush.bf16.msra.mxu0 %v1672
    %2328 = vmatpush.bf16.msra.mxu0 %v1666
    %2329 = vmatmul.bf16.gmra.mxu0 %v220
    %v2330 = vpop.f32.mrf.mxu0
    %v2331 = vadd.f32 %v2317, %v2330
    %v2332 = vpop.f32.mrf.mxu0
    %v2333 = vadd.f32 %v2319, %v2332
    %2334 = vdwg.mxu0
    %2335 = vmatpush.bf16.msra.mxu0 %v1469
    %2336 = vmatpush.bf16.msra.mxu0 %v1463
    %2337 = vmatpush.bf16.msra.mxu0 %v1457
    %2338 = vmatpush.bf16.msra.mxu0 %v1451
    %2339 = vmatpush.bf16.msra.mxu0 %v1445
    %2340 = vmatpush.bf16.msra.mxu0 %v1439
    %2341 = vmatpush.bf16.msra.mxu0 %v1433
    %2342 = vmatpush.bf16.msra.mxu0 %v1427
    %2343 = vmatmul.bf16.gmra.mxu0 %v215
    %v2344 = vpop.f32.mrf.mxu0
    %v2345 = vadd.f32 %v551, %v2344
    %v2346 = vpop.f32.mrf.mxu0
    %v2347 = vadd.f32 %v551, %v2346
    %2348 = vdwg.mxu0
    %2349 = vmatpush.bf16.msra.mxu0 %v1517
    %2350 = vmatpush.bf16.msra.mxu0 %v1511
    %2351 = vmatpush.bf16.msra.mxu0 %v1505
    %2352 = vmatpush.bf16.msra.mxu0 %v1499
    %2353 = vmatpush.bf16.msra.mxu0 %v1493
    %2354 = vmatpush.bf16.msra.mxu0 %v1487
    %2355 = vmatpush.bf16.msra.mxu0 %v1481
    %2356 = vmatpush.bf16.msra.mxu0 %v1475
    %2357 = vmatmul.bf16.gmra.mxu0 %v216
    %v2358 = vpop.f32.mrf.mxu0
    %v2359 = vadd.f32 %v2345, %v2358
    %v2360 = vpop.f32.mrf.mxu0
    %v2361 = vadd.f32 %v2347, %v2360
    %2362 = vdwg.mxu0
    %2363 = vmatpush.bf16.msra.mxu0 %v1565
    %2364 = vmatpush.bf16.msra.mxu0 %v1559
    %2365 = vmatpush.bf16.msra.mxu0 %v1553
    %2366 = vmatpush.bf16.msra.mxu0 %v1547
    %2367 = vmatpush.bf16.msra.mxu0 %v1541
    %2368 = vmatpush.bf16.msra.mxu0 %v1535
    %2369 = vmatpush.bf16.msra.mxu0 %v1529
    %2370 = vmatpush.bf16.msra.mxu0 %v1523
    %2371 = vmatmul.bf16.gmra.mxu0 %v217
    %v2372 = vpop.f32.mrf.mxu0
    %v2373 = vadd.f32 %v2359, %v2372
    %v2374 = vpop.f32.mrf.mxu0
    %v2375 = vadd.f32 %v2361, %v2374
    %2376 = vdwg.mxu0
    %2377 = vmatpush.bf16.msra.mxu0 %v1613
    %2378 = vmatpush.bf16.msra.mxu0 %v1607
    %2379 = vmatpush.bf16.msra.mxu0 %v1601
    %2380 = vmatpush.bf16.msra.mxu0 %v1595
    %2381 = vmatpush.bf16.msra.mxu0 %v1589
    %2382 = vmatpush.bf16.msra.mxu0 %v1583
    %2383 = vmatpush.bf16.msra.mxu0 %v1577
    %2384 = vmatpush.bf16.msra.mxu0 %v1571
    %2385 = vmatmul.bf16.gmra.mxu0 %v218
    %v2386 = vpop.f32.mrf.mxu0
    %v2387 = vadd.f32 %v2373, %v2386
    %v2388 = vpop.f32.mrf.mxu0
    %v2389 = vadd.f32 %v2375, %v2388
    %2390 = vdwg.mxu0
    %2391 = vmatpush.bf16.msra.mxu0 %v1661
    %2392 = vmatpush.bf16.msra.mxu0 %v1655
    %2393 = vmatpush.bf16.msra.mxu0 %v1649
    %2394 = vmatpush.bf16.msra.mxu0 %v1643
    %2395 = vmatpush.bf16.msra.mxu0 %v1637
    %2396 = vmatpush.bf16.msra.mxu0 %v1631
    %2397 = vmatpush.bf16.msra.mxu0 %v1625
    %2398 = vmatpush.bf16.msra.mxu0 %v1619
    %2399 = vmatmul.bf16.gmra.mxu0 %v219
    %v2400 = vpop.f32.mrf.mxu0
    %v2401 = vadd.f32 %v2387, %v2400
    %v2402 = vpop.f32.mrf.mxu0
    %v2403 = vadd.f32 %v2389, %v2402
    %2404 = vdwg.mxu0
    %2405 = vmatpush.bf16.msra.mxu0 %v1709
    %2406 = vmatpush.bf16.msra.mxu0 %v1703
    %2407 = vmatpush.bf16.msra.mxu0 %v1697
    %2408 = vmatpush.bf16.msra.mxu0 %v1691
    %2409 = vmatpush.bf16.msra.mxu0 %v1685
    %2410 = vmatpush.bf16.msra.mxu0 %v1679
    %2411 = vmatpush.bf16.msra.mxu0 %v1673
    %2412 = vmatpush.bf16.msra.mxu0 %v1667
    %2413 = vmatmul.bf16.gmra.mxu0 %v220
    %v2414 = vpop.f32.mrf.mxu0
    %v2415 = vadd.f32 %v2401, %v2414
    %v2416 = vpop.f32.mrf.mxu0
    %v2417 = vadd.f32 %v2403, %v2416
    %2418 = vdwg.mxu0
    %2419 = vmatpush.bf16.msra.mxu0 %v1470
    %2420 = vmatpush.bf16.msra.mxu0 %v1464
    %2421 = vmatpush.bf16.msra.mxu0 %v1458
    %2422 = vmatpush.bf16.msra.mxu0 %v1452
    %2423 = vmatpush.bf16.msra.mxu0 %v1446
    %2424 = vmatpush.bf16.msra.mxu0 %v1440
    %2425 = vmatpush.bf16.msra.mxu0 %v1434
    %2426 = vmatpush.bf16.msra.mxu0 %v1428
    %2427 = vmatmul.bf16.gmra.mxu0 %v215
    %v2428 = vpop.f32.mrf.mxu0
    %v2429 = vadd.f32 %v552, %v2428
    %v2430 = vpop.f32.mrf.mxu0
    %v2431 = vadd.f32 %v552, %v2430
    %2432 = vdwg.mxu0
    %2433 = vmatpush.bf16.msra.mxu0 %v1518
    %2434 = vmatpush.bf16.msra.mxu0 %v1512
    %2435 = vmatpush.bf16.msra.mxu0 %v1506
    %2436 = vmatpush.bf16.msra.mxu0 %v1500
    %2437 = vmatpush.bf16.msra.mxu0 %v1494
    %2438 = vmatpush.bf16.msra.mxu0 %v1488
    %2439 = vmatpush.bf16.msra.mxu0 %v1482
    %2440 = vmatpush.bf16.msra.mxu0 %v1476
    %2441 = vmatmul.bf16.gmra.mxu0 %v216
    %v2442 = vpop.f32.mrf.mxu0
    %v2443 = vadd.f32 %v2429, %v2442
    %v2444 = vpop.f32.mrf.mxu0
    %v2445 = vadd.f32 %v2431, %v2444
    %2446 = vdwg.mxu0
    %2447 = vmatpush.bf16.msra.mxu0 %v1566
    %2448 = vmatpush.bf16.msra.mxu0 %v1560
    %2449 = vmatpush.bf16.msra.mxu0 %v1554
    %2450 = vmatpush.bf16.msra.mxu0 %v1548
    %2451 = vmatpush.bf16.msra.mxu0 %v1542
    %2452 = vmatpush.bf16.msra.mxu0 %v1536
    %2453 = vmatpush.bf16.msra.mxu0 %v1530
    %2454 = vmatpush.bf16.msra.mxu0 %v1524
    %2455 = vmatmul.bf16.gmra.mxu0 %v217
    %v2456 = vpop.f32.mrf.mxu0
    %v2457 = vadd.f32 %v2443, %v2456
    %v2458 = vpop.f32.mrf.mxu0
    %v2459 = vadd.f32 %v2445, %v2458
    %2460 = vdwg.mxu0
    %2461 = vmatpush.bf16.msra.mxu0 %v1614
    %2462 = vmatpush.bf16.msra.mxu0 %v1608
    %2463 = vmatpush.bf16.msra.mxu0 %v1602
    %2464 = vmatpush.bf16.msra.mxu0 %v1596
    %2465 = vmatpush.bf16.msra.mxu0 %v1590
    %2466 = vmatpush.bf16.msra.mxu0 %v1584
    %2467 = vmatpush.bf16.msra.mxu0 %v1578
    %2468 = vmatpush.bf16.msra.mxu0 %v1572
    %2469 = vmatmul.bf16.gmra.mxu0 %v218
    %v2470 = vpop.f32.mrf.mxu0
    %v2471 = vadd.f32 %v2457, %v2470
    %v2472 = vpop.f32.mrf.mxu0
    %v2473 = vadd.f32 %v2459, %v2472
    %2474 = vdwg.mxu0
    %2475 = vmatpush.bf16.msra.mxu0 %v1662
    %2476 = vmatpush.bf16.msra.mxu0 %v1656
    %2477 = vmatpush.bf16.msra.mxu0 %v1650
    %2478 = vmatpush.bf16.msra.mxu0 %v1644
    %2479 = vmatpush.bf16.msra.mxu0 %v1638
    %2480 = vmatpush.bf16.msra.mxu0 %v1632
    %2481 = vmatpush.bf16.msra.mxu0 %v1626
    %2482 = vmatpush.bf16.msra.mxu0 %v1620
    %2483 = vmatmul.bf16.gmra.mxu0 %v219
    %v2484 = vpop.f32.mrf.mxu0
    %v2485 = vadd.f32 %v2471, %v2484
    %v2486 = vpop.f32.mrf.mxu0
    %v2487 = vadd.f32 %v2473, %v2486
    %2488 = vdwg.mxu0
    %2489 = vmatpush.bf16.msra.mxu0 %v1710
    %2490 = vmatpush.bf16.msra.mxu0 %v1704
    %2491 = vmatpush.bf16.msra.mxu0 %v1698
    %2492 = vmatpush.bf16.msra.mxu0 %v1692
    %2493 = vmatpush.bf16.msra.mxu0 %v1686
    %2494 = vmatpush.bf16.msra.mxu0 %v1680
    %2495 = vmatpush.bf16.msra.mxu0 %v1674
    %2496 = vmatpush.bf16.msra.mxu0 %v1668
    %2497 = vmatmul.bf16.gmra.mxu0 %v220
    %v2498 = vpop.f32.mrf.mxu0
    %v2499 = vadd.f32 %v2485, %v2498
    %v2500 = vpop.f32.mrf.mxu0
    %v2501 = vadd.f32 %v2487, %v2500
    %2502 = vdwg.mxu0
    %v2503 = vpack.c.bf16 %v2163, %v2079
    %v2504 = vpack.c.bf16 %v2331, %v2247
    %v2505 = vpack.c.bf16 %v2499, %v2415
    %v2506 = vpack.c.bf16 %v2165, %v2081
    %v2507 = vpack.c.bf16 %v2333, %v2249
    %v2508 = vpack.c.bf16 %v2501, %v2417
    %v2509 = vld [vmem:[#allocation12] sm:$0xff]
    %v2510 = vld [vmem:[#allocation12 + $0x8] sm:$0xff]
    %v2511 = vld [vmem:[#allocation12 + $0x10] sm:$0xff]
    %v2512 = vld [vmem:[#allocation12 + $0x18] sm:$0xff]
    %v2513 = vld [vmem:[#allocation12 + $0x20] sm:$0xff]
    %v2514 = vld [vmem:[#allocation12 + $0x28] sm:$0xff]
    %v2515 = vld [vmem:[#allocation12 + $0x30] sm:$0xff]
    %v2516 = vld [vmem:[#allocation12 + $0x38] sm:$0xff]
    %v2517 = vld [vmem:[#allocation12 + $0x40] sm:$0xff]
    %v2518 = vld [vmem:[#allocation12 + $0x48] sm:$0xff]
    %v2519 = vld [vmem:[#allocation12 + $0x50] sm:$0xff]
    %v2520 = vld [vmem:[#allocation12 + $0x58] sm:$0xff]
    %v2521 = vld [vmem:[#allocation12 + $0x60] sm:$0xff]
    %v2522 = vld [vmem:[#allocation12 + $0x68] sm:$0xff]
    %v2523 = vld [vmem:[#allocation12 + $0x70] sm:$0xff]
    %v2524 = vld [vmem:[#allocation12 + $0x78] sm:$0xff]
    %v2525 = vld [vmem:[#allocation12 + $0x80] sm:$0xff]
    %v2526 = vld [vmem:[#allocation12 + $0x88] sm:$0xff]
    %v2527 = vld [vmem:[#allocation12 + $0x90] sm:$0xff]
    %v2528 = vld [vmem:[#allocation12 + $0x98] sm:$0xff]
    %v2529 = vld [vmem:[#allocation12 + $0xa0] sm:$0xff]
    %v2530 = vld [vmem:[#allocation12 + $0xa8] sm:$0xff]
    %v2531 = vld [vmem:[#allocation12 + $0xb0] sm:$0xff]
    %v2532 = vld [vmem:[#allocation12 + $0xb8] sm:$0xff]
    %v2533 = vld [vmem:[#allocation12 + $0xc0] sm:$0xff]
    %v2534 = vld [vmem:[#allocation12 + $0xc8] sm:$0xff]
    %v2535 = vld [vmem:[#allocation12 + $0xd0] sm:$0xff]
    %v2536 = vld [vmem:[#allocation12 + $0xd8] sm:$0xff]
    %v2537 = vld [vmem:[#allocation12 + $0xe0] sm:$0xff]
    %v2538 = vld [vmem:[#allocation12 + $0xe8] sm:$0xff]
    %v2539 = vld [vmem:[#allocation12 + $0xf0] sm:$0xff]
    %v2540 = vld [vmem:[#allocation12 + $0xf8] sm:$0xff]
    %v2541 = vld [vmem:[#allocation12 + $0x100] sm:$0xff]
    %v2542 = vld [vmem:[#allocation12 + $0x108] sm:$0xff]
    %v2543 = vld [vmem:[#allocation12 + $0x110] sm:$0xff]
    %v2544 = vld [vmem:[#allocation12 + $0x118] sm:$0xff]
    %v2545 = vld [vmem:[#allocation12 + $0x120] sm:$0xff]
    %v2546 = vld [vmem:[#allocation12 + $0x128] sm:$0xff]
    %v2547 = vld [vmem:[#allocation12 + $0x130] sm:$0xff]
    %v2548 = vld [vmem:[#allocation12 + $0x138] sm:$0xff]
    %v2549 = vld [vmem:[#allocation12 + $0x140] sm:$0xff]
    %v2550 = vld [vmem:[#allocation12 + $0x148] sm:$0xff]
    %v2551 = vld [vmem:[#allocation12 + $0x150] sm:$0xff]
    %v2552 = vld [vmem:[#allocation12 + $0x158] sm:$0xff]
    %v2553 = vld [vmem:[#allocation12 + $0x160] sm:$0xff]
    %v2554 = vld [vmem:[#allocation12 + $0x168] sm:$0xff]
    %v2555 = vld [vmem:[#allocation12 + $0x170] sm:$0xff]
    %v2556 = vld [vmem:[#allocation12 + $0x178] sm:$0xff]
    %v2557 = vld [vmem:[#allocation12 + $0x180] sm:$0xff]
    %v2558 = vld [vmem:[#allocation12 + $0x188] sm:$0xff]
    %v2559 = vld [vmem:[#allocation12 + $0x190] sm:$0xff]
    %v2560 = vld [vmem:[#allocation12 + $0x198] sm:$0xff]
    %v2561 = vld [vmem:[#allocation12 + $0x1a0] sm:$0xff]
    %v2562 = vld [vmem:[#allocation12 + $0x1a8] sm:$0xff]
    %v2563 = vld [vmem:[#allocation12 + $0x1b0] sm:$0xff]
    %v2564 = vld [vmem:[#allocation12 + $0x1b8] sm:$0xff]
    %v2565 = vld [vmem:[#allocation12 + $0x1c0] sm:$0xff]
    %v2566 = vld [vmem:[#allocation12 + $0x1c8] sm:$0xff]
    %v2567 = vld [vmem:[#allocation12 + $0x1d0] sm:$0xff]
    %v2568 = vld [vmem:[#allocation12 + $0x1d8] sm:$0xff]
    %v2569 = vld [vmem:[#allocation12 + $0x1e0] sm:$0xff]
    %v2570 = vld [vmem:[#allocation12 + $0x1e8] sm:$0xff]
    %v2571 = vld [vmem:[#allocation12 + $0x1f0] sm:$0xff]
    %v2572 = vld [vmem:[#allocation12 + $0x1f8] sm:$0xff]
    %v2573 = vld [vmem:[#allocation12 + $0x200] sm:$0xff]
    %v2574 = vld [vmem:[#allocation12 + $0x208] sm:$0xff]
    %v2575 = vld [vmem:[#allocation12 + $0x210] sm:$0xff]
    %v2576 = vld [vmem:[#allocation12 + $0x218] sm:$0xff]
    %v2577 = vld [vmem:[#allocation12 + $0x220] sm:$0xff]
    %v2578 = vld [vmem:[#allocation12 + $0x228] sm:$0xff]
    %v2579 = vld [vmem:[#allocation12 + $0x230] sm:$0xff]
    %v2580 = vld [vmem:[#allocation12 + $0x238] sm:$0xff]
    %v2581 = vld [vmem:[#allocation12 + $0x240] sm:$0xff]
    %v2582 = vld [vmem:[#allocation12 + $0x248] sm:$0xff]
    %v2583 = vld [vmem:[#allocation12 + $0x250] sm:$0xff]
    %v2584 = vld [vmem:[#allocation12 + $0x258] sm:$0xff]
    %v2585 = vld [vmem:[#allocation12 + $0x260] sm:$0xff]
    %v2586 = vld [vmem:[#allocation12 + $0x268] sm:$0xff]
    %v2587 = vld [vmem:[#allocation12 + $0x270] sm:$0xff]
    %v2588 = vld [vmem:[#allocation12 + $0x278] sm:$0xff]
    %v2589 = vld [vmem:[#allocation12 + $0x280] sm:$0xff]
    %v2590 = vld [vmem:[#allocation12 + $0x288] sm:$0xff]
    %v2591 = vld [vmem:[#allocation12 + $0x290] sm:$0xff]
    %v2592 = vld [vmem:[#allocation12 + $0x298] sm:$0xff]
    %v2593 = vld [vmem:[#allocation12 + $0x2a0] sm:$0xff]
    %v2594 = vld [vmem:[#allocation12 + $0x2a8] sm:$0xff]
    %v2595 = vld [vmem:[#allocation12 + $0x2b0] sm:$0xff]
    %v2596 = vld [vmem:[#allocation12 + $0x2b8] sm:$0xff]
    %v2597 = vld [vmem:[#allocation12 + $0x2c0] sm:$0xff]
    %v2598 = vld [vmem:[#allocation12 + $0x2c8] sm:$0xff]
    %v2599 = vld [vmem:[#allocation12 + $0x2d0] sm:$0xff]
    %v2600 = vld [vmem:[#allocation12 + $0x2d8] sm:$0xff]
    %v2601 = vld [vmem:[#allocation12 + $0x2e0] sm:$0xff]
    %v2602 = vld [vmem:[#allocation12 + $0x2e8] sm:$0xff]
    %v2603 = vld [vmem:[#allocation12 + $0x2f0] sm:$0xff]
    %v2604 = vld [vmem:[#allocation12 + $0x2f8] sm:$0xff]
    %v2605 = vld [vmem:[#allocation12 + $0x300] sm:$0xff]
    %v2606 = vld [vmem:[#allocation12 + $0x308] sm:$0xff]
    %v2607 = vld [vmem:[#allocation12 + $0x310] sm:$0xff]
    %v2608 = vld [vmem:[#allocation12 + $0x318] sm:$0xff]
    %v2609 = vld [vmem:[#allocation12 + $0x320] sm:$0xff]
    %v2610 = vld [vmem:[#allocation12 + $0x328] sm:$0xff]
    %v2611 = vld [vmem:[#allocation12 + $0x330] sm:$0xff]
    %v2612 = vld [vmem:[#allocation12 + $0x338] sm:$0xff]
    %v2613 = vld [vmem:[#allocation12 + $0x340] sm:$0xff]
    %v2614 = vld [vmem:[#allocation12 + $0x348] sm:$0xff]
    %v2615 = vld [vmem:[#allocation12 + $0x350] sm:$0xff]
    %v2616 = vld [vmem:[#allocation12 + $0x358] sm:$0xff]
    %v2617 = vld [vmem:[#allocation12 + $0x360] sm:$0xff]
    %v2618 = vld [vmem:[#allocation12 + $0x368] sm:$0xff]
    %v2619 = vld [vmem:[#allocation12 + $0x370] sm:$0xff]
    %v2620 = vld [vmem:[#allocation12 + $0x378] sm:$0xff]
    %v2621 = vld [vmem:[#allocation12 + $0x380] sm:$0xff]
    %v2622 = vld [vmem:[#allocation12 + $0x388] sm:$0xff]
    %v2623 = vld [vmem:[#allocation12 + $0x390] sm:$0xff]
    %v2624 = vld [vmem:[#allocation12 + $0x398] sm:$0xff]
    %v2625 = vld [vmem:[#allocation12 + $0x3a0] sm:$0xff]
    %v2626 = vld [vmem:[#allocation12 + $0x3a8] sm:$0xff]
    %v2627 = vld [vmem:[#allocation12 + $0x3b0] sm:$0xff]
    %v2628 = vld [vmem:[#allocation12 + $0x3b8] sm:$0xff]
    %v2629 = vld [vmem:[#allocation12 + $0x3c0] sm:$0xff]
    %v2630 = vld [vmem:[#allocation12 + $0x3c8] sm:$0xff]
    %v2631 = vld [vmem:[#allocation12 + $0x3d0] sm:$0xff]
    %v2632 = vld [vmem:[#allocation12 + $0x3d8] sm:$0xff]
    %v2633 = vld [vmem:[#allocation12 + $0x3e0] sm:$0xff]
    %v2634 = vld [vmem:[#allocation12 + $0x3e8] sm:$0xff]
    %v2635 = vld [vmem:[#allocation12 + $0x3f0] sm:$0xff]
    %v2636 = vld [vmem:[#allocation12 + $0x3f8] sm:$0xff]
    %v2637 = vld [vmem:[#allocation12 + $0x400] sm:$0xff]
    %v2638 = vld [vmem:[#allocation12 + $0x408] sm:$0xff]
    %v2639 = vld [vmem:[#allocation12 + $0x410] sm:$0xff]
    %v2640 = vld [vmem:[#allocation12 + $0x418] sm:$0xff]
    %v2641 = vld [vmem:[#allocation12 + $0x420] sm:$0xff]
    %v2642 = vld [vmem:[#allocation12 + $0x428] sm:$0xff]
    %v2643 = vld [vmem:[#allocation12 + $0x430] sm:$0xff]
    %v2644 = vld [vmem:[#allocation12 + $0x438] sm:$0xff]
    %v2645 = vld [vmem:[#allocation12 + $0x440] sm:$0xff]
    %v2646 = vld [vmem:[#allocation12 + $0x448] sm:$0xff]
    %v2647 = vld [vmem:[#allocation12 + $0x450] sm:$0xff]
    %v2648 = vld [vmem:[#allocation12 + $0x458] sm:$0xff]
    %v2649 = vld [vmem:[#allocation12 + $0x460] sm:$0xff]
    %v2650 = vld [vmem:[#allocation12 + $0x468] sm:$0xff]
    %v2651 = vld [vmem:[#allocation12 + $0x470] sm:$0xff]
    %v2652 = vld [vmem:[#allocation12 + $0x478] sm:$0xff]
    %v2653 = vld [vmem:[#allocation12 + $0x480] sm:$0xff]
    %v2654 = vld [vmem:[#allocation12 + $0x488] sm:$0xff]
    %v2655 = vld [vmem:[#allocation12 + $0x490] sm:$0xff]
    %v2656 = vld [vmem:[#allocation12 + $0x498] sm:$0xff]
    %v2657 = vld [vmem:[#allocation12 + $0x4a0] sm:$0xff]
    %v2658 = vld [vmem:[#allocation12 + $0x4a8] sm:$0xff]
    %v2659 = vld [vmem:[#allocation12 + $0x4b0] sm:$0xff]
    %v2660 = vld [vmem:[#allocation12 + $0x4b8] sm:$0xff]
    %v2661 = vld [vmem:[#allocation12 + $0x4c0] sm:$0xff]
    %v2662 = vld [vmem:[#allocation12 + $0x4c8] sm:$0xff]
    %v2663 = vld [vmem:[#allocation12 + $0x4d0] sm:$0xff]
    %v2664 = vld [vmem:[#allocation12 + $0x4d8] sm:$0xff]
    %v2665 = vld [vmem:[#allocation12 + $0x4e0] sm:$0xff]
    %v2666 = vld [vmem:[#allocation12 + $0x4e8] sm:$0xff]
    %v2667 = vld [vmem:[#allocation12 + $0x4f0] sm:$0xff]
    %v2668 = vld [vmem:[#allocation12 + $0x4f8] sm:$0xff]
    %v2669 = vld [vmem:[#allocation12 + $0x500] sm:$0xff]
    %v2670 = vld [vmem:[#allocation12 + $0x508] sm:$0xff]
    %v2671 = vld [vmem:[#allocation12 + $0x510] sm:$0xff]
    %v2672 = vld [vmem:[#allocation12 + $0x518] sm:$0xff]
    %v2673 = vld [vmem:[#allocation12 + $0x520] sm:$0xff]
    %v2674 = vld [vmem:[#allocation12 + $0x528] sm:$0xff]
    %v2675 = vld [vmem:[#allocation12 + $0x530] sm:$0xff]
    %v2676 = vld [vmem:[#allocation12 + $0x538] sm:$0xff]
    %v2677 = vld [vmem:[#allocation12 + $0x540] sm:$0xff]
    %v2678 = vld [vmem:[#allocation12 + $0x548] sm:$0xff]
    %v2679 = vld [vmem:[#allocation12 + $0x550] sm:$0xff]
    %v2680 = vld [vmem:[#allocation12 + $0x558] sm:$0xff]
    %v2681 = vld [vmem:[#allocation12 + $0x560] sm:$0xff]
    %v2682 = vld [vmem:[#allocation12 + $0x568] sm:$0xff]
    %v2683 = vld [vmem:[#allocation12 + $0x570] sm:$0xff]
    %v2684 = vld [vmem:[#allocation12 + $0x578] sm:$0xff]
    %v2685 = vld [vmem:[#allocation12 + $0x580] sm:$0xff]
    %v2686 = vld [vmem:[#allocation12 + $0x588] sm:$0xff]
    %v2687 = vld [vmem:[#allocation12 + $0x590] sm:$0xff]
    %v2688 = vld [vmem:[#allocation12 + $0x598] sm:$0xff]
    %v2689 = vld [vmem:[#allocation12 + $0x5a0] sm:$0xff]
    %v2690 = vld [vmem:[#allocation12 + $0x5a8] sm:$0xff]
    %v2691 = vld [vmem:[#allocation12 + $0x5b0] sm:$0xff]
    %v2692 = vld [vmem:[#allocation12 + $0x5b8] sm:$0xff]
    %v2693 = vld [vmem:[#allocation12 + $0x5c0] sm:$0xff]
    %v2694 = vld [vmem:[#allocation12 + $0x5c8] sm:$0xff]
    %v2695 = vld [vmem:[#allocation12 + $0x5d0] sm:$0xff]
    %v2696 = vld [vmem:[#allocation12 + $0x5d8] sm:$0xff]
    %v2697 = vld [vmem:[#allocation12 + $0x5e0] sm:$0xff]
    %v2698 = vld [vmem:[#allocation12 + $0x5e8] sm:$0xff]
    %v2699 = vld [vmem:[#allocation12 + $0x5f0] sm:$0xff]
    %v2700 = vld [vmem:[#allocation12 + $0x5f8] sm:$0xff]
    %v2701 = vld [vmem:[#allocation12 + $0x600] sm:$0xff]
    %v2702 = vld [vmem:[#allocation12 + $0x608] sm:$0xff]
    %v2703 = vld [vmem:[#allocation12 + $0x610] sm:$0xff]
    %v2704 = vld [vmem:[#allocation12 + $0x618] sm:$0xff]
    %v2705 = vld [vmem:[#allocation12 + $0x620] sm:$0xff]
    %v2706 = vld [vmem:[#allocation12 + $0x628] sm:$0xff]
    %v2707 = vld [vmem:[#allocation12 + $0x630] sm:$0xff]
    %v2708 = vld [vmem:[#allocation12 + $0x638] sm:$0xff]
    %v2709 = vld [vmem:[#allocation12 + $0x640] sm:$0xff]
    %v2710 = vld [vmem:[#allocation12 + $0x648] sm:$0xff]
    %v2711 = vld [vmem:[#allocation12 + $0x650] sm:$0xff]
    %v2712 = vld [vmem:[#allocation12 + $0x658] sm:$0xff]
    %v2713 = vld [vmem:[#allocation12 + $0x660] sm:$0xff]
    %v2714 = vld [vmem:[#allocation12 + $0x668] sm:$0xff]
    %v2715 = vld [vmem:[#allocation12 + $0x670] sm:$0xff]
    %v2716 = vld [vmem:[#allocation12 + $0x678] sm:$0xff]
    %v2717 = vld [vmem:[#allocation12 + $0x680] sm:$0xff]
    %v2718 = vld [vmem:[#allocation12 + $0x688] sm:$0xff]
    %v2719 = vld [vmem:[#allocation12 + $0x690] sm:$0xff]
    %v2720 = vld [vmem:[#allocation12 + $0x698] sm:$0xff]
    %v2721 = vld [vmem:[#allocation12 + $0x6a0] sm:$0xff]
    %v2722 = vld [vmem:[#allocation12 + $0x6a8] sm:$0xff]
    %v2723 = vld [vmem:[#allocation12 + $0x6b0] sm:$0xff]
    %v2724 = vld [vmem:[#allocation12 + $0x6b8] sm:$0xff]
    %v2725 = vld [vmem:[#allocation12 + $0x6c0] sm:$0xff]
    %v2726 = vld [vmem:[#allocation12 + $0x6c8] sm:$0xff]
    %v2727 = vld [vmem:[#allocation12 + $0x6d0] sm:$0xff]
    %v2728 = vld [vmem:[#allocation12 + $0x6d8] sm:$0xff]
    %v2729 = vld [vmem:[#allocation12 + $0x6e0] sm:$0xff]
    %v2730 = vld [vmem:[#allocation12 + $0x6e8] sm:$0xff]
    %v2731 = vld [vmem:[#allocation12 + $0x6f0] sm:$0xff]
    %v2732 = vld [vmem:[#allocation12 + $0x6f8] sm:$0xff]
    %v2733 = vld [vmem:[#allocation12 + $0x700] sm:$0xff]
    %v2734 = vld [vmem:[#allocation12 + $0x708] sm:$0xff]
    %v2735 = vld [vmem:[#allocation12 + $0x710] sm:$0xff]
    %v2736 = vld [vmem:[#allocation12 + $0x718] sm:$0xff]
    %v2737 = vld [vmem:[#allocation12 + $0x720] sm:$0xff]
    %v2738 = vld [vmem:[#allocation12 + $0x728] sm:$0xff]
    %v2739 = vld [vmem:[#allocation12 + $0x730] sm:$0xff]
    %v2740 = vld [vmem:[#allocation12 + $0x738] sm:$0xff]
    %v2741 = vld [vmem:[#allocation12 + $0x740] sm:$0xff]
    %v2742 = vld [vmem:[#allocation12 + $0x748] sm:$0xff]
    %v2743 = vld [vmem:[#allocation12 + $0x750] sm:$0xff]
    %v2744 = vld [vmem:[#allocation12 + $0x758] sm:$0xff]
    %v2745 = vld [vmem:[#allocation12 + $0x760] sm:$0xff]
    %v2746 = vld [vmem:[#allocation12 + $0x768] sm:$0xff]
    %v2747 = vld [vmem:[#allocation12 + $0x770] sm:$0xff]
    %v2748 = vld [vmem:[#allocation12 + $0x778] sm:$0xff]
    %v2749 = vld [vmem:[#allocation12 + $0x780] sm:$0xff]
    %v2750 = vld [vmem:[#allocation12 + $0x788] sm:$0xff]
    %v2751 = vld [vmem:[#allocation12 + $0x790] sm:$0xff]
    %v2752 = vld [vmem:[#allocation12 + $0x798] sm:$0xff]
    %v2753 = vld [vmem:[#allocation12 + $0x7a0] sm:$0xff]
    %v2754 = vld [vmem:[#allocation12 + $0x7a8] sm:$0xff]
    %v2755 = vld [vmem:[#allocation12 + $0x7b0] sm:$0xff]
    %v2756 = vld [vmem:[#allocation12 + $0x7b8] sm:$0xff]
    %v2757 = vld [vmem:[#allocation12 + $0x7c0] sm:$0xff]
    %v2758 = vld [vmem:[#allocation12 + $0x7c8] sm:$0xff]
    %v2759 = vld [vmem:[#allocation12 + $0x7d0] sm:$0xff]
    %v2760 = vld [vmem:[#allocation12 + $0x7d8] sm:$0xff]
    %v2761 = vld [vmem:[#allocation12 + $0x7e0] sm:$0xff]
    %v2762 = vld [vmem:[#allocation12 + $0x7e8] sm:$0xff]
    %v2763 = vld [vmem:[#allocation12 + $0x7f0] sm:$0xff]
    %v2764 = vld [vmem:[#allocation12 + $0x7f8] sm:$0xff]
    %v2765 = vld [vmem:[#allocation12 + $0x800] sm:$0xff]
    %v2766 = vld [vmem:[#allocation12 + $0x808] sm:$0xff]
    %v2767 = vld [vmem:[#allocation12 + $0x810] sm:$0xff]
    %v2768 = vld [vmem:[#allocation12 + $0x818] sm:$0xff]
    %v2769 = vld [vmem:[#allocation12 + $0x820] sm:$0xff]
    %v2770 = vld [vmem:[#allocation12 + $0x828] sm:$0xff]
    %v2771 = vld [vmem:[#allocation12 + $0x830] sm:$0xff]
    %v2772 = vld [vmem:[#allocation12 + $0x838] sm:$0xff]
    %v2773 = vld [vmem:[#allocation12 + $0x840] sm:$0xff]
    %v2774 = vld [vmem:[#allocation12 + $0x848] sm:$0xff]
    %v2775 = vld [vmem:[#allocation12 + $0x850] sm:$0xff]
    %v2776 = vld [vmem:[#allocation12 + $0x858] sm:$0xff]
    %v2777 = vld [vmem:[#allocation12 + $0x860] sm:$0xff]
    %v2778 = vld [vmem:[#allocation12 + $0x868] sm:$0xff]
    %v2779 = vld [vmem:[#allocation12 + $0x870] sm:$0xff]
    %v2780 = vld [vmem:[#allocation12 + $0x878] sm:$0xff]
    %v2781 = vld [vmem:[#allocation12 + $0x880] sm:$0xff]
    %v2782 = vld [vmem:[#allocation12 + $0x888] sm:$0xff]
    %v2783 = vld [vmem:[#allocation12 + $0x890] sm:$0xff]
    %v2784 = vld [vmem:[#allocation12 + $0x898] sm:$0xff]
    %v2785 = vld [vmem:[#allocation12 + $0x8a0] sm:$0xff]
    %v2786 = vld [vmem:[#allocation12 + $0x8a8] sm:$0xff]
    %v2787 = vld [vmem:[#allocation12 + $0x8b0] sm:$0xff]
    %v2788 = vld [vmem:[#allocation12 + $0x8b8] sm:$0xff]
    %v2789 = vld [vmem:[#allocation12 + $0x8c0] sm:$0xff]
    %v2790 = vld [vmem:[#allocation12 + $0x8c8] sm:$0xff]
    %v2791 = vld [vmem:[#allocation12 + $0x8d0] sm:$0xff]
    %v2792 = vld [vmem:[#allocation12 + $0x8d8] sm:$0xff]
    %v2793 = vld [vmem:[#allocation12 + $0x8e0] sm:$0xff]
    %v2794 = vld [vmem:[#allocation12 + $0x8e8] sm:$0xff]
    %v2795 = vld [vmem:[#allocation12 + $0x8f0] sm:$0xff]
    %v2796 = vld [vmem:[#allocation12 + $0x8f8] sm:$0xff]
    %v2797 = vld [vmem:[#allocation14] sm:$0x3f]
    %v2799 = vperm.slane %v2797, 0
    %v2800 = vperm.slane %v2797, 1
    %v2801 = vperm.slane %v2797, 2
    %v2802 = vperm.slane %v2797, 3
    %v2803 = vperm.slane %v2797, 4
    %v2804 = vperm.slane %v2797, 5
    %v3099 = vunpack.c.l.b16 %v2509
    %v3100 = vunpack.c.h.b16 %v2509
    %v3101 = vunpack.c.l.b16 %v2510
    %v3102 = vunpack.c.h.b16 %v2510
    %v3103 = vunpack.c.l.b16 %v2511
    %v3104 = vunpack.c.h.b16 %v2511
    %v3105 = vunpack.c.l.b16 %v2512
    %v3106 = vunpack.c.h.b16 %v2512
    %v3107 = vunpack.c.l.b16 %v2513
    %v3108 = vunpack.c.h.b16 %v2513
    %v3109 = vunpack.c.l.b16 %v2514
    %v3110 = vunpack.c.h.b16 %v2514
    %v3111 = vunpack.c.l.b16 %v2515
    %v3112 = vunpack.c.h.b16 %v2515
    %v3113 = vunpack.c.l.b16 %v2516
    %v3114 = vunpack.c.h.b16 %v2516
    %v3115 = vunpack.c.l.b16 %v2517
    %v3116 = vunpack.c.h.b16 %v2517
    %v3117 = vunpack.c.l.b16 %v2518
    %v3118 = vunpack.c.h.b16 %v2518
    %v3119 = vunpack.c.l.b16 %v2519
    %v3120 = vunpack.c.h.b16 %v2519
    %v3121 = vunpack.c.l.b16 %v2520
    %v3122 = vunpack.c.h.b16 %v2520
    %v3123 = vunpack.c.l.b16 %v2521
    %v3124 = vunpack.c.h.b16 %v2521
    %v3125 = vunpack.c.l.b16 %v2522
    %v3126 = vunpack.c.h.b16 %v2522
    %v3127 = vunpack.c.l.b16 %v2523
    %v3128 = vunpack.c.h.b16 %v2523
    %v3129 = vunpack.c.l.b16 %v2524
    %v3130 = vunpack.c.h.b16 %v2524
    %v3131 = vunpack.c.l.b16 %v2525
    %v3132 = vunpack.c.h.b16 %v2525
    %v3133 = vunpack.c.l.b16 %v2526
    %v3134 = vunpack.c.h.b16 %v2526
    %v3135 = vunpack.c.l.b16 %v2527
    %v3136 = vunpack.c.h.b16 %v2527
    %v3137 = vunpack.c.l.b16 %v2528
    %v3138 = vunpack.c.h.b16 %v2528
    %v3139 = vunpack.c.l.b16 %v2529
    %v3140 = vunpack.c.h.b16 %v2529
    %v3141 = vunpack.c.l.b16 %v2530
    %v3142 = vunpack.c.h.b16 %v2530
    %v3143 = vunpack.c.l.b16 %v2531
    %v3144 = vunpack.c.h.b16 %v2531
    %v3145 = vunpack.c.l.b16 %v2532
    %v3146 = vunpack.c.h.b16 %v2532
    %v3147 = vunpack.c.l.b16 %v2533
    %v3148 = vunpack.c.h.b16 %v2533
    %v3149 = vunpack.c.l.b16 %v2534
    %v3150 = vunpack.c.h.b16 %v2534
    %v3151 = vunpack.c.l.b16 %v2535
    %v3152 = vunpack.c.h.b16 %v2535
    %v3153 = vunpack.c.l.b16 %v2536
    %v3154 = vunpack.c.h.b16 %v2536
    %v3155 = vunpack.c.l.b16 %v2537
    %v3156 = vunpack.c.h.b16 %v2537
    %v3157 = vunpack.c.l.b16 %v2538
    %v3158 = vunpack.c.h.b16 %v2538
    %v3159 = vunpack.c.l.b16 %v2539
    %v3160 = vunpack.c.h.b16 %v2539
    %v3161 = vunpack.c.l.b16 %v2540
    %v3162 = vunpack.c.h.b16 %v2540
    %v3163 = vunpack.c.l.b16 %v2541
    %v3164 = vunpack.c.h.b16 %v2541
    %v3165 = vunpack.c.l.b16 %v2542
    %v3166 = vunpack.c.h.b16 %v2542
    %v3167 = vunpack.c.l.b16 %v2543
    %v3168 = vunpack.c.h.b16 %v2543
    %v3169 = vunpack.c.l.b16 %v2544
    %v3170 = vunpack.c.h.b16 %v2544
    %v3171 = vunpack.c.l.b16 %v2545
    %v3172 = vunpack.c.h.b16 %v2545
    %v3173 = vunpack.c.l.b16 %v2546
    %v3174 = vunpack.c.h.b16 %v2546
    %v3175 = vunpack.c.l.b16 %v2547
    %v3176 = vunpack.c.h.b16 %v2547
    %v3177 = vunpack.c.l.b16 %v2548
    %v3178 = vunpack.c.h.b16 %v2548
    %v3179 = vunpack.c.l.b16 %v2549
    %v3180 = vunpack.c.h.b16 %v2549
    %v3181 = vunpack.c.l.b16 %v2550
    %v3182 = vunpack.c.h.b16 %v2550
    %v3183 = vunpack.c.l.b16 %v2551
    %v3184 = vunpack.c.h.b16 %v2551
    %v3185 = vunpack.c.l.b16 %v2552
    %v3186 = vunpack.c.h.b16 %v2552
    %v3187 = vunpack.c.l.b16 %v2553
    %v3188 = vunpack.c.h.b16 %v2553
    %v3189 = vunpack.c.l.b16 %v2554
    %v3190 = vunpack.c.h.b16 %v2554
    %v3191 = vunpack.c.l.b16 %v2555
    %v3192 = vunpack.c.h.b16 %v2555
    %v3193 = vunpack.c.l.b16 %v2556
    %v3194 = vunpack.c.h.b16 %v2556
    %v3195 = vunpack.c.l.b16 %v2557
    %v3196 = vunpack.c.h.b16 %v2557
    %v3197 = vunpack.c.l.b16 %v2558
    %v3198 = vunpack.c.h.b16 %v2558
    %v3199 = vunpack.c.l.b16 %v2559
    %v3200 = vunpack.c.h.b16 %v2559
    %v3201 = vunpack.c.l.b16 %v2560
    %v3202 = vunpack.c.h.b16 %v2560
    %v3203 = vunpack.c.l.b16 %v2561
    %v3204 = vunpack.c.h.b16 %v2561
    %v3205 = vunpack.c.l.b16 %v2562
    %v3206 = vunpack.c.h.b16 %v2562
    %v3207 = vunpack.c.l.b16 %v2563
    %v3208 = vunpack.c.h.b16 %v2563
    %v3209 = vunpack.c.l.b16 %v2564
    %v3210 = vunpack.c.h.b16 %v2564
    %v3211 = vunpack.c.l.b16 %v2565
    %v3212 = vunpack.c.h.b16 %v2565
    %v3213 = vunpack.c.l.b16 %v2566
    %v3214 = vunpack.c.h.b16 %v2566
    %v3215 = vunpack.c.l.b16 %v2567
    %v3216 = vunpack.c.h.b16 %v2567
    %v3217 = vunpack.c.l.b16 %v2568
    %v3218 = vunpack.c.h.b16 %v2568
    %v3219 = vunpack.c.l.b16 %v2569
    %v3220 = vunpack.c.h.b16 %v2569
    %v3221 = vunpack.c.l.b16 %v2570
    %v3222 = vunpack.c.h.b16 %v2570
    %v3223 = vunpack.c.l.b16 %v2571
    %v3224 = vunpack.c.h.b16 %v2571
    %v3225 = vunpack.c.l.b16 %v2572
    %v3226 = vunpack.c.h.b16 %v2572
    %v3227 = vunpack.c.l.b16 %v2573
    %v3228 = vunpack.c.h.b16 %v2573
    %v3229 = vunpack.c.l.b16 %v2574
    %v3230 = vunpack.c.h.b16 %v2574
    %v3231 = vunpack.c.l.b16 %v2575
    %v3232 = vunpack.c.h.b16 %v2575
    %v3233 = vunpack.c.l.b16 %v2576
    %v3234 = vunpack.c.h.b16 %v2576
    %v3235 = vunpack.c.l.b16 %v2577
    %v3236 = vunpack.c.h.b16 %v2577
    %v3237 = vunpack.c.l.b16 %v2578
    %v3238 = vunpack.c.h.b16 %v2578
    %v3239 = vunpack.c.l.b16 %v2579
    %v3240 = vunpack.c.h.b16 %v2579
    %v3241 = vunpack.c.l.b16 %v2580
    %v3242 = vunpack.c.h.b16 %v2580
    %v3243 = vunpack.c.l.b16 %v2581
    %v3244 = vunpack.c.h.b16 %v2581
    %v3245 = vunpack.c.l.b16 %v2582
    %v3246 = vunpack.c.h.b16 %v2582
    %v3247 = vunpack.c.l.b16 %v2583
    %v3248 = vunpack.c.h.b16 %v2583
    %v3249 = vunpack.c.l.b16 %v2584
    %v3250 = vunpack.c.h.b16 %v2584
    %v3251 = vunpack.c.l.b16 %v2585
    %v3252 = vunpack.c.h.b16 %v2585
    %v3253 = vunpack.c.l.b16 %v2586
    %v3254 = vunpack.c.h.b16 %v2586
    %v3255 = vunpack.c.l.b16 %v2587
    %v3256 = vunpack.c.h.b16 %v2587
    %v3257 = vunpack.c.l.b16 %v2588
    %v3258 = vunpack.c.h.b16 %v2588
    %v3259 = vunpack.c.l.b16 %v2589
    %v3260 = vunpack.c.h.b16 %v2589
    %v3261 = vunpack.c.l.b16 %v2590
    %v3262 = vunpack.c.h.b16 %v2590
    %v3263 = vunpack.c.l.b16 %v2591
    %v3264 = vunpack.c.h.b16 %v2591
    %v3265 = vunpack.c.l.b16 %v2592
    %v3266 = vunpack.c.h.b16 %v2592
    %v3267 = vunpack.c.l.b16 %v2593
    %v3268 = vunpack.c.h.b16 %v2593
    %v3269 = vunpack.c.l.b16 %v2594
    %v3270 = vunpack.c.h.b16 %v2594
    %v3271 = vunpack.c.l.b16 %v2595
    %v3272 = vunpack.c.h.b16 %v2595
    %v3273 = vunpack.c.l.b16 %v2596
    %v3274 = vunpack.c.h.b16 %v2596
    %v3275 = vunpack.c.l.b16 %v2597
    %v3276 = vunpack.c.h.b16 %v2597
    %v3277 = vunpack.c.l.b16 %v2598
    %v3278 = vunpack.c.h.b16 %v2598
    %v3279 = vunpack.c.l.b16 %v2599
    %v3280 = vunpack.c.h.b16 %v2599
    %v3281 = vunpack.c.l.b16 %v2600
    %v3282 = vunpack.c.h.b16 %v2600
    %v3283 = vunpack.c.l.b16 %v2601
    %v3284 = vunpack.c.h.b16 %v2601
    %v3285 = vunpack.c.l.b16 %v2602
    %v3286 = vunpack.c.h.b16 %v2602
    %v3287 = vunpack.c.l.b16 %v2603
    %v3288 = vunpack.c.h.b16 %v2603
    %v3289 = vunpack.c.l.b16 %v2604
    %v3290 = vunpack.c.h.b16 %v2604
    %v3291 = vunpack.c.l.b16 %v2605
    %v3292 = vunpack.c.h.b16 %v2605
    %v3293 = vunpack.c.l.b16 %v2606
    %v3294 = vunpack.c.h.b16 %v2606
    %v3295 = vunpack.c.l.b16 %v2607
    %v3296 = vunpack.c.h.b16 %v2607
    %v3297 = vunpack.c.l.b16 %v2608
    %v3298 = vunpack.c.h.b16 %v2608
    %v3299 = vunpack.c.l.b16 %v2609
    %v3300 = vunpack.c.h.b16 %v2609
    %v3301 = vunpack.c.l.b16 %v2610
    %v3302 = vunpack.c.h.b16 %v2610
    %v3303 = vunpack.c.l.b16 %v2611
    %v3304 = vunpack.c.h.b16 %v2611
    %v3305 = vunpack.c.l.b16 %v2612
    %v3306 = vunpack.c.h.b16 %v2612
    %v3307 = vunpack.c.l.b16 %v2613
    %v3308 = vunpack.c.h.b16 %v2613
    %v3309 = vunpack.c.l.b16 %v2614
    %v3310 = vunpack.c.h.b16 %v2614
    %v3311 = vunpack.c.l.b16 %v2615
    %v3312 = vunpack.c.h.b16 %v2615
    %v3313 = vunpack.c.l.b16 %v2616
    %v3314 = vunpack.c.h.b16 %v2616
    %v3315 = vunpack.c.l.b16 %v2617
    %v3316 = vunpack.c.h.b16 %v2617
    %v3317 = vunpack.c.l.b16 %v2618
    %v3318 = vunpack.c.h.b16 %v2618
    %v3319 = vunpack.c.l.b16 %v2619
    %v3320 = vunpack.c.h.b16 %v2619
    %v3321 = vunpack.c.l.b16 %v2620
    %v3322 = vunpack.c.h.b16 %v2620
    %v3323 = vunpack.c.l.b16 %v2621
    %v3324 = vunpack.c.h.b16 %v2621
    %v3325 = vunpack.c.l.b16 %v2622
    %v3326 = vunpack.c.h.b16 %v2622
    %v3327 = vunpack.c.l.b16 %v2623
    %v3328 = vunpack.c.h.b16 %v2623
    %v3329 = vunpack.c.l.b16 %v2624
    %v3330 = vunpack.c.h.b16 %v2624
    %v3331 = vunpack.c.l.b16 %v2625
    %v3332 = vunpack.c.h.b16 %v2625
    %v3333 = vunpack.c.l.b16 %v2626
    %v3334 = vunpack.c.h.b16 %v2626
    %v3335 = vunpack.c.l.b16 %v2627
    %v3336 = vunpack.c.h.b16 %v2627
    %v3337 = vunpack.c.l.b16 %v2628
    %v3338 = vunpack.c.h.b16 %v2628
    %v3339 = vunpack.c.l.b16 %v2629
    %v3340 = vunpack.c.h.b16 %v2629
    %v3341 = vunpack.c.l.b16 %v2630
    %v3342 = vunpack.c.h.b16 %v2630
    %v3343 = vunpack.c.l.b16 %v2631
    %v3344 = vunpack.c.h.b16 %v2631
    %v3345 = vunpack.c.l.b16 %v2632
    %v3346 = vunpack.c.h.b16 %v2632
    %v3347 = vunpack.c.l.b16 %v2633
    %v3348 = vunpack.c.h.b16 %v2633
    %v3349 = vunpack.c.l.b16 %v2634
    %v3350 = vunpack.c.h.b16 %v2634
    %v3351 = vunpack.c.l.b16 %v2635
    %v3352 = vunpack.c.h.b16 %v2635
    %v3353 = vunpack.c.l.b16 %v2636
    %v3354 = vunpack.c.h.b16 %v2636
    %v3355 = vunpack.c.l.b16 %v2637
    %v3356 = vunpack.c.h.b16 %v2637
    %v3357 = vunpack.c.l.b16 %v2638
    %v3358 = vunpack.c.h.b16 %v2638
    %v3359 = vunpack.c.l.b16 %v2639
    %v3360 = vunpack.c.h.b16 %v2639
    %v3361 = vunpack.c.l.b16 %v2640
    %v3362 = vunpack.c.h.b16 %v2640
    %v3363 = vunpack.c.l.b16 %v2641
    %v3364 = vunpack.c.h.b16 %v2641
    %v3365 = vunpack.c.l.b16 %v2642
    %v3366 = vunpack.c.h.b16 %v2642
    %v3367 = vunpack.c.l.b16 %v2643
    %v3368 = vunpack.c.h.b16 %v2643
    %v3369 = vunpack.c.l.b16 %v2644
    %v3370 = vunpack.c.h.b16 %v2644
    %v3371 = vunpack.c.l.b16 %v2645
    %v3372 = vunpack.c.h.b16 %v2645
    %v3373 = vunpack.c.l.b16 %v2646
    %v3374 = vunpack.c.h.b16 %v2646
    %v3375 = vunpack.c.l.b16 %v2647
    %v3376 = vunpack.c.h.b16 %v2647
    %v3377 = vunpack.c.l.b16 %v2648
    %v3378 = vunpack.c.h.b16 %v2648
    %v3379 = vunpack.c.l.b16 %v2649
    %v3380 = vunpack.c.h.b16 %v2649
    %v3381 = vunpack.c.l.b16 %v2650
    %v3382 = vunpack.c.h.b16 %v2650
    %v3383 = vunpack.c.l.b16 %v2651
    %v3384 = vunpack.c.h.b16 %v2651
    %v3385 = vunpack.c.l.b16 %v2652
    %v3386 = vunpack.c.h.b16 %v2652
    %v3387 = vunpack.c.l.b16 %v2653
    %v3388 = vunpack.c.h.b16 %v2653
    %v3389 = vunpack.c.l.b16 %v2654
    %v3390 = vunpack.c.h.b16 %v2654
    %v3391 = vunpack.c.l.b16 %v2655
    %v3392 = vunpack.c.h.b16 %v2655
    %v3393 = vunpack.c.l.b16 %v2656
    %v3394 = vunpack.c.h.b16 %v2656
    %v3395 = vunpack.c.l.b16 %v2657
    %v3396 = vunpack.c.h.b16 %v2657
    %v3397 = vunpack.c.l.b16 %v2658
    %v3398 = vunpack.c.h.b16 %v2658
    %v3399 = vunpack.c.l.b16 %v2659
    %v3400 = vunpack.c.h.b16 %v2659
    %v3401 = vunpack.c.l.b16 %v2660
    %v3402 = vunpack.c.h.b16 %v2660
    %v3403 = vunpack.c.l.b16 %v2661
    %v3404 = vunpack.c.h.b16 %v2661
    %v3405 = vunpack.c.l.b16 %v2662
    %v3406 = vunpack.c.h.b16 %v2662
    %v3407 = vunpack.c.l.b16 %v2663
    %v3408 = vunpack.c.h.b16 %v2663
    %v3409 = vunpack.c.l.b16 %v2664
    %v3410 = vunpack.c.h.b16 %v2664
    %v3411 = vunpack.c.l.b16 %v2665
    %v3412 = vunpack.c.h.b16 %v2665
    %v3413 = vunpack.c.l.b16 %v2666
    %v3414 = vunpack.c.h.b16 %v2666
    %v3415 = vunpack.c.l.b16 %v2667
    %v3416 = vunpack.c.h.b16 %v2667
    %v3417 = vunpack.c.l.b16 %v2668
    %v3418 = vunpack.c.h.b16 %v2668
    %v3419 = vunpack.c.l.b16 %v2669
    %v3420 = vunpack.c.h.b16 %v2669
    %v3421 = vunpack.c.l.b16 %v2670
    %v3422 = vunpack.c.h.b16 %v2670
    %v3423 = vunpack.c.l.b16 %v2671
    %v3424 = vunpack.c.h.b16 %v2671
    %v3425 = vunpack.c.l.b16 %v2672
    %v3426 = vunpack.c.h.b16 %v2672
    %v3427 = vunpack.c.l.b16 %v2673
    %v3428 = vunpack.c.h.b16 %v2673
    %v3429 = vunpack.c.l.b16 %v2674
    %v3430 = vunpack.c.h.b16 %v2674
    %v3431 = vunpack.c.l.b16 %v2675
    %v3432 = vunpack.c.h.b16 %v2675
    %v3433 = vunpack.c.l.b16 %v2676
    %v3434 = vunpack.c.h.b16 %v2676
    %v3435 = vunpack.c.l.b16 %v2677
    %v3436 = vunpack.c.h.b16 %v2677
    %v3437 = vunpack.c.l.b16 %v2678
    %v3438 = vunpack.c.h.b16 %v2678
    %v3439 = vunpack.c.l.b16 %v2679
    %v3440 = vunpack.c.h.b16 %v2679
    %v3441 = vunpack.c.l.b16 %v2680
    %v3442 = vunpack.c.h.b16 %v2680
    %v3443 = vunpack.c.l.b16 %v2681
    %v3444 = vunpack.c.h.b16 %v2681
    %v3445 = vunpack.c.l.b16 %v2682
    %v3446 = vunpack.c.h.b16 %v2682
    %v3447 = vunpack.c.l.b16 %v2683
    %v3448 = vunpack.c.h.b16 %v2683
    %v3449 = vunpack.c.l.b16 %v2684
    %v3450 = vunpack.c.h.b16 %v2684
    %v3451 = vunpack.c.l.b16 %v2685
    %v3452 = vunpack.c.h.b16 %v2685
    %v3453 = vunpack.c.l.b16 %v2686
    %v3454 = vunpack.c.h.b16 %v2686
    %v3455 = vunpack.c.l.b16 %v2687
    %v3456 = vunpack.c.h.b16 %v2687
    %v3457 = vunpack.c.l.b16 %v2688
    %v3458 = vunpack.c.h.b16 %v2688
    %v3459 = vunpack.c.l.b16 %v2689
    %v3460 = vunpack.c.h.b16 %v2689
    %v3461 = vunpack.c.l.b16 %v2690
    %v3462 = vunpack.c.h.b16 %v2690
    %v3463 = vunpack.c.l.b16 %v2691
    %v3464 = vunpack.c.h.b16 %v2691
    %v3465 = vunpack.c.l.b16 %v2692
    %v3466 = vunpack.c.h.b16 %v2692
    %v3467 = vunpack.c.l.b16 %v2693
    %v3468 = vunpack.c.h.b16 %v2693
    %v3469 = vunpack.c.l.b16 %v2694
    %v3470 = vunpack.c.h.b16 %v2694
    %v3471 = vunpack.c.l.b16 %v2695
    %v3472 = vunpack.c.h.b16 %v2695
    %v3473 = vunpack.c.l.b16 %v2696
    %v3474 = vunpack.c.h.b16 %v2696
    %v3475 = vunpack.c.l.b16 %v2697
    %v3476 = vunpack.c.h.b16 %v2697
    %v3477 = vunpack.c.l.b16 %v2698
    %v3478 = vunpack.c.h.b16 %v2698
    %v3479 = vunpack.c.l.b16 %v2699
    %v3480 = vunpack.c.h.b16 %v2699
    %v3481 = vunpack.c.l.b16 %v2700
    %v3482 = vunpack.c.h.b16 %v2700
    %v3483 = vunpack.c.l.b16 %v2701
    %v3484 = vunpack.c.h.b16 %v2701
    %v3485 = vunpack.c.l.b16 %v2702
    %v3486 = vunpack.c.h.b16 %v2702
    %v3487 = vunpack.c.l.b16 %v2703
    %v3488 = vunpack.c.h.b16 %v2703
    %v3489 = vunpack.c.l.b16 %v2704
    %v3490 = vunpack.c.h.b16 %v2704
    %v3491 = vunpack.c.l.b16 %v2705
    %v3492 = vunpack.c.h.b16 %v2705
    %v3493 = vunpack.c.l.b16 %v2706
    %v3494 = vunpack.c.h.b16 %v2706
    %v3495 = vunpack.c.l.b16 %v2707
    %v3496 = vunpack.c.h.b16 %v2707
    %v3497 = vunpack.c.l.b16 %v2708
    %v3498 = vunpack.c.h.b16 %v2708
    %v3499 = vunpack.c.l.b16 %v2709
    %v3500 = vunpack.c.h.b16 %v2709
    %v3501 = vunpack.c.l.b16 %v2710
    %v3502 = vunpack.c.h.b16 %v2710
    %v3503 = vunpack.c.l.b16 %v2711
    %v3504 = vunpack.c.h.b16 %v2711
    %v3505 = vunpack.c.l.b16 %v2712
    %v3506 = vunpack.c.h.b16 %v2712
    %v3507 = vunpack.c.l.b16 %v2713
    %v3508 = vunpack.c.h.b16 %v2713
    %v3509 = vunpack.c.l.b16 %v2714
    %v3510 = vunpack.c.h.b16 %v2714
    %v3511 = vunpack.c.l.b16 %v2715
    %v3512 = vunpack.c.h.b16 %v2715
    %v3513 = vunpack.c.l.b16 %v2716
    %v3514 = vunpack.c.h.b16 %v2716
    %v3515 = vunpack.c.l.b16 %v2717
    %v3516 = vunpack.c.h.b16 %v2717
    %v3517 = vunpack.c.l.b16 %v2718
    %v3518 = vunpack.c.h.b16 %v2718
    %v3519 = vunpack.c.l.b16 %v2719
    %v3520 = vunpack.c.h.b16 %v2719
    %v3521 = vunpack.c.l.b16 %v2720
    %v3522 = vunpack.c.h.b16 %v2720
    %v3523 = vunpack.c.l.b16 %v2721
    %v3524 = vunpack.c.h.b16 %v2721
    %v3525 = vunpack.c.l.b16 %v2722
    %v3526 = vunpack.c.h.b16 %v2722
    %v3527 = vunpack.c.l.b16 %v2723
    %v3528 = vunpack.c.h.b16 %v2723
    %v3529 = vunpack.c.l.b16 %v2724
    %v3530 = vunpack.c.h.b16 %v2724
    %v3531 = vunpack.c.l.b16 %v2725
    %v3532 = vunpack.c.h.b16 %v2725
    %v3533 = vunpack.c.l.b16 %v2726
    %v3534 = vunpack.c.h.b16 %v2726
    %v3535 = vunpack.c.l.b16 %v2727
    %v3536 = vunpack.c.h.b16 %v2727
    %v3537 = vunpack.c.l.b16 %v2728
    %v3538 = vunpack.c.h.b16 %v2728
    %v3539 = vunpack.c.l.b16 %v2729
    %v3540 = vunpack.c.h.b16 %v2729
    %v3541 = vunpack.c.l.b16 %v2730
    %v3542 = vunpack.c.h.b16 %v2730
    %v3543 = vunpack.c.l.b16 %v2731
    %v3544 = vunpack.c.h.b16 %v2731
    %v3545 = vunpack.c.l.b16 %v2732
    %v3546 = vunpack.c.h.b16 %v2732
    %v3547 = vunpack.c.l.b16 %v2733
    %v3548 = vunpack.c.h.b16 %v2733
    %v3549 = vunpack.c.l.b16 %v2734
    %v3550 = vunpack.c.h.b16 %v2734
    %v3551 = vunpack.c.l.b16 %v2735
    %v3552 = vunpack.c.h.b16 %v2735
    %v3553 = vunpack.c.l.b16 %v2736
    %v3554 = vunpack.c.h.b16 %v2736
    %v3555 = vunpack.c.l.b16 %v2737
    %v3556 = vunpack.c.h.b16 %v2737
    %v3557 = vunpack.c.l.b16 %v2738
    %v3558 = vunpack.c.h.b16 %v2738
    %v3559 = vunpack.c.l.b16 %v2739
    %v3560 = vunpack.c.h.b16 %v2739
    %v3561 = vunpack.c.l.b16 %v2740
    %v3562 = vunpack.c.h.b16 %v2740
    %v3563 = vunpack.c.l.b16 %v2741
    %v3564 = vunpack.c.h.b16 %v2741
    %v3565 = vunpack.c.l.b16 %v2742
    %v3566 = vunpack.c.h.b16 %v2742
    %v3567 = vunpack.c.l.b16 %v2743
    %v3568 = vunpack.c.h.b16 %v2743
    %v3569 = vunpack.c.l.b16 %v2744
    %v3570 = vunpack.c.h.b16 %v2744
    %v3571 = vunpack.c.l.b16 %v2745
    %v3572 = vunpack.c.h.b16 %v2745
    %v3573 = vunpack.c.l.b16 %v2746
    %v3574 = vunpack.c.h.b16 %v2746
    %v3575 = vunpack.c.l.b16 %v2747
    %v3576 = vunpack.c.h.b16 %v2747
    %v3577 = vunpack.c.l.b16 %v2748
    %v3578 = vunpack.c.h.b16 %v2748
    %v3579 = vunpack.c.l.b16 %v2749
    %v3580 = vunpack.c.h.b16 %v2749
    %v3581 = vunpack.c.l.b16 %v2750
    %v3582 = vunpack.c.h.b16 %v2750
    %v3583 = vunpack.c.l.b16 %v2751
    %v3584 = vunpack.c.h.b16 %v2751
    %v3585 = vunpack.c.l.b16 %v2752
    %v3586 = vunpack.c.h.b16 %v2752
    %v3587 = vunpack.c.l.b16 %v2753
    %v3588 = vunpack.c.h.b16 %v2753
    %v3589 = vunpack.c.l.b16 %v2754
    %v3590 = vunpack.c.h.b16 %v2754
    %v3591 = vunpack.c.l.b16 %v2755
    %v3592 = vunpack.c.h.b16 %v2755
    %v3593 = vunpack.c.l.b16 %v2756
    %v3594 = vunpack.c.h.b16 %v2756
    %v3595 = vunpack.c.l.b16 %v2757
    %v3596 = vunpack.c.h.b16 %v2757
    %v3597 = vunpack.c.l.b16 %v2758
    %v3598 = vunpack.c.h.b16 %v2758
    %v3599 = vunpack.c.l.b16 %v2759
    %v3600 = vunpack.c.h.b16 %v2759
    %v3601 = vunpack.c.l.b16 %v2760
    %v3602 = vunpack.c.h.b16 %v2760
    %v3603 = vunpack.c.l.b16 %v2761
    %v3604 = vunpack.c.h.b16 %v2761
    %v3605 = vunpack.c.l.b16 %v2762
    %v3606 = vunpack.c.h.b16 %v2762
    %v3607 = vunpack.c.l.b16 %v2763
    %v3608 = vunpack.c.h.b16 %v2763
    %v3609 = vunpack.c.l.b16 %v2764
    %v3610 = vunpack.c.h.b16 %v2764
    %v3611 = vunpack.c.l.b16 %v2765
    %v3612 = vunpack.c.h.b16 %v2765
    %v3613 = vunpack.c.l.b16 %v2766
    %v3614 = vunpack.c.h.b16 %v2766
    %v3615 = vunpack.c.l.b16 %v2767
    %v3616 = vunpack.c.h.b16 %v2767
    %v3617 = vunpack.c.l.b16 %v2768
    %v3618 = vunpack.c.h.b16 %v2768
    %v3619 = vunpack.c.l.b16 %v2769
    %v3620 = vunpack.c.h.b16 %v2769
    %v3621 = vunpack.c.l.b16 %v2770
    %v3622 = vunpack.c.h.b16 %v2770
    %v3623 = vunpack.c.l.b16 %v2771
    %v3624 = vunpack.c.h.b16 %v2771
    %v3625 = vunpack.c.l.b16 %v2772
    %v3626 = vunpack.c.h.b16 %v2772
    %v3627 = vunpack.c.l.b16 %v2773
    %v3628 = vunpack.c.h.b16 %v2773
    %v3629 = vunpack.c.l.b16 %v2774
    %v3630 = vunpack.c.h.b16 %v2774
    %v3631 = vunpack.c.l.b16 %v2775
    %v3632 = vunpack.c.h.b16 %v2775
    %v3633 = vunpack.c.l.b16 %v2776
    %v3634 = vunpack.c.h.b16 %v2776
    %v3635 = vunpack.c.l.b16 %v2777
    %v3636 = vunpack.c.h.b16 %v2777
    %v3637 = vunpack.c.l.b16 %v2778
    %v3638 = vunpack.c.h.b16 %v2778
    %v3639 = vunpack.c.l.b16 %v2779
    %v3640 = vunpack.c.h.b16 %v2779
    %v3641 = vunpack.c.l.b16 %v2780
    %v3642 = vunpack.c.h.b16 %v2780
    %v3643 = vunpack.c.l.b16 %v2781
    %v3644 = vunpack.c.h.b16 %v2781
    %v3645 = vunpack.c.l.b16 %v2782
    %v3646 = vunpack.c.h.b16 %v2782
    %v3647 = vunpack.c.l.b16 %v2783
    %v3648 = vunpack.c.h.b16 %v2783
    %v3649 = vunpack.c.l.b16 %v2784
    %v3650 = vunpack.c.h.b16 %v2784
    %v3651 = vunpack.c.l.b16 %v2785
    %v3652 = vunpack.c.h.b16 %v2785
    %v3653 = vunpack.c.l.b16 %v2786
    %v3654 = vunpack.c.h.b16 %v2786
    %v3655 = vunpack.c.l.b16 %v2787
    %v3656 = vunpack.c.h.b16 %v2787
    %v3657 = vunpack.c.l.b16 %v2788
    %v3658 = vunpack.c.h.b16 %v2788
    %v3659 = vunpack.c.l.b16 %v2789
    %v3660 = vunpack.c.h.b16 %v2789
    %v3661 = vunpack.c.l.b16 %v2790
    %v3662 = vunpack.c.h.b16 %v2790
    %v3663 = vunpack.c.l.b16 %v2791
    %v3664 = vunpack.c.h.b16 %v2791
    %v3665 = vunpack.c.l.b16 %v2792
    %v3666 = vunpack.c.h.b16 %v2792
    %v3667 = vunpack.c.l.b16 %v2793
    %v3668 = vunpack.c.h.b16 %v2793
    %v3669 = vunpack.c.l.b16 %v2794
    %v3670 = vunpack.c.h.b16 %v2794
    %v3671 = vunpack.c.l.b16 %v2795
    %v3672 = vunpack.c.h.b16 %v2795
    %v3673 = vunpack.c.l.b16 %v2796
    %v3674 = vunpack.c.h.b16 %v2796
    %v3675 = vpack.c.b16 %v3105, %v3099
    %v3676 = vpack.c.b16 %v3106, %v3100
    %v3677 = vpack.c.b16 %v3107, %v3101
    %v3678 = vpack.c.b16 %v3108, %v3102
    %v3679 = vpack.c.b16 %v3109, %v3103
    %v3680 = vpack.c.b16 %v3110, %v3104
    %v3681 = vpack.c.b16 %v3117, %v3111
    %v3682 = vpack.c.b16 %v3118, %v3112
    %v3683 = vpack.c.b16 %v3119, %v3113
    %v3684 = vpack.c.b16 %v3120, %v3114
    %v3685 = vpack.c.b16 %v3121, %v3115
    %v3686 = vpack.c.b16 %v3122, %v3116
    %v3687 = vpack.c.b16 %v3129, %v3123
    %v3688 = vpack.c.b16 %v3130, %v3124
    %v3689 = vpack.c.b16 %v3131, %v3125
    %v3690 = vpack.c.b16 %v3132, %v3126
    %v3691 = vpack.c.b16 %v3133, %v3127
    %v3692 = vpack.c.b16 %v3134, %v3128
    %v3693 = vpack.c.b16 %v3141, %v3135
    %v3694 = vpack.c.b16 %v3142, %v3136
    %v3695 = vpack.c.b16 %v3143, %v3137
    %v3696 = vpack.c.b16 %v3144, %v3138
    %v3697 = vpack.c.b16 %v3145, %v3139
    %v3698 = vpack.c.b16 %v3146, %v3140
    %v3699 = vpack.c.b16 %v3153, %v3147
    %v3700 = vpack.c.b16 %v3154, %v3148
    %v3701 = vpack.c.b16 %v3155, %v3149
    %v3702 = vpack.c.b16 %v3156, %v3150
    %v3703 = vpack.c.b16 %v3157, %v3151
    %v3704 = vpack.c.b16 %v3158, %v3152
    %v3705 = vpack.c.b16 %v3165, %v3159
    %v3706 = vpack.c.b16 %v3166, %v3160
    %v3707 = vpack.c.b16 %v3167, %v3161
    %v3708 = vpack.c.b16 %v3168, %v3162
    %v3709 = vpack.c.b16 %v3169, %v3163
    %v3710 = vpack.c.b16 %v3170, %v3164
    %v3711 = vpack.c.b16 %v3177, %v3171
    %v3712 = vpack.c.b16 %v3178, %v3172
    %v3713 = vpack.c.b16 %v3179, %v3173
    %v3714 = vpack.c.b16 %v3180, %v3174
    %v3715 = vpack.c.b16 %v3181, %v3175
    %v3716 = vpack.c.b16 %v3182, %v3176
    %v3717 = vpack.c.b16 %v3189, %v3183
    %v3718 = vpack.c.b16 %v3190, %v3184
    %v3719 = vpack.c.b16 %v3191, %v3185
    %v3720 = vpack.c.b16 %v3192, %v3186
    %v3721 = vpack.c.b16 %v3193, %v3187
    %v3722 = vpack.c.b16 %v3194, %v3188
    %v3723 = vpack.c.b16 %v3201, %v3195
    %v3724 = vpack.c.b16 %v3202, %v3196
    %v3725 = vpack.c.b16 %v3203, %v3197
    %v3726 = vpack.c.b16 %v3204, %v3198
    %v3727 = vpack.c.b16 %v3205, %v3199
    %v3728 = vpack.c.b16 %v3206, %v3200
    %v3729 = vpack.c.b16 %v3213, %v3207
    %v3730 = vpack.c.b16 %v3214, %v3208
    %v3731 = vpack.c.b16 %v3215, %v3209
    %v3732 = vpack.c.b16 %v3216, %v3210
    %v3733 = vpack.c.b16 %v3217, %v3211
    %v3734 = vpack.c.b16 %v3218, %v3212
    %v3735 = vpack.c.b16 %v3225, %v3219
    %v3736 = vpack.c.b16 %v3226, %v3220
    %v3737 = vpack.c.b16 %v3227, %v3221
    %v3738 = vpack.c.b16 %v3228, %v3222
    %v3739 = vpack.c.b16 %v3229, %v3223
    %v3740 = vpack.c.b16 %v3230, %v3224
    %v3741 = vpack.c.b16 %v3237, %v3231
    %v3742 = vpack.c.b16 %v3238, %v3232
    %v3743 = vpack.c.b16 %v3239, %v3233
    %v3744 = vpack.c.b16 %v3240, %v3234
    %v3745 = vpack.c.b16 %v3241, %v3235
    %v3746 = vpack.c.b16 %v3242, %v3236
    %v3747 = vpack.c.b16 %v3249, %v3243
    %v3748 = vpack.c.b16 %v3250, %v3244
    %v3749 = vpack.c.b16 %v3251, %v3245
    %v3750 = vpack.c.b16 %v3252, %v3246
    %v3751 = vpack.c.b16 %v3253, %v3247
    %v3752 = vpack.c.b16 %v3254, %v3248
    %v3753 = vpack.c.b16 %v3261, %v3255
    %v3754 = vpack.c.b16 %v3262, %v3256
    %v3755 = vpack.c.b16 %v3263, %v3257
    %v3756 = vpack.c.b16 %v3264, %v3258
    %v3757 = vpack.c.b16 %v3265, %v3259
    %v3758 = vpack.c.b16 %v3266, %v3260
    %v3759 = vpack.c.b16 %v3273, %v3267
    %v3760 = vpack.c.b16 %v3274, %v3268
    %v3761 = vpack.c.b16 %v3275, %v3269
    %v3762 = vpack.c.b16 %v3276, %v3270
    %v3763 = vpack.c.b16 %v3277, %v3271
    %v3764 = vpack.c.b16 %v3278, %v3272
    %v3765 = vpack.c.b16 %v3285, %v3279
    %v3766 = vpack.c.b16 %v3286, %v3280
    %v3767 = vpack.c.b16 %v3287, %v3281
    %v3768 = vpack.c.b16 %v3288, %v3282
    %v3769 = vpack.c.b16 %v3289, %v3283
    %v3770 = vpack.c.b16 %v3290, %v3284
    %v3771 = vpack.c.b16 %v3297, %v3291
    %v3772 = vpack.c.b16 %v3298, %v3292
    %v3773 = vpack.c.b16 %v3299, %v3293
    %v3774 = vpack.c.b16 %v3300, %v3294
    %v3775 = vpack.c.b16 %v3301, %v3295
    %v3776 = vpack.c.b16 %v3302, %v3296
    %v3777 = vpack.c.b16 %v3309, %v3303
    %v3778 = vpack.c.b16 %v3310, %v3304
    %v3779 = vpack.c.b16 %v3311, %v3305
    %v3780 = vpack.c.b16 %v3312, %v3306
    %v3781 = vpack.c.b16 %v3313, %v3307
    %v3782 = vpack.c.b16 %v3314, %v3308
    %v3783 = vpack.c.b16 %v3321, %v3315
    %v3784 = vpack.c.b16 %v3322, %v3316
    %v3785 = vpack.c.b16 %v3323, %v3317
    %v3786 = vpack.c.b16 %v3324, %v3318
    %v3787 = vpack.c.b16 %v3325, %v3319
    %v3788 = vpack.c.b16 %v3326, %v3320
    %v3789 = vpack.c.b16 %v3333, %v3327
    %v3790 = vpack.c.b16 %v3334, %v3328
    %v3791 = vpack.c.b16 %v3335, %v3329
    %v3792 = vpack.c.b16 %v3336, %v3330
    %v3793 = vpack.c.b16 %v3337, %v3331
    %v3794 = vpack.c.b16 %v3338, %v3332
    %v3795 = vpack.c.b16 %v3345, %v3339
    %v3796 = vpack.c.b16 %v3346, %v3340
    %v3797 = vpack.c.b16 %v3347, %v3341
    %v3798 = vpack.c.b16 %v3348, %v3342
    %v3799 = vpack.c.b16 %v3349, %v3343
    %v3800 = vpack.c.b16 %v3350, %v3344
    %v3801 = vpack.c.b16 %v3357, %v3351
    %v3802 = vpack.c.b16 %v3358, %v3352
    %v3803 = vpack.c.b16 %v3359, %v3353
    %v3804 = vpack.c.b16 %v3360, %v3354
    %v3805 = vpack.c.b16 %v3361, %v3355
    %v3806 = vpack.c.b16 %v3362, %v3356
    %v3807 = vpack.c.b16 %v3369, %v3363
    %v3808 = vpack.c.b16 %v3370, %v3364
    %v3809 = vpack.c.b16 %v3371, %v3365
    %v3810 = vpack.c.b16 %v3372, %v3366
    %v3811 = vpack.c.b16 %v3373, %v3367
    %v3812 = vpack.c.b16 %v3374, %v3368
    %v3813 = vpack.c.b16 %v3381, %v3375
    %v3814 = vpack.c.b16 %v3382, %v3376
    %v3815 = vpack.c.b16 %v3383, %v3377
    %v3816 = vpack.c.b16 %v3384, %v3378
    %v3817 = vpack.c.b16 %v3385, %v3379
    %v3818 = vpack.c.b16 %v3386, %v3380
    %v3819 = vpack.c.b16 %v3393, %v3387
    %v3820 = vpack.c.b16 %v3394, %v3388
    %v3821 = vpack.c.b16 %v3395, %v3389
    %v3822 = vpack.c.b16 %v3396, %v3390
    %v3823 = vpack.c.b16 %v3397, %v3391
    %v3824 = vpack.c.b16 %v3398, %v3392
    %v3825 = vpack.c.b16 %v3405, %v3399
    %v3826 = vpack.c.b16 %v3406, %v3400
    %v3827 = vpack.c.b16 %v3407, %v3401
    %v3828 = vpack.c.b16 %v3408, %v3402
    %v3829 = vpack.c.b16 %v3409, %v3403
    %v3830 = vpack.c.b16 %v3410, %v3404
    %v3831 = vpack.c.b16 %v3417, %v3411
    %v3832 = vpack.c.b16 %v3418, %v3412
    %v3833 = vpack.c.b16 %v3419, %v3413
    %v3834 = vpack.c.b16 %v3420, %v3414
    %v3835 = vpack.c.b16 %v3421, %v3415
    %v3836 = vpack.c.b16 %v3422, %v3416
    %v3837 = vpack.c.b16 %v3429, %v3423
    %v3838 = vpack.c.b16 %v3430, %v3424
    %v3839 = vpack.c.b16 %v3431, %v3425
    %v3840 = vpack.c.b16 %v3432, %v3426
    %v3841 = vpack.c.b16 %v3433, %v3427
    %v3842 = vpack.c.b16 %v3434, %v3428
    %v3843 = vpack.c.b16 %v3441, %v3435
    %v3844 = vpack.c.b16 %v3442, %v3436
    %v3845 = vpack.c.b16 %v3443, %v3437
    %v3846 = vpack.c.b16 %v3444, %v3438
    %v3847 = vpack.c.b16 %v3445, %v3439
    %v3848 = vpack.c.b16 %v3446, %v3440
    %v3849 = vpack.c.b16 %v3453, %v3447
    %v3850 = vpack.c.b16 %v3454, %v3448
    %v3851 = vpack.c.b16 %v3455, %v3449
    %v3852 = vpack.c.b16 %v3456, %v3450
    %v3853 = vpack.c.b16 %v3457, %v3451
    %v3854 = vpack.c.b16 %v3458, %v3452
    %v3855 = vpack.c.b16 %v3465, %v3459
    %v3856 = vpack.c.b16 %v3466, %v3460
    %v3857 = vpack.c.b16 %v3467, %v3461
    %v3858 = vpack.c.b16 %v3468, %v3462
    %v3859 = vpack.c.b16 %v3469, %v3463
    %v3860 = vpack.c.b16 %v3470, %v3464
    %v3861 = vpack.c.b16 %v3477, %v3471
    %v3862 = vpack.c.b16 %v3478, %v3472
    %v3863 = vpack.c.b16 %v3479, %v3473
    %v3864 = vpack.c.b16 %v3480, %v3474
    %v3865 = vpack.c.b16 %v3481, %v3475
    %v3866 = vpack.c.b16 %v3482, %v3476
    %v3867 = vpack.c.b16 %v3489, %v3483
    %v3868 = vpack.c.b16 %v3490, %v3484
    %v3869 = vpack.c.b16 %v3491, %v3485
    %v3870 = vpack.c.b16 %v3492, %v3486
    %v3871 = vpack.c.b16 %v3493, %v3487
    %v3872 = vpack.c.b16 %v3494, %v3488
    %v3873 = vpack.c.b16 %v3501, %v3495
    %v3874 = vpack.c.b16 %v3502, %v3496
    %v3875 = vpack.c.b16 %v3503, %v3497
    %v3876 = vpack.c.b16 %v3504, %v3498
    %v3877 = vpack.c.b16 %v3505, %v3499
    %v3878 = vpack.c.b16 %v3506, %v3500
    %v3879 = vpack.c.b16 %v3513, %v3507
    %v3880 = vpack.c.b16 %v3514, %v3508
    %v3881 = vpack.c.b16 %v3515, %v3509
    %v3882 = vpack.c.b16 %v3516, %v3510
    %v3883 = vpack.c.b16 %v3517, %v3511
    %v3884 = vpack.c.b16 %v3518, %v3512
    %v3885 = vpack.c.b16 %v3525, %v3519
    %v3886 = vpack.c.b16 %v3526, %v3520
    %v3887 = vpack.c.b16 %v3527, %v3521
    %v3888 = vpack.c.b16 %v3528, %v3522
    %v3889 = vpack.c.b16 %v3529, %v3523
    %v3890 = vpack.c.b16 %v3530, %v3524
    %v3891 = vpack.c.b16 %v3537, %v3531
    %v3892 = vpack.c.b16 %v3538, %v3532
    %v3893 = vpack.c.b16 %v3539, %v3533
    %v3894 = vpack.c.b16 %v3540, %v3534
    %v3895 = vpack.c.b16 %v3541, %v3535
    %v3896 = vpack.c.b16 %v3542, %v3536
    %v3897 = vpack.c.b16 %v3549, %v3543
    %v3898 = vpack.c.b16 %v3550, %v3544
    %v3899 = vpack.c.b16 %v3551, %v3545
    %v3900 = vpack.c.b16 %v3552, %v3546
    %v3901 = vpack.c.b16 %v3553, %v3547
    %v3902 = vpack.c.b16 %v3554, %v3548
    %v3903 = vpack.c.b16 %v3561, %v3555
    %v3904 = vpack.c.b16 %v3562, %v3556
    %v3905 = vpack.c.b16 %v3563, %v3557
    %v3906 = vpack.c.b16 %v3564, %v3558
    %v3907 = vpack.c.b16 %v3565, %v3559
    %v3908 = vpack.c.b16 %v3566, %v3560
    %v3909 = vpack.c.b16 %v3573, %v3567
    %v3910 = vpack.c.b16 %v3574, %v3568
    %v3911 = vpack.c.b16 %v3575, %v3569
    %v3912 = vpack.c.b16 %v3576, %v3570
    %v3913 = vpack.c.b16 %v3577, %v3571
    %v3914 = vpack.c.b16 %v3578, %v3572
    %v3915 = vpack.c.b16 %v3585, %v3579
    %v3916 = vpack.c.b16 %v3586, %v3580
    %v3917 = vpack.c.b16 %v3587, %v3581
    %v3918 = vpack.c.b16 %v3588, %v3582
    %v3919 = vpack.c.b16 %v3589, %v3583
    %v3920 = vpack.c.b16 %v3590, %v3584
    %v3921 = vpack.c.b16 %v3597, %v3591
    %v3922 = vpack.c.b16 %v3598, %v3592
    %v3923 = vpack.c.b16 %v3599, %v3593
    %v3924 = vpack.c.b16 %v3600, %v3594
    %v3925 = vpack.c.b16 %v3601, %v3595
    %v3926 = vpack.c.b16 %v3602, %v3596
    %v3927 = vpack.c.b16 %v3609, %v3603
    %v3928 = vpack.c.b16 %v3610, %v3604
    %v3929 = vpack.c.b16 %v3611, %v3605
    %v3930 = vpack.c.b16 %v3612, %v3606
    %v3931 = vpack.c.b16 %v3613, %v3607
    %v3932 = vpack.c.b16 %v3614, %v3608
    %v3933 = vpack.c.b16 %v3621, %v3615
    %v3934 = vpack.c.b16 %v3622, %v3616
    %v3935 = vpack.c.b16 %v3623, %v3617
    %v3936 = vpack.c.b16 %v3624, %v3618
    %v3937 = vpack.c.b16 %v3625, %v3619
    %v3938 = vpack.c.b16 %v3626, %v3620
    %v3939 = vpack.c.b16 %v3633, %v3627
    %v3940 = vpack.c.b16 %v3634, %v3628
    %v3941 = vpack.c.b16 %v3635, %v3629
    %v3942 = vpack.c.b16 %v3636, %v3630
    %v3943 = vpack.c.b16 %v3637, %v3631
    %v3944 = vpack.c.b16 %v3638, %v3632
    %v3945 = vpack.c.b16 %v3645, %v3639
    %v3946 = vpack.c.b16 %v3646, %v3640
    %v3947 = vpack.c.b16 %v3647, %v3641
    %v3948 = vpack.c.b16 %v3648, %v3642
    %v3949 = vpack.c.b16 %v3649, %v3643
    %v3950 = vpack.c.b16 %v3650, %v3644
    %v3951 = vpack.c.b16 %v3657, %v3651
    %v3952 = vpack.c.b16 %v3658, %v3652
    %v3953 = vpack.c.b16 %v3659, %v3653
    %v3954 = vpack.c.b16 %v3660, %v3654
    %v3955 = vpack.c.b16 %v3661, %v3655
    %v3956 = vpack.c.b16 %v3662, %v3656
    %v3957 = vpack.c.b16 %v3669, %v3663
    %v3958 = vpack.c.b16 %v3670, %v3664
    %v3959 = vpack.c.b16 %v3671, %v3665
    %v3960 = vpack.c.b16 %v3672, %v3666
    %v3961 = vpack.c.b16 %v3673, %v3667
    %v3962 = vpack.c.b16 %v3674, %v3668
    %4251 = vmatpush.bf16.msra.mxu0 %v3717
    %4252 = vmatpush.bf16.msra.mxu0 %v3711
    %4253 = vmatpush.bf16.msra.mxu0 %v3705
    %4254 = vmatpush.bf16.msra.mxu0 %v3699
    %4255 = vmatpush.bf16.msra.mxu0 %v3693
    %4256 = vmatpush.bf16.msra.mxu0 %v3687
    %4257 = vmatpush.bf16.msra.mxu0 %v3681
    %4258 = vmatpush.bf16.msra.mxu0 %v3675
    %4259 = vmatmul.bf16.gmra.mxu0 %v233
    %v4260 = vpop.f32.mrf.mxu0
    %v4261 = vadd.f32 %v2799, %v4260
    %v4262 = vpop.f32.mrf.mxu0
    %v4263 = vadd.f32 %v2799, %v4262
    %4264 = vdwg.mxu0
    %4265 = vmatpush.bf16.msra.mxu0 %v3765
    %4266 = vmatpush.bf16.msra.mxu0 %v3759
    %4267 = vmatpush.bf16.msra.mxu0 %v3753
    %4268 = vmatpush.bf16.msra.mxu0 %v3747
    %4269 = vmatpush.bf16.msra.mxu0 %v3741
    %4270 = vmatpush.bf16.msra.mxu0 %v3735
    %4271 = vmatpush.bf16.msra.mxu0 %v3729
    %4272 = vmatpush.bf16.msra.mxu0 %v3723
    %4273 = vmatmul.bf16.gmra.mxu0 %v234
    %v4274 = vpop.f32.mrf.mxu0
    %v4275 = vadd.f32 %v4261, %v4274
    %v4276 = vpop.f32.mrf.mxu0
    %v4277 = vadd.f32 %v4263, %v4276
    %4278 = vdwg.mxu0
    %4279 = vmatpush.bf16.msra.mxu0 %v3813
    %4280 = vmatpush.bf16.msra.mxu0 %v3807
    %4281 = vmatpush.bf16.msra.mxu0 %v3801
    %4282 = vmatpush.bf16.msra.mxu0 %v3795
    %4283 = vmatpush.bf16.msra.mxu0 %v3789
    %4284 = vmatpush.bf16.msra.mxu0 %v3783
    %4285 = vmatpush.bf16.msra.mxu0 %v3777
    %4286 = vmatpush.bf16.msra.mxu0 %v3771
    %4287 = vmatmul.bf16.gmra.mxu0 %v235
    %v4288 = vpop.f32.mrf.mxu0
    %v4289 = vadd.f32 %v4275, %v4288
    %v4290 = vpop.f32.mrf.mxu0
    %v4291 = vadd.f32 %v4277, %v4290
    %4292 = vdwg.mxu0
    %4293 = vmatpush.bf16.msra.mxu0 %v3861
    %4294 = vmatpush.bf16.msra.mxu0 %v3855
    %4295 = vmatpush.bf16.msra.mxu0 %v3849
    %4296 = vmatpush.bf16.msra.mxu0 %v3843
    %4297 = vmatpush.bf16.msra.mxu0 %v3837
    %4298 = vmatpush.bf16.msra.mxu0 %v3831
    %4299 = vmatpush.bf16.msra.mxu0 %v3825
    %4300 = vmatpush.bf16.msra.mxu0 %v3819
    %4301 = vmatmul.bf16.gmra.mxu0 %v236
    %v4302 = vpop.f32.mrf.mxu0
    %v4303 = vadd.f32 %v4289, %v4302
    %v4304 = vpop.f32.mrf.mxu0
    %v4305 = vadd.f32 %v4291, %v4304
    %4306 = vdwg.mxu0
    %4307 = vmatpush.bf16.msra.mxu0 %v3909
    %4308 = vmatpush.bf16.msra.mxu0 %v3903
    %4309 = vmatpush.bf16.msra.mxu0 %v3897
    %4310 = vmatpush.bf16.msra.mxu0 %v3891
    %4311 = vmatpush.bf16.msra.mxu0 %v3885
    %4312 = vmatpush.bf16.msra.mxu0 %v3879
    %4313 = vmatpush.bf16.msra.mxu0 %v3873
    %4314 = vmatpush.bf16.msra.mxu0 %v3867
    %4315 = vmatmul.bf16.gmra.mxu0 %v237
    %v4316 = vpop.f32.mrf.mxu0
    %v4317 = vadd.f32 %v4303, %v4316
    %v4318 = vpop.f32.mrf.mxu0
    %v4319 = vadd.f32 %v4305, %v4318
    %4320 = vdwg.mxu0
    %4321 = vmatpush.bf16.msra.mxu0 %v3957
    %4322 = vmatpush.bf16.msra.mxu0 %v3951
    %4323 = vmatpush.bf16.msra.mxu0 %v3945
    %4324 = vmatpush.bf16.msra.mxu0 %v3939
    %4325 = vmatpush.bf16.msra.mxu0 %v3933
    %4326 = vmatpush.bf16.msra.mxu0 %v3927
    %4327 = vmatpush.bf16.msra.mxu0 %v3921
    %4328 = vmatpush.bf16.msra.mxu0 %v3915
    %4329 = vmatmul.bf16.gmra.mxu0 %v238
    %v4330 = vpop.f32.mrf.mxu0
    %v4331 = vadd.f32 %v4317, %v4330
    %v4332 = vpop.f32.mrf.mxu0
    %v4333 = vadd.f32 %v4319, %v4332
    %4334 = vdwg.mxu0
    %4335 = vmatpush.bf16.msra.mxu0 %v3718
    %4336 = vmatpush.bf16.msra.mxu0 %v3712
    %4337 = vmatpush.bf16.msra.mxu0 %v3706
    %4338 = vmatpush.bf16.msra.mxu0 %v3700
    %4339 = vmatpush.bf16.msra.mxu0 %v3694
    %4340 = vmatpush.bf16.msra.mxu0 %v3688
    %4341 = vmatpush.bf16.msra.mxu0 %v3682
    %4342 = vmatpush.bf16.msra.mxu0 %v3676
    %4343 = vmatmul.bf16.gmra.mxu0 %v233
    %v4344 = vpop.f32.mrf.mxu0
    %v4345 = vadd.f32 %v2800, %v4344
    %v4346 = vpop.f32.mrf.mxu0
    %v4347 = vadd.f32 %v2800, %v4346
    %4348 = vdwg.mxu0
    %4349 = vmatpush.bf16.msra.mxu0 %v3766
    %4350 = vmatpush.bf16.msra.mxu0 %v3760
    %4351 = vmatpush.bf16.msra.mxu0 %v3754
    %4352 = vmatpush.bf16.msra.mxu0 %v3748
    %4353 = vmatpush.bf16.msra.mxu0 %v3742
    %4354 = vmatpush.bf16.msra.mxu0 %v3736
    %4355 = vmatpush.bf16.msra.mxu0 %v3730
    %4356 = vmatpush.bf16.msra.mxu0 %v3724
    %4357 = vmatmul.bf16.gmra.mxu0 %v234
    %v4358 = vpop.f32.mrf.mxu0
    %v4359 = vadd.f32 %v4345, %v4358
    %v4360 = vpop.f32.mrf.mxu0
    %v4361 = vadd.f32 %v4347, %v4360
    %4362 = vdwg.mxu0
    %4363 = vmatpush.bf16.msra.mxu0 %v3814
    %4364 = vmatpush.bf16.msra.mxu0 %v3808
    %4365 = vmatpush.bf16.msra.mxu0 %v3802
    %4366 = vmatpush.bf16.msra.mxu0 %v3796
    %4367 = vmatpush.bf16.msra.mxu0 %v3790
    %4368 = vmatpush.bf16.msra.mxu0 %v3784
    %4369 = vmatpush.bf16.msra.mxu0 %v3778
    %4370 = vmatpush.bf16.msra.mxu0 %v3772
    %4371 = vmatmul.bf16.gmra.mxu0 %v235
    %v4372 = vpop.f32.mrf.mxu0
    %v4373 = vadd.f32 %v4359, %v4372
    %v4374 = vpop.f32.mrf.mxu0
    %v4375 = vadd.f32 %v4361, %v4374
    %4376 = vdwg.mxu0
    %4377 = vmatpush.bf16.msra.mxu0 %v3862
    %4378 = vmatpush.bf16.msra.mxu0 %v3856
    %4379 = vmatpush.bf16.msra.mxu0 %v3850
    %4380 = vmatpush.bf16.msra.mxu0 %v3844
    %4381 = vmatpush.bf16.msra.mxu0 %v3838
    %4382 = vmatpush.bf16.msra.mxu0 %v3832
    %4383 = vmatpush.bf16.msra.mxu0 %v3826
    %4384 = vmatpush.bf16.msra.mxu0 %v3820
    %4385 = vmatmul.bf16.gmra.mxu0 %v236
    %v4386 = vpop.f32.mrf.mxu0
    %v4387 = vadd.f32 %v4373, %v4386
    %v4388 = vpop.f32.mrf.mxu0
    %v4389 = vadd.f32 %v4375, %v4388
    %4390 = vdwg.mxu0
    %4391 = vmatpush.bf16.msra.mxu0 %v3910
    %4392 = vmatpush.bf16.msra.mxu0 %v3904
    %4393 = vmatpush.bf16.msra.mxu0 %v3898
    %4394 = vmatpush.bf16.msra.mxu0 %v3892
    %4395 = vmatpush.bf16.msra.mxu0 %v3886
    %4396 = vmatpush.bf16.msra.mxu0 %v3880
    %4397 = vmatpush.bf16.msra.mxu0 %v3874
    %4398 = vmatpush.bf16.msra.mxu0 %v3868
    %4399 = vmatmul.bf16.gmra.mxu0 %v237
    %v4400 = vpop.f32.mrf.mxu0
    %v4401 = vadd.f32 %v4387, %v4400
    %v4402 = vpop.f32.mrf.mxu0
    %v4403 = vadd.f32 %v4389, %v4402
    %4404 = vdwg.mxu0
    %4405 = vmatpush.bf16.msra.mxu0 %v3958
    %4406 = vmatpush.bf16.msra.mxu0 %v3952
    %4407 = vmatpush.bf16.msra.mxu0 %v3946
    %4408 = vmatpush.bf16.msra.mxu0 %v3940
    %4409 = vmatpush.bf16.msra.mxu0 %v3934
    %4410 = vmatpush.bf16.msra.mxu0 %v3928
    %4411 = vmatpush.bf16.msra.mxu0 %v3922
    %4412 = vmatpush.bf16.msra.mxu0 %v3916
    %4413 = vmatmul.bf16.gmra.mxu0 %v238
    %v4414 = vpop.f32.mrf.mxu0
    %v4415 = vadd.f32 %v4401, %v4414
    %v4416 = vpop.f32.mrf.mxu0
    %v4417 = vadd.f32 %v4403, %v4416
    %4418 = vdwg.mxu0
    %4419 = vmatpush.bf16.msra.mxu0 %v3719
    %4420 = vmatpush.bf16.msra.mxu0 %v3713
    %4421 = vmatpush.bf16.msra.mxu0 %v3707
    %4422 = vmatpush.bf16.msra.mxu0 %v3701
    %4423 = vmatpush.bf16.msra.mxu0 %v3695
    %4424 = vmatpush.bf16.msra.mxu0 %v3689
    %4425 = vmatpush.bf16.msra.mxu0 %v3683
    %4426 = vmatpush.bf16.msra.mxu0 %v3677
    %4427 = vmatmul.bf16.gmra.mxu0 %v233
    %v4428 = vpop.f32.mrf.mxu0
    %v4429 = vadd.f32 %v2801, %v4428
    %v4430 = vpop.f32.mrf.mxu0
    %v4431 = vadd.f32 %v2801, %v4430
    %4432 = vdwg.mxu0
    %4433 = vmatpush.bf16.msra.mxu0 %v3767
    %4434 = vmatpush.bf16.msra.mxu0 %v3761
    %4435 = vmatpush.bf16.msra.mxu0 %v3755
    %4436 = vmatpush.bf16.msra.mxu0 %v3749
    %4437 = vmatpush.bf16.msra.mxu0 %v3743
    %4438 = vmatpush.bf16.msra.mxu0 %v3737
    %4439 = vmatpush.bf16.msra.mxu0 %v3731
    %4440 = vmatpush.bf16.msra.mxu0 %v3725
    %4441 = vmatmul.bf16.gmra.mxu0 %v234
    %v4442 = vpop.f32.mrf.mxu0
    %v4443 = vadd.f32 %v4429, %v4442
    %v4444 = vpop.f32.mrf.mxu0
    %v4445 = vadd.f32 %v4431, %v4444
    %4446 = vdwg.mxu0
    %4447 = vmatpush.bf16.msra.mxu0 %v3815
    %4448 = vmatpush.bf16.msra.mxu0 %v3809
    %4449 = vmatpush.bf16.msra.mxu0 %v3803
    %4450 = vmatpush.bf16.msra.mxu0 %v3797
    %4451 = vmatpush.bf16.msra.mxu0 %v3791
    %4452 = vmatpush.bf16.msra.mxu0 %v3785
    %4453 = vmatpush.bf16.msra.mxu0 %v3779
    %4454 = vmatpush.bf16.msra.mxu0 %v3773
    %4455 = vmatmul.bf16.gmra.mxu0 %v235
    %v4456 = vpop.f32.mrf.mxu0
    %v4457 = vadd.f32 %v4443, %v4456
    %v4458 = vpop.f32.mrf.mxu0
    %v4459 = vadd.f32 %v4445, %v4458
    %4460 = vdwg.mxu0
    %4461 = vmatpush.bf16.msra.mxu0 %v3863
    %4462 = vmatpush.bf16.msra.mxu0 %v3857
    %4463 = vmatpush.bf16.msra.mxu0 %v3851
    %4464 = vmatpush.bf16.msra.mxu0 %v3845
    %4465 = vmatpush.bf16.msra.mxu0 %v3839
    %4466 = vmatpush.bf16.msra.mxu0 %v3833
    %4467 = vmatpush.bf16.msra.mxu0 %v3827
    %4468 = vmatpush.bf16.msra.mxu0 %v3821
    %4469 = vmatmul.bf16.gmra.mxu0 %v236
    %v4470 = vpop.f32.mrf.mxu0
    %v4471 = vadd.f32 %v4457, %v4470
    %v4472 = vpop.f32.mrf.mxu0
    %v4473 = vadd.f32 %v4459, %v4472
    %4474 = vdwg.mxu0
    %4475 = vmatpush.bf16.msra.mxu0 %v3911
    %4476 = vmatpush.bf16.msra.mxu0 %v3905
    %4477 = vmatpush.bf16.msra.mxu0 %v3899
    %4478 = vmatpush.bf16.msra.mxu0 %v3893
    %4479 = vmatpush.bf16.msra.mxu0 %v3887
    %4480 = vmatpush.bf16.msra.mxu0 %v3881
    %4481 = vmatpush.bf16.msra.mxu0 %v3875
    %4482 = vmatpush.bf16.msra.mxu0 %v3869
    %4483 = vmatmul.bf16.gmra.mxu0 %v237
    %v4484 = vpop.f32.mrf.mxu0
    %v4485 = vadd.f32 %v4471, %v4484
    %v4486 = vpop.f32.mrf.mxu0
    %v4487 = vadd.f32 %v4473, %v4486
    %4488 = vdwg.mxu0
    %4489 = vmatpush.bf16.msra.mxu0 %v3959
    %4490 = vmatpush.bf16.msra.mxu0 %v3953
    %4491 = vmatpush.bf16.msra.mxu0 %v3947
    %4492 = vmatpush.bf16.msra.mxu0 %v3941
    %4493 = vmatpush.bf16.msra.mxu0 %v3935
    %4494 = vmatpush.bf16.msra.mxu0 %v3929
    %4495 = vmatpush.bf16.msra.mxu0 %v3923
    %4496 = vmatpush.bf16.msra.mxu0 %v3917
    %4497 = vmatmul.bf16.gmra.mxu0 %v238
    %v4498 = vpop.f32.mrf.mxu0
    %v4499 = vadd.f32 %v4485, %v4498
    %v4500 = vpop.f32.mrf.mxu0
    %v4501 = vadd.f32 %v4487, %v4500
    %4502 = vdwg.mxu0
    %4503 = vmatpush.bf16.msra.mxu0 %v3720
    %4504 = vmatpush.bf16.msra.mxu0 %v3714
    %4505 = vmatpush.bf16.msra.mxu0 %v3708
    %4506 = vmatpush.bf16.msra.mxu0 %v3702
    %4507 = vmatpush.bf16.msra.mxu0 %v3696
    %4508 = vmatpush.bf16.msra.mxu0 %v3690
    %4509 = vmatpush.bf16.msra.mxu0 %v3684
    %4510 = vmatpush.bf16.msra.mxu0 %v3678
    %4511 = vmatmul.bf16.gmra.mxu0 %v233
    %v4512 = vpop.f32.mrf.mxu0
    %v4513 = vadd.f32 %v2802, %v4512
    %v4514 = vpop.f32.mrf.mxu0
    %v4515 = vadd.f32 %v2802, %v4514
    %4516 = vdwg.mxu0
    %4517 = vmatpush.bf16.msra.mxu0 %v3768
    %4518 = vmatpush.bf16.msra.mxu0 %v3762
    %4519 = vmatpush.bf16.msra.mxu0 %v3756
    %4520 = vmatpush.bf16.msra.mxu0 %v3750
    %4521 = vmatpush.bf16.msra.mxu0 %v3744
    %4522 = vmatpush.bf16.msra.mxu0 %v3738
    %4523 = vmatpush.bf16.msra.mxu0 %v3732
    %4524 = vmatpush.bf16.msra.mxu0 %v3726
    %4525 = vmatmul.bf16.gmra.mxu0 %v234
    %v4526 = vpop.f32.mrf.mxu0
    %v4527 = vadd.f32 %v4513, %v4526
    %v4528 = vpop.f32.mrf.mxu0
    %v4529 = vadd.f32 %v4515, %v4528
    %4530 = vdwg.mxu0
    %4531 = vmatpush.bf16.msra.mxu0 %v3816
    %4532 = vmatpush.bf16.msra.mxu0 %v3810
    %4533 = vmatpush.bf16.msra.mxu0 %v3804
    %4534 = vmatpush.bf16.msra.mxu0 %v3798
    %4535 = vmatpush.bf16.msra.mxu0 %v3792
    %4536 = vmatpush.bf16.msra.mxu0 %v3786
    %4537 = vmatpush.bf16.msra.mxu0 %v3780
    %4538 = vmatpush.bf16.msra.mxu0 %v3774
    %4539 = vmatmul.bf16.gmra.mxu0 %v235
    %v4540 = vpop.f32.mrf.mxu0
    %v4541 = vadd.f32 %v4527, %v4540
    %v4542 = vpop.f32.mrf.mxu0
    %v4543 = vadd.f32 %v4529, %v4542
    %4544 = vdwg.mxu0
    %4545 = vmatpush.bf16.msra.mxu0 %v3864
    %4546 = vmatpush.bf16.msra.mxu0 %v3858
    %4547 = vmatpush.bf16.msra.mxu0 %v3852
    %4548 = vmatpush.bf16.msra.mxu0 %v3846
    %4549 = vmatpush.bf16.msra.mxu0 %v3840
    %4550 = vmatpush.bf16.msra.mxu0 %v3834
    %4551 = vmatpush.bf16.msra.mxu0 %v3828
    %4552 = vmatpush.bf16.msra.mxu0 %v3822
    %4553 = vmatmul.bf16.gmra.mxu0 %v236
    %v4554 = vpop.f32.mrf.mxu0
    %v4555 = vadd.f32 %v4541, %v4554
    %v4556 = vpop.f32.mrf.mxu0
    %v4557 = vadd.f32 %v4543, %v4556
    %4558 = vdwg.mxu0
    %4559 = vmatpush.bf16.msra.mxu0 %v3912
    %4560 = vmatpush.bf16.msra.mxu0 %v3906
    %4561 = vmatpush.bf16.msra.mxu0 %v3900
    %4562 = vmatpush.bf16.msra.mxu0 %v3894
    %4563 = vmatpush.bf16.msra.mxu0 %v3888
    %4564 = vmatpush.bf16.msra.mxu0 %v3882
    %4565 = vmatpush.bf16.msra.mxu0 %v3876
    %4566 = vmatpush.bf16.msra.mxu0 %v3870
    %4567 = vmatmul.bf16.gmra.mxu0 %v237
    %v4568 = vpop.f32.mrf.mxu0
    %v4569 = vadd.f32 %v4555, %v4568
    %v4570 = vpop.f32.mrf.mxu0
    %v4571 = vadd.f32 %v4557, %v4570
    %4572 = vdwg.mxu0
    %4573 = vmatpush.bf16.msra.mxu0 %v3960
    %4574 = vmatpush.bf16.msra.mxu0 %v3954
    %4575 = vmatpush.bf16.msra.mxu0 %v3948
    %4576 = vmatpush.bf16.msra.mxu0 %v3942
    %4577 = vmatpush.bf16.msra.mxu0 %v3936
    %4578 = vmatpush.bf16.msra.mxu0 %v3930
    %4579 = vmatpush.bf16.msra.mxu0 %v3924
    %4580 = vmatpush.bf16.msra.mxu0 %v3918
    %4581 = vmatmul.bf16.gmra.mxu0 %v238
    %v4582 = vpop.f32.mrf.mxu0
    %v4583 = vadd.f32 %v4569, %v4582
    %v4584 = vpop.f32.mrf.mxu0
    %v4585 = vadd.f32 %v4571, %v4584
    %4586 = vdwg.mxu0
    %4587 = vmatpush.bf16.msra.mxu0 %v3721
    %4588 = vmatpush.bf16.msra.mxu0 %v3715
    %4589 = vmatpush.bf16.msra.mxu0 %v3709
    %4590 = vmatpush.bf16.msra.mxu0 %v3703
    %4591 = vmatpush.bf16.msra.mxu0 %v3697
    %4592 = vmatpush.bf16.msra.mxu0 %v3691
    %4593 = vmatpush.bf16.msra.mxu0 %v3685
    %4594 = vmatpush.bf16.msra.mxu0 %v3679
    %4595 = vmatmul.bf16.gmra.mxu0 %v233
    %v4596 = vpop.f32.mrf.mxu0
    %v4597 = vadd.f32 %v2803, %v4596
    %v4598 = vpop.f32.mrf.mxu0
    %v4599 = vadd.f32 %v2803, %v4598
    %4600 = vdwg.mxu0
    %4601 = vmatpush.bf16.msra.mxu0 %v3769
    %4602 = vmatpush.bf16.msra.mxu0 %v3763
    %4603 = vmatpush.bf16.msra.mxu0 %v3757
    %4604 = vmatpush.bf16.msra.mxu0 %v3751
    %4605 = vmatpush.bf16.msra.mxu0 %v3745
    %4606 = vmatpush.bf16.msra.mxu0 %v3739
    %4607 = vmatpush.bf16.msra.mxu0 %v3733
    %4608 = vmatpush.bf16.msra.mxu0 %v3727
    %4609 = vmatmul.bf16.gmra.mxu0 %v234
    %v4610 = vpop.f32.mrf.mxu0
    %v4611 = vadd.f32 %v4597, %v4610
    %v4612 = vpop.f32.mrf.mxu0
    %v4613 = vadd.f32 %v4599, %v4612
    %4614 = vdwg.mxu0
    %4615 = vmatpush.bf16.msra.mxu0 %v3817
    %4616 = vmatpush.bf16.msra.mxu0 %v3811
    %4617 = vmatpush.bf16.msra.mxu0 %v3805
    %4618 = vmatpush.bf16.msra.mxu0 %v3799
    %4619 = vmatpush.bf16.msra.mxu0 %v3793
    %4620 = vmatpush.bf16.msra.mxu0 %v3787
    %4621 = vmatpush.bf16.msra.mxu0 %v3781
    %4622 = vmatpush.bf16.msra.mxu0 %v3775
    %4623 = vmatmul.bf16.gmra.mxu0 %v235
    %v4624 = vpop.f32.mrf.mxu0
    %v4625 = vadd.f32 %v4611, %v4624
    %v4626 = vpop.f32.mrf.mxu0
    %v4627 = vadd.f32 %v4613, %v4626
    %4628 = vdwg.mxu0
    %4629 = vmatpush.bf16.msra.mxu0 %v3865
    %4630 = vmatpush.bf16.msra.mxu0 %v3859
    %4631 = vmatpush.bf16.msra.mxu0 %v3853
    %4632 = vmatpush.bf16.msra.mxu0 %v3847
    %4633 = vmatpush.bf16.msra.mxu0 %v3841
    %4634 = vmatpush.bf16.msra.mxu0 %v3835
    %4635 = vmatpush.bf16.msra.mxu0 %v3829
    %4636 = vmatpush.bf16.msra.mxu0 %v3823
    %4637 = vmatmul.bf16.gmra.mxu0 %v236
    %v4638 = vpop.f32.mrf.mxu0
    %v4639 = vadd.f32 %v4625, %v4638
    %v4640 = vpop.f32.mrf.mxu0
    %v4641 = vadd.f32 %v4627, %v4640
    %4642 = vdwg.mxu0
    %4643 = vmatpush.bf16.msra.mxu0 %v3913
    %4644 = vmatpush.bf16.msra.mxu0 %v3907
    %4645 = vmatpush.bf16.msra.mxu0 %v3901
    %4646 = vmatpush.bf16.msra.mxu0 %v3895
    %4647 = vmatpush.bf16.msra.mxu0 %v3889
    %4648 = vmatpush.bf16.msra.mxu0 %v3883
    %4649 = vmatpush.bf16.msra.mxu0 %v3877
    %4650 = vmatpush.bf16.msra.mxu0 %v3871
    %4651 = vmatmul.bf16.gmra.mxu0 %v237
    %v4652 = vpop.f32.mrf.mxu0
    %v4653 = vadd.f32 %v4639, %v4652
    %v4654 = vpop.f32.mrf.mxu0
    %v4655 = vadd.f32 %v4641, %v4654
    %4656 = vdwg.mxu0
    %4657 = vmatpush.bf16.msra.mxu0 %v3961
    %4658 = vmatpush.bf16.msra.mxu0 %v3955
    %4659 = vmatpush.bf16.msra.mxu0 %v3949
    %4660 = vmatpush.bf16.msra.mxu0 %v3943
    %4661 = vmatpush.bf16.msra.mxu0 %v3937
    %4662 = vmatpush.bf16.msra.mxu0 %v3931
    %4663 = vmatpush.bf16.msra.mxu0 %v3925
    %4664 = vmatpush.bf16.msra.mxu0 %v3919
    %4665 = vmatmul.bf16.gmra.mxu0 %v238
    %v4666 = vpop.f32.mrf.mxu0
    %v4667 = vadd.f32 %v4653, %v4666
    %v4668 = vpop.f32.mrf.mxu0
    %v4669 = vadd.f32 %v4655, %v4668
    %4670 = vdwg.mxu0
    %4671 = vmatpush.bf16.msra.mxu0 %v3722
    %4672 = vmatpush.bf16.msra.mxu0 %v3716
    %4673 = vmatpush.bf16.msra.mxu0 %v3710
    %4674 = vmatpush.bf16.msra.mxu0 %v3704
    %4675 = vmatpush.bf16.msra.mxu0 %v3698
    %4676 = vmatpush.bf16.msra.mxu0 %v3692
    %4677 = vmatpush.bf16.msra.mxu0 %v3686
    %4678 = vmatpush.bf16.msra.mxu0 %v3680
    %4679 = vmatmul.bf16.gmra.mxu0 %v233
    %v4680 = vpop.f32.mrf.mxu0
    %v4681 = vadd.f32 %v2804, %v4680
    %v4682 = vpop.f32.mrf.mxu0
    %v4683 = vadd.f32 %v2804, %v4682
    %4684 = vdwg.mxu0
    %4685 = vmatpush.bf16.msra.mxu0 %v3770
    %4686 = vmatpush.bf16.msra.mxu0 %v3764
    %4687 = vmatpush.bf16.msra.mxu0 %v3758
    %4688 = vmatpush.bf16.msra.mxu0 %v3752
    %4689 = vmatpush.bf16.msra.mxu0 %v3746
    %4690 = vmatpush.bf16.msra.mxu0 %v3740
    %4691 = vmatpush.bf16.msra.mxu0 %v3734
    %4692 = vmatpush.bf16.msra.mxu0 %v3728
    %4693 = vmatmul.bf16.gmra.mxu0 %v234
    %v4694 = vpop.f32.mrf.mxu0
    %v4695 = vadd.f32 %v4681, %v4694
    %v4696 = vpop.f32.mrf.mxu0
    %v4697 = vadd.f32 %v4683, %v4696
    %4698 = vdwg.mxu0
    %4699 = vmatpush.bf16.msra.mxu0 %v3818
    %4700 = vmatpush.bf16.msra.mxu0 %v3812
    %4701 = vmatpush.bf16.msra.mxu0 %v3806
    %4702 = vmatpush.bf16.msra.mxu0 %v3800
    %4703 = vmatpush.bf16.msra.mxu0 %v3794
    %4704 = vmatpush.bf16.msra.mxu0 %v3788
    %4705 = vmatpush.bf16.msra.mxu0 %v3782
    %4706 = vmatpush.bf16.msra.mxu0 %v3776
    %4707 = vmatmul.bf16.gmra.mxu0 %v235
    %v4708 = vpop.f32.mrf.mxu0
    %v4709 = vadd.f32 %v4695, %v4708
    %v4710 = vpop.f32.mrf.mxu0
    %v4711 = vadd.f32 %v4697, %v4710
    %4712 = vdwg.mxu0
    %4713 = vmatpush.bf16.msra.mxu0 %v3866
    %4714 = vmatpush.bf16.msra.mxu0 %v3860
    %4715 = vmatpush.bf16.msra.mxu0 %v3854
    %4716 = vmatpush.bf16.msra.mxu0 %v3848
    %4717 = vmatpush.bf16.msra.mxu0 %v3842
    %4718 = vmatpush.bf16.msra.mxu0 %v3836
    %4719 = vmatpush.bf16.msra.mxu0 %v3830
    %4720 = vmatpush.bf16.msra.mxu0 %v3824
    %4721 = vmatmul.bf16.gmra.mxu0 %v236
    %v4722 = vpop.f32.mrf.mxu0
    %v4723 = vadd.f32 %v4709, %v4722
    %v4724 = vpop.f32.mrf.mxu0
    %v4725 = vadd.f32 %v4711, %v4724
    %4726 = vdwg.mxu0
    %4727 = vmatpush.bf16.msra.mxu0 %v3914
    %4728 = vmatpush.bf16.msra.mxu0 %v3908
    %4729 = vmatpush.bf16.msra.mxu0 %v3902
    %4730 = vmatpush.bf16.msra.mxu0 %v3896
    %4731 = vmatpush.bf16.msra.mxu0 %v3890
    %4732 = vmatpush.bf16.msra.mxu0 %v3884
    %4733 = vmatpush.bf16.msra.mxu0 %v3878
    %4734 = vmatpush.bf16.msra.mxu0 %v3872
    %4735 = vmatmul.bf16.gmra.mxu0 %v237
    %v4736 = vpop.f32.mrf.mxu0
    %v4737 = vadd.f32 %v4723, %v4736
    %v4738 = vpop.f32.mrf.mxu0
    %v4739 = vadd.f32 %v4725, %v4738
    %4740 = vdwg.mxu0
    %4741 = vmatpush.bf16.msra.mxu0 %v3962
    %4742 = vmatpush.bf16.msra.mxu0 %v3956
    %4743 = vmatpush.bf16.msra.mxu0 %v3950
    %4744 = vmatpush.bf16.msra.mxu0 %v3944
    %4745 = vmatpush.bf16.msra.mxu0 %v3938
    %4746 = vmatpush.bf16.msra.mxu0 %v3932
    %4747 = vmatpush.bf16.msra.mxu0 %v3926
    %4748 = vmatpush.bf16.msra.mxu0 %v3920
    %4749 = vmatmul.bf16.gmra.mxu0 %v238
    %v4750 = vpop.f32.mrf.mxu0
    %v4751 = vadd.f32 %v4737, %v4750
    %v4752 = vpop.f32.mrf.mxu0
    %v4753 = vadd.f32 %v4739, %v4752
    %4754 = vdwg.mxu0
    %v4755 = vpack.c.bf16 %v4415, %v4331
    %v4756 = vpack.c.bf16 %v4583, %v4499
    %v4757 = vpack.c.bf16 %v4751, %v4667
    %v4758 = vpack.c.bf16 %v4417, %v4333
    %v4759 = vpack.c.bf16 %v4585, %v4501
    %v4760 = vpack.c.bf16 %v4753, %v4669
    %v4761 = vld [vmem:[#allocation15] sm:$0xff]
    %v4762 = vld [vmem:[#allocation15 + $0x8] sm:$0xff]
    %v4763 = vld [vmem:[#allocation15 + $0x10] sm:$0xff]
    %v4764 = vld [vmem:[#allocation15 + $0x18] sm:$0xff]
    %v4765 = vld [vmem:[#allocation15 + $0x20] sm:$0xff]
    %v4766 = vld [vmem:[#allocation15 + $0x28] sm:$0xff]
    %v4767 = vld [vmem:[#allocation15 + $0x30] sm:$0xff]
    %v4768 = vld [vmem:[#allocation15 + $0x38] sm:$0xff]
    %v4769 = vld [vmem:[#allocation15 + $0x40] sm:$0xff]
    %v4770 = vld [vmem:[#allocation15 + $0x48] sm:$0xff]
    %v4771 = vld [vmem:[#allocation15 + $0x50] sm:$0xff]
    %v4772 = vld [vmem:[#allocation15 + $0x58] sm:$0xff]
    %v4773 = vld [vmem:[#allocation15 + $0x60] sm:$0xff]
    %v4774 = vld [vmem:[#allocation15 + $0x68] sm:$0xff]
    %v4775 = vld [vmem:[#allocation15 + $0x70] sm:$0xff]
    %v4776 = vld [vmem:[#allocation15 + $0x78] sm:$0xff]
    %v4777 = vld [vmem:[#allocation15 + $0x80] sm:$0xff]
    %v4778 = vld [vmem:[#allocation15 + $0x88] sm:$0xff]
    %v4779 = vld [vmem:[#allocation15 + $0x90] sm:$0xff]
    %v4780 = vld [vmem:[#allocation15 + $0x98] sm:$0xff]
    %v4781 = vld [vmem:[#allocation15 + $0xa0] sm:$0xff]
    %v4782 = vld [vmem:[#allocation15 + $0xa8] sm:$0xff]
    %v4783 = vld [vmem:[#allocation15 + $0xb0] sm:$0xff]
    %v4784 = vld [vmem:[#allocation15 + $0xb8] sm:$0xff]
    %v4785 = vld [vmem:[#allocation15 + $0xc0] sm:$0xff]
    %v4786 = vld [vmem:[#allocation15 + $0xc8] sm:$0xff]
    %v4787 = vld [vmem:[#allocation15 + $0xd0] sm:$0xff]
    %v4788 = vld [vmem:[#allocation15 + $0xd8] sm:$0xff]
    %v4789 = vld [vmem:[#allocation15 + $0xe0] sm:$0xff]
    %v4790 = vld [vmem:[#allocation15 + $0xe8] sm:$0xff]
    %v4791 = vld [vmem:[#allocation15 + $0xf0] sm:$0xff]
    %v4792 = vld [vmem:[#allocation15 + $0xf8] sm:$0xff]
    %v4793 = vld [vmem:[#allocation15 + $0x100] sm:$0xff]
    %v4794 = vld [vmem:[#allocation15 + $0x108] sm:$0xff]
    %v4795 = vld [vmem:[#allocation15 + $0x110] sm:$0xff]
    %v4796 = vld [vmem:[#allocation15 + $0x118] sm:$0xff]
    %v4797 = vld [vmem:[#allocation15 + $0x120] sm:$0xff]
    %v4798 = vld [vmem:[#allocation15 + $0x128] sm:$0xff]
    %v4799 = vld [vmem:[#allocation15 + $0x130] sm:$0xff]
    %v4800 = vld [vmem:[#allocation15 + $0x138] sm:$0xff]
    %v4801 = vld [vmem:[#allocation15 + $0x140] sm:$0xff]
    %v4802 = vld [vmem:[#allocation15 + $0x148] sm:$0xff]
    %v4803 = vld [vmem:[#allocation15 + $0x150] sm:$0xff]
    %v4804 = vld [vmem:[#allocation15 + $0x158] sm:$0xff]
    %v4805 = vld [vmem:[#allocation15 + $0x160] sm:$0xff]
    %v4806 = vld [vmem:[#allocation15 + $0x168] sm:$0xff]
    %v4807 = vld [vmem:[#allocation15 + $0x170] sm:$0xff]
    %v4808 = vld [vmem:[#allocation15 + $0x178] sm:$0xff]
    %v4809 = vld [vmem:[#allocation15 + $0x180] sm:$0xff]
    %v4810 = vld [vmem:[#allocation15 + $0x188] sm:$0xff]
    %v4811 = vld [vmem:[#allocation15 + $0x190] sm:$0xff]
    %v4812 = vld [vmem:[#allocation15 + $0x198] sm:$0xff]
    %v4813 = vld [vmem:[#allocation15 + $0x1a0] sm:$0xff]
    %v4814 = vld [vmem:[#allocation15 + $0x1a8] sm:$0xff]
    %v4815 = vld [vmem:[#allocation15 + $0x1b0] sm:$0xff]
    %v4816 = vld [vmem:[#allocation15 + $0x1b8] sm:$0xff]
    %v4817 = vld [vmem:[#allocation15 + $0x1c0] sm:$0xff]
    %v4818 = vld [vmem:[#allocation15 + $0x1c8] sm:$0xff]
    %v4819 = vld [vmem:[#allocation15 + $0x1d0] sm:$0xff]
    %v4820 = vld [vmem:[#allocation15 + $0x1d8] sm:$0xff]
    %v4821 = vld [vmem:[#allocation15 + $0x1e0] sm:$0xff]
    %v4822 = vld [vmem:[#allocation15 + $0x1e8] sm:$0xff]
    %v4823 = vld [vmem:[#allocation15 + $0x1f0] sm:$0xff]
    %v4824 = vld [vmem:[#allocation15 + $0x1f8] sm:$0xff]
    %v4825 = vld [vmem:[#allocation15 + $0x200] sm:$0xff]
    %v4826 = vld [vmem:[#allocation15 + $0x208] sm:$0xff]
    %v4827 = vld [vmem:[#allocation15 + $0x210] sm:$0xff]
    %v4828 = vld [vmem:[#allocation15 + $0x218] sm:$0xff]
    %v4829 = vld [vmem:[#allocation15 + $0x220] sm:$0xff]
    %v4830 = vld [vmem:[#allocation15 + $0x228] sm:$0xff]
    %v4831 = vld [vmem:[#allocation15 + $0x230] sm:$0xff]
    %v4832 = vld [vmem:[#allocation15 + $0x238] sm:$0xff]
    %v4833 = vld [vmem:[#allocation15 + $0x240] sm:$0xff]
    %v4834 = vld [vmem:[#allocation15 + $0x248] sm:$0xff]
    %v4835 = vld [vmem:[#allocation15 + $0x250] sm:$0xff]
    %v4836 = vld [vmem:[#allocation15 + $0x258] sm:$0xff]
    %v4837 = vld [vmem:[#allocation15 + $0x260] sm:$0xff]
    %v4838 = vld [vmem:[#allocation15 + $0x268] sm:$0xff]
    %v4839 = vld [vmem:[#allocation15 + $0x270] sm:$0xff]
    %v4840 = vld [vmem:[#allocation15 + $0x278] sm:$0xff]
    %v4841 = vld [vmem:[#allocation15 + $0x280] sm:$0xff]
    %v4842 = vld [vmem:[#allocation15 + $0x288] sm:$0xff]
    %v4843 = vld [vmem:[#allocation15 + $0x290] sm:$0xff]
    %v4844 = vld [vmem:[#allocation15 + $0x298] sm:$0xff]
    %v4845 = vld [vmem:[#allocation15 + $0x2a0] sm:$0xff]
    %v4846 = vld [vmem:[#allocation15 + $0x2a8] sm:$0xff]
    %v4847 = vld [vmem:[#allocation15 + $0x2b0] sm:$0xff]
    %v4848 = vld [vmem:[#allocation15 + $0x2b8] sm:$0xff]
    %v4849 = vld [vmem:[#allocation15 + $0x2c0] sm:$0xff]
    %v4850 = vld [vmem:[#allocation15 + $0x2c8] sm:$0xff]
    %v4851 = vld [vmem:[#allocation15 + $0x2d0] sm:$0xff]
    %v4852 = vld [vmem:[#allocation15 + $0x2d8] sm:$0xff]
    %v4853 = vld [vmem:[#allocation15 + $0x2e0] sm:$0xff]
    %v4854 = vld [vmem:[#allocation15 + $0x2e8] sm:$0xff]
    %v4855 = vld [vmem:[#allocation15 + $0x2f0] sm:$0xff]
    %v4856 = vld [vmem:[#allocation15 + $0x2f8] sm:$0xff]
    %v4857 = vld [vmem:[#allocation15 + $0x300] sm:$0xff]
    %v4858 = vld [vmem:[#allocation15 + $0x308] sm:$0xff]
    %v4859 = vld [vmem:[#allocation15 + $0x310] sm:$0xff]
    %v4860 = vld [vmem:[#allocation15 + $0x318] sm:$0xff]
    %v4861 = vld [vmem:[#allocation15 + $0x320] sm:$0xff]
    %v4862 = vld [vmem:[#allocation15 + $0x328] sm:$0xff]
    %v4863 = vld [vmem:[#allocation15 + $0x330] sm:$0xff]
    %v4864 = vld [vmem:[#allocation15 + $0x338] sm:$0xff]
    %v4865 = vld [vmem:[#allocation15 + $0x340] sm:$0xff]
    %v4866 = vld [vmem:[#allocation15 + $0x348] sm:$0xff]
    %v4867 = vld [vmem:[#allocation15 + $0x350] sm:$0xff]
    %v4868 = vld [vmem:[#allocation15 + $0x358] sm:$0xff]
    %v4869 = vld [vmem:[#allocation15 + $0x360] sm:$0xff]
    %v4870 = vld [vmem:[#allocation15 + $0x368] sm:$0xff]
    %v4871 = vld [vmem:[#allocation15 + $0x370] sm:$0xff]
    %v4872 = vld [vmem:[#allocation15 + $0x378] sm:$0xff]
    %v4873 = vld [vmem:[#allocation15 + $0x380] sm:$0xff]
    %v4874 = vld [vmem:[#allocation15 + $0x388] sm:$0xff]
    %v4875 = vld [vmem:[#allocation15 + $0x390] sm:$0xff]
    %v4876 = vld [vmem:[#allocation15 + $0x398] sm:$0xff]
    %v4877 = vld [vmem:[#allocation15 + $0x3a0] sm:$0xff]
    %v4878 = vld [vmem:[#allocation15 + $0x3a8] sm:$0xff]
    %v4879 = vld [vmem:[#allocation15 + $0x3b0] sm:$0xff]
    %v4880 = vld [vmem:[#allocation15 + $0x3b8] sm:$0xff]
    %v4881 = vld [vmem:[#allocation15 + $0x3c0] sm:$0xff]
    %v4882 = vld [vmem:[#allocation15 + $0x3c8] sm:$0xff]
    %v4883 = vld [vmem:[#allocation15 + $0x3d0] sm:$0xff]
    %v4884 = vld [vmem:[#allocation15 + $0x3d8] sm:$0xff]
    %v4885 = vld [vmem:[#allocation15 + $0x3e0] sm:$0xff]
    %v4886 = vld [vmem:[#allocation15 + $0x3e8] sm:$0xff]
    %v4887 = vld [vmem:[#allocation15 + $0x3f0] sm:$0xff]
    %v4888 = vld [vmem:[#allocation15 + $0x3f8] sm:$0xff]
    %v4889 = vld [vmem:[#allocation15 + $0x400] sm:$0xff]
    %v4890 = vld [vmem:[#allocation15 + $0x408] sm:$0xff]
    %v4891 = vld [vmem:[#allocation15 + $0x410] sm:$0xff]
    %v4892 = vld [vmem:[#allocation15 + $0x418] sm:$0xff]
    %v4893 = vld [vmem:[#allocation15 + $0x420] sm:$0xff]
    %v4894 = vld [vmem:[#allocation15 + $0x428] sm:$0xff]
    %v4895 = vld [vmem:[#allocation15 + $0x430] sm:$0xff]
    %v4896 = vld [vmem:[#allocation15 + $0x438] sm:$0xff]
    %v4897 = vld [vmem:[#allocation15 + $0x440] sm:$0xff]
    %v4898 = vld [vmem:[#allocation15 + $0x448] sm:$0xff]
    %v4899 = vld [vmem:[#allocation15 + $0x450] sm:$0xff]
    %v4900 = vld [vmem:[#allocation15 + $0x458] sm:$0xff]
    %v4901 = vld [vmem:[#allocation15 + $0x460] sm:$0xff]
    %v4902 = vld [vmem:[#allocation15 + $0x468] sm:$0xff]
    %v4903 = vld [vmem:[#allocation15 + $0x470] sm:$0xff]
    %v4904 = vld [vmem:[#allocation15 + $0x478] sm:$0xff]
    %v4905 = vld [vmem:[#allocation15 + $0x480] sm:$0xff]
    %v4906 = vld [vmem:[#allocation15 + $0x488] sm:$0xff]
    %v4907 = vld [vmem:[#allocation15 + $0x490] sm:$0xff]
    %v4908 = vld [vmem:[#allocation15 + $0x498] sm:$0xff]
    %v4909 = vld [vmem:[#allocation15 + $0x4a0] sm:$0xff]
    %v4910 = vld [vmem:[#allocation15 + $0x4a8] sm:$0xff]
    %v4911 = vld [vmem:[#allocation15 + $0x4b0] sm:$0xff]
    %v4912 = vld [vmem:[#allocation15 + $0x4b8] sm:$0xff]
    %v4913 = vld [vmem:[#allocation15 + $0x4c0] sm:$0xff]
    %v4914 = vld [vmem:[#allocation15 + $0x4c8] sm:$0xff]
    %v4915 = vld [vmem:[#allocation15 + $0x4d0] sm:$0xff]
    %v4916 = vld [vmem:[#allocation15 + $0x4d8] sm:$0xff]
    %v4917 = vld [vmem:[#allocation15 + $0x4e0] sm:$0xff]
    %v4918 = vld [vmem:[#allocation15 + $0x4e8] sm:$0xff]
    %v4919 = vld [vmem:[#allocation15 + $0x4f0] sm:$0xff]
    %v4920 = vld [vmem:[#allocation15 + $0x4f8] sm:$0xff]
    %v4921 = vld [vmem:[#allocation15 + $0x500] sm:$0xff]
    %v4922 = vld [vmem:[#allocation15 + $0x508] sm:$0xff]
    %v4923 = vld [vmem:[#allocation15 + $0x510] sm:$0xff]
    %v4924 = vld [vmem:[#allocation15 + $0x518] sm:$0xff]
    %v4925 = vld [vmem:[#allocation15 + $0x520] sm:$0xff]
    %v4926 = vld [vmem:[#allocation15 + $0x528] sm:$0xff]
    %v4927 = vld [vmem:[#allocation15 + $0x530] sm:$0xff]
    %v4928 = vld [vmem:[#allocation15 + $0x538] sm:$0xff]
    %v4929 = vld [vmem:[#allocation15 + $0x540] sm:$0xff]
    %v4930 = vld [vmem:[#allocation15 + $0x548] sm:$0xff]
    %v4931 = vld [vmem:[#allocation15 + $0x550] sm:$0xff]
    %v4932 = vld [vmem:[#allocation15 + $0x558] sm:$0xff]
    %v4933 = vld [vmem:[#allocation15 + $0x560] sm:$0xff]
    %v4934 = vld [vmem:[#allocation15 + $0x568] sm:$0xff]
    %v4935 = vld [vmem:[#allocation15 + $0x570] sm:$0xff]
    %v4936 = vld [vmem:[#allocation15 + $0x578] sm:$0xff]
    %v4937 = vld [vmem:[#allocation15 + $0x580] sm:$0xff]
    %v4938 = vld [vmem:[#allocation15 + $0x588] sm:$0xff]
    %v4939 = vld [vmem:[#allocation15 + $0x590] sm:$0xff]
    %v4940 = vld [vmem:[#allocation15 + $0x598] sm:$0xff]
    %v4941 = vld [vmem:[#allocation15 + $0x5a0] sm:$0xff]
    %v4942 = vld [vmem:[#allocation15 + $0x5a8] sm:$0xff]
    %v4943 = vld [vmem:[#allocation15 + $0x5b0] sm:$0xff]
    %v4944 = vld [vmem:[#allocation15 + $0x5b8] sm:$0xff]
    %v4945 = vld [vmem:[#allocation15 + $0x5c0] sm:$0xff]
    %v4946 = vld [vmem:[#allocation15 + $0x5c8] sm:$0xff]
    %v4947 = vld [vmem:[#allocation15 + $0x5d0] sm:$0xff]
    %v4948 = vld [vmem:[#allocation15 + $0x5d8] sm:$0xff]
    %v4949 = vld [vmem:[#allocation15 + $0x5e0] sm:$0xff]
    %v4950 = vld [vmem:[#allocation15 + $0x5e8] sm:$0xff]
    %v4951 = vld [vmem:[#allocation15 + $0x5f0] sm:$0xff]
    %v4952 = vld [vmem:[#allocation15 + $0x5f8] sm:$0xff]
    %v4953 = vld [vmem:[#allocation15 + $0x600] sm:$0xff]
    %v4954 = vld [vmem:[#allocation15 + $0x608] sm:$0xff]
    %v4955 = vld [vmem:[#allocation15 + $0x610] sm:$0xff]
    %v4956 = vld [vmem:[#allocation15 + $0x618] sm:$0xff]
    %v4957 = vld [vmem:[#allocation15 + $0x620] sm:$0xff]
    %v4958 = vld [vmem:[#allocation15 + $0x628] sm:$0xff]
    %v4959 = vld [vmem:[#allocation15 + $0x630] sm:$0xff]
    %v4960 = vld [vmem:[#allocation15 + $0x638] sm:$0xff]
    %v4961 = vld [vmem:[#allocation15 + $0x640] sm:$0xff]
    %v4962 = vld [vmem:[#allocation15 + $0x648] sm:$0xff]
    %v4963 = vld [vmem:[#allocation15 + $0x650] sm:$0xff]
    %v4964 = vld [vmem:[#allocation15 + $0x658] sm:$0xff]
    %v4965 = vld [vmem:[#allocation15 + $0x660] sm:$0xff]
    %v4966 = vld [vmem:[#allocation15 + $0x668] sm:$0xff]
    %v4967 = vld [vmem:[#allocation15 + $0x670] sm:$0xff]
    %v4968 = vld [vmem:[#allocation15 + $0x678] sm:$0xff]
    %v4969 = vld [vmem:[#allocation15 + $0x680] sm:$0xff]
    %v4970 = vld [vmem:[#allocation15 + $0x688] sm:$0xff]
    %v4971 = vld [vmem:[#allocation15 + $0x690] sm:$0xff]
    %v4972 = vld [vmem:[#allocation15 + $0x698] sm:$0xff]
    %v4973 = vld [vmem:[#allocation15 + $0x6a0] sm:$0xff]
    %v4974 = vld [vmem:[#allocation15 + $0x6a8] sm:$0xff]
    %v4975 = vld [vmem:[#allocation15 + $0x6b0] sm:$0xff]
    %v4976 = vld [vmem:[#allocation15 + $0x6b8] sm:$0xff]
    %v4977 = vld [vmem:[#allocation15 + $0x6c0] sm:$0xff]
    %v4978 = vld [vmem:[#allocation15 + $0x6c8] sm:$0xff]
    %v4979 = vld [vmem:[#allocation15 + $0x6d0] sm:$0xff]
    %v4980 = vld [vmem:[#allocation15 + $0x6d8] sm:$0xff]
    %v4981 = vld [vmem:[#allocation15 + $0x6e0] sm:$0xff]
    %v4982 = vld [vmem:[#allocation15 + $0x6e8] sm:$0xff]
    %v4983 = vld [vmem:[#allocation15 + $0x6f0] sm:$0xff]
    %v4984 = vld [vmem:[#allocation15 + $0x6f8] sm:$0xff]
    %v4985 = vld [vmem:[#allocation15 + $0x700] sm:$0xff]
    %v4986 = vld [vmem:[#allocation15 + $0x708] sm:$0xff]
    %v4987 = vld [vmem:[#allocation15 + $0x710] sm:$0xff]
    %v4988 = vld [vmem:[#allocation15 + $0x718] sm:$0xff]
    %v4989 = vld [vmem:[#allocation15 + $0x720] sm:$0xff]
    %v4990 = vld [vmem:[#allocation15 + $0x728] sm:$0xff]
    %v4991 = vld [vmem:[#allocation15 + $0x730] sm:$0xff]
    %v4992 = vld [vmem:[#allocation15 + $0x738] sm:$0xff]
    %v4993 = vld [vmem:[#allocation15 + $0x740] sm:$0xff]
    %v4994 = vld [vmem:[#allocation15 + $0x748] sm:$0xff]
    %v4995 = vld [vmem:[#allocation15 + $0x750] sm:$0xff]
    %v4996 = vld [vmem:[#allocation15 + $0x758] sm:$0xff]
    %v4997 = vld [vmem:[#allocation15 + $0x760] sm:$0xff]
    %v4998 = vld [vmem:[#allocation15 + $0x768] sm:$0xff]
    %v4999 = vld [vmem:[#allocation15 + $0x770] sm:$0xff]
    %v5000 = vld [vmem:[#allocation15 + $0x778] sm:$0xff]
    %v5001 = vld [vmem:[#allocation15 + $0x780] sm:$0xff]
    %v5002 = vld [vmem:[#allocation15 + $0x788] sm:$0xff]
    %v5003 = vld [vmem:[#allocation15 + $0x790] sm:$0xff]
    %v5004 = vld [vmem:[#allocation15 + $0x798] sm:$0xff]
    %v5005 = vld [vmem:[#allocation15 + $0x7a0] sm:$0xff]
    %v5006 = vld [vmem:[#allocation15 + $0x7a8] sm:$0xff]
    %v5007 = vld [vmem:[#allocation15 + $0x7b0] sm:$0xff]
    %v5008 = vld [vmem:[#allocation15 + $0x7b8] sm:$0xff]
    %v5009 = vld [vmem:[#allocation15 + $0x7c0] sm:$0xff]
    %v5010 = vld [vmem:[#allocation15 + $0x7c8] sm:$0xff]
    %v5011 = vld [vmem:[#allocation15 + $0x7d0] sm:$0xff]
    %v5012 = vld [vmem:[#allocation15 + $0x7d8] sm:$0xff]
    %v5013 = vld [vmem:[#allocation15 + $0x7e0] sm:$0xff]
    %v5014 = vld [vmem:[#allocation15 + $0x7e8] sm:$0xff]
    %v5015 = vld [vmem:[#allocation15 + $0x7f0] sm:$0xff]
    %v5016 = vld [vmem:[#allocation15 + $0x7f8] sm:$0xff]
    %v5017 = vld [vmem:[#allocation15 + $0x800] sm:$0xff]
    %v5018 = vld [vmem:[#allocation15 + $0x808] sm:$0xff]
    %v5019 = vld [vmem:[#allocation15 + $0x810] sm:$0xff]
    %v5020 = vld [vmem:[#allocation15 + $0x818] sm:$0xff]
    %v5021 = vld [vmem:[#allocation15 + $0x820] sm:$0xff]
    %v5022 = vld [vmem:[#allocation15 + $0x828] sm:$0xff]
    %v5023 = vld [vmem:[#allocation15 + $0x830] sm:$0xff]
    %v5024 = vld [vmem:[#allocation15 + $0x838] sm:$0xff]
    %v5025 = vld [vmem:[#allocation15 + $0x840] sm:$0xff]
    %v5026 = vld [vmem:[#allocation15 + $0x848] sm:$0xff]
    %v5027 = vld [vmem:[#allocation15 + $0x850] sm:$0xff]
    %v5028 = vld [vmem:[#allocation15 + $0x858] sm:$0xff]
    %v5029 = vld [vmem:[#allocation15 + $0x860] sm:$0xff]
    %v5030 = vld [vmem:[#allocation15 + $0x868] sm:$0xff]
    %v5031 = vld [vmem:[#allocation15 + $0x870] sm:$0xff]
    %v5032 = vld [vmem:[#allocation15 + $0x878] sm:$0xff]
    %v5033 = vld [vmem:[#allocation15 + $0x880] sm:$0xff]
    %v5034 = vld [vmem:[#allocation15 + $0x888] sm:$0xff]
    %v5035 = vld [vmem:[#allocation15 + $0x890] sm:$0xff]
    %v5036 = vld [vmem:[#allocation15 + $0x898] sm:$0xff]
    %v5037 = vld [vmem:[#allocation15 + $0x8a0] sm:$0xff]
    %v5038 = vld [vmem:[#allocation15 + $0x8a8] sm:$0xff]
    %v5039 = vld [vmem:[#allocation15 + $0x8b0] sm:$0xff]
    %v5040 = vld [vmem:[#allocation15 + $0x8b8] sm:$0xff]
    %v5041 = vld [vmem:[#allocation15 + $0x8c0] sm:$0xff]
    %v5042 = vld [vmem:[#allocation15 + $0x8c8] sm:$0xff]
    %v5043 = vld [vmem:[#allocation15 + $0x8d0] sm:$0xff]
    %v5044 = vld [vmem:[#allocation15 + $0x8d8] sm:$0xff]
    %v5045 = vld [vmem:[#allocation15 + $0x8e0] sm:$0xff]
    %v5046 = vld [vmem:[#allocation15 + $0x8e8] sm:$0xff]
    %v5047 = vld [vmem:[#allocation15 + $0x8f0] sm:$0xff]
    %v5048 = vld [vmem:[#allocation15 + $0x8f8] sm:$0xff]
    %v5049 = vld [vmem:[#allocation17] sm:$0x3f]
    %v5051 = vperm.slane %v5049, 0
    %v5052 = vperm.slane %v5049, 1
    %v5053 = vperm.slane %v5049, 2
    %v5054 = vperm.slane %v5049, 3
    %v5055 = vperm.slane %v5049, 4
    %v5056 = vperm.slane %v5049, 5
    %v5351 = vunpack.c.l.b16 %v4761
    %v5352 = vunpack.c.h.b16 %v4761
    %v5353 = vunpack.c.l.b16 %v4762
    %v5354 = vunpack.c.h.b16 %v4762
    %v5355 = vunpack.c.l.b16 %v4763
    %v5356 = vunpack.c.h.b16 %v4763
    %v5357 = vunpack.c.l.b16 %v4764
    %v5358 = vunpack.c.h.b16 %v4764
    %v5359 = vunpack.c.l.b16 %v4765
    %v5360 = vunpack.c.h.b16 %v4765
    %v5361 = vunpack.c.l.b16 %v4766
    %v5362 = vunpack.c.h.b16 %v4766
    %v5363 = vunpack.c.l.b16 %v4767
    %v5364 = vunpack.c.h.b16 %v4767
    %v5365 = vunpack.c.l.b16 %v4768
    %v5366 = vunpack.c.h.b16 %v4768
    %v5367 = vunpack.c.l.b16 %v4769
    %v5368 = vunpack.c.h.b16 %v4769
    %v5369 = vunpack.c.l.b16 %v4770
    %v5370 = vunpack.c.h.b16 %v4770
    %v5371 = vunpack.c.l.b16 %v4771
    %v5372 = vunpack.c.h.b16 %v4771
    %v5373 = vunpack.c.l.b16 %v4772
    %v5374 = vunpack.c.h.b16 %v4772
    %v5375 = vunpack.c.l.b16 %v4773
    %v5376 = vunpack.c.h.b16 %v4773
    %v5377 = vunpack.c.l.b16 %v4774
    %v5378 = vunpack.c.h.b16 %v4774
    %v5379 = vunpack.c.l.b16 %v4775
    %v5380 = vunpack.c.h.b16 %v4775
    %v5381 = vunpack.c.l.b16 %v4776
    %v5382 = vunpack.c.h.b16 %v4776
    %v5383 = vunpack.c.l.b16 %v4777
    %v5384 = vunpack.c.h.b16 %v4777
    %v5385 = vunpack.c.l.b16 %v4778
    %v5386 = vunpack.c.h.b16 %v4778
    %v5387 = vunpack.c.l.b16 %v4779
    %v5388 = vunpack.c.h.b16 %v4779
    %v5389 = vunpack.c.l.b16 %v4780
    %v5390 = vunpack.c.h.b16 %v4780
    %v5391 = vunpack.c.l.b16 %v4781
    %v5392 = vunpack.c.h.b16 %v4781
    %v5393 = vunpack.c.l.b16 %v4782
    %v5394 = vunpack.c.h.b16 %v4782
    %v5395 = vunpack.c.l.b16 %v4783
    %v5396 = vunpack.c.h.b16 %v4783
    %v5397 = vunpack.c.l.b16 %v4784
    %v5398 = vunpack.c.h.b16 %v4784
    %v5399 = vunpack.c.l.b16 %v4785
    %v5400 = vunpack.c.h.b16 %v4785
    %v5401 = vunpack.c.l.b16 %v4786
    %v5402 = vunpack.c.h.b16 %v4786
    %v5403 = vunpack.c.l.b16 %v4787
    %v5404 = vunpack.c.h.b16 %v4787
    %v5405 = vunpack.c.l.b16 %v4788
    %v5406 = vunpack.c.h.b16 %v4788
    %v5407 = vunpack.c.l.b16 %v4789
    %v5408 = vunpack.c.h.b16 %v4789
    %v5409 = vunpack.c.l.b16 %v4790
    %v5410 = vunpack.c.h.b16 %v4790
    %v5411 = vunpack.c.l.b16 %v4791
    %v5412 = vunpack.c.h.b16 %v4791
    %v5413 = vunpack.c.l.b16 %v4792
    %v5414 = vunpack.c.h.b16 %v4792
    %v5415 = vunpack.c.l.b16 %v4793
    %v5416 = vunpack.c.h.b16 %v4793
    %v5417 = vunpack.c.l.b16 %v4794
    %v5418 = vunpack.c.h.b16 %v4794
    %v5419 = vunpack.c.l.b16 %v4795
    %v5420 = vunpack.c.h.b16 %v4795
    %v5421 = vunpack.c.l.b16 %v4796
    %v5422 = vunpack.c.h.b16 %v4796
    %v5423 = vunpack.c.l.b16 %v4797
    %v5424 = vunpack.c.h.b16 %v4797
    %v5425 = vunpack.c.l.b16 %v4798
    %v5426 = vunpack.c.h.b16 %v4798
    %v5427 = vunpack.c.l.b16 %v4799
    %v5428 = vunpack.c.h.b16 %v4799
    %v5429 = vunpack.c.l.b16 %v4800
    %v5430 = vunpack.c.h.b16 %v4800
    %v5431 = vunpack.c.l.b16 %v4801
    %v5432 = vunpack.c.h.b16 %v4801
    %v5433 = vunpack.c.l.b16 %v4802
    %v5434 = vunpack.c.h.b16 %v4802
    %v5435 = vunpack.c.l.b16 %v4803
    %v5436 = vunpack.c.h.b16 %v4803
    %v5437 = vunpack.c.l.b16 %v4804
    %v5438 = vunpack.c.h.b16 %v4804
    %v5439 = vunpack.c.l.b16 %v4805
    %v5440 = vunpack.c.h.b16 %v4805
    %v5441 = vunpack.c.l.b16 %v4806
    %v5442 = vunpack.c.h.b16 %v4806
    %v5443 = vunpack.c.l.b16 %v4807
    %v5444 = vunpack.c.h.b16 %v4807
    %v5445 = vunpack.c.l.b16 %v4808
    %v5446 = vunpack.c.h.b16 %v4808
    %v5447 = vunpack.c.l.b16 %v4809
    %v5448 = vunpack.c.h.b16 %v4809
    %v5449 = vunpack.c.l.b16 %v4810
    %v5450 = vunpack.c.h.b16 %v4810
    %v5451 = vunpack.c.l.b16 %v4811
    %v5452 = vunpack.c.h.b16 %v4811
    %v5453 = vunpack.c.l.b16 %v4812
    %v5454 = vunpack.c.h.b16 %v4812
    %v5455 = vunpack.c.l.b16 %v4813
    %v5456 = vunpack.c.h.b16 %v4813
    %v5457 = vunpack.c.l.b16 %v4814
    %v5458 = vunpack.c.h.b16 %v4814
    %v5459 = vunpack.c.l.b16 %v4815
    %v5460 = vunpack.c.h.b16 %v4815
    %v5461 = vunpack.c.l.b16 %v4816
    %v5462 = vunpack.c.h.b16 %v4816
    %v5463 = vunpack.c.l.b16 %v4817
    %v5464 = vunpack.c.h.b16 %v4817
    %v5465 = vunpack.c.l.b16 %v4818
    %v5466 = vunpack.c.h.b16 %v4818
    %v5467 = vunpack.c.l.b16 %v4819
    %v5468 = vunpack.c.h.b16 %v4819
    %v5469 = vunpack.c.l.b16 %v4820
    %v5470 = vunpack.c.h.b16 %v4820
    %v5471 = vunpack.c.l.b16 %v4821
    %v5472 = vunpack.c.h.b16 %v4821
    %v5473 = vunpack.c.l.b16 %v4822
    %v5474 = vunpack.c.h.b16 %v4822
    %v5475 = vunpack.c.l.b16 %v4823
    %v5476 = vunpack.c.h.b16 %v4823
    %v5477 = vunpack.c.l.b16 %v4824
    %v5478 = vunpack.c.h.b16 %v4824
    %v5479 = vunpack.c.l.b16 %v4825
    %v5480 = vunpack.c.h.b16 %v4825
    %v5481 = vunpack.c.l.b16 %v4826
    %v5482 = vunpack.c.h.b16 %v4826
    %v5483 = vunpack.c.l.b16 %v4827
    %v5484 = vunpack.c.h.b16 %v4827
    %v5485 = vunpack.c.l.b16 %v4828
    %v5486 = vunpack.c.h.b16 %v4828
    %v5487 = vunpack.c.l.b16 %v4829
    %v5488 = vunpack.c.h.b16 %v4829
    %v5489 = vunpack.c.l.b16 %v4830
    %v5490 = vunpack.c.h.b16 %v4830
    %v5491 = vunpack.c.l.b16 %v4831
    %v5492 = vunpack.c.h.b16 %v4831
    %v5493 = vunpack.c.l.b16 %v4832
    %v5494 = vunpack.c.h.b16 %v4832
    %v5495 = vunpack.c.l.b16 %v4833
    %v5496 = vunpack.c.h.b16 %v4833
    %v5497 = vunpack.c.l.b16 %v4834
    %v5498 = vunpack.c.h.b16 %v4834
    %v5499 = vunpack.c.l.b16 %v4835
    %v5500 = vunpack.c.h.b16 %v4835
    %v5501 = vunpack.c.l.b16 %v4836
    %v5502 = vunpack.c.h.b16 %v4836
    %v5503 = vunpack.c.l.b16 %v4837
    %v5504 = vunpack.c.h.b16 %v4837
    %v5505 = vunpack.c.l.b16 %v4838
    %v5506 = vunpack.c.h.b16 %v4838
    %v5507 = vunpack.c.l.b16 %v4839
    %v5508 = vunpack.c.h.b16 %v4839
    %v5509 = vunpack.c.l.b16 %v4840
    %v5510 = vunpack.c.h.b16 %v4840
    %v5511 = vunpack.c.l.b16 %v4841
    %v5512 = vunpack.c.h.b16 %v4841
    %v5513 = vunpack.c.l.b16 %v4842
    %v5514 = vunpack.c.h.b16 %v4842
    %v5515 = vunpack.c.l.b16 %v4843
    %v5516 = vunpack.c.h.b16 %v4843
    %v5517 = vunpack.c.l.b16 %v4844
    %v5518 = vunpack.c.h.b16 %v4844
    %v5519 = vunpack.c.l.b16 %v4845
    %v5520 = vunpack.c.h.b16 %v4845
    %v5521 = vunpack.c.l.b16 %v4846
    %v5522 = vunpack.c.h.b16 %v4846
    %v5523 = vunpack.c.l.b16 %v4847
    %v5524 = vunpack.c.h.b16 %v4847
    %v5525 = vunpack.c.l.b16 %v4848
    %v5526 = vunpack.c.h.b16 %v4848
    %v5527 = vunpack.c.l.b16 %v4849
    %v5528 = vunpack.c.h.b16 %v4849
    %v5529 = vunpack.c.l.b16 %v4850
    %v5530 = vunpack.c.h.b16 %v4850
    %v5531 = vunpack.c.l.b16 %v4851
    %v5532 = vunpack.c.h.b16 %v4851
    %v5533 = vunpack.c.l.b16 %v4852
    %v5534 = vunpack.c.h.b16 %v4852
    %v5535 = vunpack.c.l.b16 %v4853
    %v5536 = vunpack.c.h.b16 %v4853
    %v5537 = vunpack.c.l.b16 %v4854
    %v5538 = vunpack.c.h.b16 %v4854
    %v5539 = vunpack.c.l.b16 %v4855
    %v5540 = vunpack.c.h.b16 %v4855
    %v5541 = vunpack.c.l.b16 %v4856
    %v5542 = vunpack.c.h.b16 %v4856
    %v5543 = vunpack.c.l.b16 %v4857
    %v5544 = vunpack.c.h.b16 %v4857
    %v5545 = vunpack.c.l.b16 %v4858
    %v5546 = vunpack.c.h.b16 %v4858
    %v5547 = vunpack.c.l.b16 %v4859
    %v5548 = vunpack.c.h.b16 %v4859
    %v5549 = vunpack.c.l.b16 %v4860
    %v5550 = vunpack.c.h.b16 %v4860
    %v5551 = vunpack.c.l.b16 %v4861
    %v5552 = vunpack.c.h.b16 %v4861
    %v5553 = vunpack.c.l.b16 %v4862
    %v5554 = vunpack.c.h.b16 %v4862
    %v5555 = vunpack.c.l.b16 %v4863
    %v5556 = vunpack.c.h.b16 %v4863
    %v5557 = vunpack.c.l.b16 %v4864
    %v5558 = vunpack.c.h.b16 %v4864
    %v5559 = vunpack.c.l.b16 %v4865
    %v5560 = vunpack.c.h.b16 %v4865
    %v5561 = vunpack.c.l.b16 %v4866
    %v5562 = vunpack.c.h.b16 %v4866
    %v5563 = vunpack.c.l.b16 %v4867
    %v5564 = vunpack.c.h.b16 %v4867
    %v5565 = vunpack.c.l.b16 %v4868
    %v5566 = vunpack.c.h.b16 %v4868
    %v5567 = vunpack.c.l.b16 %v4869
    %v5568 = vunpack.c.h.b16 %v4869
    %v5569 = vunpack.c.l.b16 %v4870
    %v5570 = vunpack.c.h.b16 %v4870
    %v5571 = vunpack.c.l.b16 %v4871
    %v5572 = vunpack.c.h.b16 %v4871
    %v5573 = vunpack.c.l.b16 %v4872
    %v5574 = vunpack.c.h.b16 %v4872
    %v5575 = vunpack.c.l.b16 %v4873
    %v5576 = vunpack.c.h.b16 %v4873
    %v5577 = vunpack.c.l.b16 %v4874
    %v5578 = vunpack.c.h.b16 %v4874
    %v5579 = vunpack.c.l.b16 %v4875
    %v5580 = vunpack.c.h.b16 %v4875
    %v5581 = vunpack.c.l.b16 %v4876
    %v5582 = vunpack.c.h.b16 %v4876
    %v5583 = vunpack.c.l.b16 %v4877
    %v5584 = vunpack.c.h.b16 %v4877
    %v5585 = vunpack.c.l.b16 %v4878
    %v5586 = vunpack.c.h.b16 %v4878
    %v5587 = vunpack.c.l.b16 %v4879
    %v5588 = vunpack.c.h.b16 %v4879
    %v5589 = vunpack.c.l.b16 %v4880
    %v5590 = vunpack.c.h.b16 %v4880
    %v5591 = vunpack.c.l.b16 %v4881
    %v5592 = vunpack.c.h.b16 %v4881
    %v5593 = vunpack.c.l.b16 %v4882
    %v5594 = vunpack.c.h.b16 %v4882
    %v5595 = vunpack.c.l.b16 %v4883
    %v5596 = vunpack.c.h.b16 %v4883
    %v5597 = vunpack.c.l.b16 %v4884
    %v5598 = vunpack.c.h.b16 %v4884
    %v5599 = vunpack.c.l.b16 %v4885
    %v5600 = vunpack.c.h.b16 %v4885
    %v5601 = vunpack.c.l.b16 %v4886
    %v5602 = vunpack.c.h.b16 %v4886
    %v5603 = vunpack.c.l.b16 %v4887
    %v5604 = vunpack.c.h.b16 %v4887
    %v5605 = vunpack.c.l.b16 %v4888
    %v5606 = vunpack.c.h.b16 %v4888
    %v5607 = vunpack.c.l.b16 %v4889
    %v5608 = vunpack.c.h.b16 %v4889
    %v5609 = vunpack.c.l.b16 %v4890
    %v5610 = vunpack.c.h.b16 %v4890
    %v5611 = vunpack.c.l.b16 %v4891
    %v5612 = vunpack.c.h.b16 %v4891
    %v5613 = vunpack.c.l.b16 %v4892
    %v5614 = vunpack.c.h.b16 %v4892
    %v5615 = vunpack.c.l.b16 %v4893
    %v5616 = vunpack.c.h.b16 %v4893
    %v5617 = vunpack.c.l.b16 %v4894
    %v5618 = vunpack.c.h.b16 %v4894
    %v5619 = vunpack.c.l.b16 %v4895
    %v5620 = vunpack.c.h.b16 %v4895
    %v5621 = vunpack.c.l.b16 %v4896
    %v5622 = vunpack.c.h.b16 %v4896
    %v5623 = vunpack.c.l.b16 %v4897
    %v5624 = vunpack.c.h.b16 %v4897
    %v5625 = vunpack.c.l.b16 %v4898
    %v5626 = vunpack.c.h.b16 %v4898
    %v5627 = vunpack.c.l.b16 %v4899
    %v5628 = vunpack.c.h.b16 %v4899
    %v5629 = vunpack.c.l.b16 %v4900
    %v5630 = vunpack.c.h.b16 %v4900
    %v5631 = vunpack.c.l.b16 %v4901
    %v5632 = vunpack.c.h.b16 %v4901
    %v5633 = vunpack.c.l.b16 %v4902
    %v5634 = vunpack.c.h.b16 %v4902
    %v5635 = vunpack.c.l.b16 %v4903
    %v5636 = vunpack.c.h.b16 %v4903
    %v5637 = vunpack.c.l.b16 %v4904
    %v5638 = vunpack.c.h.b16 %v4904
    %v5639 = vunpack.c.l.b16 %v4905
    %v5640 = vunpack.c.h.b16 %v4905
    %v5641 = vunpack.c.l.b16 %v4906
    %v5642 = vunpack.c.h.b16 %v4906
    %v5643 = vunpack.c.l.b16 %v4907
    %v5644 = vunpack.c.h.b16 %v4907
    %v5645 = vunpack.c.l.b16 %v4908
    %v5646 = vunpack.c.h.b16 %v4908
    %v5647 = vunpack.c.l.b16 %v4909
    %v5648 = vunpack.c.h.b16 %v4909
    %v5649 = vunpack.c.l.b16 %v4910
    %v5650 = vunpack.c.h.b16 %v4910
    %v5651 = vunpack.c.l.b16 %v4911
    %v5652 = vunpack.c.h.b16 %v4911
    %v5653 = vunpack.c.l.b16 %v4912
    %v5654 = vunpack.c.h.b16 %v4912
    %v5655 = vunpack.c.l.b16 %v4913
    %v5656 = vunpack.c.h.b16 %v4913
    %v5657 = vunpack.c.l.b16 %v4914
    %v5658 = vunpack.c.h.b16 %v4914
    %v5659 = vunpack.c.l.b16 %v4915
    %v5660 = vunpack.c.h.b16 %v4915
    %v5661 = vunpack.c.l.b16 %v4916
    %v5662 = vunpack.c.h.b16 %v4916
    %v5663 = vunpack.c.l.b16 %v4917
    %v5664 = vunpack.c.h.b16 %v4917
    %v5665 = vunpack.c.l.b16 %v4918
    %v5666 = vunpack.c.h.b16 %v4918
    %v5667 = vunpack.c.l.b16 %v4919
    %v5668 = vunpack.c.h.b16 %v4919
    %v5669 = vunpack.c.l.b16 %v4920
    %v5670 = vunpack.c.h.b16 %v4920
    %v5671 = vunpack.c.l.b16 %v4921
    %v5672 = vunpack.c.h.b16 %v4921
    %v5673 = vunpack.c.l.b16 %v4922
    %v5674 = vunpack.c.h.b16 %v4922
    %v5675 = vunpack.c.l.b16 %v4923
    %v5676 = vunpack.c.h.b16 %v4923
    %v5677 = vunpack.c.l.b16 %v4924
    %v5678 = vunpack.c.h.b16 %v4924
    %v5679 = vunpack.c.l.b16 %v4925
    %v5680 = vunpack.c.h.b16 %v4925
    %v5681 = vunpack.c.l.b16 %v4926
    %v5682 = vunpack.c.h.b16 %v4926
    %v5683 = vunpack.c.l.b16 %v4927
    %v5684 = vunpack.c.h.b16 %v4927
    %v5685 = vunpack.c.l.b16 %v4928
    %v5686 = vunpack.c.h.b16 %v4928
    %v5687 = vunpack.c.l.b16 %v4929
    %v5688 = vunpack.c.h.b16 %v4929
    %v5689 = vunpack.c.l.b16 %v4930
    %v5690 = vunpack.c.h.b16 %v4930
    %v5691 = vunpack.c.l.b16 %v4931
    %v5692 = vunpack.c.h.b16 %v4931
    %v5693 = vunpack.c.l.b16 %v4932
    %v5694 = vunpack.c.h.b16 %v4932
    %v5695 = vunpack.c.l.b16 %v4933
    %v5696 = vunpack.c.h.b16 %v4933
    %v5697 = vunpack.c.l.b16 %v4934
    %v5698 = vunpack.c.h.b16 %v4934
    %v5699 = vunpack.c.l.b16 %v4935
    %v5700 = vunpack.c.h.b16 %v4935
    %v5701 = vunpack.c.l.b16 %v4936
    %v5702 = vunpack.c.h.b16 %v4936
    %v5703 = vunpack.c.l.b16 %v4937
    %v5704 = vunpack.c.h.b16 %v4937
    %v5705 = vunpack.c.l.b16 %v4938
    %v5706 = vunpack.c.h.b16 %v4938
    %v5707 = vunpack.c.l.b16 %v4939
    %v5708 = vunpack.c.h.b16 %v4939
    %v5709 = vunpack.c.l.b16 %v4940
    %v5710 = vunpack.c.h.b16 %v4940
    %v5711 = vunpack.c.l.b16 %v4941
    %v5712 = vunpack.c.h.b16 %v4941
    %v5713 = vunpack.c.l.b16 %v4942
    %v5714 = vunpack.c.h.b16 %v4942
    %v5715 = vunpack.c.l.b16 %v4943
    %v5716 = vunpack.c.h.b16 %v4943
    %v5717 = vunpack.c.l.b16 %v4944
    %v5718 = vunpack.c.h.b16 %v4944
    %v5719 = vunpack.c.l.b16 %v4945
    %v5720 = vunpack.c.h.b16 %v4945
    %v5721 = vunpack.c.l.b16 %v4946
    %v5722 = vunpack.c.h.b16 %v4946
    %v5723 = vunpack.c.l.b16 %v4947
    %v5724 = vunpack.c.h.b16 %v4947
    %v5725 = vunpack.c.l.b16 %v4948
    %v5726 = vunpack.c.h.b16 %v4948
    %v5727 = vunpack.c.l.b16 %v4949
    %v5728 = vunpack.c.h.b16 %v4949
    %v5729 = vunpack.c.l.b16 %v4950
    %v5730 = vunpack.c.h.b16 %v4950
    %v5731 = vunpack.c.l.b16 %v4951
    %v5732 = vunpack.c.h.b16 %v4951
    %v5733 = vunpack.c.l.b16 %v4952
    %v5734 = vunpack.c.h.b16 %v4952
    %v5735 = vunpack.c.l.b16 %v4953
    %v5736 = vunpack.c.h.b16 %v4953
    %v5737 = vunpack.c.l.b16 %v4954
    %v5738 = vunpack.c.h.b16 %v4954
    %v5739 = vunpack.c.l.b16 %v4955
    %v5740 = vunpack.c.h.b16 %v4955
    %v5741 = vunpack.c.l.b16 %v4956
    %v5742 = vunpack.c.h.b16 %v4956
    %v5743 = vunpack.c.l.b16 %v4957
    %v5744 = vunpack.c.h.b16 %v4957
    %v5745 = vunpack.c.l.b16 %v4958
    %v5746 = vunpack.c.h.b16 %v4958
    %v5747 = vunpack.c.l.b16 %v4959
    %v5748 = vunpack.c.h.b16 %v4959
    %v5749 = vunpack.c.l.b16 %v4960
    %v5750 = vunpack.c.h.b16 %v4960
    %v5751 = vunpack.c.l.b16 %v4961
    %v5752 = vunpack.c.h.b16 %v4961
    %v5753 = vunpack.c.l.b16 %v4962
    %v5754 = vunpack.c.h.b16 %v4962
    %v5755 = vunpack.c.l.b16 %v4963
    %v5756 = vunpack.c.h.b16 %v4963
    %v5757 = vunpack.c.l.b16 %v4964
    %v5758 = vunpack.c.h.b16 %v4964
    %v5759 = vunpack.c.l.b16 %v4965
    %v5760 = vunpack.c.h.b16 %v4965
    %v5761 = vunpack.c.l.b16 %v4966
    %v5762 = vunpack.c.h.b16 %v4966
    %v5763 = vunpack.c.l.b16 %v4967
    %v5764 = vunpack.c.h.b16 %v4967
    %v5765 = vunpack.c.l.b16 %v4968
    %v5766 = vunpack.c.h.b16 %v4968
    %v5767 = vunpack.c.l.b16 %v4969
    %v5768 = vunpack.c.h.b16 %v4969
    %v5769 = vunpack.c.l.b16 %v4970
    %v5770 = vunpack.c.h.b16 %v4970
    %v5771 = vunpack.c.l.b16 %v4971
    %v5772 = vunpack.c.h.b16 %v4971
    %v5773 = vunpack.c.l.b16 %v4972
    %v5774 = vunpack.c.h.b16 %v4972
    %v5775 = vunpack.c.l.b16 %v4973
    %v5776 = vunpack.c.h.b16 %v4973
    %v5777 = vunpack.c.l.b16 %v4974
    %v5778 = vunpack.c.h.b16 %v4974
    %v5779 = vunpack.c.l.b16 %v4975
    %v5780 = vunpack.c.h.b16 %v4975
    %v5781 = vunpack.c.l.b16 %v4976
    %v5782 = vunpack.c.h.b16 %v4976
    %v5783 = vunpack.c.l.b16 %v4977
    %v5784 = vunpack.c.h.b16 %v4977
    %v5785 = vunpack.c.l.b16 %v4978
    %v5786 = vunpack.c.h.b16 %v4978
    %v5787 = vunpack.c.l.b16 %v4979
    %v5788 = vunpack.c.h.b16 %v4979
    %v5789 = vunpack.c.l.b16 %v4980
    %v5790 = vunpack.c.h.b16 %v4980
    %v5791 = vunpack.c.l.b16 %v4981
    %v5792 = vunpack.c.h.b16 %v4981
    %v5793 = vunpack.c.l.b16 %v4982
    %v5794 = vunpack.c.h.b16 %v4982
    %v5795 = vunpack.c.l.b16 %v4983
    %v5796 = vunpack.c.h.b16 %v4983
    %v5797 = vunpack.c.l.b16 %v4984
    %v5798 = vunpack.c.h.b16 %v4984
    %v5799 = vunpack.c.l.b16 %v4985
    %v5800 = vunpack.c.h.b16 %v4985
    %v5801 = vunpack.c.l.b16 %v4986
    %v5802 = vunpack.c.h.b16 %v4986
    %v5803 = vunpack.c.l.b16 %v4987
    %v5804 = vunpack.c.h.b16 %v4987
    %v5805 = vunpack.c.l.b16 %v4988
    %v5806 = vunpack.c.h.b16 %v4988
    %v5807 = vunpack.c.l.b16 %v4989
    %v5808 = vunpack.c.h.b16 %v4989
    %v5809 = vunpack.c.l.b16 %v4990
    %v5810 = vunpack.c.h.b16 %v4990
    %v5811 = vunpack.c.l.b16 %v4991
    %v5812 = vunpack.c.h.b16 %v4991
    %v5813 = vunpack.c.l.b16 %v4992
    %v5814 = vunpack.c.h.b16 %v4992
    %v5815 = vunpack.c.l.b16 %v4993
    %v5816 = vunpack.c.h.b16 %v4993
    %v5817 = vunpack.c.l.b16 %v4994
    %v5818 = vunpack.c.h.b16 %v4994
    %v5819 = vunpack.c.l.b16 %v4995
    %v5820 = vunpack.c.h.b16 %v4995
    %v5821 = vunpack.c.l.b16 %v4996
    %v5822 = vunpack.c.h.b16 %v4996
    %v5823 = vunpack.c.l.b16 %v4997
    %v5824 = vunpack.c.h.b16 %v4997
    %v5825 = vunpack.c.l.b16 %v4998
    %v5826 = vunpack.c.h.b16 %v4998
    %v5827 = vunpack.c.l.b16 %v4999
    %v5828 = vunpack.c.h.b16 %v4999
    %v5829 = vunpack.c.l.b16 %v5000
    %v5830 = vunpack.c.h.b16 %v5000
    %v5831 = vunpack.c.l.b16 %v5001
    %v5832 = vunpack.c.h.b16 %v5001
    %v5833 = vunpack.c.l.b16 %v5002
    %v5834 = vunpack.c.h.b16 %v5002
    %v5835 = vunpack.c.l.b16 %v5003
    %v5836 = vunpack.c.h.b16 %v5003
    %v5837 = vunpack.c.l.b16 %v5004
    %v5838 = vunpack.c.h.b16 %v5004
    %v5839 = vunpack.c.l.b16 %v5005
    %v5840 = vunpack.c.h.b16 %v5005
    %v5841 = vunpack.c.l.b16 %v5006
    %v5842 = vunpack.c.h.b16 %v5006
    %v5843 = vunpack.c.l.b16 %v5007
    %v5844 = vunpack.c.h.b16 %v5007
    %v5845 = vunpack.c.l.b16 %v5008
    %v5846 = vunpack.c.h.b16 %v5008
    %v5847 = vunpack.c.l.b16 %v5009
    %v5848 = vunpack.c.h.b16 %v5009
    %v5849 = vunpack.c.l.b16 %v5010
    %v5850 = vunpack.c.h.b16 %v5010
    %v5851 = vunpack.c.l.b16 %v5011
    %v5852 = vunpack.c.h.b16 %v5011
    %v5853 = vunpack.c.l.b16 %v5012
    %v5854 = vunpack.c.h.b16 %v5012
    %v5855 = vunpack.c.l.b16 %v5013
    %v5856 = vunpack.c.h.b16 %v5013
    %v5857 = vunpack.c.l.b16 %v5014
    %v5858 = vunpack.c.h.b16 %v5014
    %v5859 = vunpack.c.l.b16 %v5015
    %v5860 = vunpack.c.h.b16 %v5015
    %v5861 = vunpack.c.l.b16 %v5016
    %v5862 = vunpack.c.h.b16 %v5016
    %v5863 = vunpack.c.l.b16 %v5017
    %v5864 = vunpack.c.h.b16 %v5017
    %v5865 = vunpack.c.l.b16 %v5018
    %v5866 = vunpack.c.h.b16 %v5018
    %v5867 = vunpack.c.l.b16 %v5019
    %v5868 = vunpack.c.h.b16 %v5019
    %v5869 = vunpack.c.l.b16 %v5020
    %v5870 = vunpack.c.h.b16 %v5020
    %v5871 = vunpack.c.l.b16 %v5021
    %v5872 = vunpack.c.h.b16 %v5021
    %v5873 = vunpack.c.l.b16 %v5022
    %v5874 = vunpack.c.h.b16 %v5022
    %v5875 = vunpack.c.l.b16 %v5023
    %v5876 = vunpack.c.h.b16 %v5023
    %v5877 = vunpack.c.l.b16 %v5024
    %v5878 = vunpack.c.h.b16 %v5024
    %v5879 = vunpack.c.l.b16 %v5025
    %v5880 = vunpack.c.h.b16 %v5025
    %v5881 = vunpack.c.l.b16 %v5026
    %v5882 = vunpack.c.h.b16 %v5026
    %v5883 = vunpack.c.l.b16 %v5027
    %v5884 = vunpack.c.h.b16 %v5027
    %v5885 = vunpack.c.l.b16 %v5028
    %v5886 = vunpack.c.h.b16 %v5028
    %v5887 = vunpack.c.l.b16 %v5029
    %v5888 = vunpack.c.h.b16 %v5029
    %v5889 = vunpack.c.l.b16 %v5030
    %v5890 = vunpack.c.h.b16 %v5030
    %v5891 = vunpack.c.l.b16 %v5031
    %v5892 = vunpack.c.h.b16 %v5031
    %v5893 = vunpack.c.l.b16 %v5032
    %v5894 = vunpack.c.h.b16 %v5032
    %v5895 = vunpack.c.l.b16 %v5033
    %v5896 = vunpack.c.h.b16 %v5033
    %v5897 = vunpack.c.l.b16 %v5034
    %v5898 = vunpack.c.h.b16 %v5034
    %v5899 = vunpack.c.l.b16 %v5035
    %v5900 = vunpack.c.h.b16 %v5035
    %v5901 = vunpack.c.l.b16 %v5036
    %v5902 = vunpack.c.h.b16 %v5036
    %v5903 = vunpack.c.l.b16 %v5037
    %v5904 = vunpack.c.h.b16 %v5037
    %v5905 = vunpack.c.l.b16 %v5038
    %v5906 = vunpack.c.h.b16 %v5038
    %v5907 = vunpack.c.l.b16 %v5039
    %v5908 = vunpack.c.h.b16 %v5039
    %v5909 = vunpack.c.l.b16 %v5040
    %v5910 = vunpack.c.h.b16 %v5040
    %v5911 = vunpack.c.l.b16 %v5041
    %v5912 = vunpack.c.h.b16 %v5041
    %v5913 = vunpack.c.l.b16 %v5042
    %v5914 = vunpack.c.h.b16 %v5042
    %v5915 = vunpack.c.l.b16 %v5043
    %v5916 = vunpack.c.h.b16 %v5043
    %v5917 = vunpack.c.l.b16 %v5044
    %v5918 = vunpack.c.h.b16 %v5044
    %v5919 = vunpack.c.l.b16 %v5045
    %v5920 = vunpack.c.h.b16 %v5045
    %v5921 = vunpack.c.l.b16 %v5046
    %v5922 = vunpack.c.h.b16 %v5046
    %v5923 = vunpack.c.l.b16 %v5047
    %v5924 = vunpack.c.h.b16 %v5047
    %v5925 = vunpack.c.l.b16 %v5048
    %v5926 = vunpack.c.h.b16 %v5048
    %v5927 = vpack.c.b16 %v5357, %v5351
    %v5928 = vpack.c.b16 %v5358, %v5352
    %v5929 = vpack.c.b16 %v5359, %v5353
    %v5930 = vpack.c.b16 %v5360, %v5354
    %v5931 = vpack.c.b16 %v5361, %v5355
    %v5932 = vpack.c.b16 %v5362, %v5356
    %v5933 = vpack.c.b16 %v5369, %v5363
    %v5934 = vpack.c.b16 %v5370, %v5364
    %v5935 = vpack.c.b16 %v5371, %v5365
    %v5936 = vpack.c.b16 %v5372, %v5366
    %v5937 = vpack.c.b16 %v5373, %v5367
    %v5938 = vpack.c.b16 %v5374, %v5368
    %v5939 = vpack.c.b16 %v5381, %v5375
    %v5940 = vpack.c.b16 %v5382, %v5376
    %v5941 = vpack.c.b16 %v5383, %v5377
    %v5942 = vpack.c.b16 %v5384, %v5378
    %v5943 = vpack.c.b16 %v5385, %v5379
    %v5944 = vpack.c.b16 %v5386, %v5380
    %v5945 = vpack.c.b16 %v5393, %v5387
    %v5946 = vpack.c.b16 %v5394, %v5388
    %v5947 = vpack.c.b16 %v5395, %v5389
    %v5948 = vpack.c.b16 %v5396, %v5390
    %v5949 = vpack.c.b16 %v5397, %v5391
    %v5950 = vpack.c.b16 %v5398, %v5392
    %v5951 = vpack.c.b16 %v5405, %v5399
    %v5952 = vpack.c.b16 %v5406, %v5400
    %v5953 = vpack.c.b16 %v5407, %v5401
    %v5954 = vpack.c.b16 %v5408, %v5402
    %v5955 = vpack.c.b16 %v5409, %v5403
    %v5956 = vpack.c.b16 %v5410, %v5404
    %v5957 = vpack.c.b16 %v5417, %v5411
    %v5958 = vpack.c.b16 %v5418, %v5412
    %v5959 = vpack.c.b16 %v5419, %v5413
    %v5960 = vpack.c.b16 %v5420, %v5414
    %v5961 = vpack.c.b16 %v5421, %v5415
    %v5962 = vpack.c.b16 %v5422, %v5416
    %v5963 = vpack.c.b16 %v5429, %v5423
    %v5964 = vpack.c.b16 %v5430, %v5424
    %v5965 = vpack.c.b16 %v5431, %v5425
    %v5966 = vpack.c.b16 %v5432, %v5426
    %v5967 = vpack.c.b16 %v5433, %v5427
    %v5968 = vpack.c.b16 %v5434, %v5428
    %v5969 = vpack.c.b16 %v5441, %v5435
    %v5970 = vpack.c.b16 %v5442, %v5436
    %v5971 = vpack.c.b16 %v5443, %v5437
    %v5972 = vpack.c.b16 %v5444, %v5438
    %v5973 = vpack.c.b16 %v5445, %v5439
    %v5974 = vpack.c.b16 %v5446, %v5440
    %v5975 = vpack.c.b16 %v5453, %v5447
    %v5976 = vpack.c.b16 %v5454, %v5448
    %v5977 = vpack.c.b16 %v5455, %v5449
    %v5978 = vpack.c.b16 %v5456, %v5450
    %v5979 = vpack.c.b16 %v5457, %v5451
    %v5980 = vpack.c.b16 %v5458, %v5452
    %v5981 = vpack.c.b16 %v5465, %v5459
    %v5982 = vpack.c.b16 %v5466, %v5460
    %v5983 = vpack.c.b16 %v5467, %v5461
    %v5984 = vpack.c.b16 %v5468, %v5462
    %v5985 = vpack.c.b16 %v5469, %v5463
    %v5986 = vpack.c.b16 %v5470, %v5464
    %v5987 = vpack.c.b16 %v5477, %v5471
    %v5988 = vpack.c.b16 %v5478, %v5472
    %v5989 = vpack.c.b16 %v5479, %v5473
    %v5990 = vpack.c.b16 %v5480, %v5474
    %v5991 = vpack.c.b16 %v5481, %v5475
    %v5992 = vpack.c.b16 %v5482, %v5476
    %v5993 = vpack.c.b16 %v5489, %v5483
    %v5994 = vpack.c.b16 %v5490, %v5484
    %v5995 = vpack.c.b16 %v5491, %v5485
    %v5996 = vpack.c.b16 %v5492, %v5486
    %v5997 = vpack.c.b16 %v5493, %v5487
    %v5998 = vpack.c.b16 %v5494, %v5488
    %v5999 = vpack.c.b16 %v5501, %v5495
    %v6000 = vpack.c.b16 %v5502, %v5496
    %v6001 = vpack.c.b16 %v5503, %v5497
    %v6002 = vpack.c.b16 %v5504, %v5498
    %v6003 = vpack.c.b16 %v5505, %v5499
    %v6004 = vpack.c.b16 %v5506, %v5500
    %v6005 = vpack.c.b16 %v5513, %v5507
    %v6006 = vpack.c.b16 %v5514, %v5508
    %v6007 = vpack.c.b16 %v5515, %v5509
    %v6008 = vpack.c.b16 %v5516, %v5510
    %v6009 = vpack.c.b16 %v5517, %v5511
    %v6010 = vpack.c.b16 %v5518, %v5512
    %v6011 = vpack.c.b16 %v5525, %v5519
    %v6012 = vpack.c.b16 %v5526, %v5520
    %v6013 = vpack.c.b16 %v5527, %v5521
    %v6014 = vpack.c.b16 %v5528, %v5522
    %v6015 = vpack.c.b16 %v5529, %v5523
    %v6016 = vpack.c.b16 %v5530, %v5524
    %v6017 = vpack.c.b16 %v5537, %v5531
    %v6018 = vpack.c.b16 %v5538, %v5532
    %v6019 = vpack.c.b16 %v5539, %v5533
    %v6020 = vpack.c.b16 %v5540, %v5534
    %v6021 = vpack.c.b16 %v5541, %v5535
    %v6022 = vpack.c.b16 %v5542, %v5536
    %v6023 = vpack.c.b16 %v5549, %v5543
    %v6024 = vpack.c.b16 %v5550, %v5544
    %v6025 = vpack.c.b16 %v5551, %v5545
    %v6026 = vpack.c.b16 %v5552, %v5546
    %v6027 = vpack.c.b16 %v5553, %v5547
    %v6028 = vpack.c.b16 %v5554, %v5548
    %v6029 = vpack.c.b16 %v5561, %v5555
    %v6030 = vpack.c.b16 %v5562, %v5556
    %v6031 = vpack.c.b16 %v5563, %v5557
    %v6032 = vpack.c.b16 %v5564, %v5558
    %v6033 = vpack.c.b16 %v5565, %v5559
    %v6034 = vpack.c.b16 %v5566, %v5560
    %v6035 = vpack.c.b16 %v5573, %v5567
    %v6036 = vpack.c.b16 %v5574, %v5568
    %v6037 = vpack.c.b16 %v5575, %v5569
    %v6038 = vpack.c.b16 %v5576, %v5570
    %v6039 = vpack.c.b16 %v5577, %v5571
    %v6040 = vpack.c.b16 %v5578, %v5572
    %v6041 = vpack.c.b16 %v5585, %v5579
    %v6042 = vpack.c.b16 %v5586, %v5580
    %v6043 = vpack.c.b16 %v5587, %v5581
    %v6044 = vpack.c.b16 %v5588, %v5582
    %v6045 = vpack.c.b16 %v5589, %v5583
    %v6046 = vpack.c.b16 %v5590, %v5584
    %v6047 = vpack.c.b16 %v5597, %v5591
    %v6048 = vpack.c.b16 %v5598, %v5592
    %v6049 = vpack.c.b16 %v5599, %v5593
    %v6050 = vpack.c.b16 %v5600, %v5594
    %v6051 = vpack.c.b16 %v5601, %v5595
    %v6052 = vpack.c.b16 %v5602, %v5596
    %v6053 = vpack.c.b16 %v5609, %v5603
    %v6054 = vpack.c.b16 %v5610, %v5604
    %v6055 = vpack.c.b16 %v5611, %v5605
    %v6056 = vpack.c.b16 %v5612, %v5606
    %v6057 = vpack.c.b16 %v5613, %v5607
    %v6058 = vpack.c.b16 %v5614, %v5608
    %v6059 = vpack.c.b16 %v5621, %v5615
    %v6060 = vpack.c.b16 %v5622, %v5616
    %v6061 = vpack.c.b16 %v5623, %v5617
    %v6062 = vpack.c.b16 %v5624, %v5618
    %v6063 = vpack.c.b16 %v5625, %v5619
    %v6064 = vpack.c.b16 %v5626, %v5620
    %v6065 = vpack.c.b16 %v5633, %v5627
    %v6066 = vpack.c.b16 %v5634, %v5628
    %v6067 = vpack.c.b16 %v5635, %v5629
    %v6068 = vpack.c.b16 %v5636, %v5630
    %v6069 = vpack.c.b16 %v5637, %v5631
    %v6070 = vpack.c.b16 %v5638, %v5632
    %v6071 = vpack.c.b16 %v5645, %v5639
    %v6072 = vpack.c.b16 %v5646, %v5640
    %v6073 = vpack.c.b16 %v5647, %v5641
    %v6074 = vpack.c.b16 %v5648, %v5642
    %v6075 = vpack.c.b16 %v5649, %v5643
    %v6076 = vpack.c.b16 %v5650, %v5644
    %v6077 = vpack.c.b16 %v5657, %v5651
    %v6078 = vpack.c.b16 %v5658, %v5652
    %v6079 = vpack.c.b16 %v5659, %v5653
    %v6080 = vpack.c.b16 %v5660, %v5654
    %v6081 = vpack.c.b16 %v5661, %v5655
    %v6082 = vpack.c.b16 %v5662, %v5656
    %v6083 = vpack.c.b16 %v5669, %v5663
    %v6084 = vpack.c.b16 %v5670, %v5664
    %v6085 = vpack.c.b16 %v5671, %v5665
    %v6086 = vpack.c.b16 %v5672, %v5666
    %v6087 = vpack.c.b16 %v5673, %v5667
    %v6088 = vpack.c.b16 %v5674, %v5668
    %v6089 = vpack.c.b16 %v5681, %v5675
    %v6090 = vpack.c.b16 %v5682, %v5676
    %v6091 = vpack.c.b16 %v5683, %v5677
    %v6092 = vpack.c.b16 %v5684, %v5678
    %v6093 = vpack.c.b16 %v5685, %v5679
    %v6094 = vpack.c.b16 %v5686, %v5680
    %v6095 = vpack.c.b16 %v5693, %v5687
    %v6096 = vpack.c.b16 %v5694, %v5688
    %v6097 = vpack.c.b16 %v5695, %v5689
    %v6098 = vpack.c.b16 %v5696, %v5690
    %v6099 = vpack.c.b16 %v5697, %v5691
    %v6100 = vpack.c.b16 %v5698, %v5692
    %v6101 = vpack.c.b16 %v5705, %v5699
    %v6102 = vpack.c.b16 %v5706, %v5700
    %v6103 = vpack.c.b16 %v5707, %v5701
    %v6104 = vpack.c.b16 %v5708, %v5702
    %v6105 = vpack.c.b16 %v5709, %v5703
    %v6106 = vpack.c.b16 %v5710, %v5704
    %v6107 = vpack.c.b16 %v5717, %v5711
    %v6108 = vpack.c.b16 %v5718, %v5712
    %v6109 = vpack.c.b16 %v5719, %v5713
    %v6110 = vpack.c.b16 %v5720, %v5714
    %v6111 = vpack.c.b16 %v5721, %v5715
    %v6112 = vpack.c.b16 %v5722, %v5716
    %v6113 = vpack.c.b16 %v5729, %v5723
    %v6114 = vpack.c.b16 %v5730, %v5724
    %v6115 = vpack.c.b16 %v5731, %v5725
    %v6116 = vpack.c.b16 %v5732, %v5726
    %v6117 = vpack.c.b16 %v5733, %v5727
    %v6118 = vpack.c.b16 %v5734, %v5728
    %v6119 = vpack.c.b16 %v5741, %v5735
    %v6120 = vpack.c.b16 %v5742, %v5736
    %v6121 = vpack.c.b16 %v5743, %v5737
    %v6122 = vpack.c.b16 %v5744, %v5738
    %v6123 = vpack.c.b16 %v5745, %v5739
    %v6124 = vpack.c.b16 %v5746, %v5740
    %v6125 = vpack.c.b16 %v5753, %v5747
    %v6126 = vpack.c.b16 %v5754, %v5748
    %v6127 = vpack.c.b16 %v5755, %v5749
    %v6128 = vpack.c.b16 %v5756, %v5750
    %v6129 = vpack.c.b16 %v5757, %v5751
    %v6130 = vpack.c.b16 %v5758, %v5752
    %v6131 = vpack.c.b16 %v5765, %v5759
    %v6132 = vpack.c.b16 %v5766, %v5760
    %v6133 = vpack.c.b16 %v5767, %v5761
    %v6134 = vpack.c.b16 %v5768, %v5762
    %v6135 = vpack.c.b16 %v5769, %v5763
    %v6136 = vpack.c.b16 %v5770, %v5764
    %v6137 = vpack.c.b16 %v5777, %v5771
    %v6138 = vpack.c.b16 %v5778, %v5772
    %v6139 = vpack.c.b16 %v5779, %v5773
    %v6140 = vpack.c.b16 %v5780, %v5774
    %v6141 = vpack.c.b16 %v5781, %v5775
    %v6142 = vpack.c.b16 %v5782, %v5776
    %v6143 = vpack.c.b16 %v5789, %v5783
    %v6144 = vpack.c.b16 %v5790, %v5784
    %v6145 = vpack.c.b16 %v5791, %v5785
    %v6146 = vpack.c.b16 %v5792, %v5786
    %v6147 = vpack.c.b16 %v5793, %v5787
    %v6148 = vpack.c.b16 %v5794, %v5788
    %v6149 = vpack.c.b16 %v5801, %v5795
    %v6150 = vpack.c.b16 %v5802, %v5796
    %v6151 = vpack.c.b16 %v5803, %v5797
    %v6152 = vpack.c.b16 %v5804, %v5798
    %v6153 = vpack.c.b16 %v5805, %v5799
    %v6154 = vpack.c.b16 %v5806, %v5800
    %v6155 = vpack.c.b16 %v5813, %v5807
    %v6156 = vpack.c.b16 %v5814, %v5808
    %v6157 = vpack.c.b16 %v5815, %v5809
    %v6158 = vpack.c.b16 %v5816, %v5810
    %v6159 = vpack.c.b16 %v5817, %v5811
    %v6160 = vpack.c.b16 %v5818, %v5812
    %v6161 = vpack.c.b16 %v5825, %v5819
    %v6162 = vpack.c.b16 %v5826, %v5820
    %v6163 = vpack.c.b16 %v5827, %v5821
    %v6164 = vpack.c.b16 %v5828, %v5822
    %v6165 = vpack.c.b16 %v5829, %v5823
    %v6166 = vpack.c.b16 %v5830, %v5824
    %v6167 = vpack.c.b16 %v5837, %v5831
    %v6168 = vpack.c.b16 %v5838, %v5832
    %v6169 = vpack.c.b16 %v5839, %v5833
    %v6170 = vpack.c.b16 %v5840, %v5834
    %v6171 = vpack.c.b16 %v5841, %v5835
    %v6172 = vpack.c.b16 %v5842, %v5836
    %v6173 = vpack.c.b16 %v5849, %v5843
    %v6174 = vpack.c.b16 %v5850, %v5844
    %v6175 = vpack.c.b16 %v5851, %v5845
    %v6176 = vpack.c.b16 %v5852, %v5846
    %v6177 = vpack.c.b16 %v5853, %v5847
    %v6178 = vpack.c.b16 %v5854, %v5848
    %v6179 = vpack.c.b16 %v5861, %v5855
    %v6180 = vpack.c.b16 %v5862, %v5856
    %v6181 = vpack.c.b16 %v5863, %v5857
    %v6182 = vpack.c.b16 %v5864, %v5858
    %v6183 = vpack.c.b16 %v5865, %v5859
    %v6184 = vpack.c.b16 %v5866, %v5860
    %v6185 = vpack.c.b16 %v5873, %v5867
    %v6186 = vpack.c.b16 %v5874, %v5868
    %v6187 = vpack.c.b16 %v5875, %v5869
    %v6188 = vpack.c.b16 %v5876, %v5870
    %v6189 = vpack.c.b16 %v5877, %v5871
    %v6190 = vpack.c.b16 %v5878, %v5872
    %v6191 = vpack.c.b16 %v5885, %v5879
    %v6192 = vpack.c.b16 %v5886, %v5880
    %v6193 = vpack.c.b16 %v5887, %v5881
    %v6194 = vpack.c.b16 %v5888, %v5882
    %v6195 = vpack.c.b16 %v5889, %v5883
    %v6196 = vpack.c.b16 %v5890, %v5884
    %v6197 = vpack.c.b16 %v5897, %v5891
    %v6198 = vpack.c.b16 %v5898, %v5892
    %v6199 = vpack.c.b16 %v5899, %v5893
    %v6200 = vpack.c.b16 %v5900, %v5894
    %v6201 = vpack.c.b16 %v5901, %v5895
    %v6202 = vpack.c.b16 %v5902, %v5896
    %v6203 = vpack.c.b16 %v5909, %v5903
    %v6204 = vpack.c.b16 %v5910, %v5904
    %v6205 = vpack.c.b16 %v5911, %v5905
    %v6206 = vpack.c.b16 %v5912, %v5906
    %v6207 = vpack.c.b16 %v5913, %v5907
    %v6208 = vpack.c.b16 %v5914, %v5908
    %v6209 = vpack.c.b16 %v5921, %v5915
    %v6210 = vpack.c.b16 %v5922, %v5916
    %v6211 = vpack.c.b16 %v5923, %v5917
    %v6212 = vpack.c.b16 %v5924, %v5918
    %v6213 = vpack.c.b16 %v5925, %v5919
    %v6214 = vpack.c.b16 %v5926, %v5920
    %6503 = vmatpush.bf16.msra.mxu0 %v5969
    %6504 = vmatpush.bf16.msra.mxu0 %v5963
    %6505 = vmatpush.bf16.msra.mxu0 %v5957
    %6506 = vmatpush.bf16.msra.mxu0 %v5951
    %6507 = vmatpush.bf16.msra.mxu0 %v5945
    %6508 = vmatpush.bf16.msra.mxu0 %v5939
    %6509 = vmatpush.bf16.msra.mxu0 %v5933
    %6510 = vmatpush.bf16.msra.mxu0 %v5927
    %6511 = vmatmul.bf16.gmra.mxu0 %v251
    %v6512 = vpop.f32.mrf.mxu0
    %v6513 = vadd.f32 %v5051, %v6512
    %v6514 = vpop.f32.mrf.mxu0
    %v6515 = vadd.f32 %v5051, %v6514
    %6516 = vdwg.mxu0
    %6517 = vmatpush.bf16.msra.mxu0 %v6017
    %6518 = vmatpush.bf16.msra.mxu0 %v6011
    %6519 = vmatpush.bf16.msra.mxu0 %v6005
    %6520 = vmatpush.bf16.msra.mxu0 %v5999
    %6521 = vmatpush.bf16.msra.mxu0 %v5993
    %6522 = vmatpush.bf16.msra.mxu0 %v5987
    %6523 = vmatpush.bf16.msra.mxu0 %v5981
    %6524 = vmatpush.bf16.msra.mxu0 %v5975
    %6525 = vmatmul.bf16.gmra.mxu0 %v252
    %v6526 = vpop.f32.mrf.mxu0
    %v6527 = vadd.f32 %v6513, %v6526
    %v6528 = vpop.f32.mrf.mxu0
    %v6529 = vadd.f32 %v6515, %v6528
    %6530 = vdwg.mxu0
    %6531 = vmatpush.bf16.msra.mxu0 %v6065
    %6532 = vmatpush.bf16.msra.mxu0 %v6059
    %6533 = vmatpush.bf16.msra.mxu0 %v6053
    %6534 = vmatpush.bf16.msra.mxu0 %v6047
    %6535 = vmatpush.bf16.msra.mxu0 %v6041
    %6536 = vmatpush.bf16.msra.mxu0 %v6035
    %6537 = vmatpush.bf16.msra.mxu0 %v6029
    %6538 = vmatpush.bf16.msra.mxu0 %v6023
    %6539 = vmatmul.bf16.gmra.mxu0 %v253
    %v6540 = vpop.f32.mrf.mxu0
    %v6541 = vadd.f32 %v6527, %v6540
    %v6542 = vpop.f32.mrf.mxu0
    %v6543 = vadd.f32 %v6529, %v6542
    %6544 = vdwg.mxu0
    %6545 = vmatpush.bf16.msra.mxu0 %v6113
    %6546 = vmatpush.bf16.msra.mxu0 %v6107
    %6547 = vmatpush.bf16.msra.mxu0 %v6101
    %6548 = vmatpush.bf16.msra.mxu0 %v6095
    %6549 = vmatpush.bf16.msra.mxu0 %v6089
    %6550 = vmatpush.bf16.msra.mxu0 %v6083
    %6551 = vmatpush.bf16.msra.mxu0 %v6077
    %6552 = vmatpush.bf16.msra.mxu0 %v6071
    %6553 = vmatmul.bf16.gmra.mxu0 %v254
    %v6554 = vpop.f32.mrf.mxu0
    %v6555 = vadd.f32 %v6541, %v6554
    %v6556 = vpop.f32.mrf.mxu0
    %v6557 = vadd.f32 %v6543, %v6556
    %6558 = vdwg.mxu0
    %6559 = vmatpush.bf16.msra.mxu0 %v6161
    %6560 = vmatpush.bf16.msra.mxu0 %v6155
    %6561 = vmatpush.bf16.msra.mxu0 %v6149
    %6562 = vmatpush.bf16.msra.mxu0 %v6143
    %6563 = vmatpush.bf16.msra.mxu0 %v6137
    %6564 = vmatpush.bf16.msra.mxu0 %v6131
    %6565 = vmatpush.bf16.msra.mxu0 %v6125
    %6566 = vmatpush.bf16.msra.mxu0 %v6119
    %6567 = vmatmul.bf16.gmra.mxu0 %v255
    %v6568 = vpop.f32.mrf.mxu0
    %v6569 = vadd.f32 %v6555, %v6568
    %v6570 = vpop.f32.mrf.mxu0
    %v6571 = vadd.f32 %v6557, %v6570
    %6572 = vdwg.mxu0
    %6573 = vmatpush.bf16.msra.mxu0 %v6209
    %6574 = vmatpush.bf16.msra.mxu0 %v6203
    %6575 = vmatpush.bf16.msra.mxu0 %v6197
    %6576 = vmatpush.bf16.msra.mxu0 %v6191
    %6577 = vmatpush.bf16.msra.mxu0 %v6185
    %6578 = vmatpush.bf16.msra.mxu0 %v6179
    %6579 = vmatpush.bf16.msra.mxu0 %v6173
    %6580 = vmatpush.bf16.msra.mxu0 %v6167
    %6581 = vmatmul.bf16.gmra.mxu0 %v256
    %v6582 = vpop.f32.mrf.mxu0
    %v6583 = vadd.f32 %v6569, %v6582
    %v6584 = vpop.f32.mrf.mxu0
    %v6585 = vadd.f32 %v6571, %v6584
    %6586 = vdwg.mxu0
    %6587 = vmatpush.bf16.msra.mxu0 %v5970
    %6588 = vmatpush.bf16.msra.mxu0 %v5964
    %6589 = vmatpush.bf16.msra.mxu0 %v5958
    %6590 = vmatpush.bf16.msra.mxu0 %v5952
    %6591 = vmatpush.bf16.msra.mxu0 %v5946
    %6592 = vmatpush.bf16.msra.mxu0 %v5940
    %6593 = vmatpush.bf16.msra.mxu0 %v5934
    %6594 = vmatpush.bf16.msra.mxu0 %v5928
    %6595 = vmatmul.bf16.gmra.mxu0 %v251
    %v6596 = vpop.f32.mrf.mxu0
    %v6597 = vadd.f32 %v5052, %v6596
    %v6598 = vpop.f32.mrf.mxu0
    %v6599 = vadd.f32 %v5052, %v6598
    %6600 = vdwg.mxu0
    %6601 = vmatpush.bf16.msra.mxu0 %v6018
    %6602 = vmatpush.bf16.msra.mxu0 %v6012
    %6603 = vmatpush.bf16.msra.mxu0 %v6006
    %6604 = vmatpush.bf16.msra.mxu0 %v6000
    %6605 = vmatpush.bf16.msra.mxu0 %v5994
    %6606 = vmatpush.bf16.msra.mxu0 %v5988
    %6607 = vmatpush.bf16.msra.mxu0 %v5982
    %6608 = vmatpush.bf16.msra.mxu0 %v5976
    %6609 = vmatmul.bf16.gmra.mxu0 %v252
    %v6610 = vpop.f32.mrf.mxu0
    %v6611 = vadd.f32 %v6597, %v6610
    %v6612 = vpop.f32.mrf.mxu0
    %v6613 = vadd.f32 %v6599, %v6612
    %6614 = vdwg.mxu0
    %6615 = vmatpush.bf16.msra.mxu0 %v6066
    %6616 = vmatpush.bf16.msra.mxu0 %v6060
    %6617 = vmatpush.bf16.msra.mxu0 %v6054
    %6618 = vmatpush.bf16.msra.mxu0 %v6048
    %6619 = vmatpush.bf16.msra.mxu0 %v6042
    %6620 = vmatpush.bf16.msra.mxu0 %v6036
    %6621 = vmatpush.bf16.msra.mxu0 %v6030
    %6622 = vmatpush.bf16.msra.mxu0 %v6024
    %6623 = vmatmul.bf16.gmra.mxu0 %v253
    %v6624 = vpop.f32.mrf.mxu0
    %v6625 = vadd.f32 %v6611, %v6624
    %v6626 = vpop.f32.mrf.mxu0
    %v6627 = vadd.f32 %v6613, %v6626
    %6628 = vdwg.mxu0
    %6629 = vmatpush.bf16.msra.mxu0 %v6114
    %6630 = vmatpush.bf16.msra.mxu0 %v6108
    %6631 = vmatpush.bf16.msra.mxu0 %v6102
    %6632 = vmatpush.bf16.msra.mxu0 %v6096
    %6633 = vmatpush.bf16.msra.mxu0 %v6090
    %6634 = vmatpush.bf16.msra.mxu0 %v6084
    %6635 = vmatpush.bf16.msra.mxu0 %v6078
    %6636 = vmatpush.bf16.msra.mxu0 %v6072
    %6637 = vmatmul.bf16.gmra.mxu0 %v254
    %v6638 = vpop.f32.mrf.mxu0
    %v6639 = vadd.f32 %v6625, %v6638
    %v6640 = vpop.f32.mrf.mxu0
    %v6641 = vadd.f32 %v6627, %v6640
    %6642 = vdwg.mxu0
    %6643 = vmatpush.bf16.msra.mxu0 %v6162
    %6644 = vmatpush.bf16.msra.mxu0 %v6156
    %6645 = vmatpush.bf16.msra.mxu0 %v6150
    %6646 = vmatpush.bf16.msra.mxu0 %v6144
    %6647 = vmatpush.bf16.msra.mxu0 %v6138
    %6648 = vmatpush.bf16.msra.mxu0 %v6132
    %6649 = vmatpush.bf16.msra.mxu0 %v6126
    %6650 = vmatpush.bf16.msra.mxu0 %v6120
    %6651 = vmatmul.bf16.gmra.mxu0 %v255
    %v6652 = vpop.f32.mrf.mxu0
    %v6653 = vadd.f32 %v6639, %v6652
    %v6654 = vpop.f32.mrf.mxu0
    %v6655 = vadd.f32 %v6641, %v6654
    %6656 = vdwg.mxu0
    %6657 = vmatpush.bf16.msra.mxu0 %v6210
    %6658 = vmatpush.bf16.msra.mxu0 %v6204
    %6659 = vmatpush.bf16.msra.mxu0 %v6198
    %6660 = vmatpush.bf16.msra.mxu0 %v6192
    %6661 = vmatpush.bf16.msra.mxu0 %v6186
    %6662 = vmatpush.bf16.msra.mxu0 %v6180
    %6663 = vmatpush.bf16.msra.mxu0 %v6174
    %6664 = vmatpush.bf16.msra.mxu0 %v6168
    %6665 = vmatmul.bf16.gmra.mxu0 %v256
    %v6666 = vpop.f32.mrf.mxu0
    %v6667 = vadd.f32 %v6653, %v6666
    %v6668 = vpop.f32.mrf.mxu0
    %v6669 = vadd.f32 %v6655, %v6668
    %6670 = vdwg.mxu0
    %6671 = vmatpush.bf16.msra.mxu0 %v5971
    %6672 = vmatpush.bf16.msra.mxu0 %v5965
    %6673 = vmatpush.bf16.msra.mxu0 %v5959
    %6674 = vmatpush.bf16.msra.mxu0 %v5953
    %6675 = vmatpush.bf16.msra.mxu0 %v5947
    %6676 = vmatpush.bf16.msra.mxu0 %v5941
    %6677 = vmatpush.bf16.msra.mxu0 %v5935
    %6678 = vmatpush.bf16.msra.mxu0 %v5929
    %6679 = vmatmul.bf16.gmra.mxu0 %v251
    %v6680 = vpop.f32.mrf.mxu0
    %v6681 = vadd.f32 %v5053, %v6680
    %v6682 = vpop.f32.mrf.mxu0
    %v6683 = vadd.f32 %v5053, %v6682
    %6684 = vdwg.mxu0
    %6685 = vmatpush.bf16.msra.mxu0 %v6019
    %6686 = vmatpush.bf16.msra.mxu0 %v6013
    %6687 = vmatpush.bf16.msra.mxu0 %v6007
    %6688 = vmatpush.bf16.msra.mxu0 %v6001
    %6689 = vmatpush.bf16.msra.mxu0 %v5995
    %6690 = vmatpush.bf16.msra.mxu0 %v5989
    %6691 = vmatpush.bf16.msra.mxu0 %v5983
    %6692 = vmatpush.bf16.msra.mxu0 %v5977
    %6693 = vmatmul.bf16.gmra.mxu0 %v252
    %v6694 = vpop.f32.mrf.mxu0
    %v6695 = vadd.f32 %v6681, %v6694
    %v6696 = vpop.f32.mrf.mxu0
    %v6697 = vadd.f32 %v6683, %v6696
    %6698 = vdwg.mxu0
    %6699 = vmatpush.bf16.msra.mxu0 %v6067
    %6700 = vmatpush.bf16.msra.mxu0 %v6061
    %6701 = vmatpush.bf16.msra.mxu0 %v6055
    %6702 = vmatpush.bf16.msra.mxu0 %v6049
    %6703 = vmatpush.bf16.msra.mxu0 %v6043
    %6704 = vmatpush.bf16.msra.mxu0 %v6037
    %6705 = vmatpush.bf16.msra.mxu0 %v6031
    %6706 = vmatpush.bf16.msra.mxu0 %v6025
    %6707 = vmatmul.bf16.gmra.mxu0 %v253
    %v6708 = vpop.f32.mrf.mxu0
    %v6709 = vadd.f32 %v6695, %v6708
    %v6710 = vpop.f32.mrf.mxu0
    %v6711 = vadd.f32 %v6697, %v6710
    %6712 = vdwg.mxu0
    %6713 = vmatpush.bf16.msra.mxu0 %v6115
    %6714 = vmatpush.bf16.msra.mxu0 %v6109
    %6715 = vmatpush.bf16.msra.mxu0 %v6103
    %6716 = vmatpush.bf16.msra.mxu0 %v6097
    %6717 = vmatpush.bf16.msra.mxu0 %v6091
    %6718 = vmatpush.bf16.msra.mxu0 %v6085
    %6719 = vmatpush.bf16.msra.mxu0 %v6079
    %6720 = vmatpush.bf16.msra.mxu0 %v6073
    %6721 = vmatmul.bf16.gmra.mxu0 %v254
    %v6722 = vpop.f32.mrf.mxu0
    %v6723 = vadd.f32 %v6709, %v6722
    %v6724 = vpop.f32.mrf.mxu0
    %v6725 = vadd.f32 %v6711, %v6724
    %6726 = vdwg.mxu0
    %6727 = vmatpush.bf16.msra.mxu0 %v6163
    %6728 = vmatpush.bf16.msra.mxu0 %v6157
    %6729 = vmatpush.bf16.msra.mxu0 %v6151
    %6730 = vmatpush.bf16.msra.mxu0 %v6145
    %6731 = vmatpush.bf16.msra.mxu0 %v6139
    %6732 = vmatpush.bf16.msra.mxu0 %v6133
    %6733 = vmatpush.bf16.msra.mxu0 %v6127
    %6734 = vmatpush.bf16.msra.mxu0 %v6121
    %6735 = vmatmul.bf16.gmra.mxu0 %v255
    %v6736 = vpop.f32.mrf.mxu0
    %v6737 = vadd.f32 %v6723, %v6736
    %v6738 = vpop.f32.mrf.mxu0
    %v6739 = vadd.f32 %v6725, %v6738
    %6740 = vdwg.mxu0
    %6741 = vmatpush.bf16.msra.mxu0 %v6211
    %6742 = vmatpush.bf16.msra.mxu0 %v6205
    %6743 = vmatpush.bf16.msra.mxu0 %v6199
    %6744 = vmatpush.bf16.msra.mxu0 %v6193
    %6745 = vmatpush.bf16.msra.mxu0 %v6187
    %6746 = vmatpush.bf16.msra.mxu0 %v6181
    %6747 = vmatpush.bf16.msra.mxu0 %v6175
    %6748 = vmatpush.bf16.msra.mxu0 %v6169
    %6749 = vmatmul.bf16.gmra.mxu0 %v256
    %v6750 = vpop.f32.mrf.mxu0
    %v6751 = vadd.f32 %v6737, %v6750
    %v6752 = vpop.f32.mrf.mxu0
    %v6753 = vadd.f32 %v6739, %v6752
    %6754 = vdwg.mxu0
    %6755 = vmatpush.bf16.msra.mxu0 %v5972
    %6756 = vmatpush.bf16.msra.mxu0 %v5966
    %6757 = vmatpush.bf16.msra.mxu0 %v5960
    %6758 = vmatpush.bf16.msra.mxu0 %v5954
    %6759 = vmatpush.bf16.msra.mxu0 %v5948
    %6760 = vmatpush.bf16.msra.mxu0 %v5942
    %6761 = vmatpush.bf16.msra.mxu0 %v5936
    %6762 = vmatpush.bf16.msra.mxu0 %v5930
    %6763 = vmatmul.bf16.gmra.mxu0 %v251
    %v6764 = vpop.f32.mrf.mxu0
    %v6765 = vadd.f32 %v5054, %v6764
    %v6766 = vpop.f32.mrf.mxu0
    %v6767 = vadd.f32 %v5054, %v6766
    %6768 = vdwg.mxu0
    %6769 = vmatpush.bf16.msra.mxu0 %v6020
    %6770 = vmatpush.bf16.msra.mxu0 %v6014
    %6771 = vmatpush.bf16.msra.mxu0 %v6008
    %6772 = vmatpush.bf16.msra.mxu0 %v6002
    %6773 = vmatpush.bf16.msra.mxu0 %v5996
    %6774 = vmatpush.bf16.msra.mxu0 %v5990
    %6775 = vmatpush.bf16.msra.mxu0 %v5984
    %6776 = vmatpush.bf16.msra.mxu0 %v5978
    %6777 = vmatmul.bf16.gmra.mxu0 %v252
    %v6778 = vpop.f32.mrf.mxu0
    %v6779 = vadd.f32 %v6765, %v6778
    %v6780 = vpop.f32.mrf.mxu0
    %v6781 = vadd.f32 %v6767, %v6780
    %6782 = vdwg.mxu0
    %6783 = vmatpush.bf16.msra.mxu0 %v6068
    %6784 = vmatpush.bf16.msra.mxu0 %v6062
    %6785 = vmatpush.bf16.msra.mxu0 %v6056
    %6786 = vmatpush.bf16.msra.mxu0 %v6050
    %6787 = vmatpush.bf16.msra.mxu0 %v6044
    %6788 = vmatpush.bf16.msra.mxu0 %v6038
    %6789 = vmatpush.bf16.msra.mxu0 %v6032
    %6790 = vmatpush.bf16.msra.mxu0 %v6026
    %6791 = vmatmul.bf16.gmra.mxu0 %v253
    %v6792 = vpop.f32.mrf.mxu0
    %v6793 = vadd.f32 %v6779, %v6792
    %v6794 = vpop.f32.mrf.mxu0
    %v6795 = vadd.f32 %v6781, %v6794
    %6796 = vdwg.mxu0
    %6797 = vmatpush.bf16.msra.mxu0 %v6116
    %6798 = vmatpush.bf16.msra.mxu0 %v6110
    %6799 = vmatpush.bf16.msra.mxu0 %v6104
    %6800 = vmatpush.bf16.msra.mxu0 %v6098
    %6801 = vmatpush.bf16.msra.mxu0 %v6092
    %6802 = vmatpush.bf16.msra.mxu0 %v6086
    %6803 = vmatpush.bf16.msra.mxu0 %v6080
    %6804 = vmatpush.bf16.msra.mxu0 %v6074
    %6805 = vmatmul.bf16.gmra.mxu0 %v254
    %v6806 = vpop.f32.mrf.mxu0
    %v6807 = vadd.f32 %v6793, %v6806
    %v6808 = vpop.f32.mrf.mxu0
    %v6809 = vadd.f32 %v6795, %v6808
    %6810 = vdwg.mxu0
    %6811 = vmatpush.bf16.msra.mxu0 %v6164
    %6812 = vmatpush.bf16.msra.mxu0 %v6158
    %6813 = vmatpush.bf16.msra.mxu0 %v6152
    %6814 = vmatpush.bf16.msra.mxu0 %v6146
    %6815 = vmatpush.bf16.msra.mxu0 %v6140
    %6816 = vmatpush.bf16.msra.mxu0 %v6134
    %6817 = vmatpush.bf16.msra.mxu0 %v6128
    %6818 = vmatpush.bf16.msra.mxu0 %v6122
    %6819 = vmatmul.bf16.gmra.mxu0 %v255
    %v6820 = vpop.f32.mrf.mxu0
    %v6821 = vadd.f32 %v6807, %v6820
    %v6822 = vpop.f32.mrf.mxu0
    %v6823 = vadd.f32 %v6809, %v6822
    %6824 = vdwg.mxu0
    %6825 = vmatpush.bf16.msra.mxu0 %v6212
    %6826 = vmatpush.bf16.msra.mxu0 %v6206
    %6827 = vmatpush.bf16.msra.mxu0 %v6200
    %6828 = vmatpush.bf16.msra.mxu0 %v6194
    %6829 = vmatpush.bf16.msra.mxu0 %v6188
    %6830 = vmatpush.bf16.msra.mxu0 %v6182
    %6831 = vmatpush.bf16.msra.mxu0 %v6176
    %6832 = vmatpush.bf16.msra.mxu0 %v6170
    %6833 = vmatmul.bf16.gmra.mxu0 %v256
    %v6834 = vpop.f32.mrf.mxu0
    %v6835 = vadd.f32 %v6821, %v6834
    %v6836 = vpop.f32.mrf.mxu0
    %v6837 = vadd.f32 %v6823, %v6836
    %6838 = vdwg.mxu0
    %6839 = vmatpush.bf16.msra.mxu0 %v5973
    %6840 = vmatpush.bf16.msra.mxu0 %v5967
    %6841 = vmatpush.bf16.msra.mxu0 %v5961
    %6842 = vmatpush.bf16.msra.mxu0 %v5955
    %6843 = vmatpush.bf16.msra.mxu0 %v5949
    %6844 = vmatpush.bf16.msra.mxu0 %v5943
    %6845 = vmatpush.bf16.msra.mxu0 %v5937
    %6846 = vmatpush.bf16.msra.mxu0 %v5931
    %6847 = vmatmul.bf16.gmra.mxu0 %v251
    %v6848 = vpop.f32.mrf.mxu0
    %v6849 = vadd.f32 %v5055, %v6848
    %v6850 = vpop.f32.mrf.mxu0
    %v6851 = vadd.f32 %v5055, %v6850
    %6852 = vdwg.mxu0
    %6853 = vmatpush.bf16.msra.mxu0 %v6021
    %6854 = vmatpush.bf16.msra.mxu0 %v6015
    %6855 = vmatpush.bf16.msra.mxu0 %v6009
    %6856 = vmatpush.bf16.msra.mxu0 %v6003
    %6857 = vmatpush.bf16.msra.mxu0 %v5997
    %6858 = vmatpush.bf16.msra.mxu0 %v5991
    %6859 = vmatpush.bf16.msra.mxu0 %v5985
    %6860 = vmatpush.bf16.msra.mxu0 %v5979
    %6861 = vmatmul.bf16.gmra.mxu0 %v252
    %v6862 = vpop.f32.mrf.mxu0
    %v6863 = vadd.f32 %v6849, %v6862
    %v6864 = vpop.f32.mrf.mxu0
    %v6865 = vadd.f32 %v6851, %v6864
    %6866 = vdwg.mxu0
    %6867 = vmatpush.bf16.msra.mxu0 %v6069
    %6868 = vmatpush.bf16.msra.mxu0 %v6063
    %6869 = vmatpush.bf16.msra.mxu0 %v6057
    %6870 = vmatpush.bf16.msra.mxu0 %v6051
    %6871 = vmatpush.bf16.msra.mxu0 %v6045
    %6872 = vmatpush.bf16.msra.mxu0 %v6039
    %6873 = vmatpush.bf16.msra.mxu0 %v6033
    %6874 = vmatpush.bf16.msra.mxu0 %v6027
    %6875 = vmatmul.bf16.gmra.mxu0 %v253
    %v6876 = vpop.f32.mrf.mxu0
    %v6877 = vadd.f32 %v6863, %v6876
    %v6878 = vpop.f32.mrf.mxu0
    %v6879 = vadd.f32 %v6865, %v6878
    %6880 = vdwg.mxu0
    %6881 = vmatpush.bf16.msra.mxu0 %v6117
    %6882 = vmatpush.bf16.msra.mxu0 %v6111
    %6883 = vmatpush.bf16.msra.mxu0 %v6105
    %6884 = vmatpush.bf16.msra.mxu0 %v6099
    %6885 = vmatpush.bf16.msra.mxu0 %v6093
    %6886 = vmatpush.bf16.msra.mxu0 %v6087
    %6887 = vmatpush.bf16.msra.mxu0 %v6081
    %6888 = vmatpush.bf16.msra.mxu0 %v6075
    %6889 = vmatmul.bf16.gmra.mxu0 %v254
    %v6890 = vpop.f32.mrf.mxu0
    %v6891 = vadd.f32 %v6877, %v6890
    %v6892 = vpop.f32.mrf.mxu0
    %v6893 = vadd.f32 %v6879, %v6892
    %6894 = vdwg.mxu0
    %6895 = vmatpush.bf16.msra.mxu0 %v6165
    %6896 = vmatpush.bf16.msra.mxu0 %v6159
    %6897 = vmatpush.bf16.msra.mxu0 %v6153
    %6898 = vmatpush.bf16.msra.mxu0 %v6147
    %6899 = vmatpush.bf16.msra.mxu0 %v6141
    %6900 = vmatpush.bf16.msra.mxu0 %v6135
    %6901 = vmatpush.bf16.msra.mxu0 %v6129
    %6902 = vmatpush.bf16.msra.mxu0 %v6123
    %6903 = vmatmul.bf16.gmra.mxu0 %v255
    %v6904 = vpop.f32.mrf.mxu0
    %v6905 = vadd.f32 %v6891, %v6904
    %v6906 = vpop.f32.mrf.mxu0
    %v6907 = vadd.f32 %v6893, %v6906
    %6908 = vdwg.mxu0
    %6909 = vmatpush.bf16.msra.mxu0 %v6213
    %6910 = vmatpush.bf16.msra.mxu0 %v6207
    %6911 = vmatpush.bf16.msra.mxu0 %v6201
    %6912 = vmatpush.bf16.msra.mxu0 %v6195
    %6913 = vmatpush.bf16.msra.mxu0 %v6189
    %6914 = vmatpush.bf16.msra.mxu0 %v6183
    %6915 = vmatpush.bf16.msra.mxu0 %v6177
    %6916 = vmatpush.bf16.msra.mxu0 %v6171
    %6917 = vmatmul.bf16.gmra.mxu0 %v256
    %v6918 = vpop.f32.mrf.mxu0
    %v6919 = vadd.f32 %v6905, %v6918
    %v6920 = vpop.f32.mrf.mxu0
    %v6921 = vadd.f32 %v6907, %v6920
    %6922 = vdwg.mxu0
    %6923 = vmatpush.bf16.msra.mxu0 %v5974
    %6924 = vmatpush.bf16.msra.mxu0 %v5968
    %6925 = vmatpush.bf16.msra.mxu0 %v5962
    %6926 = vmatpush.bf16.msra.mxu0 %v5956
    %6927 = vmatpush.bf16.msra.mxu0 %v5950
    %6928 = vmatpush.bf16.msra.mxu0 %v5944
    %6929 = vmatpush.bf16.msra.mxu0 %v5938
    %6930 = vmatpush.bf16.msra.mxu0 %v5932
    %6931 = vmatmul.bf16.gmra.mxu0 %v251
    %v6932 = vpop.f32.mrf.mxu0
    %v6933 = vadd.f32 %v5056, %v6932
    %v6934 = vpop.f32.mrf.mxu0
    %v6935 = vadd.f32 %v5056, %v6934
    %6936 = vdwg.mxu0
    %6937 = vmatpush.bf16.msra.mxu0 %v6022
    %6938 = vmatpush.bf16.msra.mxu0 %v6016
    %6939 = vmatpush.bf16.msra.mxu0 %v6010
    %6940 = vmatpush.bf16.msra.mxu0 %v6004
    %6941 = vmatpush.bf16.msra.mxu0 %v5998
    %6942 = vmatpush.bf16.msra.mxu0 %v5992
    %6943 = vmatpush.bf16.msra.mxu0 %v5986
    %6944 = vmatpush.bf16.msra.mxu0 %v5980
    %6945 = vmatmul.bf16.gmra.mxu0 %v252
    %v6946 = vpop.f32.mrf.mxu0
    %v6947 = vadd.f32 %v6933, %v6946
    %v6948 = vpop.f32.mrf.mxu0
    %v6949 = vadd.f32 %v6935, %v6948
    %6950 = vdwg.mxu0
    %6951 = vmatpush.bf16.msra.mxu0 %v6070
    %6952 = vmatpush.bf16.msra.mxu0 %v6064
    %6953 = vmatpush.bf16.msra.mxu0 %v6058
    %6954 = vmatpush.bf16.msra.mxu0 %v6052
    %6955 = vmatpush.bf16.msra.mxu0 %v6046
    %6956 = vmatpush.bf16.msra.mxu0 %v6040
    %6957 = vmatpush.bf16.msra.mxu0 %v6034
    %6958 = vmatpush.bf16.msra.mxu0 %v6028
    %6959 = vmatmul.bf16.gmra.mxu0 %v253
    %v6960 = vpop.f32.mrf.mxu0
    %v6961 = vadd.f32 %v6947, %v6960
    %v6962 = vpop.f32.mrf.mxu0
    %v6963 = vadd.f32 %v6949, %v6962
    %6964 = vdwg.mxu0
    %6965 = vmatpush.bf16.msra.mxu0 %v6118
    %6966 = vmatpush.bf16.msra.mxu0 %v6112
    %6967 = vmatpush.bf16.msra.mxu0 %v6106
    %6968 = vmatpush.bf16.msra.mxu0 %v6100
    %6969 = vmatpush.bf16.msra.mxu0 %v6094
    %6970 = vmatpush.bf16.msra.mxu0 %v6088
    %6971 = vmatpush.bf16.msra.mxu0 %v6082
    %6972 = vmatpush.bf16.msra.mxu0 %v6076
    %6973 = vmatmul.bf16.gmra.mxu0 %v254
    %v6974 = vpop.f32.mrf.mxu0
    %v6975 = vadd.f32 %v6961, %v6974
    %v6976 = vpop.f32.mrf.mxu0
    %v6977 = vadd.f32 %v6963, %v6976
    %6978 = vdwg.mxu0
    %6979 = vmatpush.bf16.msra.mxu0 %v6166
    %6980 = vmatpush.bf16.msra.mxu0 %v6160
    %6981 = vmatpush.bf16.msra.mxu0 %v6154
    %6982 = vmatpush.bf16.msra.mxu0 %v6148
    %6983 = vmatpush.bf16.msra.mxu0 %v6142
    %6984 = vmatpush.bf16.msra.mxu0 %v6136
    %6985 = vmatpush.bf16.msra.mxu0 %v6130
    %6986 = vmatpush.bf16.msra.mxu0 %v6124
    %6987 = vmatmul.bf16.gmra.mxu0 %v255
    %v6988 = vpop.f32.mrf.mxu0
    %v6989 = vadd.f32 %v6975, %v6988
    %v6990 = vpop.f32.mrf.mxu0
    %v6991 = vadd.f32 %v6977, %v6990
    %6992 = vdwg.mxu0
    %6993 = vmatpush.bf16.msra.mxu0 %v6214
    %6994 = vmatpush.bf16.msra.mxu0 %v6208
    %6995 = vmatpush.bf16.msra.mxu0 %v6202
    %6996 = vmatpush.bf16.msra.mxu0 %v6196
    %6997 = vmatpush.bf16.msra.mxu0 %v6190
    %6998 = vmatpush.bf16.msra.mxu0 %v6184
    %6999 = vmatpush.bf16.msra.mxu0 %v6178
    %7000 = vmatpush.bf16.msra.mxu0 %v6172
    %7001 = vmatmul.bf16.gmra.mxu0 %v256
    %v7002 = vpop.f32.mrf.mxu0
    %v7003 = vadd.f32 %v6989, %v7002
    %v7004 = vpop.f32.mrf.mxu0
    %v7005 = vadd.f32 %v6991, %v7004
    %7006 = vdwg.mxu0
    %v7007 = vpack.c.bf16 %v6667, %v6583
    %v7008 = vpack.c.bf16 %v6835, %v6751
    %v7009 = vpack.c.bf16 %v7003, %v6919
    %v7010 = vpack.c.bf16 %v6669, %v6585
    %v7011 = vpack.c.bf16 %v6837, %v6753
    %v7012 = vpack.c.bf16 %v7005, %v6921
    %vm7013 = vcmask 523264
    %v7015 = vsel %vm7013, %v2503, 0
    %v7018 = vsel %vm7013, %v4755, 0
    %7020 = vmatpush.bf16.xpose.msra.mxu0 0
    %7021 = vmatpush.bf16.xpose.msra.mxu0 0
    %7022 = vmatpush.bf16.xpose.msra.mxu0 0
    %7023 = vmatpush.bf16.xpose.msra.mxu0 0
    %7024 = vmatpush.bf16.xpose.msra.mxu0 0
    %7025 = vmatpush.bf16.xpose.msra.mxu0 0
    %7026 = vmatpush.bf16.xpose.msra.mxu0 0
    %7027 = vmatpush.bf16.xpose.msra.mxu0 %v7018
    %7028 = vmatmul.bf16.gmra.mxu0 %v7015
    %v7029 = vpop.f32.mrf.mxu0
    %v7030 = vadd.f32 0.0, %v7029
    %v7031 = vpop.f32.mrf.mxu0
    %7032 = vdwg.mxu0
    %vm7033 = vcmask 64512
    %v7034 = vsel %vm7033, %v7030, -inf
    %7035 = vmax.xlane.f32.xlu0 %v7034
    %v7036 = vpop.xlane.xlu0 %7035
    %v7037 = vsub.f32 %v7030, %v7036
    %v7038 = vmul.f32 %v7037, 1.442695
    %v7039 = vpow.pop %v7038
    %v7040 = vsel %vm7033, %v7039, 0.0
    %7041 = vadd.xlane.f32.xlu0 %v7040
    %v7042 = vpop.xlane.xlu0 %7041
    %v7043 = vrcp.pop %v7042
    %v7044 = vmul.f32 %v7039, %v7043
    %v7045 = vpack.c.bf16 %v7044, %v7044
    %v7047 = vsel %vm7033, %v7045, 0
    %vm7049 = vcmask 1043456
    %v7051 = vsel %vm7049, %v7007, 0
    %7053 = vmatpush.bf16.msra.mxu0 0
    %7054 = vmatpush.bf16.msra.mxu0 0
    %7055 = vmatpush.bf16.msra.mxu0 0
    %7056 = vmatpush.bf16.msra.mxu0 0
    %7057 = vmatpush.bf16.msra.mxu0 0
    %7058 = vmatpush.bf16.msra.mxu0 0
    %7059 = vmatpush.bf16.msra.mxu0 0
    %7060 = vmatpush.bf16.msra.mxu0 %v7051
    %7061 = vmatmul.bf16.gmra.mxu0 %v7047
    %v7062 = vpop.f32.mrf.mxu0
    %v7063 = vadd.f32 0.0, %v7062
    %v7064 = vpop.f32.mrf.mxu0
    %7065 = vdwg.mxu0
    %v7067 = vunpack.c.l.b16 %v2503
    %v7068 = vpack.c.b16 %v7067, %v7067
    %7069 = vrot.lane.b32.xlu0 %v7068, 64
    %v7070 = vpop.permute.xlu0 %7069
    %v7072 = vunpack.c.l.b16 %v4755
    %v7073 = vpack.c.b16 %v7072, %v7072
    %7074 = vrot.lane.b32.xlu0 %v7073, 64
    %v7075 = vpop.permute.xlu0 %7074
    %v7077 = vsel %vm7013, %v7070, 0
    %v7080 = vsel %vm7013, %v7075, 0
    %7082 = vmatpush.bf16.xpose.msra.mxu0 0
    %7083 = vmatpush.bf16.xpose.msra.mxu0 0
    %7084 = vmatpush.bf16.xpose.msra.mxu0 0
    %7085 = vmatpush.bf16.xpose.msra.mxu0 0
    %7086 = vmatpush.bf16.xpose.msra.mxu0 0
    %7087 = vmatpush.bf16.xpose.msra.mxu0 0
    %7088 = vmatpush.bf16.xpose.msra.mxu0 0
    %7089 = vmatpush.bf16.xpose.msra.mxu0 %v7080
    %7090 = vmatmul.bf16.gmra.mxu0 %v7077
    %v7091 = vpop.f32.mrf.mxu0
    %v7092 = vadd.f32 0.0, %v7091
    %v7093 = vpop.f32.mrf.mxu0
    %7094 = vdwg.mxu0
    %v7095 = vsel %vm7033, %v7092, -inf
    %7096 = vmax.xlane.f32.xlu0 %v7095
    %v7097 = vpop.xlane.xlu0 %7096
    %v7098 = vsub.f32 %v7092, %v7097
    %v7099 = vmul.f32 %v7098, 1.442695
    %v7100 = vpow.pop %v7099
    %v7101 = vsel %vm7033, %v7100, 0.0
    %7102 = vadd.xlane.f32.xlu0 %v7101
    %v7103 = vpop.xlane.xlu0 %7102
    %v7104 = vrcp.pop %v7103
    %v7105 = vmul.f32 %v7100, %v7104
    %v7106 = vpack.c.bf16 %v7105, %v7105
    %v7108 = vunpack.c.l.b16 %v7007
    %v7109 = vpack.c.b16 %v7108, %v7108
    %7110 = vrot.lane.b32.xlu0 %v7109, 64
    %v7111 = vpop.permute.xlu0 %7110
    %v7113 = vsel %vm7033, %v7106, 0
    %v7116 = vsel %vm7049, %v7111, 0
    %7118 = vmatpush.bf16.msra.mxu0 0
    %7119 = vmatpush.bf16.msra.mxu0 0
    %7120 = vmatpush.bf16.msra.mxu0 0
    %7121 = vmatpush.bf16.msra.mxu0 0
    %7122 = vmatpush.bf16.msra.mxu0 0
    %7123 = vmatpush.bf16.msra.mxu0 0
    %7124 = vmatpush.bf16.msra.mxu0 0
    %7125 = vmatpush.bf16.msra.mxu0 %v7116
    %7126 = vmatmul.bf16.gmra.mxu0 %v7113
    %v7127 = vpop.f32.mrf.mxu0
    %v7128 = vadd.f32 0.0, %v7127
    %v7129 = vpop.f32.mrf.mxu0
    %7130 = vdwg.mxu0
    %7132 = vrot.lane.b32.xlu0 %v7128, 64
    %v7133 = vpop.permute.xlu0 %7132
    %v7135 = vsel %vm7013, %v7063, %v7133
    %v7136 = vpack.c.bf16 %v7135, %v7135
    %7137 = vst [vmem:[#allocation2] sm:$0xf] %v7136
    %v7138 = vunpack.c.h.b16 %v2503
    %v7139 = vpack.c.b16 %v7138, %v7138
    %v7140 = vunpack.c.h.b16 %v4755
    %v7141 = vpack.c.b16 %v7140, %v7140
    %v7143 = vsel %vm7013, %v7139, 0
    %v7146 = vsel %vm7013, %v7141, 0
    %7148 = vmatpush.bf16.xpose.msra.mxu0 0
    %7149 = vmatpush.bf16.xpose.msra.mxu0 0
    %7150 = vmatpush.bf16.xpose.msra.mxu0 0
    %7151 = vmatpush.bf16.xpose.msra.mxu0 0
    %7152 = vmatpush.bf16.xpose.msra.mxu0 0
    %7153 = vmatpush.bf16.xpose.msra.mxu0 0
    %7154 = vmatpush.bf16.xpose.msra.mxu0 0
    %7155 = vmatpush.bf16.xpose.msra.mxu0 %v7146
    %7156 = vmatmul.bf16.gmra.mxu0 %v7143
    %v7157 = vpop.f32.mrf.mxu0
    %v7158 = vadd.f32 0.0, %v7157
    %v7159 = vpop.f32.mrf.mxu0
    %7160 = vdwg.mxu0
    %v7161 = vsel %vm7033, %v7158, -inf
    %7162 = vmax.xlane.f32.xlu0 %v7161
    %v7163 = vpop.xlane.xlu0 %7162
    %v7164 = vsub.f32 %v7158, %v7163
    %v7165 = vmul.f32 %v7164, 1.442695
    %v7166 = vpow.pop %v7165
    %v7167 = vsel %vm7033, %v7166, 0.0
    %7168 = vadd.xlane.f32.xlu0 %v7167
    %v7169 = vpop.xlane.xlu0 %7168
    %v7170 = vrcp.pop %v7169
    %v7171 = vmul.f32 %v7166, %v7170
    %v7172 = vpack.c.bf16 %v7171, %v7171
    %v7173 = vunpack.c.h.b16 %v7007
    %v7174 = vpack.c.b16 %v7173, %v7173
    %v7176 = vsel %vm7033, %v7172, 0
    %v7179 = vsel %vm7049, %v7174, 0
    %7181 = vmatpush.bf16.msra.mxu0 0
    %7182 = vmatpush.bf16.msra.mxu0 0
    %7183 = vmatpush.bf16.msra.mxu0 0
    %7184 = vmatpush.bf16.msra.mxu0 0
    %7185 = vmatpush.bf16.msra.mxu0 0
    %7186 = vmatpush.bf16.msra.mxu0 0
    %7187 = vmatpush.bf16.msra.mxu0 0
    %7188 = vmatpush.bf16.msra.mxu0 %v7179
    %7189 = vmatmul.bf16.gmra.mxu0 %v7176
    %v7190 = vpop.f32.mrf.mxu0
    %v7191 = vadd.f32 0.0, %v7190
    %v7192 = vpop.f32.mrf.mxu0
    %7193 = vdwg.mxu0
    %7194 = vrot.lane.b32.xlu0 %v7139, 64
    %v7195 = vpop.permute.xlu0 %7194
    %7196 = vrot.lane.b32.xlu0 %v7141, 64
    %v7197 = vpop.permute.xlu0 %7196
    %v7199 = vsel %vm7013, %v7195, 0
    %v7202 = vsel %vm7013, %v7197, 0
    %7204 = vmatpush.bf16.xpose.msra.mxu0 0
    %7205 = vmatpush.bf16.xpose.msra.mxu0 0
    %7206 = vmatpush.bf16.xpose.msra.mxu0 0
    %7207 = vmatpush.bf16.xpose.msra.mxu0 0
    %7208 = vmatpush.bf16.xpose.msra.mxu0 0
    %7209 = vmatpush.bf16.xpose.msra.mxu0 0
    %7210 = vmatpush.bf16.xpose.msra.mxu0 0
    %7211 = vmatpush.bf16.xpose.msra.mxu0 %v7202
    %7212 = vmatmul.bf16.gmra.mxu0 %v7199
    %v7213 = vpop.f32.mrf.mxu0
    %v7214 = vadd.f32 0.0, %v7213
    %v7215 = vpop.f32.mrf.mxu0
    %7216 = vdwg.mxu0
    %v7217 = vsel %vm7033, %v7214, -inf
    %7218 = vmax.xlane.f32.xlu0 %v7217
    %v7219 = vpop.xlane.xlu0 %7218
    %v7220 = vsub.f32 %v7214, %v7219
    %v7221 = vmul.f32 %v7220, 1.442695
    %v7222 = vpow.pop %v7221
    %v7223 = vsel %vm7033, %v7222, 0.0
    %7224 = vadd.xlane.f32.xlu0 %v7223
    %v7225 = vpop.xlane.xlu0 %7224
    %v7226 = vrcp.pop %v7225
    %v7227 = vmul.f32 %v7222, %v7226
    %v7228 = vpack.c.bf16 %v7227, %v7227
    %7229 = vrot.lane.b32.xlu0 %v7174, 64
    %v7230 = vpop.permute.xlu0 %7229
    %v7232 = vsel %vm7033, %v7228, 0
    %v7235 = vsel %vm7049, %v7230, 0
    %7237 = vmatpush.bf16.msra.mxu0 0
    %7238 = vmatpush.bf16.msra.mxu0 0
    %7239 = vmatpush.bf16.msra.mxu0 0
    %7240 = vmatpush.bf16.msra.mxu0 0
    %7241 = vmatpush.bf16.msra.mxu0 0
    %7242 = vmatpush.bf16.msra.mxu0 0
    %7243 = vmatpush.bf16.msra.mxu0 0
    %7244 = vmatpush.bf16.msra.mxu0 %v7235
    %7245 = vmatmul.bf16.gmra.mxu0 %v7232
    %v7246 = vpop.f32.mrf.mxu0
    %v7247 = vadd.f32 0.0, %v7246
    %v7248 = vpop.f32.mrf.mxu0
    %7249 = vdwg.mxu0
    %7251 = vrot.lane.b32.xlu0 %v7247, 64
    %v7252 = vpop.permute.xlu0 %7251
    %v7254 = vsel %vm7013, %v7191, %v7252
    %v7255 = vpack.c.bf16 %v7254, %v7254
    %7256 = vst [vmem:[#allocation2 + $0x4] sm:$0xf] %v7255
    %v7258 = vsel %vm7013, %v2504, 0
    %v7261 = vsel %vm7013, %v4756, 0
    %7263 = vmatpush.bf16.xpose.msra.mxu0 0
    %7264 = vmatpush.bf16.xpose.msra.mxu0 0
    %7265 = vmatpush.bf16.xpose.msra.mxu0 0
    %7266 = vmatpush.bf16.xpose.msra.mxu0 0
    %7267 = vmatpush.bf16.xpose.msra.mxu0 0
    %7268 = vmatpush.bf16.xpose.msra.mxu0 0
    %7269 = vmatpush.bf16.xpose.msra.mxu0 0
    %7270 = vmatpush.bf16.xpose.msra.mxu0 %v7261
    %7271 = vmatmul.bf16.gmra.mxu0 %v7258
    %v7272 = vpop.f32.mrf.mxu0
    %v7273 = vadd.f32 0.0, %v7272
    %v7274 = vpop.f32.mrf.mxu0
    %7275 = vdwg.mxu0
    %v7276 = vsel %vm7033, %v7273, -inf
    %7277 = vmax.xlane.f32.xlu0 %v7276
    %v7278 = vpop.xlane.xlu0 %7277
    %v7279 = vsub.f32 %v7273, %v7278
    %v7280 = vmul.f32 %v7279, 1.442695
    %v7281 = vpow.pop %v7280
    %v7282 = vsel %vm7033, %v7281, 0.0
    %7283 = vadd.xlane.f32.xlu0 %v7282
    %v7284 = vpop.xlane.xlu0 %7283
    %v7285 = vrcp.pop %v7284
    %v7286 = vmul.f32 %v7281, %v7285
    %v7287 = vpack.c.bf16 %v7286, %v7286
    %v7289 = vsel %vm7033, %v7287, 0
    %v7292 = vsel %vm7049, %v7008, 0
    %7294 = vmatpush.bf16.msra.mxu0 0
    %7295 = vmatpush.bf16.msra.mxu0 0
    %7296 = vmatpush.bf16.msra.mxu0 0
    %7297 = vmatpush.bf16.msra.mxu0 0
    %7298 = vmatpush.bf16.msra.mxu0 0
    %7299 = vmatpush.bf16.msra.mxu0 0
    %7300 = vmatpush.bf16.msra.mxu0 0
    %7301 = vmatpush.bf16.msra.mxu0 %v7292
    %7302 = vmatmul.bf16.gmra.mxu0 %v7289
    %v7303 = vpop.f32.mrf.mxu0
    %v7304 = vadd.f32 0.0, %v7303
    %v7305 = vpop.f32.mrf.mxu0
    %7306 = vdwg.mxu0
    %v7308 = vunpack.c.l.b16 %v2504
    %v7309 = vpack.c.b16 %v7308, %v7308
    %7310 = vrot.lane.b32.xlu0 %v7309, 64
    %v7311 = vpop.permute.xlu0 %7310
    %v7313 = vunpack.c.l.b16 %v4756
    %v7314 = vpack.c.b16 %v7313, %v7313
    %7315 = vrot.lane.b32.xlu0 %v7314, 64
    %v7316 = vpop.permute.xlu0 %7315
    %v7318 = vsel %vm7013, %v7311, 0
    %v7321 = vsel %vm7013, %v7316, 0
    %7323 = vmatpush.bf16.xpose.msra.mxu0 0
    %7324 = vmatpush.bf16.xpose.msra.mxu0 0
    %7325 = vmatpush.bf16.xpose.msra.mxu0 0
    %7326 = vmatpush.bf16.xpose.msra.mxu0 0
    %7327 = vmatpush.bf16.xpose.msra.mxu0 0
    %7328 = vmatpush.bf16.xpose.msra.mxu0 0
    %7329 = vmatpush.bf16.xpose.msra.mxu0 0
    %7330 = vmatpush.bf16.xpose.msra.mxu0 %v7321
    %7331 = vmatmul.bf16.gmra.mxu0 %v7318
    %v7332 = vpop.f32.mrf.mxu0
    %v7333 = vadd.f32 0.0, %v7332
    %v7334 = vpop.f32.mrf.mxu0
    %7335 = vdwg.mxu0
    %v7336 = vsel %vm7033, %v7333, -inf
    %7337 = vmax.xlane.f32.xlu0 %v7336
    %v7338 = vpop.xlane.xlu0 %7337
    %v7339 = vsub.f32 %v7333, %v7338
    %v7340 = vmul.f32 %v7339, 1.442695
    %v7341 = vpow.pop %v7340
    %v7342 = vsel %vm7033, %v7341, 0.0
    %7343 = vadd.xlane.f32.xlu0 %v7342
    %v7344 = vpop.xlane.xlu0 %7343
    %v7345 = vrcp.pop %v7344
    %v7346 = vmul.f32 %v7341, %v7345
    %v7347 = vpack.c.bf16 %v7346, %v7346
    %v7349 = vunpack.c.l.b16 %v7008
    %v7350 = vpack.c.b16 %v7349, %v7349
    %7351 = vrot.lane.b32.xlu0 %v7350, 64
    %v7352 = vpop.permute.xlu0 %7351
    %v7354 = vsel %vm7033, %v7347, 0
    %v7357 = vsel %vm7049, %v7352, 0
    %7359 = vmatpush.bf16.msra.mxu0 0
    %7360 = vmatpush.bf16.msra.mxu0 0
    %7361 = vmatpush.bf16.msra.mxu0 0
    %7362 = vmatpush.bf16.msra.mxu0 0
    %7363 = vmatpush.bf16.msra.mxu0 0
    %7364 = vmatpush.bf16.msra.mxu0 0
    %7365 = vmatpush.bf16.msra.mxu0 0
    %7366 = vmatpush.bf16.msra.mxu0 %v7357
    %7367 = vmatmul.bf16.gmra.mxu0 %v7354
    %v7368 = vpop.f32.mrf.mxu0
    %v7369 = vadd.f32 0.0, %v7368
    %v7370 = vpop.f32.mrf.mxu0
    %7371 = vdwg.mxu0
    %7373 = vrot.lane.b32.xlu0 %v7369, 64
    %v7374 = vpop.permute.xlu0 %7373
    %v7376 = vsel %vm7013, %v7304, %v7374
    %v7377 = vpack.c.bf16 %v7376, %v7376
    %7378 = vst [vmem:[#allocation2 + $0x8] sm:$0xf] %v7377
    %v7379 = vunpack.c.h.b16 %v2504
    %v7380 = vpack.c.b16 %v7379, %v7379
    %v7381 = vunpack.c.h.b16 %v4756
    %v7382 = vpack.c.b16 %v7381, %v7381
    %v7384 = vsel %vm7013, %v7380, 0
    %v7387 = vsel %vm7013, %v7382, 0
    %7389 = vmatpush.bf16.xpose.msra.mxu0 0
    %7390 = vmatpush.bf16.xpose.msra.mxu0 0
    %7391 = vmatpush.bf16.xpose.msra.mxu0 0
    %7392 = vmatpush.bf16.xpose.msra.mxu0 0
    %7393 = vmatpush.bf16.xpose.msra.mxu0 0
    %7394 = vmatpush.bf16.xpose.msra.mxu0 0
    %7395 = vmatpush.bf16.xpose.msra.mxu0 0
    %7396 = vmatpush.bf16.xpose.msra.mxu0 %v7387
    %7397 = vmatmul.bf16.gmra.mxu0 %v7384
    %v7398 = vpop.f32.mrf.mxu0
    %v7399 = vadd.f32 0.0, %v7398
    %v7400 = vpop.f32.mrf.mxu0
    %7401 = vdwg.mxu0
    %v7402 = vsel %vm7033, %v7399, -inf
    %7403 = vmax.xlane.f32.xlu0 %v7402
    %v7404 = vpop.xlane.xlu0 %7403
    %v7405 = vsub.f32 %v7399, %v7404
    %v7406 = vmul.f32 %v7405, 1.442695
    %v7407 = vpow.pop %v7406
    %v7408 = vsel %vm7033, %v7407, 0.0
    %7409 = vadd.xlane.f32.xlu0 %v7408
    %v7410 = vpop.xlane.xlu0 %7409
    %v7411 = vrcp.pop %v7410
    %v7412 = vmul.f32 %v7407, %v7411
    %v7413 = vpack.c.bf16 %v7412, %v7412
    %v7414 = vunpack.c.h.b16 %v7008
    %v7415 = vpack.c.b16 %v7414, %v7414
    %v7417 = vsel %vm7033, %v7413, 0
    %v7420 = vsel %vm7049, %v7415, 0
    %7422 = vmatpush.bf16.msra.mxu0 0
    %7423 = vmatpush.bf16.msra.mxu0 0
    %7424 = vmatpush.bf16.msra.mxu0 0
    %7425 = vmatpush.bf16.msra.mxu0 0
    %7426 = vmatpush.bf16.msra.mxu0 0
    %7427 = vmatpush.bf16.msra.mxu0 0
    %7428 = vmatpush.bf16.msra.mxu0 0
    %7429 = vmatpush.bf16.msra.mxu0 %v7420
    %7430 = vmatmul.bf16.gmra.mxu0 %v7417
    %v7431 = vpop.f32.mrf.mxu0
    %v7432 = vadd.f32 0.0, %v7431
    %v7433 = vpop.f32.mrf.mxu0
    %7434 = vdwg.mxu0
    %7435 = vrot.lane.b32.xlu0 %v7380, 64
    %v7436 = vpop.permute.xlu0 %7435
    %7437 = vrot.lane.b32.xlu0 %v7382, 64
    %v7438 = vpop.permute.xlu0 %7437
    %v7440 = vsel %vm7013, %v7436, 0
    %v7443 = vsel %vm7013, %v7438, 0
    %7445 = vmatpush.bf16.xpose.msra.mxu0 0
    %7446 = vmatpush.bf16.xpose.msra.mxu0 0
    %7447 = vmatpush.bf16.xpose.msra.mxu0 0
    %7448 = vmatpush.bf16.xpose.msra.mxu0 0
    %7449 = vmatpush.bf16.xpose.msra.mxu0 0
    %7450 = vmatpush.bf16.xpose.msra.mxu0 0
    %7451 = vmatpush.bf16.xpose.msra.mxu0 0
    %7452 = vmatpush.bf16.xpose.msra.mxu0 %v7443
    %7453 = vmatmul.bf16.gmra.mxu0 %v7440
    %v7454 = vpop.f32.mrf.mxu0
    %v7455 = vadd.f32 0.0, %v7454
    %v7456 = vpop.f32.mrf.mxu0
    %7457 = vdwg.mxu0
    %v7458 = vsel %vm7033, %v7455, -inf
    %7459 = vmax.xlane.f32.xlu0 %v7458
    %v7460 = vpop.xlane.xlu0 %7459
    %v7461 = vsub.f32 %v7455, %v7460
    %v7462 = vmul.f32 %v7461, 1.442695
    %v7463 = vpow.pop %v7462
    %v7464 = vsel %vm7033, %v7463, 0.0
    %7465 = vadd.xlane.f32.xlu0 %v7464
    %v7466 = vpop.xlane.xlu0 %7465
    %v7467 = vrcp.pop %v7466
    %v7468 = vmul.f32 %v7463, %v7467
    %v7469 = vpack.c.bf16 %v7468, %v7468
    %7470 = vrot.lane.b32.xlu0 %v7415, 64
    %v7471 = vpop.permute.xlu0 %7470
    %v7473 = vsel %vm7033, %v7469, 0
    %v7476 = vsel %vm7049, %v7471, 0
    %7478 = vmatpush.bf16.msra.mxu0 0
    %7479 = vmatpush.bf16.msra.mxu0 0
    %7480 = vmatpush.bf16.msra.mxu0 0
    %7481 = vmatpush.bf16.msra.mxu0 0
    %7482 = vmatpush.bf16.msra.mxu0 0
    %7483 = vmatpush.bf16.msra.mxu0 0
    %7484 = vmatpush.bf16.msra.mxu0 0
    %7485 = vmatpush.bf16.msra.mxu0 %v7476
    %7486 = vmatmul.bf16.gmra.mxu0 %v7473
    %v7487 = vpop.f32.mrf.mxu0
    %v7488 = vadd.f32 0.0, %v7487
    %v7489 = vpop.f32.mrf.mxu0
    %7490 = vdwg.mxu0
    %7492 = vrot.lane.b32.xlu0 %v7488, 64
    %v7493 = vpop.permute.xlu0 %7492
    %v7495 = vsel %vm7013, %v7432, %v7493
    %v7496 = vpack.c.bf16 %v7495, %v7495
    %7497 = vst [vmem:[#allocation2 + $0xc] sm:$0xf] %v7496
    %v7499 = vsel %vm7013, %v2505, 0
    %v7502 = vsel %vm7013, %v4757, 0
    %7504 = vmatpush.bf16.xpose.msra.mxu0 0
    %7505 = vmatpush.bf16.xpose.msra.mxu0 0
    %7506 = vmatpush.bf16.xpose.msra.mxu0 0
    %7507 = vmatpush.bf16.xpose.msra.mxu0 0
    %7508 = vmatpush.bf16.xpose.msra.mxu0 0
    %7509 = vmatpush.bf16.xpose.msra.mxu0 0
    %7510 = vmatpush.bf16.xpose.msra.mxu0 0
    %7511 = vmatpush.bf16.xpose.msra.mxu0 %v7502
    %7512 = vmatmul.bf16.gmra.mxu0 %v7499
    %v7513 = vpop.f32.mrf.mxu0
    %v7514 = vadd.f32 0.0, %v7513
    %v7515 = vpop.f32.mrf.mxu0
    %7516 = vdwg.mxu0
    %v7517 = vsel %vm7033, %v7514, -inf
    %7518 = vmax.xlane.f32.xlu0 %v7517
    %v7519 = vpop.xlane.xlu0 %7518
    %v7520 = vsub.f32 %v7514, %v7519
    %v7521 = vmul.f32 %v7520, 1.442695
    %v7522 = vpow.pop %v7521
    %v7523 = vsel %vm7033, %v7522, 0.0
    %7524 = vadd.xlane.f32.xlu0 %v7523
    %v7525 = vpop.xlane.xlu0 %7524
    %v7526 = vrcp.pop %v7525
    %v7527 = vmul.f32 %v7522, %v7526
    %v7528 = vpack.c.bf16 %v7527, %v7527
    %v7530 = vsel %vm7033, %v7528, 0
    %v7533 = vsel %vm7049, %v7009, 0
    %7535 = vmatpush.bf16.msra.mxu0 0
    %7536 = vmatpush.bf16.msra.mxu0 0
    %7537 = vmatpush.bf16.msra.mxu0 0
    %7538 = vmatpush.bf16.msra.mxu0 0
    %7539 = vmatpush.bf16.msra.mxu0 0
    %7540 = vmatpush.bf16.msra.mxu0 0
    %7541 = vmatpush.bf16.msra.mxu0 0
    %7542 = vmatpush.bf16.msra.mxu0 %v7533
    %7543 = vmatmul.bf16.gmra.mxu0 %v7530
    %v7544 = vpop.f32.mrf.mxu0
    %v7545 = vadd.f32 0.0, %v7544
    %v7546 = vpop.f32.mrf.mxu0
    %7547 = vdwg.mxu0
    %v7549 = vunpack.c.l.b16 %v2505
    %v7550 = vpack.c.b16 %v7549, %v7549
    %7551 = vrot.lane.b32.xlu0 %v7550, 64
    %v7552 = vpop.permute.xlu0 %7551
    %v7554 = vunpack.c.l.b16 %v4757
    %v7555 = vpack.c.b16 %v7554, %v7554
    %7556 = vrot.lane.b32.xlu0 %v7555, 64
    %v7557 = vpop.permute.xlu0 %7556
    %v7559 = vsel %vm7013, %v7552, 0
    %v7562 = vsel %vm7013, %v7557, 0
    %7564 = vmatpush.bf16.xpose.msra.mxu0 0
    %7565 = vmatpush.bf16.xpose.msra.mxu0 0
    %7566 = vmatpush.bf16.xpose.msra.mxu0 0
    %7567 = vmatpush.bf16.xpose.msra.mxu0 0
    %7568 = vmatpush.bf16.xpose.msra.mxu0 0
    %7569 = vmatpush.bf16.xpose.msra.mxu0 0
    %7570 = vmatpush.bf16.xpose.msra.mxu0 0
    %7571 = vmatpush.bf16.xpose.msra.mxu0 %v7562
    %7572 = vmatmul.bf16.gmra.mxu0 %v7559
    %v7573 = vpop.f32.mrf.mxu0
    %v7574 = vadd.f32 0.0, %v7573
    %v7575 = vpop.f32.mrf.mxu0
    %7576 = vdwg.mxu0
    %v7577 = vsel %vm7033, %v7574, -inf
    %7578 = vmax.xlane.f32.xlu0 %v7577
    %v7579 = vpop.xlane.xlu0 %7578
    %v7580 = vsub.f32 %v7574, %v7579
    %v7581 = vmul.f32 %v7580, 1.442695
    %v7582 = vpow.pop %v7581
    %v7583 = vsel %vm7033, %v7582, 0.0
    %7584 = vadd.xlane.f32.xlu0 %v7583
    %v7585 = vpop.xlane.xlu0 %7584
    %v7586 = vrcp.pop %v7585
    %v7587 = vmul.f32 %v7582, %v7586
    %v7588 = vpack.c.bf16 %v7587, %v7587
    %v7590 = vunpack.c.l.b16 %v7009
    %v7591 = vpack.c.b16 %v7590, %v7590
    %7592 = vrot.lane.b32.xlu0 %v7591, 64
    %v7593 = vpop.permute.xlu0 %7592
    %v7595 = vsel %vm7033, %v7588, 0
    %v7598 = vsel %vm7049, %v7593, 0
    %7600 = vmatpush.bf16.msra.mxu0 0
    %7601 = vmatpush.bf16.msra.mxu0 0
    %7602 = vmatpush.bf16.msra.mxu0 0
    %7603 = vmatpush.bf16.msra.mxu0 0
    %7604 = vmatpush.bf16.msra.mxu0 0
    %7605 = vmatpush.bf16.msra.mxu0 0
    %7606 = vmatpush.bf16.msra.mxu0 0
    %7607 = vmatpush.bf16.msra.mxu0 %v7598
    %7608 = vmatmul.bf16.gmra.mxu0 %v7595
    %v7609 = vpop.f32.mrf.mxu0
    %v7610 = vadd.f32 0.0, %v7609
    %v7611 = vpop.f32.mrf.mxu0
    %7612 = vdwg.mxu0
    %7614 = vrot.lane.b32.xlu0 %v7610, 64
    %v7615 = vpop.permute.xlu0 %7614
    %v7617 = vsel %vm7013, %v7545, %v7615
    %v7618 = vpack.c.bf16 %v7617, %v7617
    %7619 = vst [vmem:[#allocation2 + $0x10] sm:$0xf] %v7618
    %v7620 = vunpack.c.h.b16 %v2505
    %v7621 = vpack.c.b16 %v7620, %v7620
    %v7622 = vunpack.c.h.b16 %v4757
    %v7623 = vpack.c.b16 %v7622, %v7622
    %v7625 = vsel %vm7013, %v7621, 0
    %v7628 = vsel %vm7013, %v7623, 0
    %7630 = vmatpush.bf16.xpose.msra.mxu0 0
    %7631 = vmatpush.bf16.xpose.msra.mxu0 0
    %7632 = vmatpush.bf16.xpose.msra.mxu0 0
    %7633 = vmatpush.bf16.xpose.msra.mxu0 0
    %7634 = vmatpush.bf16.xpose.msra.mxu0 0
    %7635 = vmatpush.bf16.xpose.msra.mxu0 0
    %7636 = vmatpush.bf16.xpose.msra.mxu0 0
    %7637 = vmatpush.bf16.xpose.msra.mxu0 %v7628
    %7638 = vmatmul.bf16.gmra.mxu0 %v7625
    %v7639 = vpop.f32.mrf.mxu0
    %v7640 = vadd.f32 0.0, %v7639
    %v7641 = vpop.f32.mrf.mxu0
    %7642 = vdwg.mxu0
    %v7643 = vsel %vm7033, %v7640, -inf
    %7644 = vmax.xlane.f32.xlu0 %v7643
    %v7645 = vpop.xlane.xlu0 %7644
    %v7646 = vsub.f32 %v7640, %v7645
    %v7647 = vmul.f32 %v7646, 1.442695
    %v7648 = vpow.pop %v7647
    %v7649 = vsel %vm7033, %v7648, 0.0
    %7650 = vadd.xlane.f32.xlu0 %v7649
    %v7651 = vpop.xlane.xlu0 %7650
    %v7652 = vrcp.pop %v7651
    %v7653 = vmul.f32 %v7648, %v7652
    %v7654 = vpack.c.bf16 %v7653, %v7653
    %v7655 = vunpack.c.h.b16 %v7009
    %v7656 = vpack.c.b16 %v7655, %v7655
    %v7658 = vsel %vm7033, %v7654, 0
    %v7661 = vsel %vm7049, %v7656, 0
    %7663 = vmatpush.bf16.msra.mxu0 0
    %7664 = vmatpush.bf16.msra.mxu0 0
    %7665 = vmatpush.bf16.msra.mxu0 0
    %7666 = vmatpush.bf16.msra.mxu0 0
    %7667 = vmatpush.bf16.msra.mxu0 0
    %7668 = vmatpush.bf16.msra.mxu0 0
    %7669 = vmatpush.bf16.msra.mxu0 0
    %7670 = vmatpush.bf16.msra.mxu0 %v7661
    %7671 = vmatmul.bf16.gmra.mxu0 %v7658
    %v7672 = vpop.f32.mrf.mxu0
    %v7673 = vadd.f32 0.0, %v7672
    %v7674 = vpop.f32.mrf.mxu0
    %7675 = vdwg.mxu0
    %7676 = vrot.lane.b32.xlu0 %v7621, 64
    %v7677 = vpop.permute.xlu0 %7676
    %7678 = vrot.lane.b32.xlu0 %v7623, 64
    %v7679 = vpop.permute.xlu0 %7678
    %v7681 = vsel %vm7013, %v7677, 0
    %v7684 = vsel %vm7013, %v7679, 0
    %7686 = vmatpush.bf16.xpose.msra.mxu0 0
    %7687 = vmatpush.bf16.xpose.msra.mxu0 0
    %7688 = vmatpush.bf16.xpose.msra.mxu0 0
    %7689 = vmatpush.bf16.xpose.msra.mxu0 0
    %7690 = vmatpush.bf16.xpose.msra.mxu0 0
    %7691 = vmatpush.bf16.xpose.msra.mxu0 0
    %7692 = vmatpush.bf16.xpose.msra.mxu0 0
    %7693 = vmatpush.bf16.xpose.msra.mxu0 %v7684
    %7694 = vmatmul.bf16.gmra.mxu0 %v7681
    %v7695 = vpop.f32.mrf.mxu0
    %v7696 = vadd.f32 0.0, %v7695
    %v7697 = vpop.f32.mrf.mxu0
    %7698 = vdwg.mxu0
    %v7699 = vsel %vm7033, %v7696, -inf
    %7700 = vmax.xlane.f32.xlu0 %v7699
    %v7701 = vpop.xlane.xlu0 %7700
    %v7702 = vsub.f32 %v7696, %v7701
    %v7703 = vmul.f32 %v7702, 1.442695
    %v7704 = vpow.pop %v7703
    %v7705 = vsel %vm7033, %v7704, 0.0
    %7706 = vadd.xlane.f32.xlu0 %v7705
    %v7707 = vpop.xlane.xlu0 %7706
    %v7708 = vrcp.pop %v7707
    %v7709 = vmul.f32 %v7704, %v7708
    %v7710 = vpack.c.bf16 %v7709, %v7709
    %7711 = vrot.lane.b32.xlu0 %v7656, 64
    %v7712 = vpop.permute.xlu0 %7711
    %v7714 = vsel %vm7033, %v7710, 0
    %v7717 = vsel %vm7049, %v7712, 0
    %7719 = vmatpush.bf16.msra.mxu0 0
    %7720 = vmatpush.bf16.msra.mxu0 0
    %7721 = vmatpush.bf16.msra.mxu0 0
    %7722 = vmatpush.bf16.msra.mxu0 0
    %7723 = vmatpush.bf16.msra.mxu0 0
    %7724 = vmatpush.bf16.msra.mxu0 0
    %7725 = vmatpush.bf16.msra.mxu0 0
    %7726 = vmatpush.bf16.msra.mxu0 %v7717
    %7727 = vmatmul.bf16.gmra.mxu0 %v7714
    %v7728 = vpop.f32.mrf.mxu0
    %v7729 = vadd.f32 0.0, %v7728
    %v7730 = vpop.f32.mrf.mxu0
    %7731 = vdwg.mxu0
    %7733 = vrot.lane.b32.xlu0 %v7729, 64
    %v7734 = vpop.permute.xlu0 %7733
    %v7736 = vsel %vm7013, %v7673, %v7734
    %v7737 = vpack.c.bf16 %v7736, %v7736
    %7738 = vst [vmem:[#allocation2 + $0x14] sm:$0xf] %v7737
    %v7740 = vsel %vm7013, %v2506, 0
    %v7743 = vsel %vm7013, %v4758, 0
    %7745 = vmatpush.bf16.xpose.msra.mxu0 0
    %7746 = vmatpush.bf16.xpose.msra.mxu0 0
    %7747 = vmatpush.bf16.xpose.msra.mxu0 0
    %7748 = vmatpush.bf16.xpose.msra.mxu0 0
    %7749 = vmatpush.bf16.xpose.msra.mxu0 0
    %7750 = vmatpush.bf16.xpose.msra.mxu0 0
    %7751 = vmatpush.bf16.xpose.msra.mxu0 0
    %7752 = vmatpush.bf16.xpose.msra.mxu0 %v7743
    %7753 = vmatmul.bf16.gmra.mxu0 %v7740
    %v7754 = vpop.f32.mrf.mxu0
    %v7755 = vadd.f32 0.0, %v7754
    %v7756 = vpop.f32.mrf.mxu0
    %7757 = vdwg.mxu0
    %v7758 = vsel %vm7033, %v7755, -inf
    %7759 = vmax.xlane.f32.xlu0 %v7758
    %v7760 = vpop.xlane.xlu0 %7759
    %v7761 = vsub.f32 %v7755, %v7760
    %v7762 = vmul.f32 %v7761, 1.442695
    %v7763 = vpow.pop %v7762
    %v7764 = vsel %vm7033, %v7763, 0.0
    %7765 = vadd.xlane.f32.xlu0 %v7764
    %v7766 = vpop.xlane.xlu0 %7765
    %v7767 = vrcp.pop %v7766
    %v7768 = vmul.f32 %v7763, %v7767
    %v7769 = vpack.c.bf16 %v7768, %v7768
    %v7771 = vsel %vm7033, %v7769, 0
    %v7774 = vsel %vm7049, %v7010, 0
    %7776 = vmatpush.bf16.msra.mxu0 0
    %7777 = vmatpush.bf16.msra.mxu0 0
    %7778 = vmatpush.bf16.msra.mxu0 0
    %7779 = vmatpush.bf16.msra.mxu0 0
    %7780 = vmatpush.bf16.msra.mxu0 0
    %7781 = vmatpush.bf16.msra.mxu0 0
    %7782 = vmatpush.bf16.msra.mxu0 0
    %7783 = vmatpush.bf16.msra.mxu0 %v7774
    %7784 = vmatmul.bf16.gmra.mxu0 %v7771
    %v7785 = vpop.f32.mrf.mxu0
    %v7786 = vadd.f32 0.0, %v7785
    %v7787 = vpop.f32.mrf.mxu0
    %7788 = vdwg.mxu0
    %v7790 = vunpack.c.l.b16 %v2506
    %v7791 = vpack.c.b16 %v7790, %v7790
    %7792 = vrot.lane.b32.xlu0 %v7791, 64
    %v7793 = vpop.permute.xlu0 %7792
    %v7795 = vunpack.c.l.b16 %v4758
    %v7796 = vpack.c.b16 %v7795, %v7795
    %7797 = vrot.lane.b32.xlu0 %v7796, 64
    %v7798 = vpop.permute.xlu0 %7797
    %v7800 = vsel %vm7013, %v7793, 0
    %v7803 = vsel %vm7013, %v7798, 0
    %7805 = vmatpush.bf16.xpose.msra.mxu0 0
    %7806 = vmatpush.bf16.xpose.msra.mxu0 0
    %7807 = vmatpush.bf16.xpose.msra.mxu0 0
    %7808 = vmatpush.bf16.xpose.msra.mxu0 0
    %7809 = vmatpush.bf16.xpose.msra.mxu0 0
    %7810 = vmatpush.bf16.xpose.msra.mxu0 0
    %7811 = vmatpush.bf16.xpose.msra.mxu0 0
    %7812 = vmatpush.bf16.xpose.msra.mxu0 %v7803
    %7813 = vmatmul.bf16.gmra.mxu0 %v7800
    %v7814 = vpop.f32.mrf.mxu0
    %v7815 = vadd.f32 0.0, %v7814
    %v7816 = vpop.f32.mrf.mxu0
    %7817 = vdwg.mxu0
    %v7818 = vsel %vm7033, %v7815, -inf
    %7819 = vmax.xlane.f32.xlu0 %v7818
    %v7820 = vpop.xlane.xlu0 %7819
    %v7821 = vsub.f32 %v7815, %v7820
    %v7822 = vmul.f32 %v7821, 1.442695
    %v7823 = vpow.pop %v7822
    %v7824 = vsel %vm7033, %v7823, 0.0
    %7825 = vadd.xlane.f32.xlu0 %v7824
    %v7826 = vpop.xlane.xlu0 %7825
    %v7827 = vrcp.pop %v7826
    %v7828 = vmul.f32 %v7823, %v7827
    %v7829 = vpack.c.bf16 %v7828, %v7828
    %v7831 = vunpack.c.l.b16 %v7010
    %v7832 = vpack.c.b16 %v7831, %v7831
    %7833 = vrot.lane.b32.xlu0 %v7832, 64
    %v7834 = vpop.permute.xlu0 %7833
    %v7836 = vsel %vm7033, %v7829, 0
    %v7839 = vsel %vm7049, %v7834, 0
    %7841 = vmatpush.bf16.msra.mxu0 0
    %7842 = vmatpush.bf16.msra.mxu0 0
    %7843 = vmatpush.bf16.msra.mxu0 0
    %7844 = vmatpush.bf16.msra.mxu0 0
    %7845 = vmatpush.bf16.msra.mxu0 0
    %7846 = vmatpush.bf16.msra.mxu0 0
    %7847 = vmatpush.bf16.msra.mxu0 0
    %7848 = vmatpush.bf16.msra.mxu0 %v7839
    %7849 = vmatmul.bf16.gmra.mxu0 %v7836
    %v7850 = vpop.f32.mrf.mxu0
    %v7851 = vadd.f32 0.0, %v7850
    %v7852 = vpop.f32.mrf.mxu0
    %7853 = vdwg.mxu0
    %7855 = vrot.lane.b32.xlu0 %v7851, 64
    %v7856 = vpop.permute.xlu0 %7855
    %v7858 = vsel %vm7013, %v7786, %v7856
    %v7859 = vpack.c.bf16 %v7858, %v7858
    %7860 = vst [vmem:[#allocation2 + $0x18] sm:$0xf] %v7859
    %v7861 = vunpack.c.h.b16 %v2506
    %v7862 = vpack.c.b16 %v7861, %v7861
    %v7863 = vunpack.c.h.b16 %v4758
    %v7864 = vpack.c.b16 %v7863, %v7863
    %v7866 = vsel %vm7013, %v7862, 0
    %v7869 = vsel %vm7013, %v7864, 0
    %7871 = vmatpush.bf16.xpose.msra.mxu0 0
    %7872 = vmatpush.bf16.xpose.msra.mxu0 0
    %7873 = vmatpush.bf16.xpose.msra.mxu0 0
    %7874 = vmatpush.bf16.xpose.msra.mxu0 0
    %7875 = vmatpush.bf16.xpose.msra.mxu0 0
    %7876 = vmatpush.bf16.xpose.msra.mxu0 0
    %7877 = vmatpush.bf16.xpose.msra.mxu0 0
    %7878 = vmatpush.bf16.xpose.msra.mxu0 %v7869
    %7879 = vmatmul.bf16.gmra.mxu0 %v7866
    %v7880 = vpop.f32.mrf.mxu0
    %v7881 = vadd.f32 0.0, %v7880
    %v7882 = vpop.f32.mrf.mxu0
    %7883 = vdwg.mxu0
    %v7884 = vsel %vm7033, %v7881, -inf
    %7885 = vmax.xlane.f32.xlu0 %v7884
    %v7886 = vpop.xlane.xlu0 %7885
    %v7887 = vsub.f32 %v7881, %v7886
    %v7888 = vmul.f32 %v7887, 1.442695
    %v7889 = vpow.pop %v7888
    %v7890 = vsel %vm7033, %v7889, 0.0
    %7891 = vadd.xlane.f32.xlu0 %v7890
    %v7892 = vpop.xlane.xlu0 %7891
    %v7893 = vrcp.pop %v7892
    %v7894 = vmul.f32 %v7889, %v7893
    %v7895 = vpack.c.bf16 %v7894, %v7894
    %v7896 = vunpack.c.h.b16 %v7010
    %v7897 = vpack.c.b16 %v7896, %v7896
    %v7899 = vsel %vm7033, %v7895, 0
    %v7902 = vsel %vm7049, %v7897, 0
    %7904 = vmatpush.bf16.msra.mxu0 0
    %7905 = vmatpush.bf16.msra.mxu0 0
    %7906 = vmatpush.bf16.msra.mxu0 0
    %7907 = vmatpush.bf16.msra.mxu0 0
    %7908 = vmatpush.bf16.msra.mxu0 0
    %7909 = vmatpush.bf16.msra.mxu0 0
    %7910 = vmatpush.bf16.msra.mxu0 0
    %7911 = vmatpush.bf16.msra.mxu0 %v7902
    %7912 = vmatmul.bf16.gmra.mxu0 %v7899
    %v7913 = vpop.f32.mrf.mxu0
    %v7914 = vadd.f32 0.0, %v7913
    %v7915 = vpop.f32.mrf.mxu0
    %7916 = vdwg.mxu0
    %7917 = vrot.lane.b32.xlu0 %v7862, 64
    %v7918 = vpop.permute.xlu0 %7917
    %7919 = vrot.lane.b32.xlu0 %v7864, 64
    %v7920 = vpop.permute.xlu0 %7919
    %v7922 = vsel %vm7013, %v7918, 0
    %v7925 = vsel %vm7013, %v7920, 0
    %7927 = vmatpush.bf16.xpose.msra.mxu0 0
    %7928 = vmatpush.bf16.xpose.msra.mxu0 0
    %7929 = vmatpush.bf16.xpose.msra.mxu0 0
    %7930 = vmatpush.bf16.xpose.msra.mxu0 0
    %7931 = vmatpush.bf16.xpose.msra.mxu0 0
    %7932 = vmatpush.bf16.xpose.msra.mxu0 0
    %7933 = vmatpush.bf16.xpose.msra.mxu0 0
    %7934 = vmatpush.bf16.xpose.msra.mxu0 %v7925
    %7935 = vmatmul.bf16.gmra.mxu0 %v7922
    %v7936 = vpop.f32.mrf.mxu0
    %v7937 = vadd.f32 0.0, %v7936
    %v7938 = vpop.f32.mrf.mxu0
    %7939 = vdwg.mxu0
    %v7940 = vsel %vm7033, %v7937, -inf
    %7941 = vmax.xlane.f32.xlu0 %v7940
    %v7942 = vpop.xlane.xlu0 %7941
    %v7943 = vsub.f32 %v7937, %v7942
    %v7944 = vmul.f32 %v7943, 1.442695
    %v7945 = vpow.pop %v7944
    %v7946 = vsel %vm7033, %v7945, 0.0
    %7947 = vadd.xlane.f32.xlu0 %v7946
    %v7948 = vpop.xlane.xlu0 %7947
    %v7949 = vrcp.pop %v7948
    %v7950 = vmul.f32 %v7945, %v7949
    %v7951 = vpack.c.bf16 %v7950, %v7950
    %7952 = vrot.lane.b32.xlu0 %v7897, 64
    %v7953 = vpop.permute.xlu0 %7952
    %v7955 = vsel %vm7033, %v7951, 0
    %v7958 = vsel %vm7049, %v7953, 0
    %7960 = vmatpush.bf16.msra.mxu0 0
    %7961 = vmatpush.bf16.msra.mxu0 0
    %7962 = vmatpush.bf16.msra.mxu0 0
    %7963 = vmatpush.bf16.msra.mxu0 0
    %7964 = vmatpush.bf16.msra.mxu0 0
    %7965 = vmatpush.bf16.msra.mxu0 0
    %7966 = vmatpush.bf16.msra.mxu0 0
    %7967 = vmatpush.bf16.msra.mxu0 %v7958
    %7968 = vmatmul.bf16.gmra.mxu0 %v7955
    %v7969 = vpop.f32.mrf.mxu0
    %v7970 = vadd.f32 0.0, %v7969
    %v7971 = vpop.f32.mrf.mxu0
    %7972 = vdwg.mxu0
    %7974 = vrot.lane.b32.xlu0 %v7970, 64
    %v7975 = vpop.permute.xlu0 %7974
    %v7977 = vsel %vm7013, %v7914, %v7975
    %v7978 = vpack.c.bf16 %v7977, %v7977
    %7979 = vst [vmem:[#allocation2 + $0x1c] sm:$0xf] %v7978
    %v7981 = vsel %vm7013, %v2507, 0
    %v7984 = vsel %vm7013, %v4759, 0
    %7986 = vmatpush.bf16.xpose.msra.mxu0 0
    %7987 = vmatpush.bf16.xpose.msra.mxu0 0
    %7988 = vmatpush.bf16.xpose.msra.mxu0 0
    %7989 = vmatpush.bf16.xpose.msra.mxu0 0
    %7990 = vmatpush.bf16.xpose.msra.mxu0 0
    %7991 = vmatpush.bf16.xpose.msra.mxu0 0
    %7992 = vmatpush.bf16.xpose.msra.mxu0 0
    %7993 = vmatpush.bf16.xpose.msra.mxu0 %v7984
    %7994 = vmatmul.bf16.gmra.mxu0 %v7981
    %v7995 = vpop.f32.mrf.mxu0
    %v7996 = vadd.f32 0.0, %v7995
    %v7997 = vpop.f32.mrf.mxu0
    %7998 = vdwg.mxu0
    %v7999 = vsel %vm7033, %v7996, -inf
    %8000 = vmax.xlane.f32.xlu0 %v7999
    %v8001 = vpop.xlane.xlu0 %8000
    %v8002 = vsub.f32 %v7996, %v8001
    %v8003 = vmul.f32 %v8002, 1.442695
    %v8004 = vpow.pop %v8003
    %v8005 = vsel %vm7033, %v8004, 0.0
    %8006 = vadd.xlane.f32.xlu0 %v8005
    %v8007 = vpop.xlane.xlu0 %8006
    %v8008 = vrcp.pop %v8007
    %v8009 = vmul.f32 %v8004, %v8008
    %v8010 = vpack.c.bf16 %v8009, %v8009
    %v8012 = vsel %vm7033, %v8010, 0
    %v8015 = vsel %vm7049, %v7011, 0
    %8017 = vmatpush.bf16.msra.mxu0 0
    %8018 = vmatpush.bf16.msra.mxu0 0
    %8019 = vmatpush.bf16.msra.mxu0 0
    %8020 = vmatpush.bf16.msra.mxu0 0
    %8021 = vmatpush.bf16.msra.mxu0 0
    %8022 = vmatpush.bf16.msra.mxu0 0
    %8023 = vmatpush.bf16.msra.mxu0 0
    %8024 = vmatpush.bf16.msra.mxu0 %v8015
    %8025 = vmatmul.bf16.gmra.mxu0 %v8012
    %v8026 = vpop.f32.mrf.mxu0
    %v8027 = vadd.f32 0.0, %v8026
    %v8028 = vpop.f32.mrf.mxu0
    %8029 = vdwg.mxu0
    %v8031 = vunpack.c.l.b16 %v2507
    %v8032 = vpack.c.b16 %v8031, %v8031
    %8033 = vrot.lane.b32.xlu0 %v8032, 64
    %v8034 = vpop.permute.xlu0 %8033
    %v8036 = vunpack.c.l.b16 %v4759
    %v8037 = vpack.c.b16 %v8036, %v8036
    %8038 = vrot.lane.b32.xlu0 %v8037, 64
    %v8039 = vpop.permute.xlu0 %8038
    %v8041 = vsel %vm7013, %v8034, 0
    %v8044 = vsel %vm7013, %v8039, 0
    %8046 = vmatpush.bf16.xpose.msra.mxu0 0
    %8047 = vmatpush.bf16.xpose.msra.mxu0 0
    %8048 = vmatpush.bf16.xpose.msra.mxu0 0
    %8049 = vmatpush.bf16.xpose.msra.mxu0 0
    %8050 = vmatpush.bf16.xpose.msra.mxu0 0
    %8051 = vmatpush.bf16.xpose.msra.mxu0 0
    %8052 = vmatpush.bf16.xpose.msra.mxu0 0
    %8053 = vmatpush.bf16.xpose.msra.mxu0 %v8044
    %8054 = vmatmul.bf16.gmra.mxu0 %v8041
    %v8055 = vpop.f32.mrf.mxu0
    %v8056 = vadd.f32 0.0, %v8055
    %v8057 = vpop.f32.mrf.mxu0
    %8058 = vdwg.mxu0
    %v8059 = vsel %vm7033, %v8056, -inf
    %8060 = vmax.xlane.f32.xlu0 %v8059
    %v8061 = vpop.xlane.xlu0 %8060
    %v8062 = vsub.f32 %v8056, %v8061
    %v8063 = vmul.f32 %v8062, 1.442695
    %v8064 = vpow.pop %v8063
    %v8065 = vsel %vm7033, %v8064, 0.0
    %8066 = vadd.xlane.f32.xlu0 %v8065
    %v8067 = vpop.xlane.xlu0 %8066
    %v8068 = vrcp.pop %v8067
    %v8069 = vmul.f32 %v8064, %v8068
    %v8070 = vpack.c.bf16 %v8069, %v8069
    %v8072 = vunpack.c.l.b16 %v7011
    %v8073 = vpack.c.b16 %v8072, %v8072
    %8074 = vrot.lane.b32.xlu0 %v8073, 64
    %v8075 = vpop.permute.xlu0 %8074
    %v8077 = vsel %vm7033, %v8070, 0
    %v8080 = vsel %vm7049, %v8075, 0
    %8082 = vmatpush.bf16.msra.mxu0 0
    %8083 = vmatpush.bf16.msra.mxu0 0
    %8084 = vmatpush.bf16.msra.mxu0 0
    %8085 = vmatpush.bf16.msra.mxu0 0
    %8086 = vmatpush.bf16.msra.mxu0 0
    %8087 = vmatpush.bf16.msra.mxu0 0
    %8088 = vmatpush.bf16.msra.mxu0 0
    %8089 = vmatpush.bf16.msra.mxu0 %v8080
    %8090 = vmatmul.bf16.gmra.mxu0 %v8077
    %v8091 = vpop.f32.mrf.mxu0
    %v8092 = vadd.f32 0.0, %v8091
    %v8093 = vpop.f32.mrf.mxu0
    %8094 = vdwg.mxu0
    %8096 = vrot.lane.b32.xlu0 %v8092, 64
    %v8097 = vpop.permute.xlu0 %8096
    %v8099 = vsel %vm7013, %v8027, %v8097
    %v8100 = vpack.c.bf16 %v8099, %v8099
    %8101 = vst [vmem:[#allocation2 + $0x20] sm:$0xf] %v8100
    %v8102 = vunpack.c.h.b16 %v2507
    %v8103 = vpack.c.b16 %v8102, %v8102
    %v8104 = vunpack.c.h.b16 %v4759
    %v8105 = vpack.c.b16 %v8104, %v8104
    %v8107 = vsel %vm7013, %v8103, 0
    %v8110 = vsel %vm7013, %v8105, 0
    %8112 = vmatpush.bf16.xpose.msra.mxu0 0
    %8113 = vmatpush.bf16.xpose.msra.mxu0 0
    %8114 = vmatpush.bf16.xpose.msra.mxu0 0
    %8115 = vmatpush.bf16.xpose.msra.mxu0 0
    %8116 = vmatpush.bf16.xpose.msra.mxu0 0
    %8117 = vmatpush.bf16.xpose.msra.mxu0 0
    %8118 = vmatpush.bf16.xpose.msra.mxu0 0
    %8119 = vmatpush.bf16.xpose.msra.mxu0 %v8110
    %8120 = vmatmul.bf16.gmra.mxu0 %v8107
    %v8121 = vpop.f32.mrf.mxu0
    %v8122 = vadd.f32 0.0, %v8121
    %v8123 = vpop.f32.mrf.mxu0
    %8124 = vdwg.mxu0
    %v8125 = vsel %vm7033, %v8122, -inf
    %8126 = vmax.xlane.f32.xlu0 %v8125
    %v8127 = vpop.xlane.xlu0 %8126
    %v8128 = vsub.f32 %v8122, %v8127
    %v8129 = vmul.f32 %v8128, 1.442695
    %v8130 = vpow.pop %v8129
    %v8131 = vsel %vm7033, %v8130, 0.0
    %8132 = vadd.xlane.f32.xlu0 %v8131
    %v8133 = vpop.xlane.xlu0 %8132
    %v8134 = vrcp.pop %v8133
    %v8135 = vmul.f32 %v8130, %v8134
    %v8136 = vpack.c.bf16 %v8135, %v8135
    %v8137 = vunpack.c.h.b16 %v7011
    %v8138 = vpack.c.b16 %v8137, %v8137
    %v8140 = vsel %vm7033, %v8136, 0
    %v8143 = vsel %vm7049, %v8138, 0
    %8145 = vmatpush.bf16.msra.mxu0 0
    %8146 = vmatpush.bf16.msra.mxu0 0
    %8147 = vmatpush.bf16.msra.mxu0 0
    %8148 = vmatpush.bf16.msra.mxu0 0
    %8149 = vmatpush.bf16.msra.mxu0 0
    %8150 = vmatpush.bf16.msra.mxu0 0
    %8151 = vmatpush.bf16.msra.mxu0 0
    %8152 = vmatpush.bf16.msra.mxu0 %v8143
    %8153 = vmatmul.bf16.gmra.mxu0 %v8140
    %v8154 = vpop.f32.mrf.mxu0
    %v8155 = vadd.f32 0.0, %v8154
    %v8156 = vpop.f32.mrf.mxu0
    %8157 = vdwg.mxu0
    %8158 = vrot.lane.b32.xlu0 %v8103, 64
    %v8159 = vpop.permute.xlu0 %8158
    %8160 = vrot.lane.b32.xlu0 %v8105, 64
    %v8161 = vpop.permute.xlu0 %8160
    %v8163 = vsel %vm7013, %v8159, 0
    %v8166 = vsel %vm7013, %v8161, 0
    %8168 = vmatpush.bf16.xpose.msra.mxu0 0
    %8169 = vmatpush.bf16.xpose.msra.mxu0 0
    %8170 = vmatpush.bf16.xpose.msra.mxu0 0
    %8171 = vmatpush.bf16.xpose.msra.mxu0 0
    %8172 = vmatpush.bf16.xpose.msra.mxu0 0
    %8173 = vmatpush.bf16.xpose.msra.mxu0 0
    %8174 = vmatpush.bf16.xpose.msra.mxu0 0
    %8175 = vmatpush.bf16.xpose.msra.mxu0 %v8166
    %8176 = vmatmul.bf16.gmra.mxu0 %v8163
    %v8177 = vpop.f32.mrf.mxu0
    %v8178 = vadd.f32 0.0, %v8177
    %v8179 = vpop.f32.mrf.mxu0
    %8180 = vdwg.mxu0
    %v8181 = vsel %vm7033, %v8178, -inf
    %8182 = vmax.xlane.f32.xlu0 %v8181
    %v8183 = vpop.xlane.xlu0 %8182
    %v8184 = vsub.f32 %v8178, %v8183
    %v8185 = vmul.f32 %v8184, 1.442695
    %v8186 = vpow.pop %v8185
    %v8187 = vsel %vm7033, %v8186, 0.0
    %8188 = vadd.xlane.f32.xlu0 %v8187
    %v8189 = vpop.xlane.xlu0 %8188
    %v8190 = vrcp.pop %v8189
    %v8191 = vmul.f32 %v8186, %v8190
    %v8192 = vpack.c.bf16 %v8191, %v8191
    %8193 = vrot.lane.b32.xlu0 %v8138, 64
    %v8194 = vpop.permute.xlu0 %8193
    %v8196 = vsel %vm7033, %v8192, 0
    %v8199 = vsel %vm7049, %v8194, 0
    %8201 = vmatpush.bf16.msra.mxu0 0
    %8202 = vmatpush.bf16.msra.mxu0 0
    %8203 = vmatpush.bf16.msra.mxu0 0
    %8204 = vmatpush.bf16.msra.mxu0 0
    %8205 = vmatpush.bf16.msra.mxu0 0
    %8206 = vmatpush.bf16.msra.mxu0 0
    %8207 = vmatpush.bf16.msra.mxu0 0
    %8208 = vmatpush.bf16.msra.mxu0 %v8199
    %8209 = vmatmul.bf16.gmra.mxu0 %v8196
    %v8210 = vpop.f32.mrf.mxu0
    %v8211 = vadd.f32 0.0, %v8210
    %v8212 = vpop.f32.mrf.mxu0
    %8213 = vdwg.mxu0
    %8215 = vrot.lane.b32.xlu0 %v8211, 64
    %v8216 = vpop.permute.xlu0 %8215
    %v8218 = vsel %vm7013, %v8155, %v8216
    %v8219 = vpack.c.bf16 %v8218, %v8218
    %8220 = vst [vmem:[#allocation2 + $0x24] sm:$0xf] %v8219
    %v8222 = vsel %vm7013, %v2508, 0
    %v8225 = vsel %vm7013, %v4760, 0
    %8227 = vmatpush.bf16.xpose.msra.mxu0 0
    %8228 = vmatpush.bf16.xpose.msra.mxu0 0
    %8229 = vmatpush.bf16.xpose.msra.mxu0 0
    %8230 = vmatpush.bf16.xpose.msra.mxu0 0
    %8231 = vmatpush.bf16.xpose.msra.mxu0 0
    %8232 = vmatpush.bf16.xpose.msra.mxu0 0
    %8233 = vmatpush.bf16.xpose.msra.mxu0 0
    %8234 = vmatpush.bf16.xpose.msra.mxu0 %v8225
    %8235 = vmatmul.bf16.gmra.mxu0 %v8222
    %v8236 = vpop.f32.mrf.mxu0
    %v8237 = vadd.f32 0.0, %v8236
    %v8238 = vpop.f32.mrf.mxu0
    %8239 = vdwg.mxu0
    %v8240 = vsel %vm7033, %v8237, -inf
    %8241 = vmax.xlane.f32.xlu0 %v8240
    %v8242 = vpop.xlane.xlu0 %8241
    %v8243 = vsub.f32 %v8237, %v8242
    %v8244 = vmul.f32 %v8243, 1.442695
    %v8245 = vpow.pop %v8244
    %v8246 = vsel %vm7033, %v8245, 0.0
    %8247 = vadd.xlane.f32.xlu0 %v8246
    %v8248 = vpop.xlane.xlu0 %8247
    %v8249 = vrcp.pop %v8248
    %v8250 = vmul.f32 %v8245, %v8249
    %v8251 = vpack.c.bf16 %v8250, %v8250
    %v8253 = vsel %vm7033, %v8251, 0
    %v8256 = vsel %vm7049, %v7012, 0
    %8258 = vmatpush.bf16.msra.mxu0 0
    %8259 = vmatpush.bf16.msra.mxu0 0
    %8260 = vmatpush.bf16.msra.mxu0 0
    %8261 = vmatpush.bf16.msra.mxu0 0
    %8262 = vmatpush.bf16.msra.mxu0 0
    %8263 = vmatpush.bf16.msra.mxu0 0
    %8264 = vmatpush.bf16.msra.mxu0 0
    %8265 = vmatpush.bf16.msra.mxu0 %v8256
    %8266 = vmatmul.bf16.gmra.mxu0 %v8253
    %v8267 = vpop.f32.mrf.mxu0
    %v8268 = vadd.f32 0.0, %v8267
    %v8269 = vpop.f32.mrf.mxu0
    %8270 = vdwg.mxu0
    %v8272 = vunpack.c.l.b16 %v2508
    %v8273 = vpack.c.b16 %v8272, %v8272
    %8274 = vrot.lane.b32.xlu0 %v8273, 64
    %v8275 = vpop.permute.xlu0 %8274
    %v8277 = vunpack.c.l.b16 %v4760
    %v8278 = vpack.c.b16 %v8277, %v8277
    %8279 = vrot.lane.b32.xlu0 %v8278, 64
    %v8280 = vpop.permute.xlu0 %8279
    %v8282 = vsel %vm7013, %v8275, 0
    %v8285 = vsel %vm7013, %v8280, 0
    %8287 = vmatpush.bf16.xpose.msra.mxu0 0
    %8288 = vmatpush.bf16.xpose.msra.mxu0 0
    %8289 = vmatpush.bf16.xpose.msra.mxu0 0
    %8290 = vmatpush.bf16.xpose.msra.mxu0 0
    %8291 = vmatpush.bf16.xpose.msra.mxu0 0
    %8292 = vmatpush.bf16.xpose.msra.mxu0 0
    %8293 = vmatpush.bf16.xpose.msra.mxu0 0
    %8294 = vmatpush.bf16.xpose.msra.mxu0 %v8285
    %8295 = vmatmul.bf16.gmra.mxu0 %v8282
    %v8296 = vpop.f32.mrf.mxu0
    %v8297 = vadd.f32 0.0, %v8296
    %v8298 = vpop.f32.mrf.mxu0
    %8299 = vdwg.mxu0
    %v8300 = vsel %vm7033, %v8297, -inf
    %8301 = vmax.xlane.f32.xlu0 %v8300
    %v8302 = vpop.xlane.xlu0 %8301
    %v8303 = vsub.f32 %v8297, %v8302
    %v8304 = vmul.f32 %v8303, 1.442695
    %v8305 = vpow.pop %v8304
    %v8306 = vsel %vm7033, %v8305, 0.0
    %8307 = vadd.xlane.f32.xlu0 %v8306
    %v8308 = vpop.xlane.xlu0 %8307
    %v8309 = vrcp.pop %v8308
    %v8310 = vmul.f32 %v8305, %v8309
    %v8311 = vpack.c.bf16 %v8310, %v8310
    %v8313 = vunpack.c.l.b16 %v7012
    %v8314 = vpack.c.b16 %v8313, %v8313
    %8315 = vrot.lane.b32.xlu0 %v8314, 64
    %v8316 = vpop.permute.xlu0 %8315
    %v8318 = vsel %vm7033, %v8311, 0
    %v8321 = vsel %vm7049, %v8316, 0
    %8323 = vmatpush.bf16.msra.mxu0 0
    %8324 = vmatpush.bf16.msra.mxu0 0
    %8325 = vmatpush.bf16.msra.mxu0 0
    %8326 = vmatpush.bf16.msra.mxu0 0
    %8327 = vmatpush.bf16.msra.mxu0 0
    %8328 = vmatpush.bf16.msra.mxu0 0
    %8329 = vmatpush.bf16.msra.mxu0 0
    %8330 = vmatpush.bf16.msra.mxu0 %v8321
    %8331 = vmatmul.bf16.gmra.mxu0 %v8318
    %v8332 = vpop.f32.mrf.mxu0
    %v8333 = vadd.f32 0.0, %v8332
    %v8334 = vpop.f32.mrf.mxu0
    %8335 = vdwg.mxu0
    %8337 = vrot.lane.b32.xlu0 %v8333, 64
    %v8338 = vpop.permute.xlu0 %8337
    %v8340 = vsel %vm7013, %v8268, %v8338
    %v8341 = vpack.c.bf16 %v8340, %v8340
    %8342 = vst [vmem:[#allocation2 + $0x28] sm:$0xf] %v8341
    %v8343 = vunpack.c.h.b16 %v2508
    %v8344 = vpack.c.b16 %v8343, %v8343
    %v8345 = vunpack.c.h.b16 %v4760
    %v8346 = vpack.c.b16 %v8345, %v8345
    %v8348 = vsel %vm7013, %v8344, 0
    %v8351 = vsel %vm7013, %v8346, 0
    %8353 = vmatpush.bf16.xpose.msra.mxu0 0
    %8354 = vmatpush.bf16.xpose.msra.mxu0 0
    %8355 = vmatpush.bf16.xpose.msra.mxu0 0
    %8356 = vmatpush.bf16.xpose.msra.mxu0 0
    %8357 = vmatpush.bf16.xpose.msra.mxu0 0
    %8358 = vmatpush.bf16.xpose.msra.mxu0 0
    %8359 = vmatpush.bf16.xpose.msra.mxu0 0
    %8360 = vmatpush.bf16.xpose.msra.mxu0 %v8351
    %8361 = vmatmul.bf16.gmra.mxu0 %v8348
    %v8362 = vpop.f32.mrf.mxu0
    %v8363 = vadd.f32 0.0, %v8362
    %v8364 = vpop.f32.mrf.mxu0
    %8365 = vdwg.mxu0
    %v8366 = vsel %vm7033, %v8363, -inf
    %8367 = vmax.xlane.f32.xlu0 %v8366
    %v8368 = vpop.xlane.xlu0 %8367
    %v8369 = vsub.f32 %v8363, %v8368
    %v8370 = vmul.f32 %v8369, 1.442695
    %v8371 = vpow.pop %v8370
    %v8372 = vsel %vm7033, %v8371, 0.0
    %8373 = vadd.xlane.f32.xlu0 %v8372
    %v8374 = vpop.xlane.xlu0 %8373
    %v8375 = vrcp.pop %v8374
    %v8376 = vmul.f32 %v8371, %v8375
    %v8377 = vpack.c.bf16 %v8376, %v8376
    %v8378 = vunpack.c.h.b16 %v7012
    %v8379 = vpack.c.b16 %v8378, %v8378
    %v8381 = vsel %vm7033, %v8377, 0
    %v8384 = vsel %vm7049, %v8379, 0
    %8386 = vmatpush.bf16.msra.mxu0 0
    %8387 = vmatpush.bf16.msra.mxu0 0
    %8388 = vmatpush.bf16.msra.mxu0 0
    %8389 = vmatpush.bf16.msra.mxu0 0
    %8390 = vmatpush.bf16.msra.mxu0 0
    %8391 = vmatpush.bf16.msra.mxu0 0
    %8392 = vmatpush.bf16.msra.mxu0 0
    %8393 = vmatpush.bf16.msra.mxu0 %v8384
    %8394 = vmatmul.bf16.gmra.mxu0 %v8381
    %v8395 = vpop.f32.mrf.mxu0
    %v8396 = vadd.f32 0.0, %v8395
    %v8397 = vpop.f32.mrf.mxu0
    %8398 = vdwg.mxu0
    %8399 = vrot.lane.b32.xlu0 %v8344, 64
    %v8400 = vpop.permute.xlu0 %8399
    %8401 = vrot.lane.b32.xlu0 %v8346, 64
    %v8402 = vpop.permute.xlu0 %8401
    %v8404 = vsel %vm7013, %v8400, 0
    %v8407 = vsel %vm7013, %v8402, 0
    %8409 = vmatpush.bf16.xpose.msra.mxu0 0
    %8410 = vmatpush.bf16.xpose.msra.mxu0 0
    %8411 = vmatpush.bf16.xpose.msra.mxu0 0
    %8412 = vmatpush.bf16.xpose.msra.mxu0 0
    %8413 = vmatpush.bf16.xpose.msra.mxu0 0
    %8414 = vmatpush.bf16.xpose.msra.mxu0 0
    %8415 = vmatpush.bf16.xpose.msra.mxu0 0
    %8416 = vmatpush.bf16.xpose.msra.mxu0 %v8407
    %8417 = vmatmul.bf16.gmra.mxu0 %v8404
    %v8418 = vpop.f32.mrf.mxu0
    %v8419 = vadd.f32 0.0, %v8418
    %v8420 = vpop.f32.mrf.mxu0
    %8421 = vdwg.mxu0
    %v8422 = vsel %vm7033, %v8419, -inf
    %8423 = vmax.xlane.f32.xlu0 %v8422
    %v8424 = vpop.xlane.xlu0 %8423
    %v8425 = vsub.f32 %v8419, %v8424
    %v8426 = vmul.f32 %v8425, 1.442695
    %v8427 = vpow.pop %v8426
    %v8428 = vsel %vm7033, %v8427, 0.0
    %8429 = vadd.xlane.f32.xlu0 %v8428
    %v8430 = vpop.xlane.xlu0 %8429
    %v8431 = vrcp.pop %v8430
    %v8432 = vmul.f32 %v8427, %v8431
    %v8433 = vpack.c.bf16 %v8432, %v8432
    %8434 = vrot.lane.b32.xlu0 %v8379, 64
    %v8435 = vpop.permute.xlu0 %8434
    %v8437 = vsel %vm7033, %v8433, 0
    %v8440 = vsel %vm7049, %v8435, 0
    %8442 = vmatpush.bf16.msra.mxu0 0
    %8443 = vmatpush.bf16.msra.mxu0 0
    %8444 = vmatpush.bf16.msra.mxu0 0
    %8445 = vmatpush.bf16.msra.mxu0 0
    %8446 = vmatpush.bf16.msra.mxu0 0
    %8447 = vmatpush.bf16.msra.mxu0 0
    %8448 = vmatpush.bf16.msra.mxu0 0
    %8449 = vmatpush.bf16.msra.mxu0 %v8440
    %8450 = vmatmul.bf16.gmra.mxu0 %v8437
    %v8451 = vpop.f32.mrf.mxu0
    %v8452 = vadd.f32 0.0, %v8451
    %v8453 = vpop.f32.mrf.mxu0
    %8454 = vdwg.mxu0
    %8456 = vrot.lane.b32.xlu0 %v8452, 64
    %v8457 = vpop.permute.xlu0 %8456
    %v8459 = vsel %vm7013, %v8396, %v8457
    %v8460 = vpack.c.bf16 %v8459, %v8459
    %8461 = vst [vmem:[#allocation2 + $0x2c] sm:$0xf] %v8460
    %v8462 = vld [vmem:[#allocation2] sm:$0xff]
    %v8463 = vld [vmem:[#allocation2 + $0x8] sm:$0xff]
    %v8464 = vld [vmem:[#allocation2 + $0x10] sm:$0xff]
    %v8465 = vld [vmem:[#allocation2 + $0x18] sm:$0xff]
    %v8466 = vld [vmem:[#allocation2 + $0x20] sm:$0xff]
    %v8467 = vld [vmem:[#allocation2 + $0x28] sm:$0xff]
    %v8468 = vld [vmem:[#allocation18] sm:$0xff]
    %v8469 = vld [vmem:[#allocation18 + $0x8] sm:$0xff]
    %v8470 = vld [vmem:[#allocation18 + $0x10] sm:$0xff]
    %v8471 = vld [vmem:[#allocation18 + $0x18] sm:$0xff]
    %v8472 = vld [vmem:[#allocation18 + $0x20] sm:$0xff]
    %v8473 = vld [vmem:[#allocation18 + $0x28] sm:$0xff]
    %v8474 = vld [vmem:[#allocation18 + $0x30] sm:$0xff]
    %v8475 = vld [vmem:[#allocation18 + $0x38] sm:$0xff]
    %v8476 = vld [vmem:[#allocation18 + $0x40] sm:$0xff]
    %v8477 = vld [vmem:[#allocation18 + $0x48] sm:$0xff]
    %v8478 = vld [vmem:[#allocation18 + $0x50] sm:$0xff]
    %v8479 = vld [vmem:[#allocation18 + $0x58] sm:$0xff]
    %v8480 = vld [vmem:[#allocation18 + $0x60] sm:$0xff]
    %v8481 = vld [vmem:[#allocation18 + $0x68] sm:$0xff]
    %v8482 = vld [vmem:[#allocation18 + $0x70] sm:$0xff]
    %v8483 = vld [vmem:[#allocation18 + $0x78] sm:$0xff]
    %v8484 = vld [vmem:[#allocation18 + $0x80] sm:$0xff]
    %v8485 = vld [vmem:[#allocation18 + $0x88] sm:$0xff]
    %v8486 = vld [vmem:[#allocation18 + $0x90] sm:$0xff]
    %v8487 = vld [vmem:[#allocation18 + $0x98] sm:$0xff]
    %v8488 = vld [vmem:[#allocation18 + $0xa0] sm:$0xff]
    %v8489 = vld [vmem:[#allocation18 + $0xa8] sm:$0xff]
    %v8490 = vld [vmem:[#allocation18 + $0xb0] sm:$0xff]
    %v8491 = vld [vmem:[#allocation18 + $0xb8] sm:$0xff]
    %v8492 = vld [vmem:[#allocation18 + $0xc0] sm:$0xff]
    %v8493 = vld [vmem:[#allocation18 + $0xc8] sm:$0xff]
    %v8494 = vld [vmem:[#allocation18 + $0xd0] sm:$0xff]
    %v8495 = vld [vmem:[#allocation18 + $0xd8] sm:$0xff]
    %v8496 = vld [vmem:[#allocation18 + $0xe0] sm:$0xff]
    %v8497 = vld [vmem:[#allocation18 + $0xe8] sm:$0xff]
    %v8498 = vld [vmem:[#allocation18 + $0xf0] sm:$0xff]
    %v8499 = vld [vmem:[#allocation18 + $0xf8] sm:$0xff]
    %v8500 = vld [vmem:[#allocation18 + $0x100] sm:$0xff]
    %v8501 = vld [vmem:[#allocation18 + $0x108] sm:$0xff]
    %v8502 = vld [vmem:[#allocation18 + $0x110] sm:$0xff]
    %v8503 = vld [vmem:[#allocation18 + $0x118] sm:$0xff]
    %v8504 = vld [vmem:[#allocation18 + $0x120] sm:$0xff]
    %v8505 = vld [vmem:[#allocation18 + $0x128] sm:$0xff]
    %v8506 = vld [vmem:[#allocation18 + $0x130] sm:$0xff]
    %v8507 = vld [vmem:[#allocation18 + $0x138] sm:$0xff]
    %v8508 = vld [vmem:[#allocation18 + $0x140] sm:$0xff]
    %v8509 = vld [vmem:[#allocation18 + $0x148] sm:$0xff]
    %v8510 = vld [vmem:[#allocation18 + $0x150] sm:$0xff]
    %v8511 = vld [vmem:[#allocation18 + $0x158] sm:$0xff]
    %v8512 = vld [vmem:[#allocation18 + $0x160] sm:$0xff]
    %v8513 = vld [vmem:[#allocation18 + $0x168] sm:$0xff]
    %v8514 = vld [vmem:[#allocation18 + $0x170] sm:$0xff]
    %v8515 = vld [vmem:[#allocation18 + $0x178] sm:$0xff]
    %v8516 = vld [vmem:[#allocation18 + $0x180] sm:$0xff]
    %v8517 = vld [vmem:[#allocation18 + $0x188] sm:$0xff]
    %v8518 = vld [vmem:[#allocation18 + $0x190] sm:$0xff]
    %v8519 = vld [vmem:[#allocation18 + $0x198] sm:$0xff]
    %v8520 = vld [vmem:[#allocation18 + $0x1a0] sm:$0xff]
    %v8521 = vld [vmem:[#allocation18 + $0x1a8] sm:$0xff]
    %v8522 = vld [vmem:[#allocation18 + $0x1b0] sm:$0xff]
    %v8523 = vld [vmem:[#allocation18 + $0x1b8] sm:$0xff]
    %v8524 = vld [vmem:[#allocation18 + $0x1c0] sm:$0xff]
    %v8525 = vld [vmem:[#allocation18 + $0x1c8] sm:$0xff]
    %v8526 = vld [vmem:[#allocation18 + $0x1d0] sm:$0xff]
    %v8527 = vld [vmem:[#allocation18 + $0x1d8] sm:$0xff]
    %v8528 = vld [vmem:[#allocation18 + $0x1e0] sm:$0xff]
    %v8529 = vld [vmem:[#allocation18 + $0x1e8] sm:$0xff]
    %v8530 = vld [vmem:[#allocation18 + $0x1f0] sm:$0xff]
    %v8531 = vld [vmem:[#allocation18 + $0x1f8] sm:$0xff]
    %v8532 = vld [vmem:[#allocation18 + $0x200] sm:$0xff]
    %v8533 = vld [vmem:[#allocation18 + $0x208] sm:$0xff]
    %v8534 = vld [vmem:[#allocation18 + $0x210] sm:$0xff]
    %v8535 = vld [vmem:[#allocation18 + $0x218] sm:$0xff]
    %v8536 = vld [vmem:[#allocation18 + $0x220] sm:$0xff]
    %v8537 = vld [vmem:[#allocation18 + $0x228] sm:$0xff]
    %v8538 = vld [vmem:[#allocation18 + $0x230] sm:$0xff]
    %v8539 = vld [vmem:[#allocation18 + $0x238] sm:$0xff]
    %v8540 = vld [vmem:[#allocation18 + $0x240] sm:$0xff]
    %v8541 = vld [vmem:[#allocation18 + $0x248] sm:$0xff]
    %v8542 = vld [vmem:[#allocation18 + $0x250] sm:$0xff]
    %v8543 = vld [vmem:[#allocation18 + $0x258] sm:$0xff]
    %v8544 = vld [vmem:[#allocation18 + $0x260] sm:$0xff]
    %v8545 = vld [vmem:[#allocation18 + $0x268] sm:$0xff]
    %v8546 = vld [vmem:[#allocation18 + $0x270] sm:$0xff]
    %v8547 = vld [vmem:[#allocation18 + $0x278] sm:$0xff]
    %v8548 = vld [vmem:[#allocation18 + $0x280] sm:$0xff]
    %v8549 = vld [vmem:[#allocation18 + $0x288] sm:$0xff]
    %v8550 = vld [vmem:[#allocation18 + $0x290] sm:$0xff]
    %v8551 = vld [vmem:[#allocation18 + $0x298] sm:$0xff]
    %v8552 = vld [vmem:[#allocation18 + $0x2a0] sm:$0xff]
    %v8553 = vld [vmem:[#allocation18 + $0x2a8] sm:$0xff]
    %v8554 = vld [vmem:[#allocation18 + $0x2b0] sm:$0xff]
    %v8555 = vld [vmem:[#allocation18 + $0x2b8] sm:$0xff]
    %v8556 = vld [vmem:[#allocation18 + $0x2c0] sm:$0xff]
    %v8557 = vld [vmem:[#allocation18 + $0x2c8] sm:$0xff]
    %v8558 = vld [vmem:[#allocation18 + $0x2d0] sm:$0xff]
    %v8559 = vld [vmem:[#allocation18 + $0x2d8] sm:$0xff]
    %v8560 = vld [vmem:[#allocation18 + $0x2e0] sm:$0xff]
    %v8561 = vld [vmem:[#allocation18 + $0x2e8] sm:$0xff]
    %v8562 = vld [vmem:[#allocation18 + $0x2f0] sm:$0xff]
    %v8563 = vld [vmem:[#allocation18 + $0x2f8] sm:$0xff]
    %v8564 = vld [vmem:[#allocation18 + $0x300] sm:$0xff]
    %v8565 = vld [vmem:[#allocation18 + $0x308] sm:$0xff]
    %v8566 = vld [vmem:[#allocation18 + $0x310] sm:$0xff]
    %v8567 = vld [vmem:[#allocation18 + $0x318] sm:$0xff]
    %v8568 = vld [vmem:[#allocation18 + $0x320] sm:$0xff]
    %v8569 = vld [vmem:[#allocation18 + $0x328] sm:$0xff]
    %v8570 = vld [vmem:[#allocation18 + $0x330] sm:$0xff]
    %v8571 = vld [vmem:[#allocation18 + $0x338] sm:$0xff]
    %v8572 = vld [vmem:[#allocation18 + $0x340] sm:$0xff]
    %v8573 = vld [vmem:[#allocation18 + $0x348] sm:$0xff]
    %v8574 = vld [vmem:[#allocation18 + $0x350] sm:$0xff]
    %v8575 = vld [vmem:[#allocation18 + $0x358] sm:$0xff]
    %v8576 = vld [vmem:[#allocation18 + $0x360] sm:$0xff]
    %v8577 = vld [vmem:[#allocation18 + $0x368] sm:$0xff]
    %v8578 = vld [vmem:[#allocation18 + $0x370] sm:$0xff]
    %v8579 = vld [vmem:[#allocation18 + $0x378] sm:$0xff]
    %v8580 = vld [vmem:[#allocation18 + $0x380] sm:$0xff]
    %v8581 = vld [vmem:[#allocation18 + $0x388] sm:$0xff]
    %v8582 = vld [vmem:[#allocation18 + $0x390] sm:$0xff]
    %v8583 = vld [vmem:[#allocation18 + $0x398] sm:$0xff]
    %v8584 = vld [vmem:[#allocation18 + $0x3a0] sm:$0xff]
    %v8585 = vld [vmem:[#allocation18 + $0x3a8] sm:$0xff]
    %v8586 = vld [vmem:[#allocation18 + $0x3b0] sm:$0xff]
    %v8587 = vld [vmem:[#allocation18 + $0x3b8] sm:$0xff]
    %v8588 = vld [vmem:[#allocation18 + $0x3c0] sm:$0xff]
    %v8589 = vld [vmem:[#allocation18 + $0x3c8] sm:$0xff]
    %v8590 = vld [vmem:[#allocation18 + $0x3d0] sm:$0xff]
    %v8591 = vld [vmem:[#allocation18 + $0x3d8] sm:$0xff]
    %v8592 = vld [vmem:[#allocation18 + $0x3e0] sm:$0xff]
    %v8593 = vld [vmem:[#allocation18 + $0x3e8] sm:$0xff]
    %v8594 = vld [vmem:[#allocation18 + $0x3f0] sm:$0xff]
    %v8595 = vld [vmem:[#allocation18 + $0x3f8] sm:$0xff]
    %v8596 = vld [vmem:[#allocation18 + $0x400] sm:$0xff]
    %v8597 = vld [vmem:[#allocation18 + $0x408] sm:$0xff]
    %v8598 = vld [vmem:[#allocation18 + $0x410] sm:$0xff]
    %v8599 = vld [vmem:[#allocation18 + $0x418] sm:$0xff]
    %v8600 = vld [vmem:[#allocation18 + $0x420] sm:$0xff]
    %v8601 = vld [vmem:[#allocation18 + $0x428] sm:$0xff]
    %v8602 = vld [vmem:[#allocation18 + $0x430] sm:$0xff]
    %v8603 = vld [vmem:[#allocation18 + $0x438] sm:$0xff]
    %v8604 = vld [vmem:[#allocation18 + $0x440] sm:$0xff]
    %v8605 = vld [vmem:[#allocation18 + $0x448] sm:$0xff]
    %v8606 = vld [vmem:[#allocation18 + $0x450] sm:$0xff]
    %v8607 = vld [vmem:[#allocation18 + $0x458] sm:$0xff]
    %v8608 = vld [vmem:[#allocation18 + $0x460] sm:$0xff]
    %v8609 = vld [vmem:[#allocation18 + $0x468] sm:$0xff]
    %v8610 = vld [vmem:[#allocation18 + $0x470] sm:$0xff]
    %v8611 = vld [vmem:[#allocation18 + $0x478] sm:$0xff]
    %v8612 = vld [vmem:[#allocation18 + $0x480] sm:$0xff]
    %v8613 = vld [vmem:[#allocation18 + $0x488] sm:$0xff]
    %v8614 = vld [vmem:[#allocation18 + $0x490] sm:$0xff]
    %v8615 = vld [vmem:[#allocation18 + $0x498] sm:$0xff]
    %v8616 = vld [vmem:[#allocation18 + $0x4a0] sm:$0xff]
    %v8617 = vld [vmem:[#allocation18 + $0x4a8] sm:$0xff]
    %v8618 = vld [vmem:[#allocation18 + $0x4b0] sm:$0xff]
    %v8619 = vld [vmem:[#allocation18 + $0x4b8] sm:$0xff]
    %v8620 = vld [vmem:[#allocation18 + $0x4c0] sm:$0xff]
    %v8621 = vld [vmem:[#allocation18 + $0x4c8] sm:$0xff]
    %v8622 = vld [vmem:[#allocation18 + $0x4d0] sm:$0xff]
    %v8623 = vld [vmem:[#allocation18 + $0x4d8] sm:$0xff]
    %v8624 = vld [vmem:[#allocation18 + $0x4e0] sm:$0xff]
    %v8625 = vld [vmem:[#allocation18 + $0x4e8] sm:$0xff]
    %v8626 = vld [vmem:[#allocation18 + $0x4f0] sm:$0xff]
    %v8627 = vld [vmem:[#allocation18 + $0x4f8] sm:$0xff]
    %v8628 = vld [vmem:[#allocation18 + $0x500] sm:$0xff]
    %v8629 = vld [vmem:[#allocation18 + $0x508] sm:$0xff]
    %v8630 = vld [vmem:[#allocation18 + $0x510] sm:$0xff]
    %v8631 = vld [vmem:[#allocation18 + $0x518] sm:$0xff]
    %v8632 = vld [vmem:[#allocation18 + $0x520] sm:$0xff]
    %v8633 = vld [vmem:[#allocation18 + $0x528] sm:$0xff]
    %v8634 = vld [vmem:[#allocation18 + $0x530] sm:$0xff]
    %v8635 = vld [vmem:[#allocation18 + $0x538] sm:$0xff]
    %v8636 = vld [vmem:[#allocation18 + $0x540] sm:$0xff]
    %v8637 = vld [vmem:[#allocation18 + $0x548] sm:$0xff]
    %v8638 = vld [vmem:[#allocation18 + $0x550] sm:$0xff]
    %v8639 = vld [vmem:[#allocation18 + $0x558] sm:$0xff]
    %v8640 = vld [vmem:[#allocation18 + $0x560] sm:$0xff]
    %v8641 = vld [vmem:[#allocation18 + $0x568] sm:$0xff]
    %v8642 = vld [vmem:[#allocation18 + $0x570] sm:$0xff]
    %v8643 = vld [vmem:[#allocation18 + $0x578] sm:$0xff]
    %v8644 = vld [vmem:[#allocation18 + $0x580] sm:$0xff]
    %v8645 = vld [vmem:[#allocation18 + $0x588] sm:$0xff]
    %v8646 = vld [vmem:[#allocation18 + $0x590] sm:$0xff]
    %v8647 = vld [vmem:[#allocation18 + $0x598] sm:$0xff]
    %v8648 = vld [vmem:[#allocation18 + $0x5a0] sm:$0xff]
    %v8649 = vld [vmem:[#allocation18 + $0x5a8] sm:$0xff]
    %v8650 = vld [vmem:[#allocation18 + $0x5b0] sm:$0xff]
    %v8651 = vld [vmem:[#allocation18 + $0x5b8] sm:$0xff]
    %v8652 = vld [vmem:[#allocation18 + $0x5c0] sm:$0xff]
    %v8653 = vld [vmem:[#allocation18 + $0x5c8] sm:$0xff]
    %v8654 = vld [vmem:[#allocation18 + $0x5d0] sm:$0xff]
    %v8655 = vld [vmem:[#allocation18 + $0x5d8] sm:$0xff]
    %v8656 = vld [vmem:[#allocation18 + $0x5e0] sm:$0xff]
    %v8657 = vld [vmem:[#allocation18 + $0x5e8] sm:$0xff]
    %v8658 = vld [vmem:[#allocation18 + $0x5f0] sm:$0xff]
    %v8659 = vld [vmem:[#allocation18 + $0x5f8] sm:$0xff]
    %v8660 = vld [vmem:[#allocation18 + $0x600] sm:$0xff]
    %v8661 = vld [vmem:[#allocation18 + $0x608] sm:$0xff]
    %v8662 = vld [vmem:[#allocation18 + $0x610] sm:$0xff]
    %v8663 = vld [vmem:[#allocation18 + $0x618] sm:$0xff]
    %v8664 = vld [vmem:[#allocation18 + $0x620] sm:$0xff]
    %v8665 = vld [vmem:[#allocation18 + $0x628] sm:$0xff]
    %v8666 = vld [vmem:[#allocation18 + $0x630] sm:$0xff]
    %v8667 = vld [vmem:[#allocation18 + $0x638] sm:$0xff]
    %v8668 = vld [vmem:[#allocation18 + $0x640] sm:$0xff]
    %v8669 = vld [vmem:[#allocation18 + $0x648] sm:$0xff]
    %v8670 = vld [vmem:[#allocation18 + $0x650] sm:$0xff]
    %v8671 = vld [vmem:[#allocation18 + $0x658] sm:$0xff]
    %v8672 = vld [vmem:[#allocation18 + $0x660] sm:$0xff]
    %v8673 = vld [vmem:[#allocation18 + $0x668] sm:$0xff]
    %v8674 = vld [vmem:[#allocation18 + $0x670] sm:$0xff]
    %v8675 = vld [vmem:[#allocation18 + $0x678] sm:$0xff]
    %v8676 = vld [vmem:[#allocation18 + $0x680] sm:$0xff]
    %v8677 = vld [vmem:[#allocation18 + $0x688] sm:$0xff]
    %v8678 = vld [vmem:[#allocation18 + $0x690] sm:$0xff]
    %v8679 = vld [vmem:[#allocation18 + $0x698] sm:$0xff]
    %v8680 = vld [vmem:[#allocation18 + $0x6a0] sm:$0xff]
    %v8681 = vld [vmem:[#allocation18 + $0x6a8] sm:$0xff]
    %v8682 = vld [vmem:[#allocation18 + $0x6b0] sm:$0xff]
    %v8683 = vld [vmem:[#allocation18 + $0x6b8] sm:$0xff]
    %v8684 = vld [vmem:[#allocation18 + $0x6c0] sm:$0xff]
    %v8685 = vld [vmem:[#allocation18 + $0x6c8] sm:$0xff]
    %v8686 = vld [vmem:[#allocation18 + $0x6d0] sm:$0xff]
    %v8687 = vld [vmem:[#allocation18 + $0x6d8] sm:$0xff]
    %v8688 = vld [vmem:[#allocation18 + $0x6e0] sm:$0xff]
    %v8689 = vld [vmem:[#allocation18 + $0x6e8] sm:$0xff]
    %v8690 = vld [vmem:[#allocation18 + $0x6f0] sm:$0xff]
    %v8691 = vld [vmem:[#allocation18 + $0x6f8] sm:$0xff]
    %v8692 = vld [vmem:[#allocation18 + $0x700] sm:$0xff]
    %v8693 = vld [vmem:[#allocation18 + $0x708] sm:$0xff]
    %v8694 = vld [vmem:[#allocation18 + $0x710] sm:$0xff]
    %v8695 = vld [vmem:[#allocation18 + $0x718] sm:$0xff]
    %v8696 = vld [vmem:[#allocation18 + $0x720] sm:$0xff]
    %v8697 = vld [vmem:[#allocation18 + $0x728] sm:$0xff]
    %v8698 = vld [vmem:[#allocation18 + $0x730] sm:$0xff]
    %v8699 = vld [vmem:[#allocation18 + $0x738] sm:$0xff]
    %v8700 = vld [vmem:[#allocation18 + $0x740] sm:$0xff]
    %v8701 = vld [vmem:[#allocation18 + $0x748] sm:$0xff]
    %v8702 = vld [vmem:[#allocation18 + $0x750] sm:$0xff]
    %v8703 = vld [vmem:[#allocation18 + $0x758] sm:$0xff]
    %v8704 = vld [vmem:[#allocation18 + $0x760] sm:$0xff]
    %v8705 = vld [vmem:[#allocation18 + $0x768] sm:$0xff]
    %v8706 = vld [vmem:[#allocation18 + $0x770] sm:$0xff]
    %v8707 = vld [vmem:[#allocation18 + $0x778] sm:$0xff]
    %v8708 = vld [vmem:[#allocation18 + $0x780] sm:$0xff]
    %v8709 = vld [vmem:[#allocation18 + $0x788] sm:$0xff]
    %v8710 = vld [vmem:[#allocation18 + $0x790] sm:$0xff]
    %v8711 = vld [vmem:[#allocation18 + $0x798] sm:$0xff]
    %v8712 = vld [vmem:[#allocation18 + $0x7a0] sm:$0xff]
    %v8713 = vld [vmem:[#allocation18 + $0x7a8] sm:$0xff]
    %v8714 = vld [vmem:[#allocation18 + $0x7b0] sm:$0xff]
    %v8715 = vld [vmem:[#allocation18 + $0x7b8] sm:$0xff]
    %v8716 = vld [vmem:[#allocation18 + $0x7c0] sm:$0xff]
    %v8717 = vld [vmem:[#allocation18 + $0x7c8] sm:$0xff]
    %v8718 = vld [vmem:[#allocation18 + $0x7d0] sm:$0xff]
    %v8719 = vld [vmem:[#allocation18 + $0x7d8] sm:$0xff]
    %v8720 = vld [vmem:[#allocation18 + $0x7e0] sm:$0xff]
    %v8721 = vld [vmem:[#allocation18 + $0x7e8] sm:$0xff]
    %v8722 = vld [vmem:[#allocation18 + $0x7f0] sm:$0xff]
    %v8723 = vld [vmem:[#allocation18 + $0x7f8] sm:$0xff]
    %v8724 = vld [vmem:[#allocation18 + $0x800] sm:$0xff]
    %v8725 = vld [vmem:[#allocation18 + $0x808] sm:$0xff]
    %v8726 = vld [vmem:[#allocation18 + $0x810] sm:$0xff]
    %v8727 = vld [vmem:[#allocation18 + $0x818] sm:$0xff]
    %v8728 = vld [vmem:[#allocation18 + $0x820] sm:$0xff]
    %v8729 = vld [vmem:[#allocation18 + $0x828] sm:$0xff]
    %v8730 = vld [vmem:[#allocation18 + $0x830] sm:$0xff]
    %v8731 = vld [vmem:[#allocation18 + $0x838] sm:$0xff]
    %v8732 = vld [vmem:[#allocation18 + $0x840] sm:$0xff]
    %v8733 = vld [vmem:[#allocation18 + $0x848] sm:$0xff]
    %v8734 = vld [vmem:[#allocation18 + $0x850] sm:$0xff]
    %v8735 = vld [vmem:[#allocation18 + $0x858] sm:$0xff]
    %v8736 = vld [vmem:[#allocation18 + $0x860] sm:$0xff]
    %v8737 = vld [vmem:[#allocation18 + $0x868] sm:$0xff]
    %v8738 = vld [vmem:[#allocation18 + $0x870] sm:$0xff]
    %v8739 = vld [vmem:[#allocation18 + $0x878] sm:$0xff]
    %v8740 = vld [vmem:[#allocation18 + $0x880] sm:$0xff]
    %v8741 = vld [vmem:[#allocation18 + $0x888] sm:$0xff]
    %v8742 = vld [vmem:[#allocation18 + $0x890] sm:$0xff]
    %v8743 = vld [vmem:[#allocation18 + $0x898] sm:$0xff]
    %v8744 = vld [vmem:[#allocation18 + $0x8a0] sm:$0xff]
    %v8745 = vld [vmem:[#allocation18 + $0x8a8] sm:$0xff]
    %v8746 = vld [vmem:[#allocation18 + $0x8b0] sm:$0xff]
    %v8747 = vld [vmem:[#allocation18 + $0x8b8] sm:$0xff]
    %v8748 = vld [vmem:[#allocation18 + $0x8c0] sm:$0xff]
    %v8749 = vld [vmem:[#allocation18 + $0x8c8] sm:$0xff]
    %v8750 = vld [vmem:[#allocation18 + $0x8d0] sm:$0xff]
    %v8751 = vld [vmem:[#allocation18 + $0x8d8] sm:$0xff]
    %v8752 = vld [vmem:[#allocation18 + $0x8e0] sm:$0xff]
    %v8753 = vld [vmem:[#allocation18 + $0x8e8] sm:$0xff]
    %v8754 = vld [vmem:[#allocation18 + $0x8f0] sm:$0xff]
    %v8755 = vld [vmem:[#allocation18 + $0x8f8] sm:$0xff]
    %v8756 = vld [vmem:[#allocation20] sm:$0x3f]
    %v8758 = vperm.slane %v8756, 0
    %v8759 = vperm.slane %v8756, 1
    %v8760 = vperm.slane %v8756, 2
    %v8761 = vperm.slane %v8756, 3
    %v8762 = vperm.slane %v8756, 4
    %v8763 = vperm.slane %v8756, 5
    %v8776 = vunpack.c.l.b16 %v8462
    %v8777 = vunpack.c.h.b16 %v8462
    %v8778 = vunpack.c.l.b16 %v8463
    %v8779 = vunpack.c.h.b16 %v8463
    %v8780 = vunpack.c.l.b16 %v8464
    %v8781 = vunpack.c.h.b16 %v8464
    %v8782 = vunpack.c.l.b16 %v8465
    %v8783 = vunpack.c.h.b16 %v8465
    %v8784 = vunpack.c.l.b16 %v8466
    %v8785 = vunpack.c.h.b16 %v8466
    %v8786 = vunpack.c.l.b16 %v8467
    %v8787 = vunpack.c.h.b16 %v8467
    %v8788 = vpack.c.b16 %v8782, %v8776
    %v8789 = vpack.c.b16 %v8783, %v8777
    %v8790 = vpack.c.b16 %v8784, %v8778
    %v8791 = vpack.c.b16 %v8785, %v8779
    %v8792 = vpack.c.b16 %v8786, %v8780
    %v8793 = vpack.c.b16 %v8787, %v8781
    %v9088 = vunpack.c.l.b16 %v8468
    %v9089 = vunpack.c.h.b16 %v8468
    %v9090 = vunpack.c.l.b16 %v8469
    %v9091 = vunpack.c.h.b16 %v8469
    %v9092 = vunpack.c.l.b16 %v8470
    %v9093 = vunpack.c.h.b16 %v8470
    %v9094 = vunpack.c.l.b16 %v8471
    %v9095 = vunpack.c.h.b16 %v8471
    %v9096 = vunpack.c.l.b16 %v8472
    %v9097 = vunpack.c.h.b16 %v8472
    %v9098 = vunpack.c.l.b16 %v8473
    %v9099 = vunpack.c.h.b16 %v8473
    %v9100 = vunpack.c.l.b16 %v8474
    %v9101 = vunpack.c.h.b16 %v8474
    %v9102 = vunpack.c.l.b16 %v8475
    %v9103 = vunpack.c.h.b16 %v8475
    %v9104 = vunpack.c.l.b16 %v8476
    %v9105 = vunpack.c.h.b16 %v8476
    %v9106 = vunpack.c.l.b16 %v8477
    %v9107 = vunpack.c.h.b16 %v8477
    %v9108 = vunpack.c.l.b16 %v8478
    %v9109 = vunpack.c.h.b16 %v8478
    %v9110 = vunpack.c.l.b16 %v8479
    %v9111 = vunpack.c.h.b16 %v8479
    %v9112 = vunpack.c.l.b16 %v8480
    %v9113 = vunpack.c.h.b16 %v8480
    %v9114 = vunpack.c.l.b16 %v8481
    %v9115 = vunpack.c.h.b16 %v8481
    %v9116 = vunpack.c.l.b16 %v8482
    %v9117 = vunpack.c.h.b16 %v8482
    %v9118 = vunpack.c.l.b16 %v8483
    %v9119 = vunpack.c.h.b16 %v8483
    %v9120 = vunpack.c.l.b16 %v8484
    %v9121 = vunpack.c.h.b16 %v8484
    %v9122 = vunpack.c.l.b16 %v8485
    %v9123 = vunpack.c.h.b16 %v8485
    %v9124 = vunpack.c.l.b16 %v8486
    %v9125 = vunpack.c.h.b16 %v8486
    %v9126 = vunpack.c.l.b16 %v8487
    %v9127 = vunpack.c.h.b16 %v8487
    %v9128 = vunpack.c.l.b16 %v8488
    %v9129 = vunpack.c.h.b16 %v8488
    %v9130 = vunpack.c.l.b16 %v8489
    %v9131 = vunpack.c.h.b16 %v8489
    %v9132 = vunpack.c.l.b16 %v8490
    %v9133 = vunpack.c.h.b16 %v8490
    %v9134 = vunpack.c.l.b16 %v8491
    %v9135 = vunpack.c.h.b16 %v8491
    %v9136 = vunpack.c.l.b16 %v8492
    %v9137 = vunpack.c.h.b16 %v8492
    %v9138 = vunpack.c.l.b16 %v8493
    %v9139 = vunpack.c.h.b16 %v8493
    %v9140 = vunpack.c.l.b16 %v8494
    %v9141 = vunpack.c.h.b16 %v8494
    %v9142 = vunpack.c.l.b16 %v8495
    %v9143 = vunpack.c.h.b16 %v8495
    %v9144 = vunpack.c.l.b16 %v8496
    %v9145 = vunpack.c.h.b16 %v8496
    %v9146 = vunpack.c.l.b16 %v8497
    %v9147 = vunpack.c.h.b16 %v8497
    %v9148 = vunpack.c.l.b16 %v8498
    %v9149 = vunpack.c.h.b16 %v8498
    %v9150 = vunpack.c.l.b16 %v8499
    %v9151 = vunpack.c.h.b16 %v8499
    %v9152 = vunpack.c.l.b16 %v8500
    %v9153 = vunpack.c.h.b16 %v8500
    %v9154 = vunpack.c.l.b16 %v8501
    %v9155 = vunpack.c.h.b16 %v8501
    %v9156 = vunpack.c.l.b16 %v8502
    %v9157 = vunpack.c.h.b16 %v8502
    %v9158 = vunpack.c.l.b16 %v8503
    %v9159 = vunpack.c.h.b16 %v8503
    %v9160 = vunpack.c.l.b16 %v8504
    %v9161 = vunpack.c.h.b16 %v8504
    %v9162 = vunpack.c.l.b16 %v8505
    %v9163 = vunpack.c.h.b16 %v8505
    %v9164 = vunpack.c.l.b16 %v8506
    %v9165 = vunpack.c.h.b16 %v8506
    %v9166 = vunpack.c.l.b16 %v8507
    %v9167 = vunpack.c.h.b16 %v8507
    %v9168 = vunpack.c.l.b16 %v8508
    %v9169 = vunpack.c.h.b16 %v8508
    %v9170 = vunpack.c.l.b16 %v8509
    %v9171 = vunpack.c.h.b16 %v8509
    %v9172 = vunpack.c.l.b16 %v8510
    %v9173 = vunpack.c.h.b16 %v8510
    %v9174 = vunpack.c.l.b16 %v8511
    %v9175 = vunpack.c.h.b16 %v8511
    %v9176 = vunpack.c.l.b16 %v8512
    %v9177 = vunpack.c.h.b16 %v8512
    %v9178 = vunpack.c.l.b16 %v8513
    %v9179 = vunpack.c.h.b16 %v8513
    %v9180 = vunpack.c.l.b16 %v8514
    %v9181 = vunpack.c.h.b16 %v8514
    %v9182 = vunpack.c.l.b16 %v8515
    %v9183 = vunpack.c.h.b16 %v8515
    %v9184 = vunpack.c.l.b16 %v8516
    %v9185 = vunpack.c.h.b16 %v8516
    %v9186 = vunpack.c.l.b16 %v8517
    %v9187 = vunpack.c.h.b16 %v8517
    %v9188 = vunpack.c.l.b16 %v8518
    %v9189 = vunpack.c.h.b16 %v8518
    %v9190 = vunpack.c.l.b16 %v8519
    %v9191 = vunpack.c.h.b16 %v8519
    %v9192 = vunpack.c.l.b16 %v8520
    %v9193 = vunpack.c.h.b16 %v8520
    %v9194 = vunpack.c.l.b16 %v8521
    %v9195 = vunpack.c.h.b16 %v8521
    %v9196 = vunpack.c.l.b16 %v8522
    %v9197 = vunpack.c.h.b16 %v8522
    %v9198 = vunpack.c.l.b16 %v8523
    %v9199 = vunpack.c.h.b16 %v8523
    %v9200 = vunpack.c.l.b16 %v8524
    %v9201 = vunpack.c.h.b16 %v8524
    %v9202 = vunpack.c.l.b16 %v8525
    %v9203 = vunpack.c.h.b16 %v8525
    %v9204 = vunpack.c.l.b16 %v8526
    %v9205 = vunpack.c.h.b16 %v8526
    %v9206 = vunpack.c.l.b16 %v8527
    %v9207 = vunpack.c.h.b16 %v8527
    %v9208 = vunpack.c.l.b16 %v8528
    %v9209 = vunpack.c.h.b16 %v8528
    %v9210 = vunpack.c.l.b16 %v8529
    %v9211 = vunpack.c.h.b16 %v8529
    %v9212 = vunpack.c.l.b16 %v8530
    %v9213 = vunpack.c.h.b16 %v8530
    %v9214 = vunpack.c.l.b16 %v8531
    %v9215 = vunpack.c.h.b16 %v8531
    %v9216 = vunpack.c.l.b16 %v8532
    %v9217 = vunpack.c.h.b16 %v8532
    %v9218 = vunpack.c.l.b16 %v8533
    %v9219 = vunpack.c.h.b16 %v8533
    %v9220 = vunpack.c.l.b16 %v8534
    %v9221 = vunpack.c.h.b16 %v8534
    %v9222 = vunpack.c.l.b16 %v8535
    %v9223 = vunpack.c.h.b16 %v8535
    %v9224 = vunpack.c.l.b16 %v8536
    %v9225 = vunpack.c.h.b16 %v8536
    %v9226 = vunpack.c.l.b16 %v8537
    %v9227 = vunpack.c.h.b16 %v8537
    %v9228 = vunpack.c.l.b16 %v8538
    %v9229 = vunpack.c.h.b16 %v8538
    %v9230 = vunpack.c.l.b16 %v8539
    %v9231 = vunpack.c.h.b16 %v8539
    %v9232 = vunpack.c.l.b16 %v8540
    %v9233 = vunpack.c.h.b16 %v8540
    %v9234 = vunpack.c.l.b16 %v8541
    %v9235 = vunpack.c.h.b16 %v8541
    %v9236 = vunpack.c.l.b16 %v8542
    %v9237 = vunpack.c.h.b16 %v8542
    %v9238 = vunpack.c.l.b16 %v8543
    %v9239 = vunpack.c.h.b16 %v8543
    %v9240 = vunpack.c.l.b16 %v8544
    %v9241 = vunpack.c.h.b16 %v8544
    %v9242 = vunpack.c.l.b16 %v8545
    %v9243 = vunpack.c.h.b16 %v8545
    %v9244 = vunpack.c.l.b16 %v8546
    %v9245 = vunpack.c.h.b16 %v8546
    %v9246 = vunpack.c.l.b16 %v8547
    %v9247 = vunpack.c.h.b16 %v8547
    %v9248 = vunpack.c.l.b16 %v8548
    %v9249 = vunpack.c.h.b16 %v8548
    %v9250 = vunpack.c.l.b16 %v8549
    %v9251 = vunpack.c.h.b16 %v8549
    %v9252 = vunpack.c.l.b16 %v8550
    %v9253 = vunpack.c.h.b16 %v8550
    %v9254 = vunpack.c.l.b16 %v8551
    %v9255 = vunpack.c.h.b16 %v8551
    %v9256 = vunpack.c.l.b16 %v8552
    %v9257 = vunpack.c.h.b16 %v8552
    %v9258 = vunpack.c.l.b16 %v8553
    %v9259 = vunpack.c.h.b16 %v8553
    %v9260 = vunpack.c.l.b16 %v8554
    %v9261 = vunpack.c.h.b16 %v8554
    %v9262 = vunpack.c.l.b16 %v8555
    %v9263 = vunpack.c.h.b16 %v8555
    %v9264 = vunpack.c.l.b16 %v8556
    %v9265 = vunpack.c.h.b16 %v8556
    %v9266 = vunpack.c.l.b16 %v8557
    %v9267 = vunpack.c.h.b16 %v8557
    %v9268 = vunpack.c.l.b16 %v8558
    %v9269 = vunpack.c.h.b16 %v8558
    %v9270 = vunpack.c.l.b16 %v8559
    %v9271 = vunpack.c.h.b16 %v8559
    %v9272 = vunpack.c.l.b16 %v8560
    %v9273 = vunpack.c.h.b16 %v8560
    %v9274 = vunpack.c.l.b16 %v8561
    %v9275 = vunpack.c.h.b16 %v8561
    %v9276 = vunpack.c.l.b16 %v8562
    %v9277 = vunpack.c.h.b16 %v8562
    %v9278 = vunpack.c.l.b16 %v8563
    %v9279 = vunpack.c.h.b16 %v8563
    %v9280 = vunpack.c.l.b16 %v8564
    %v9281 = vunpack.c.h.b16 %v8564
    %v9282 = vunpack.c.l.b16 %v8565
    %v9283 = vunpack.c.h.b16 %v8565
    %v9284 = vunpack.c.l.b16 %v8566
    %v9285 = vunpack.c.h.b16 %v8566
    %v9286 = vunpack.c.l.b16 %v8567
    %v9287 = vunpack.c.h.b16 %v8567
    %v9288 = vunpack.c.l.b16 %v8568
    %v9289 = vunpack.c.h.b16 %v8568
    %v9290 = vunpack.c.l.b16 %v8569
    %v9291 = vunpack.c.h.b16 %v8569
    %v9292 = vunpack.c.l.b16 %v8570
    %v9293 = vunpack.c.h.b16 %v8570
    %v9294 = vunpack.c.l.b16 %v8571
    %v9295 = vunpack.c.h.b16 %v8571
    %v9296 = vunpack.c.l.b16 %v8572
    %v9297 = vunpack.c.h.b16 %v8572
    %v9298 = vunpack.c.l.b16 %v8573
    %v9299 = vunpack.c.h.b16 %v8573
    %v9300 = vunpack.c.l.b16 %v8574
    %v9301 = vunpack.c.h.b16 %v8574
    %v9302 = vunpack.c.l.b16 %v8575
    %v9303 = vunpack.c.h.b16 %v8575
    %v9304 = vunpack.c.l.b16 %v8576
    %v9305 = vunpack.c.h.b16 %v8576
    %v9306 = vunpack.c.l.b16 %v8577
    %v9307 = vunpack.c.h.b16 %v8577
    %v9308 = vunpack.c.l.b16 %v8578
    %v9309 = vunpack.c.h.b16 %v8578
    %v9310 = vunpack.c.l.b16 %v8579
    %v9311 = vunpack.c.h.b16 %v8579
    %v9312 = vunpack.c.l.b16 %v8580
    %v9313 = vunpack.c.h.b16 %v8580
    %v9314 = vunpack.c.l.b16 %v8581
    %v9315 = vunpack.c.h.b16 %v8581
    %v9316 = vunpack.c.l.b16 %v8582
    %v9317 = vunpack.c.h.b16 %v8582
    %v9318 = vunpack.c.l.b16 %v8583
    %v9319 = vunpack.c.h.b16 %v8583
    %v9320 = vunpack.c.l.b16 %v8584
    %v9321 = vunpack.c.h.b16 %v8584
    %v9322 = vunpack.c.l.b16 %v8585
    %v9323 = vunpack.c.h.b16 %v8585
    %v9324 = vunpack.c.l.b16 %v8586
    %v9325 = vunpack.c.h.b16 %v8586
    %v9326 = vunpack.c.l.b16 %v8587
    %v9327 = vunpack.c.h.b16 %v8587
    %v9328 = vunpack.c.l.b16 %v8588
    %v9329 = vunpack.c.h.b16 %v8588
    %v9330 = vunpack.c.l.b16 %v8589
    %v9331 = vunpack.c.h.b16 %v8589
    %v9332 = vunpack.c.l.b16 %v8590
    %v9333 = vunpack.c.h.b16 %v8590
    %v9334 = vunpack.c.l.b16 %v8591
    %v9335 = vunpack.c.h.b16 %v8591
    %v9336 = vunpack.c.l.b16 %v8592
    %v9337 = vunpack.c.h.b16 %v8592
    %v9338 = vunpack.c.l.b16 %v8593
    %v9339 = vunpack.c.h.b16 %v8593
    %v9340 = vunpack.c.l.b16 %v8594
    %v9341 = vunpack.c.h.b16 %v8594
    %v9342 = vunpack.c.l.b16 %v8595
    %v9343 = vunpack.c.h.b16 %v8595
    %v9344 = vunpack.c.l.b16 %v8596
    %v9345 = vunpack.c.h.b16 %v8596
    %v9346 = vunpack.c.l.b16 %v8597
    %v9347 = vunpack.c.h.b16 %v8597
    %v9348 = vunpack.c.l.b16 %v8598
    %v9349 = vunpack.c.h.b16 %v8598
    %v9350 = vunpack.c.l.b16 %v8599
    %v9351 = vunpack.c.h.b16 %v8599
    %v9352 = vunpack.c.l.b16 %v8600
    %v9353 = vunpack.c.h.b16 %v8600
    %v9354 = vunpack.c.l.b16 %v8601
    %v9355 = vunpack.c.h.b16 %v8601
    %v9356 = vunpack.c.l.b16 %v8602
    %v9357 = vunpack.c.h.b16 %v8602
    %v9358 = vunpack.c.l.b16 %v8603
    %v9359 = vunpack.c.h.b16 %v8603
    %v9360 = vunpack.c.l.b16 %v8604
    %v9361 = vunpack.c.h.b16 %v8604
    %v9362 = vunpack.c.l.b16 %v8605
    %v9363 = vunpack.c.h.b16 %v8605
    %v9364 = vunpack.c.l.b16 %v8606
    %v9365 = vunpack.c.h.b16 %v8606
    %v9366 = vunpack.c.l.b16 %v8607
    %v9367 = vunpack.c.h.b16 %v8607
    %v9368 = vunpack.c.l.b16 %v8608
    %v9369 = vunpack.c.h.b16 %v8608
    %v9370 = vunpack.c.l.b16 %v8609
    %v9371 = vunpack.c.h.b16 %v8609
    %v9372 = vunpack.c.l.b16 %v8610
    %v9373 = vunpack.c.h.b16 %v8610
    %v9374 = vunpack.c.l.b16 %v8611
    %v9375 = vunpack.c.h.b16 %v8611
    %v9376 = vunpack.c.l.b16 %v8612
    %v9377 = vunpack.c.h.b16 %v8612
    %v9378 = vunpack.c.l.b16 %v8613
    %v9379 = vunpack.c.h.b16 %v8613
    %v9380 = vunpack.c.l.b16 %v8614
    %v9381 = vunpack.c.h.b16 %v8614
    %v9382 = vunpack.c.l.b16 %v8615
    %v9383 = vunpack.c.h.b16 %v8615
    %v9384 = vunpack.c.l.b16 %v8616
    %v9385 = vunpack.c.h.b16 %v8616
    %v9386 = vunpack.c.l.b16 %v8617
    %v9387 = vunpack.c.h.b16 %v8617
    %v9388 = vunpack.c.l.b16 %v8618
    %v9389 = vunpack.c.h.b16 %v8618
    %v9390 = vunpack.c.l.b16 %v8619
    %v9391 = vunpack.c.h.b16 %v8619
    %v9392 = vunpack.c.l.b16 %v8620
    %v9393 = vunpack.c.h.b16 %v8620
    %v9394 = vunpack.c.l.b16 %v8621
    %v9395 = vunpack.c.h.b16 %v8621
    %v9396 = vunpack.c.l.b16 %v8622
    %v9397 = vunpack.c.h.b16 %v8622
    %v9398 = vunpack.c.l.b16 %v8623
    %v9399 = vunpack.c.h.b16 %v8623
    %v9400 = vunpack.c.l.b16 %v8624
    %v9401 = vunpack.c.h.b16 %v8624
    %v9402 = vunpack.c.l.b16 %v8625
    %v9403 = vunpack.c.h.b16 %v8625
    %v9404 = vunpack.c.l.b16 %v8626
    %v9405 = vunpack.c.h.b16 %v8626
    %v9406 = vunpack.c.l.b16 %v8627
    %v9407 = vunpack.c.h.b16 %v8627
    %v9408 = vunpack.c.l.b16 %v8628
    %v9409 = vunpack.c.h.b16 %v8628
    %v9410 = vunpack.c.l.b16 %v8629
    %v9411 = vunpack.c.h.b16 %v8629
    %v9412 = vunpack.c.l.b16 %v8630
    %v9413 = vunpack.c.h.b16 %v8630
    %v9414 = vunpack.c.l.b16 %v8631
    %v9415 = vunpack.c.h.b16 %v8631
    %v9416 = vunpack.c.l.b16 %v8632
    %v9417 = vunpack.c.h.b16 %v8632
    %v9418 = vunpack.c.l.b16 %v8633
    %v9419 = vunpack.c.h.b16 %v8633
    %v9420 = vunpack.c.l.b16 %v8634
    %v9421 = vunpack.c.h.b16 %v8634
    %v9422 = vunpack.c.l.b16 %v8635
    %v9423 = vunpack.c.h.b16 %v8635
    %v9424 = vunpack.c.l.b16 %v8636
    %v9425 = vunpack.c.h.b16 %v8636
    %v9426 = vunpack.c.l.b16 %v8637
    %v9427 = vunpack.c.h.b16 %v8637
    %v9428 = vunpack.c.l.b16 %v8638
    %v9429 = vunpack.c.h.b16 %v8638
    %v9430 = vunpack.c.l.b16 %v8639
    %v9431 = vunpack.c.h.b16 %v8639
    %v9432 = vunpack.c.l.b16 %v8640
    %v9433 = vunpack.c.h.b16 %v8640
    %v9434 = vunpack.c.l.b16 %v8641
    %v9435 = vunpack.c.h.b16 %v8641
    %v9436 = vunpack.c.l.b16 %v8642
    %v9437 = vunpack.c.h.b16 %v8642
    %v9438 = vunpack.c.l.b16 %v8643
    %v9439 = vunpack.c.h.b16 %v8643
    %v9440 = vunpack.c.l.b16 %v8644
    %v9441 = vunpack.c.h.b16 %v8644
    %v9442 = vunpack.c.l.b16 %v8645
    %v9443 = vunpack.c.h.b16 %v8645
    %v9444 = vunpack.c.l.b16 %v8646
    %v9445 = vunpack.c.h.b16 %v8646
    %v9446 = vunpack.c.l.b16 %v8647
    %v9447 = vunpack.c.h.b16 %v8647
    %v9448 = vunpack.c.l.b16 %v8648
    %v9449 = vunpack.c.h.b16 %v8648
    %v9450 = vunpack.c.l.b16 %v8649
    %v9451 = vunpack.c.h.b16 %v8649
    %v9452 = vunpack.c.l.b16 %v8650
    %v9453 = vunpack.c.h.b16 %v8650
    %v9454 = vunpack.c.l.b16 %v8651
    %v9455 = vunpack.c.h.b16 %v8651
    %v9456 = vunpack.c.l.b16 %v8652
    %v9457 = vunpack.c.h.b16 %v8652
    %v9458 = vunpack.c.l.b16 %v8653
    %v9459 = vunpack.c.h.b16 %v8653
    %v9460 = vunpack.c.l.b16 %v8654
    %v9461 = vunpack.c.h.b16 %v8654
    %v9462 = vunpack.c.l.b16 %v8655
    %v9463 = vunpack.c.h.b16 %v8655
    %v9464 = vunpack.c.l.b16 %v8656
    %v9465 = vunpack.c.h.b16 %v8656
    %v9466 = vunpack.c.l.b16 %v8657
    %v9467 = vunpack.c.h.b16 %v8657
    %v9468 = vunpack.c.l.b16 %v8658
    %v9469 = vunpack.c.h.b16 %v8658
    %v9470 = vunpack.c.l.b16 %v8659
    %v9471 = vunpack.c.h.b16 %v8659
    %v9472 = vunpack.c.l.b16 %v8660
    %v9473 = vunpack.c.h.b16 %v8660
    %v9474 = vunpack.c.l.b16 %v8661
    %v9475 = vunpack.c.h.b16 %v8661
    %v9476 = vunpack.c.l.b16 %v8662
    %v9477 = vunpack.c.h.b16 %v8662
    %v9478 = vunpack.c.l.b16 %v8663
    %v9479 = vunpack.c.h.b16 %v8663
    %v9480 = vunpack.c.l.b16 %v8664
    %v9481 = vunpack.c.h.b16 %v8664
    %v9482 = vunpack.c.l.b16 %v8665
    %v9483 = vunpack.c.h.b16 %v8665
    %v9484 = vunpack.c.l.b16 %v8666
    %v9485 = vunpack.c.h.b16 %v8666
    %v9486 = vunpack.c.l.b16 %v8667
    %v9487 = vunpack.c.h.b16 %v8667
    %v9488 = vunpack.c.l.b16 %v8668
    %v9489 = vunpack.c.h.b16 %v8668
    %v9490 = vunpack.c.l.b16 %v8669
    %v9491 = vunpack.c.h.b16 %v8669
    %v9492 = vunpack.c.l.b16 %v8670
    %v9493 = vunpack.c.h.b16 %v8670
    %v9494 = vunpack.c.l.b16 %v8671
    %v9495 = vunpack.c.h.b16 %v8671
    %v9496 = vunpack.c.l.b16 %v8672
    %v9497 = vunpack.c.h.b16 %v8672
    %v9498 = vunpack.c.l.b16 %v8673
    %v9499 = vunpack.c.h.b16 %v8673
    %v9500 = vunpack.c.l.b16 %v8674
    %v9501 = vunpack.c.h.b16 %v8674
    %v9502 = vunpack.c.l.b16 %v8675
    %v9503 = vunpack.c.h.b16 %v8675
    %v9504 = vunpack.c.l.b16 %v8676
    %v9505 = vunpack.c.h.b16 %v8676
    %v9506 = vunpack.c.l.b16 %v8677
    %v9507 = vunpack.c.h.b16 %v8677
    %v9508 = vunpack.c.l.b16 %v8678
    %v9509 = vunpack.c.h.b16 %v8678
    %v9510 = vunpack.c.l.b16 %v8679
    %v9511 = vunpack.c.h.b16 %v8679
    %v9512 = vunpack.c.l.b16 %v8680
    %v9513 = vunpack.c.h.b16 %v8680
    %v9514 = vunpack.c.l.b16 %v8681
    %v9515 = vunpack.c.h.b16 %v8681
    %v9516 = vunpack.c.l.b16 %v8682
    %v9517 = vunpack.c.h.b16 %v8682
    %v9518 = vunpack.c.l.b16 %v8683
    %v9519 = vunpack.c.h.b16 %v8683
    %v9520 = vunpack.c.l.b16 %v8684
    %v9521 = vunpack.c.h.b16 %v8684
    %v9522 = vunpack.c.l.b16 %v8685
    %v9523 = vunpack.c.h.b16 %v8685
    %v9524 = vunpack.c.l.b16 %v8686
    %v9525 = vunpack.c.h.b16 %v8686
    %v9526 = vunpack.c.l.b16 %v8687
    %v9527 = vunpack.c.h.b16 %v8687
    %v9528 = vunpack.c.l.b16 %v8688
    %v9529 = vunpack.c.h.b16 %v8688
    %v9530 = vunpack.c.l.b16 %v8689
    %v9531 = vunpack.c.h.b16 %v8689
    %v9532 = vunpack.c.l.b16 %v8690
    %v9533 = vunpack.c.h.b16 %v8690
    %v9534 = vunpack.c.l.b16 %v8691
    %v9535 = vunpack.c.h.b16 %v8691
    %v9536 = vunpack.c.l.b16 %v8692
    %v9537 = vunpack.c.h.b16 %v8692
    %v9538 = vunpack.c.l.b16 %v8693
    %v9539 = vunpack.c.h.b16 %v8693
    %v9540 = vunpack.c.l.b16 %v8694
    %v9541 = vunpack.c.h.b16 %v8694
    %v9542 = vunpack.c.l.b16 %v8695
    %v9543 = vunpack.c.h.b16 %v8695
    %v9544 = vunpack.c.l.b16 %v8696
    %v9545 = vunpack.c.h.b16 %v8696
    %v9546 = vunpack.c.l.b16 %v8697
    %v9547 = vunpack.c.h.b16 %v8697
    %v9548 = vunpack.c.l.b16 %v8698
    %v9549 = vunpack.c.h.b16 %v8698
    %v9550 = vunpack.c.l.b16 %v8699
    %v9551 = vunpack.c.h.b16 %v8699
    %v9552 = vunpack.c.l.b16 %v8700
    %v9553 = vunpack.c.h.b16 %v8700
    %v9554 = vunpack.c.l.b16 %v8701
    %v9555 = vunpack.c.h.b16 %v8701
    %v9556 = vunpack.c.l.b16 %v8702
    %v9557 = vunpack.c.h.b16 %v8702
    %v9558 = vunpack.c.l.b16 %v8703
    %v9559 = vunpack.c.h.b16 %v8703
    %v9560 = vunpack.c.l.b16 %v8704
    %v9561 = vunpack.c.h.b16 %v8704
    %v9562 = vunpack.c.l.b16 %v8705
    %v9563 = vunpack.c.h.b16 %v8705
    %v9564 = vunpack.c.l.b16 %v8706
    %v9565 = vunpack.c.h.b16 %v8706
    %v9566 = vunpack.c.l.b16 %v8707
    %v9567 = vunpack.c.h.b16 %v8707
    %v9568 = vunpack.c.l.b16 %v8708
    %v9569 = vunpack.c.h.b16 %v8708
    %v9570 = vunpack.c.l.b16 %v8709
    %v9571 = vunpack.c.h.b16 %v8709
    %v9572 = vunpack.c.l.b16 %v8710
    %v9573 = vunpack.c.h.b16 %v8710
    %v9574 = vunpack.c.l.b16 %v8711
    %v9575 = vunpack.c.h.b16 %v8711
    %v9576 = vunpack.c.l.b16 %v8712
    %v9577 = vunpack.c.h.b16 %v8712
    %v9578 = vunpack.c.l.b16 %v8713
    %v9579 = vunpack.c.h.b16 %v8713
    %v9580 = vunpack.c.l.b16 %v8714
    %v9581 = vunpack.c.h.b16 %v8714
    %v9582 = vunpack.c.l.b16 %v8715
    %v9583 = vunpack.c.h.b16 %v8715
    %v9584 = vunpack.c.l.b16 %v8716
    %v9585 = vunpack.c.h.b16 %v8716
    %v9586 = vunpack.c.l.b16 %v8717
    %v9587 = vunpack.c.h.b16 %v8717
    %v9588 = vunpack.c.l.b16 %v8718
    %v9589 = vunpack.c.h.b16 %v8718
    %v9590 = vunpack.c.l.b16 %v8719
    %v9591 = vunpack.c.h.b16 %v8719
    %v9592 = vunpack.c.l.b16 %v8720
    %v9593 = vunpack.c.h.b16 %v8720
    %v9594 = vunpack.c.l.b16 %v8721
    %v9595 = vunpack.c.h.b16 %v8721
    %v9596 = vunpack.c.l.b16 %v8722
    %v9597 = vunpack.c.h.b16 %v8722
    %v9598 = vunpack.c.l.b16 %v8723
    %v9599 = vunpack.c.h.b16 %v8723
    %v9600 = vunpack.c.l.b16 %v8724
    %v9601 = vunpack.c.h.b16 %v8724
    %v9602 = vunpack.c.l.b16 %v8725
    %v9603 = vunpack.c.h.b16 %v8725
    %v9604 = vunpack.c.l.b16 %v8726
    %v9605 = vunpack.c.h.b16 %v8726
    %v9606 = vunpack.c.l.b16 %v8727
    %v9607 = vunpack.c.h.b16 %v8727
    %v9608 = vunpack.c.l.b16 %v8728
    %v9609 = vunpack.c.h.b16 %v8728
    %v9610 = vunpack.c.l.b16 %v8729
    %v9611 = vunpack.c.h.b16 %v8729
    %v9612 = vunpack.c.l.b16 %v8730
    %v9613 = vunpack.c.h.b16 %v8730
    %v9614 = vunpack.c.l.b16 %v8731
    %v9615 = vunpack.c.h.b16 %v8731
    %v9616 = vunpack.c.l.b16 %v8732
    %v9617 = vunpack.c.h.b16 %v8732
    %v9618 = vunpack.c.l.b16 %v8733
    %v9619 = vunpack.c.h.b16 %v8733
    %v9620 = vunpack.c.l.b16 %v8734
    %v9621 = vunpack.c.h.b16 %v8734
    %v9622 = vunpack.c.l.b16 %v8735
    %v9623 = vunpack.c.h.b16 %v8735
    %v9624 = vunpack.c.l.b16 %v8736
    %v9625 = vunpack.c.h.b16 %v8736
    %v9626 = vunpack.c.l.b16 %v8737
    %v9627 = vunpack.c.h.b16 %v8737
    %v9628 = vunpack.c.l.b16 %v8738
    %v9629 = vunpack.c.h.b16 %v8738
    %v9630 = vunpack.c.l.b16 %v8739
    %v9631 = vunpack.c.h.b16 %v8739
    %v9632 = vunpack.c.l.b16 %v8740
    %v9633 = vunpack.c.h.b16 %v8740
    %v9634 = vunpack.c.l.b16 %v8741
    %v9635 = vunpack.c.h.b16 %v8741
    %v9636 = vunpack.c.l.b16 %v8742
    %v9637 = vunpack.c.h.b16 %v8742
    %v9638 = vunpack.c.l.b16 %v8743
    %v9639 = vunpack.c.h.b16 %v8743
    %v9640 = vunpack.c.l.b16 %v8744
    %v9641 = vunpack.c.h.b16 %v8744
    %v9642 = vunpack.c.l.b16 %v8745
    %v9643 = vunpack.c.h.b16 %v8745
    %v9644 = vunpack.c.l.b16 %v8746
    %v9645 = vunpack.c.h.b16 %v8746
    %v9646 = vunpack.c.l.b16 %v8747
    %v9647 = vunpack.c.h.b16 %v8747
    %v9648 = vunpack.c.l.b16 %v8748
    %v9649 = vunpack.c.h.b16 %v8748
    %v9650 = vunpack.c.l.b16 %v8749
    %v9651 = vunpack.c.h.b16 %v8749
    %v9652 = vunpack.c.l.b16 %v8750
    %v9653 = vunpack.c.h.b16 %v8750
    %v9654 = vunpack.c.l.b16 %v8751
    %v9655 = vunpack.c.h.b16 %v8751
    %v9656 = vunpack.c.l.b16 %v8752
    %v9657 = vunpack.c.h.b16 %v8752
    %v9658 = vunpack.c.l.b16 %v8753
    %v9659 = vunpack.c.h.b16 %v8753
    %v9660 = vunpack.c.l.b16 %v8754
    %v9661 = vunpack.c.h.b16 %v8754
    %v9662 = vunpack.c.l.b16 %v8755
    %v9663 = vunpack.c.h.b16 %v8755
    %v9664 = vpack.c.b16 %v9094, %v9088
    %v9665 = vpack.c.b16 %v9095, %v9089
    %v9666 = vpack.c.b16 %v9096, %v9090
    %v9667 = vpack.c.b16 %v9097, %v9091
    %v9668 = vpack.c.b16 %v9098, %v9092
    %v9669 = vpack.c.b16 %v9099, %v9093
    %v9670 = vpack.c.b16 %v9106, %v9100
    %v9671 = vpack.c.b16 %v9107, %v9101
    %v9672 = vpack.c.b16 %v9108, %v9102
    %v9673 = vpack.c.b16 %v9109, %v9103
    %v9674 = vpack.c.b16 %v9110, %v9104
    %v9675 = vpack.c.b16 %v9111, %v9105
    %v9676 = vpack.c.b16 %v9118, %v9112
    %v9677 = vpack.c.b16 %v9119, %v9113
    %v9678 = vpack.c.b16 %v9120, %v9114
    %v9679 = vpack.c.b16 %v9121, %v9115
    %v9680 = vpack.c.b16 %v9122, %v9116
    %v9681 = vpack.c.b16 %v9123, %v9117
    %v9682 = vpack.c.b16 %v9130, %v9124
    %v9683 = vpack.c.b16 %v9131, %v9125
    %v9684 = vpack.c.b16 %v9132, %v9126
    %v9685 = vpack.c.b16 %v9133, %v9127
    %v9686 = vpack.c.b16 %v9134, %v9128
    %v9687 = vpack.c.b16 %v9135, %v9129
    %v9688 = vpack.c.b16 %v9142, %v9136
    %v9689 = vpack.c.b16 %v9143, %v9137
    %v9690 = vpack.c.b16 %v9144, %v9138
    %v9691 = vpack.c.b16 %v9145, %v9139
    %v9692 = vpack.c.b16 %v9146, %v9140
    %v9693 = vpack.c.b16 %v9147, %v9141
    %v9694 = vpack.c.b16 %v9154, %v9148
    %v9695 = vpack.c.b16 %v9155, %v9149
    %v9696 = vpack.c.b16 %v9156, %v9150
    %v9697 = vpack.c.b16 %v9157, %v9151
    %v9698 = vpack.c.b16 %v9158, %v9152
    %v9699 = vpack.c.b16 %v9159, %v9153
    %v9700 = vpack.c.b16 %v9166, %v9160
    %v9701 = vpack.c.b16 %v9167, %v9161
    %v9702 = vpack.c.b16 %v9168, %v9162
    %v9703 = vpack.c.b16 %v9169, %v9163
    %v9704 = vpack.c.b16 %v9170, %v9164
    %v9705 = vpack.c.b16 %v9171, %v9165
    %v9706 = vpack.c.b16 %v9178, %v9172
    %v9707 = vpack.c.b16 %v9179, %v9173
    %v9708 = vpack.c.b16 %v9180, %v9174
    %v9709 = vpack.c.b16 %v9181, %v9175
    %v9710 = vpack.c.b16 %v9182, %v9176
    %v9711 = vpack.c.b16 %v9183, %v9177
    %v9712 = vpack.c.b16 %v9190, %v9184
    %v9713 = vpack.c.b16 %v9191, %v9185
    %v9714 = vpack.c.b16 %v9192, %v9186
    %v9715 = vpack.c.b16 %v9193, %v9187
    %v9716 = vpack.c.b16 %v9194, %v9188
    %v9717 = vpack.c.b16 %v9195, %v9189
    %v9718 = vpack.c.b16 %v9202, %v9196
    %v9719 = vpack.c.b16 %v9203, %v9197
    %v9720 = vpack.c.b16 %v9204, %v9198
    %v9721 = vpack.c.b16 %v9205, %v9199
    %v9722 = vpack.c.b16 %v9206, %v9200
    %v9723 = vpack.c.b16 %v9207, %v9201
    %v9724 = vpack.c.b16 %v9214, %v9208
    %v9725 = vpack.c.b16 %v9215, %v9209
    %v9726 = vpack.c.b16 %v9216, %v9210
    %v9727 = vpack.c.b16 %v9217, %v9211
    %v9728 = vpack.c.b16 %v9218, %v9212
    %v9729 = vpack.c.b16 %v9219, %v9213
    %v9730 = vpack.c.b16 %v9226, %v9220
    %v9731 = vpack.c.b16 %v9227, %v9221
    %v9732 = vpack.c.b16 %v9228, %v9222
    %v9733 = vpack.c.b16 %v9229, %v9223
    %v9734 = vpack.c.b16 %v9230, %v9224
    %v9735 = vpack.c.b16 %v9231, %v9225
    %v9736 = vpack.c.b16 %v9238, %v9232
    %v9737 = vpack.c.b16 %v9239, %v9233
    %v9738 = vpack.c.b16 %v9240, %v9234
    %v9739 = vpack.c.b16 %v9241, %v9235
    %v9740 = vpack.c.b16 %v9242, %v9236
    %v9741 = vpack.c.b16 %v9243, %v9237
    %v9742 = vpack.c.b16 %v9250, %v9244
    %v9743 = vpack.c.b16 %v9251, %v9245
    %v9744 = vpack.c.b16 %v9252, %v9246
    %v9745 = vpack.c.b16 %v9253, %v9247
    %v9746 = vpack.c.b16 %v9254, %v9248
    %v9747 = vpack.c.b16 %v9255, %v9249
    %v9748 = vpack.c.b16 %v9262, %v9256
    %v9749 = vpack.c.b16 %v9263, %v9257
    %v9750 = vpack.c.b16 %v9264, %v9258
    %v9751 = vpack.c.b16 %v9265, %v9259
    %v9752 = vpack.c.b16 %v9266, %v9260
    %v9753 = vpack.c.b16 %v9267, %v9261
    %v9754 = vpack.c.b16 %v9274, %v9268
    %v9755 = vpack.c.b16 %v9275, %v9269
    %v9756 = vpack.c.b16 %v9276, %v9270
    %v9757 = vpack.c.b16 %v9277, %v9271
    %v9758 = vpack.c.b16 %v9278, %v9272
    %v9759 = vpack.c.b16 %v9279, %v9273
    %v9760 = vpack.c.b16 %v9286, %v9280
    %v9761 = vpack.c.b16 %v9287, %v9281
    %v9762 = vpack.c.b16 %v9288, %v9282
    %v9763 = vpack.c.b16 %v9289, %v9283
    %v9764 = vpack.c.b16 %v9290, %v9284
    %v9765 = vpack.c.b16 %v9291, %v9285
    %v9766 = vpack.c.b16 %v9298, %v9292
    %v9767 = vpack.c.b16 %v9299, %v9293
    %v9768 = vpack.c.b16 %v9300, %v9294
    %v9769 = vpack.c.b16 %v9301, %v9295
    %v9770 = vpack.c.b16 %v9302, %v9296
    %v9771 = vpack.c.b16 %v9303, %v9297
    %v9772 = vpack.c.b16 %v9310, %v9304
    %v9773 = vpack.c.b16 %v9311, %v9305
    %v9774 = vpack.c.b16 %v9312, %v9306
    %v9775 = vpack.c.b16 %v9313, %v9307
    %v9776 = vpack.c.b16 %v9314, %v9308
    %v9777 = vpack.c.b16 %v9315, %v9309
    %v9778 = vpack.c.b16 %v9322, %v9316
    %v9779 = vpack.c.b16 %v9323, %v9317
    %v9780 = vpack.c.b16 %v9324, %v9318
    %v9781 = vpack.c.b16 %v9325, %v9319
    %v9782 = vpack.c.b16 %v9326, %v9320
    %v9783 = vpack.c.b16 %v9327, %v9321
    %v9784 = vpack.c.b16 %v9334, %v9328
    %v9785 = vpack.c.b16 %v9335, %v9329
    %v9786 = vpack.c.b16 %v9336, %v9330
    %v9787 = vpack.c.b16 %v9337, %v9331
    %v9788 = vpack.c.b16 %v9338, %v9332
    %v9789 = vpack.c.b16 %v9339, %v9333
    %v9790 = vpack.c.b16 %v9346, %v9340
    %v9791 = vpack.c.b16 %v9347, %v9341
    %v9792 = vpack.c.b16 %v9348, %v9342
    %v9793 = vpack.c.b16 %v9349, %v9343
    %v9794 = vpack.c.b16 %v9350, %v9344
    %v9795 = vpack.c.b16 %v9351, %v9345
    %v9796 = vpack.c.b16 %v9358, %v9352
    %v9797 = vpack.c.b16 %v9359, %v9353
    %v9798 = vpack.c.b16 %v9360, %v9354
    %v9799 = vpack.c.b16 %v9361, %v9355
    %v9800 = vpack.c.b16 %v9362, %v9356
    %v9801 = vpack.c.b16 %v9363, %v9357
    %v9802 = vpack.c.b16 %v9370, %v9364
    %v9803 = vpack.c.b16 %v9371, %v9365
    %v9804 = vpack.c.b16 %v9372, %v9366
    %v9805 = vpack.c.b16 %v9373, %v9367
    %v9806 = vpack.c.b16 %v9374, %v9368
    %v9807 = vpack.c.b16 %v9375, %v9369
    %v9808 = vpack.c.b16 %v9382, %v9376
    %v9809 = vpack.c.b16 %v9383, %v9377
    %v9810 = vpack.c.b16 %v9384, %v9378
    %v9811 = vpack.c.b16 %v9385, %v9379
    %v9812 = vpack.c.b16 %v9386, %v9380
    %v9813 = vpack.c.b16 %v9387, %v9381
    %v9814 = vpack.c.b16 %v9394, %v9388
    %v9815 = vpack.c.b16 %v9395, %v9389
    %v9816 = vpack.c.b16 %v9396, %v9390
    %v9817 = vpack.c.b16 %v9397, %v9391
    %v9818 = vpack.c.b16 %v9398, %v9392
    %v9819 = vpack.c.b16 %v9399, %v9393
    %v9820 = vpack.c.b16 %v9406, %v9400
    %v9821 = vpack.c.b16 %v9407, %v9401
    %v9822 = vpack.c.b16 %v9408, %v9402
    %v9823 = vpack.c.b16 %v9409, %v9403
    %v9824 = vpack.c.b16 %v9410, %v9404
    %v9825 = vpack.c.b16 %v9411, %v9405
    %v9826 = vpack.c.b16 %v9418, %v9412
    %v9827 = vpack.c.b16 %v9419, %v9413
    %v9828 = vpack.c.b16 %v9420, %v9414
    %v9829 = vpack.c.b16 %v9421, %v9415
    %v9830 = vpack.c.b16 %v9422, %v9416
    %v9831 = vpack.c.b16 %v9423, %v9417
    %v9832 = vpack.c.b16 %v9430, %v9424
    %v9833 = vpack.c.b16 %v9431, %v9425
    %v9834 = vpack.c.b16 %v9432, %v9426
    %v9835 = vpack.c.b16 %v9433, %v9427
    %v9836 = vpack.c.b16 %v9434, %v9428
    %v9837 = vpack.c.b16 %v9435, %v9429
    %v9838 = vpack.c.b16 %v9442, %v9436
    %v9839 = vpack.c.b16 %v9443, %v9437
    %v9840 = vpack.c.b16 %v9444, %v9438
    %v9841 = vpack.c.b16 %v9445, %v9439
    %v9842 = vpack.c.b16 %v9446, %v9440
    %v9843 = vpack.c.b16 %v9447, %v9441
    %v9844 = vpack.c.b16 %v9454, %v9448
    %v9845 = vpack.c.b16 %v9455, %v9449
    %v9846 = vpack.c.b16 %v9456, %v9450
    %v9847 = vpack.c.b16 %v9457, %v9451
    %v9848 = vpack.c.b16 %v9458, %v9452
    %v9849 = vpack.c.b16 %v9459, %v9453
    %v9850 = vpack.c.b16 %v9466, %v9460
    %v9851 = vpack.c.b16 %v9467, %v9461
    %v9852 = vpack.c.b16 %v9468, %v9462
    %v9853 = vpack.c.b16 %v9469, %v9463
    %v9854 = vpack.c.b16 %v9470, %v9464
    %v9855 = vpack.c.b16 %v9471, %v9465
    %v9856 = vpack.c.b16 %v9478, %v9472
    %v9857 = vpack.c.b16 %v9479, %v9473
    %v9858 = vpack.c.b16 %v9480, %v9474
    %v9859 = vpack.c.b16 %v9481, %v9475
    %v9860 = vpack.c.b16 %v9482, %v9476
    %v9861 = vpack.c.b16 %v9483, %v9477
    %v9862 = vpack.c.b16 %v9490, %v9484
    %v9863 = vpack.c.b16 %v9491, %v9485
    %v9864 = vpack.c.b16 %v9492, %v9486
    %v9865 = vpack.c.b16 %v9493, %v9487
    %v9866 = vpack.c.b16 %v9494, %v9488
    %v9867 = vpack.c.b16 %v9495, %v9489
    %v9868 = vpack.c.b16 %v9502, %v9496
    %v9869 = vpack.c.b16 %v9503, %v9497
    %v9870 = vpack.c.b16 %v9504, %v9498
    %v9871 = vpack.c.b16 %v9505, %v9499
    %v9872 = vpack.c.b16 %v9506, %v9500
    %v9873 = vpack.c.b16 %v9507, %v9501
    %v9874 = vpack.c.b16 %v9514, %v9508
    %v9875 = vpack.c.b16 %v9515, %v9509
    %v9876 = vpack.c.b16 %v9516, %v9510
    %v9877 = vpack.c.b16 %v9517, %v9511
    %v9878 = vpack.c.b16 %v9518, %v9512
    %v9879 = vpack.c.b16 %v9519, %v9513
    %v9880 = vpack.c.b16 %v9526, %v9520
    %v9881 = vpack.c.b16 %v9527, %v9521
    %v9882 = vpack.c.b16 %v9528, %v9522
    %v9883 = vpack.c.b16 %v9529, %v9523
    %v9884 = vpack.c.b16 %v9530, %v9524
    %v9885 = vpack.c.b16 %v9531, %v9525
    %v9886 = vpack.c.b16 %v9538, %v9532
    %v9887 = vpack.c.b16 %v9539, %v9533
    %v9888 = vpack.c.b16 %v9540, %v9534
    %v9889 = vpack.c.b16 %v9541, %v9535
    %v9890 = vpack.c.b16 %v9542, %v9536
    %v9891 = vpack.c.b16 %v9543, %v9537
    %v9892 = vpack.c.b16 %v9550, %v9544
    %v9893 = vpack.c.b16 %v9551, %v9545
    %v9894 = vpack.c.b16 %v9552, %v9546
    %v9895 = vpack.c.b16 %v9553, %v9547
    %v9896 = vpack.c.b16 %v9554, %v9548
    %v9897 = vpack.c.b16 %v9555, %v9549
    %v9898 = vpack.c.b16 %v9562, %v9556
    %v9899 = vpack.c.b16 %v9563, %v9557
    %v9900 = vpack.c.b16 %v9564, %v9558
    %v9901 = vpack.c.b16 %v9565, %v9559
    %v9902 = vpack.c.b16 %v9566, %v9560
    %v9903 = vpack.c.b16 %v9567, %v9561
    %v9904 = vpack.c.b16 %v9574, %v9568
    %v9905 = vpack.c.b16 %v9575, %v9569
    %v9906 = vpack.c.b16 %v9576, %v9570
    %v9907 = vpack.c.b16 %v9577, %v9571
    %v9908 = vpack.c.b16 %v9578, %v9572
    %v9909 = vpack.c.b16 %v9579, %v9573
    %v9910 = vpack.c.b16 %v9586, %v9580
    %v9911 = vpack.c.b16 %v9587, %v9581
    %v9912 = vpack.c.b16 %v9588, %v9582
    %v9913 = vpack.c.b16 %v9589, %v9583
    %v9914 = vpack.c.b16 %v9590, %v9584
    %v9915 = vpack.c.b16 %v9591, %v9585
    %v9916 = vpack.c.b16 %v9598, %v9592
    %v9917 = vpack.c.b16 %v9599, %v9593
    %v9918 = vpack.c.b16 %v9600, %v9594
    %v9919 = vpack.c.b16 %v9601, %v9595
    %v9920 = vpack.c.b16 %v9602, %v9596
    %v9921 = vpack.c.b16 %v9603, %v9597
    %v9922 = vpack.c.b16 %v9610, %v9604
    %v9923 = vpack.c.b16 %v9611, %v9605
    %v9924 = vpack.c.b16 %v9612, %v9606
    %v9925 = vpack.c.b16 %v9613, %v9607
    %v9926 = vpack.c.b16 %v9614, %v9608
    %v9927 = vpack.c.b16 %v9615, %v9609
    %v9928 = vpack.c.b16 %v9622, %v9616
    %v9929 = vpack.c.b16 %v9623, %v9617
    %v9930 = vpack.c.b16 %v9624, %v9618
    %v9931 = vpack.c.b16 %v9625, %v9619
    %v9932 = vpack.c.b16 %v9626, %v9620
    %v9933 = vpack.c.b16 %v9627, %v9621
    %v9934 = vpack.c.b16 %v9634, %v9628
    %v9935 = vpack.c.b16 %v9635, %v9629
    %v9936 = vpack.c.b16 %v9636, %v9630
    %v9937 = vpack.c.b16 %v9637, %v9631
    %v9938 = vpack.c.b16 %v9638, %v9632
    %v9939 = vpack.c.b16 %v9639, %v9633
    %v9940 = vpack.c.b16 %v9646, %v9640
    %v9941 = vpack.c.b16 %v9647, %v9641
    %v9942 = vpack.c.b16 %v9648, %v9642
    %v9943 = vpack.c.b16 %v9649, %v9643
    %v9944 = vpack.c.b16 %v9650, %v9644
    %v9945 = vpack.c.b16 %v9651, %v9645
    %v9946 = vpack.c.b16 %v9658, %v9652
    %v9947 = vpack.c.b16 %v9659, %v9653
    %v9948 = vpack.c.b16 %v9660, %v9654
    %v9949 = vpack.c.b16 %v9661, %v9655
    %v9950 = vpack.c.b16 %v9662, %v9656
    %v9951 = vpack.c.b16 %v9663, %v9657
    %10240 = vmatpush.bf16.msra.mxu0 %v9706
    %10241 = vmatpush.bf16.msra.mxu0 %v9700
    %10242 = vmatpush.bf16.msra.mxu0 %v9694
    %10243 = vmatpush.bf16.msra.mxu0 %v9688
    %10244 = vmatpush.bf16.msra.mxu0 %v9682
    %10245 = vmatpush.bf16.msra.mxu0 %v9676
    %10246 = vmatpush.bf16.msra.mxu0 %v9670
    %10247 = vmatpush.bf16.msra.mxu0 %v9664
    %10248 = vmatmul.bf16.gmra.mxu0 %v8788
    %v10249 = vpop.f32.mrf.mxu0
    %v10250 = vadd.f32 %v8758, %v10249
    %v10251 = vpop.f32.mrf.mxu0
    %v10252 = vadd.f32 %v8758, %v10251
    %10253 = vdwg.mxu0
    %10254 = vmatpush.bf16.msra.mxu0 %v9754
    %10255 = vmatpush.bf16.msra.mxu0 %v9748
    %10256 = vmatpush.bf16.msra.mxu0 %v9742
    %10257 = vmatpush.bf16.msra.mxu0 %v9736
    %10258 = vmatpush.bf16.msra.mxu0 %v9730
    %10259 = vmatpush.bf16.msra.mxu0 %v9724
    %10260 = vmatpush.bf16.msra.mxu0 %v9718
    %10261 = vmatpush.bf16.msra.mxu0 %v9712
    %10262 = vmatmul.bf16.gmra.mxu0 %v8789
    %v10263 = vpop.f32.mrf.mxu0
    %v10264 = vadd.f32 %v10250, %v10263
    %v10265 = vpop.f32.mrf.mxu0
    %v10266 = vadd.f32 %v10252, %v10265
    %10267 = vdwg.mxu0
    %10268 = vmatpush.bf16.msra.mxu0 %v9802
    %10269 = vmatpush.bf16.msra.mxu0 %v9796
    %10270 = vmatpush.bf16.msra.mxu0 %v9790
    %10271 = vmatpush.bf16.msra.mxu0 %v9784
    %10272 = vmatpush.bf16.msra.mxu0 %v9778
    %10273 = vmatpush.bf16.msra.mxu0 %v9772
    %10274 = vmatpush.bf16.msra.mxu0 %v9766
    %10275 = vmatpush.bf16.msra.mxu0 %v9760
    %10276 = vmatmul.bf16.gmra.mxu0 %v8790
    %v10277 = vpop.f32.mrf.mxu0
    %v10278 = vadd.f32 %v10264, %v10277
    %v10279 = vpop.f32.mrf.mxu0
    %v10280 = vadd.f32 %v10266, %v10279
    %10281 = vdwg.mxu0
    %10282 = vmatpush.bf16.msra.mxu0 %v9850
    %10283 = vmatpush.bf16.msra.mxu0 %v9844
    %10284 = vmatpush.bf16.msra.mxu0 %v9838
    %10285 = vmatpush.bf16.msra.mxu0 %v9832
    %10286 = vmatpush.bf16.msra.mxu0 %v9826
    %10287 = vmatpush.bf16.msra.mxu0 %v9820
    %10288 = vmatpush.bf16.msra.mxu0 %v9814
    %10289 = vmatpush.bf16.msra.mxu0 %v9808
    %10290 = vmatmul.bf16.gmra.mxu0 %v8791
    %v10291 = vpop.f32.mrf.mxu0
    %v10292 = vadd.f32 %v10278, %v10291
    %v10293 = vpop.f32.mrf.mxu0
    %v10294 = vadd.f32 %v10280, %v10293
    %10295 = vdwg.mxu0
    %10296 = vmatpush.bf16.msra.mxu0 %v9898
    %10297 = vmatpush.bf16.msra.mxu0 %v9892
    %10298 = vmatpush.bf16.msra.mxu0 %v9886
    %10299 = vmatpush.bf16.msra.mxu0 %v9880
    %10300 = vmatpush.bf16.msra.mxu0 %v9874
    %10301 = vmatpush.bf16.msra.mxu0 %v9868
    %10302 = vmatpush.bf16.msra.mxu0 %v9862
    %10303 = vmatpush.bf16.msra.mxu0 %v9856
    %10304 = vmatmul.bf16.gmra.mxu0 %v8792
    %v10305 = vpop.f32.mrf.mxu0
    %v10306 = vadd.f32 %v10292, %v10305
    %v10307 = vpop.f32.mrf.mxu0
    %v10308 = vadd.f32 %v10294, %v10307
    %10309 = vdwg.mxu0
    %10310 = vmatpush.bf16.msra.mxu0 %v9946
    %10311 = vmatpush.bf16.msra.mxu0 %v9940
    %10312 = vmatpush.bf16.msra.mxu0 %v9934
    %10313 = vmatpush.bf16.msra.mxu0 %v9928
    %10314 = vmatpush.bf16.msra.mxu0 %v9922
    %10315 = vmatpush.bf16.msra.mxu0 %v9916
    %10316 = vmatpush.bf16.msra.mxu0 %v9910
    %10317 = vmatpush.bf16.msra.mxu0 %v9904
    %10318 = vmatmul.bf16.gmra.mxu0 %v8793
    %v10319 = vpop.f32.mrf.mxu0
    %v10320 = vadd.f32 %v10306, %v10319
    %v10321 = vpop.f32.mrf.mxu0
    %v10322 = vadd.f32 %v10308, %v10321
    %10323 = vdwg.mxu0
    %10324 = vmatpush.bf16.msra.mxu0 %v9707
    %10325 = vmatpush.bf16.msra.mxu0 %v9701
    %10326 = vmatpush.bf16.msra.mxu0 %v9695
    %10327 = vmatpush.bf16.msra.mxu0 %v9689
    %10328 = vmatpush.bf16.msra.mxu0 %v9683
    %10329 = vmatpush.bf16.msra.mxu0 %v9677
    %10330 = vmatpush.bf16.msra.mxu0 %v9671
    %10331 = vmatpush.bf16.msra.mxu0 %v9665
    %10332 = vmatmul.bf16.gmra.mxu0 %v8788
    %v10333 = vpop.f32.mrf.mxu0
    %v10334 = vadd.f32 %v8759, %v10333
    %v10335 = vpop.f32.mrf.mxu0
    %v10336 = vadd.f32 %v8759, %v10335
    %10337 = vdwg.mxu0
    %10338 = vmatpush.bf16.msra.mxu0 %v9755
    %10339 = vmatpush.bf16.msra.mxu0 %v9749
    %10340 = vmatpush.bf16.msra.mxu0 %v9743
    %10341 = vmatpush.bf16.msra.mxu0 %v9737
    %10342 = vmatpush.bf16.msra.mxu0 %v9731
    %10343 = vmatpush.bf16.msra.mxu0 %v9725
    %10344 = vmatpush.bf16.msra.mxu0 %v9719
    %10345 = vmatpush.bf16.msra.mxu0 %v9713
    %10346 = vmatmul.bf16.gmra.mxu0 %v8789
    %v10347 = vpop.f32.mrf.mxu0
    %v10348 = vadd.f32 %v10334, %v10347
    %v10349 = vpop.f32.mrf.mxu0
    %v10350 = vadd.f32 %v10336, %v10349
    %10351 = vdwg.mxu0
    %10352 = vmatpush.bf16.msra.mxu0 %v9803
    %10353 = vmatpush.bf16.msra.mxu0 %v9797
    %10354 = vmatpush.bf16.msra.mxu0 %v9791
    %10355 = vmatpush.bf16.msra.mxu0 %v9785
    %10356 = vmatpush.bf16.msra.mxu0 %v9779
    %10357 = vmatpush.bf16.msra.mxu0 %v9773
    %10358 = vmatpush.bf16.msra.mxu0 %v9767
    %10359 = vmatpush.bf16.msra.mxu0 %v9761
    %10360 = vmatmul.bf16.gmra.mxu0 %v8790
    %v10361 = vpop.f32.mrf.mxu0
    %v10362 = vadd.f32 %v10348, %v10361
    %v10363 = vpop.f32.mrf.mxu0
    %v10364 = vadd.f32 %v10350, %v10363
    %10365 = vdwg.mxu0
    %10366 = vmatpush.bf16.msra.mxu0 %v9851
    %10367 = vmatpush.bf16.msra.mxu0 %v9845
    %10368 = vmatpush.bf16.msra.mxu0 %v9839
    %10369 = vmatpush.bf16.msra.mxu0 %v9833
    %10370 = vmatpush.bf16.msra.mxu0 %v9827
    %10371 = vmatpush.bf16.msra.mxu0 %v9821
    %10372 = vmatpush.bf16.msra.mxu0 %v9815
    %10373 = vmatpush.bf16.msra.mxu0 %v9809
    %10374 = vmatmul.bf16.gmra.mxu0 %v8791
    %v10375 = vpop.f32.mrf.mxu0
    %v10376 = vadd.f32 %v10362, %v10375
    %v10377 = vpop.f32.mrf.mxu0
    %v10378 = vadd.f32 %v10364, %v10377
    %10379 = vdwg.mxu0
    %10380 = vmatpush.bf16.msra.mxu0 %v9899
    %10381 = vmatpush.bf16.msra.mxu0 %v9893
    %10382 = vmatpush.bf16.msra.mxu0 %v9887
    %10383 = vmatpush.bf16.msra.mxu0 %v9881
    %10384 = vmatpush.bf16.msra.mxu0 %v9875
    %10385 = vmatpush.bf16.msra.mxu0 %v9869
    %10386 = vmatpush.bf16.msra.mxu0 %v9863
    %10387 = vmatpush.bf16.msra.mxu0 %v9857
    %10388 = vmatmul.bf16.gmra.mxu0 %v8792
    %v10389 = vpop.f32.mrf.mxu0
    %v10390 = vadd.f32 %v10376, %v10389
    %v10391 = vpop.f32.mrf.mxu0
    %v10392 = vadd.f32 %v10378, %v10391
    %10393 = vdwg.mxu0
    %10394 = vmatpush.bf16.msra.mxu0 %v9947
    %10395 = vmatpush.bf16.msra.mxu0 %v9941
    %10396 = vmatpush.bf16.msra.mxu0 %v9935
    %10397 = vmatpush.bf16.msra.mxu0 %v9929
    %10398 = vmatpush.bf16.msra.mxu0 %v9923
    %10399 = vmatpush.bf16.msra.mxu0 %v9917
    %10400 = vmatpush.bf16.msra.mxu0 %v9911
    %10401 = vmatpush.bf16.msra.mxu0 %v9905
    %10402 = vmatmul.bf16.gmra.mxu0 %v8793
    %v10403 = vpop.f32.mrf.mxu0
    %v10404 = vadd.f32 %v10390, %v10403
    %v10405 = vpop.f32.mrf.mxu0
    %v10406 = vadd.f32 %v10392, %v10405
    %10407 = vdwg.mxu0
    %10408 = vmatpush.bf16.msra.mxu0 %v9708
    %10409 = vmatpush.bf16.msra.mxu0 %v9702
    %10410 = vmatpush.bf16.msra.mxu0 %v9696
    %10411 = vmatpush.bf16.msra.mxu0 %v9690
    %10412 = vmatpush.bf16.msra.mxu0 %v9684
    %10413 = vmatpush.bf16.msra.mxu0 %v9678
    %10414 = vmatpush.bf16.msra.mxu0 %v9672
    %10415 = vmatpush.bf16.msra.mxu0 %v9666
    %10416 = vmatmul.bf16.gmra.mxu0 %v8788
    %v10417 = vpop.f32.mrf.mxu0
    %v10418 = vadd.f32 %v8760, %v10417
    %v10419 = vpop.f32.mrf.mxu0
    %v10420 = vadd.f32 %v8760, %v10419
    %10421 = vdwg.mxu0
    %10422 = vmatpush.bf16.msra.mxu0 %v9756
    %10423 = vmatpush.bf16.msra.mxu0 %v9750
    %10424 = vmatpush.bf16.msra.mxu0 %v9744
    %10425 = vmatpush.bf16.msra.mxu0 %v9738
    %10426 = vmatpush.bf16.msra.mxu0 %v9732
    %10427 = vmatpush.bf16.msra.mxu0 %v9726
    %10428 = vmatpush.bf16.msra.mxu0 %v9720
    %10429 = vmatpush.bf16.msra.mxu0 %v9714
    %10430 = vmatmul.bf16.gmra.mxu0 %v8789
    %v10431 = vpop.f32.mrf.mxu0
    %v10432 = vadd.f32 %v10418, %v10431
    %v10433 = vpop.f32.mrf.mxu0
    %v10434 = vadd.f32 %v10420, %v10433
    %10435 = vdwg.mxu0
    %10436 = vmatpush.bf16.msra.mxu0 %v9804
    %10437 = vmatpush.bf16.msra.mxu0 %v9798
    %10438 = vmatpush.bf16.msra.mxu0 %v9792
    %10439 = vmatpush.bf16.msra.mxu0 %v9786
    %10440 = vmatpush.bf16.msra.mxu0 %v9780
    %10441 = vmatpush.bf16.msra.mxu0 %v9774
    %10442 = vmatpush.bf16.msra.mxu0 %v9768
    %10443 = vmatpush.bf16.msra.mxu0 %v9762
    %10444 = vmatmul.bf16.gmra.mxu0 %v8790
    %v10445 = vpop.f32.mrf.mxu0
    %v10446 = vadd.f32 %v10432, %v10445
    %v10447 = vpop.f32.mrf.mxu0
    %v10448 = vadd.f32 %v10434, %v10447
    %10449 = vdwg.mxu0
    %10450 = vmatpush.bf16.msra.mxu0 %v9852
    %10451 = vmatpush.bf16.msra.mxu0 %v9846
    %10452 = vmatpush.bf16.msra.mxu0 %v9840
    %10453 = vmatpush.bf16.msra.mxu0 %v9834
    %10454 = vmatpush.bf16.msra.mxu0 %v9828
    %10455 = vmatpush.bf16.msra.mxu0 %v9822
    %10456 = vmatpush.bf16.msra.mxu0 %v9816
    %10457 = vmatpush.bf16.msra.mxu0 %v9810
    %10458 = vmatmul.bf16.gmra.mxu0 %v8791
    %v10459 = vpop.f32.mrf.mxu0
    %v10460 = vadd.f32 %v10446, %v10459
    %v10461 = vpop.f32.mrf.mxu0
    %v10462 = vadd.f32 %v10448, %v10461
    %10463 = vdwg.mxu0
    %10464 = vmatpush.bf16.msra.mxu0 %v9900
    %10465 = vmatpush.bf16.msra.mxu0 %v9894
    %10466 = vmatpush.bf16.msra.mxu0 %v9888
    %10467 = vmatpush.bf16.msra.mxu0 %v9882
    %10468 = vmatpush.bf16.msra.mxu0 %v9876
    %10469 = vmatpush.bf16.msra.mxu0 %v9870
    %10470 = vmatpush.bf16.msra.mxu0 %v9864
    %10471 = vmatpush.bf16.msra.mxu0 %v9858
    %10472 = vmatmul.bf16.gmra.mxu0 %v8792
    %v10473 = vpop.f32.mrf.mxu0
    %v10474 = vadd.f32 %v10460, %v10473
    %v10475 = vpop.f32.mrf.mxu0
    %v10476 = vadd.f32 %v10462, %v10475
    %10477 = vdwg.mxu0
    %10478 = vmatpush.bf16.msra.mxu0 %v9948
    %10479 = vmatpush.bf16.msra.mxu0 %v9942
    %10480 = vmatpush.bf16.msra.mxu0 %v9936
    %10481 = vmatpush.bf16.msra.mxu0 %v9930
    %10482 = vmatpush.bf16.msra.mxu0 %v9924
    %10483 = vmatpush.bf16.msra.mxu0 %v9918
    %10484 = vmatpush.bf16.msra.mxu0 %v9912
    %10485 = vmatpush.bf16.msra.mxu0 %v9906
    %10486 = vmatmul.bf16.gmra.mxu0 %v8793
    %v10487 = vpop.f32.mrf.mxu0
    %v10488 = vadd.f32 %v10474, %v10487
    %v10489 = vpop.f32.mrf.mxu0
    %v10490 = vadd.f32 %v10476, %v10489
    %10491 = vdwg.mxu0
    %10492 = vmatpush.bf16.msra.mxu0 %v9709
    %10493 = vmatpush.bf16.msra.mxu0 %v9703
    %10494 = vmatpush.bf16.msra.mxu0 %v9697
    %10495 = vmatpush.bf16.msra.mxu0 %v9691
    %10496 = vmatpush.bf16.msra.mxu0 %v9685
    %10497 = vmatpush.bf16.msra.mxu0 %v9679
    %10498 = vmatpush.bf16.msra.mxu0 %v9673
    %10499 = vmatpush.bf16.msra.mxu0 %v9667
    %10500 = vmatmul.bf16.gmra.mxu0 %v8788
    %v10501 = vpop.f32.mrf.mxu0
    %v10502 = vadd.f32 %v8761, %v10501
    %v10503 = vpop.f32.mrf.mxu0
    %v10504 = vadd.f32 %v8761, %v10503
    %10505 = vdwg.mxu0
    %10506 = vmatpush.bf16.msra.mxu0 %v9757
    %10507 = vmatpush.bf16.msra.mxu0 %v9751
    %10508 = vmatpush.bf16.msra.mxu0 %v9745
    %10509 = vmatpush.bf16.msra.mxu0 %v9739
    %10510 = vmatpush.bf16.msra.mxu0 %v9733
    %10511 = vmatpush.bf16.msra.mxu0 %v9727
    %10512 = vmatpush.bf16.msra.mxu0 %v9721
    %10513 = vmatpush.bf16.msra.mxu0 %v9715
    %10514 = vmatmul.bf16.gmra.mxu0 %v8789
    %v10515 = vpop.f32.mrf.mxu0
    %v10516 = vadd.f32 %v10502, %v10515
    %v10517 = vpop.f32.mrf.mxu0
    %v10518 = vadd.f32 %v10504, %v10517
    %10519 = vdwg.mxu0
    %10520 = vmatpush.bf16.msra.mxu0 %v9805
    %10521 = vmatpush.bf16.msra.mxu0 %v9799
    %10522 = vmatpush.bf16.msra.mxu0 %v9793
    %10523 = vmatpush.bf16.msra.mxu0 %v9787
    %10524 = vmatpush.bf16.msra.mxu0 %v9781
    %10525 = vmatpush.bf16.msra.mxu0 %v9775
    %10526 = vmatpush.bf16.msra.mxu0 %v9769
    %10527 = vmatpush.bf16.msra.mxu0 %v9763
    %10528 = vmatmul.bf16.gmra.mxu0 %v8790
    %v10529 = vpop.f32.mrf.mxu0
    %v10530 = vadd.f32 %v10516, %v10529
    %v10531 = vpop.f32.mrf.mxu0
    %v10532 = vadd.f32 %v10518, %v10531
    %10533 = vdwg.mxu0
    %10534 = vmatpush.bf16.msra.mxu0 %v9853
    %10535 = vmatpush.bf16.msra.mxu0 %v9847
    %10536 = vmatpush.bf16.msra.mxu0 %v9841
    %10537 = vmatpush.bf16.msra.mxu0 %v9835
    %10538 = vmatpush.bf16.msra.mxu0 %v9829
    %10539 = vmatpush.bf16.msra.mxu0 %v9823
    %10540 = vmatpush.bf16.msra.mxu0 %v9817
    %10541 = vmatpush.bf16.msra.mxu0 %v9811
    %10542 = vmatmul.bf16.gmra.mxu0 %v8791
    %v10543 = vpop.f32.mrf.mxu0
    %v10544 = vadd.f32 %v10530, %v10543
    %v10545 = vpop.f32.mrf.mxu0
    %v10546 = vadd.f32 %v10532, %v10545
    %10547 = vdwg.mxu0
    %10548 = vmatpush.bf16.msra.mxu0 %v9901
    %10549 = vmatpush.bf16.msra.mxu0 %v9895
    %10550 = vmatpush.bf16.msra.mxu0 %v9889
    %10551 = vmatpush.bf16.msra.mxu0 %v9883
    %10552 = vmatpush.bf16.msra.mxu0 %v9877
    %10553 = vmatpush.bf16.msra.mxu0 %v9871
    %10554 = vmatpush.bf16.msra.mxu0 %v9865
    %10555 = vmatpush.bf16.msra.mxu0 %v9859
    %10556 = vmatmul.bf16.gmra.mxu0 %v8792
    %v10557 = vpop.f32.mrf.mxu0
    %v10558 = vadd.f32 %v10544, %v10557
    %v10559 = vpop.f32.mrf.mxu0
    %v10560 = vadd.f32 %v10546, %v10559
    %10561 = vdwg.mxu0
    %10562 = vmatpush.bf16.msra.mxu0 %v9949
    %10563 = vmatpush.bf16.msra.mxu0 %v9943
    %10564 = vmatpush.bf16.msra.mxu0 %v9937
    %10565 = vmatpush.bf16.msra.mxu0 %v9931
    %10566 = vmatpush.bf16.msra.mxu0 %v9925
    %10567 = vmatpush.bf16.msra.mxu0 %v9919
    %10568 = vmatpush.bf16.msra.mxu0 %v9913
    %10569 = vmatpush.bf16.msra.mxu0 %v9907
    %10570 = vmatmul.bf16.gmra.mxu0 %v8793
    %v10571 = vpop.f32.mrf.mxu0
    %v10572 = vadd.f32 %v10558, %v10571
    %v10573 = vpop.f32.mrf.mxu0
    %v10574 = vadd.f32 %v10560, %v10573
    %10575 = vdwg.mxu0
    %10576 = vmatpush.bf16.msra.mxu0 %v9710
    %10577 = vmatpush.bf16.msra.mxu0 %v9704
    %10578 = vmatpush.bf16.msra.mxu0 %v9698
    %10579 = vmatpush.bf16.msra.mxu0 %v9692
    %10580 = vmatpush.bf16.msra.mxu0 %v9686
    %10581 = vmatpush.bf16.msra.mxu0 %v9680
    %10582 = vmatpush.bf16.msra.mxu0 %v9674
    %10583 = vmatpush.bf16.msra.mxu0 %v9668
    %10584 = vmatmul.bf16.gmra.mxu0 %v8788
    %v10585 = vpop.f32.mrf.mxu0
    %v10586 = vadd.f32 %v8762, %v10585
    %v10587 = vpop.f32.mrf.mxu0
    %v10588 = vadd.f32 %v8762, %v10587
    %10589 = vdwg.mxu0
    %10590 = vmatpush.bf16.msra.mxu0 %v9758
    %10591 = vmatpush.bf16.msra.mxu0 %v9752
    %10592 = vmatpush.bf16.msra.mxu0 %v9746
    %10593 = vmatpush.bf16.msra.mxu0 %v9740
    %10594 = vmatpush.bf16.msra.mxu0 %v9734
    %10595 = vmatpush.bf16.msra.mxu0 %v9728
    %10596 = vmatpush.bf16.msra.mxu0 %v9722
    %10597 = vmatpush.bf16.msra.mxu0 %v9716
    %10598 = vmatmul.bf16.gmra.mxu0 %v8789
    %v10599 = vpop.f32.mrf.mxu0
    %v10600 = vadd.f32 %v10586, %v10599
    %v10601 = vpop.f32.mrf.mxu0
    %v10602 = vadd.f32 %v10588, %v10601
    %10603 = vdwg.mxu0
    %10604 = vmatpush.bf16.msra.mxu0 %v9806
    %10605 = vmatpush.bf16.msra.mxu0 %v9800
    %10606 = vmatpush.bf16.msra.mxu0 %v9794
    %10607 = vmatpush.bf16.msra.mxu0 %v9788
    %10608 = vmatpush.bf16.msra.mxu0 %v9782
    %10609 = vmatpush.bf16.msra.mxu0 %v9776
    %10610 = vmatpush.bf16.msra.mxu0 %v9770
    %10611 = vmatpush.bf16.msra.mxu0 %v9764
    %10612 = vmatmul.bf16.gmra.mxu0 %v8790
    %v10613 = vpop.f32.mrf.mxu0
    %v10614 = vadd.f32 %v10600, %v10613
    %v10615 = vpop.f32.mrf.mxu0
    %v10616 = vadd.f32 %v10602, %v10615
    %10617 = vdwg.mxu0
    %10618 = vmatpush.bf16.msra.mxu0 %v9854
    %10619 = vmatpush.bf16.msra.mxu0 %v9848
    %10620 = vmatpush.bf16.msra.mxu0 %v9842
    %10621 = vmatpush.bf16.msra.mxu0 %v9836
    %10622 = vmatpush.bf16.msra.mxu0 %v9830
    %10623 = vmatpush.bf16.msra.mxu0 %v9824
    %10624 = vmatpush.bf16.msra.mxu0 %v9818
    %10625 = vmatpush.bf16.msra.mxu0 %v9812
    %10626 = vmatmul.bf16.gmra.mxu0 %v8791
    %v10627 = vpop.f32.mrf.mxu0
    %v10628 = vadd.f32 %v10614, %v10627
    %v10629 = vpop.f32.mrf.mxu0
    %v10630 = vadd.f32 %v10616, %v10629
    %10631 = vdwg.mxu0
    %10632 = vmatpush.bf16.msra.mxu0 %v9902
    %10633 = vmatpush.bf16.msra.mxu0 %v9896
    %10634 = vmatpush.bf16.msra.mxu0 %v9890
    %10635 = vmatpush.bf16.msra.mxu0 %v9884
    %10636 = vmatpush.bf16.msra.mxu0 %v9878
    %10637 = vmatpush.bf16.msra.mxu0 %v9872
    %10638 = vmatpush.bf16.msra.mxu0 %v9866
    %10639 = vmatpush.bf16.msra.mxu0 %v9860
    %10640 = vmatmul.bf16.gmra.mxu0 %v8792
    %v10641 = vpop.f32.mrf.mxu0
    %v10642 = vadd.f32 %v10628, %v10641
    %v10643 = vpop.f32.mrf.mxu0
    %v10644 = vadd.f32 %v10630, %v10643
    %10645 = vdwg.mxu0
    %10646 = vmatpush.bf16.msra.mxu0 %v9950
    %10647 = vmatpush.bf16.msra.mxu0 %v9944
    %10648 = vmatpush.bf16.msra.mxu0 %v9938
    %10649 = vmatpush.bf16.msra.mxu0 %v9932
    %10650 = vmatpush.bf16.msra.mxu0 %v9926
    %10651 = vmatpush.bf16.msra.mxu0 %v9920
    %10652 = vmatpush.bf16.msra.mxu0 %v9914
    %10653 = vmatpush.bf16.msra.mxu0 %v9908
    %10654 = vmatmul.bf16.gmra.mxu0 %v8793
    %v10655 = vpop.f32.mrf.mxu0
    %v10656 = vadd.f32 %v10642, %v10655
    %v10657 = vpop.f32.mrf.mxu0
    %v10658 = vadd.f32 %v10644, %v10657
    %10659 = vdwg.mxu0
    %10660 = vmatpush.bf16.msra.mxu0 %v9711
    %10661 = vmatpush.bf16.msra.mxu0 %v9705
    %10662 = vmatpush.bf16.msra.mxu0 %v9699
    %10663 = vmatpush.bf16.msra.mxu0 %v9693
    %10664 = vmatpush.bf16.msra.mxu0 %v9687
    %10665 = vmatpush.bf16.msra.mxu0 %v9681
    %10666 = vmatpush.bf16.msra.mxu0 %v9675
    %10667 = vmatpush.bf16.msra.mxu0 %v9669
    %10668 = vmatmul.bf16.gmra.mxu0 %v8788
    %v10669 = vpop.f32.mrf.mxu0
    %v10670 = vadd.f32 %v8763, %v10669
    %v10671 = vpop.f32.mrf.mxu0
    %v10672 = vadd.f32 %v8763, %v10671
    %10673 = vdwg.mxu0
    %10674 = vmatpush.bf16.msra.mxu0 %v9759
    %10675 = vmatpush.bf16.msra.mxu0 %v9753
    %10676 = vmatpush.bf16.msra.mxu0 %v9747
    %10677 = vmatpush.bf16.msra.mxu0 %v9741
    %10678 = vmatpush.bf16.msra.mxu0 %v9735
    %10679 = vmatpush.bf16.msra.mxu0 %v9729
    %10680 = vmatpush.bf16.msra.mxu0 %v9723
    %10681 = vmatpush.bf16.msra.mxu0 %v9717
    %10682 = vmatmul.bf16.gmra.mxu0 %v8789
    %v10683 = vpop.f32.mrf.mxu0
    %v10684 = vadd.f32 %v10670, %v10683
    %v10685 = vpop.f32.mrf.mxu0
    %v10686 = vadd.f32 %v10672, %v10685
    %10687 = vdwg.mxu0
    %10688 = vmatpush.bf16.msra.mxu0 %v9807
    %10689 = vmatpush.bf16.msra.mxu0 %v9801
    %10690 = vmatpush.bf16.msra.mxu0 %v9795
    %10691 = vmatpush.bf16.msra.mxu0 %v9789
    %10692 = vmatpush.bf16.msra.mxu0 %v9783
    %10693 = vmatpush.bf16.msra.mxu0 %v9777
    %10694 = vmatpush.bf16.msra.mxu0 %v9771
    %10695 = vmatpush.bf16.msra.mxu0 %v9765
    %10696 = vmatmul.bf16.gmra.mxu0 %v8790
    %v10697 = vpop.f32.mrf.mxu0
    %v10698 = vadd.f32 %v10684, %v10697
    %v10699 = vpop.f32.mrf.mxu0
    %v10700 = vadd.f32 %v10686, %v10699
    %10701 = vdwg.mxu0
    %10702 = vmatpush.bf16.msra.mxu0 %v9855
    %10703 = vmatpush.bf16.msra.mxu0 %v9849
    %10704 = vmatpush.bf16.msra.mxu0 %v9843
    %10705 = vmatpush.bf16.msra.mxu0 %v9837
    %10706 = vmatpush.bf16.msra.mxu0 %v9831
    %10707 = vmatpush.bf16.msra.mxu0 %v9825
    %10708 = vmatpush.bf16.msra.mxu0 %v9819
    %10709 = vmatpush.bf16.msra.mxu0 %v9813
    %10710 = vmatmul.bf16.gmra.mxu0 %v8791
    %v10711 = vpop.f32.mrf.mxu0
    %v10712 = vadd.f32 %v10698, %v10711
    %v10713 = vpop.f32.mrf.mxu0
    %v10714 = vadd.f32 %v10700, %v10713
    %10715 = vdwg.mxu0
    %10716 = vmatpush.bf16.msra.mxu0 %v9903
    %10717 = vmatpush.bf16.msra.mxu0 %v9897
    %10718 = vmatpush.bf16.msra.mxu0 %v9891
    %10719 = vmatpush.bf16.msra.mxu0 %v9885
    %10720 = vmatpush.bf16.msra.mxu0 %v9879
    %10721 = vmatpush.bf16.msra.mxu0 %v9873
    %10722 = vmatpush.bf16.msra.mxu0 %v9867
    %10723 = vmatpush.bf16.msra.mxu0 %v9861
    %10724 = vmatmul.bf16.gmra.mxu0 %v8792
    %v10725 = vpop.f32.mrf.mxu0
    %v10726 = vadd.f32 %v10712, %v10725
    %v10727 = vpop.f32.mrf.mxu0
    %v10728 = vadd.f32 %v10714, %v10727
    %10729 = vdwg.mxu0
    %10730 = vmatpush.bf16.msra.mxu0 %v9951
    %10731 = vmatpush.bf16.msra.mxu0 %v9945
    %10732 = vmatpush.bf16.msra.mxu0 %v9939
    %10733 = vmatpush.bf16.msra.mxu0 %v9933
    %10734 = vmatpush.bf16.msra.mxu0 %v9927
    %10735 = vmatpush.bf16.msra.mxu0 %v9921
    %10736 = vmatpush.bf16.msra.mxu0 %v9915
    %10737 = vmatpush.bf16.msra.mxu0 %v9909
    %10738 = vmatmul.bf16.gmra.mxu0 %v8793
    %v10739 = vpop.f32.mrf.mxu0
    %v10740 = vadd.f32 %v10726, %v10739
    %v10741 = vpop.f32.mrf.mxu0
    %v10742 = vadd.f32 %v10728, %v10741
    %10743 = vdwg.mxu0
    %10744 = vst [vmem:[#allocation21] sm:$0xff] %v10320
    %10745 = vst [vmem:[#allocation21 + $0x8] sm:$0xff] %v10404
    %10746 = vst [vmem:[#allocation21 + $0x10] sm:$0xff] %v10488
    %10747 = vst [vmem:[#allocation21 + $0x18] sm:$0xff] %v10572
    %10748 = vst [vmem:[#allocation21 + $0x20] sm:$0xff] %v10656
    %10749 = vst [vmem:[#allocation21 + $0x28] sm:$0xff] %v10740
    %10750 = vst [vmem:[#allocation21 + $0x30] sm:$0xff] %v10322
    %10751 = vst [vmem:[#allocation21 + $0x38] sm:$0xff] %v10406
    %10752 = vst [vmem:[#allocation21 + $0x40] sm:$0xff] %v10490
    %10753 = vst [vmem:[#allocation21 + $0x48] sm:$0xff] %v10574
    %10754 = vst [vmem:[#allocation21 + $0x50] sm:$0xff] %v10658
    %10755 = vst [vmem:[#allocation21 + $0x58] sm:$0xff] %v10742
    // Predicated region
    $region90: #{tpu_custom_call.1} parent=1 // pred_check
      _
    $region91: #{tpu_custom_call.1} parent=1 // pred_check_branch
      %10757 = sbr.rel (0) target = $region93
    $region92: #{tpu_custom_call.1} parent=1 // pred_region
      %10759 = vsyncadd [#allocation5], 0
      %s10760 = sshll.u32 [#allocation21], 4
      %s10761 = int_to_ptr.vmem [resolvable:$true] %s10760
      %s10762 = sshll.u32 %s11, 4
      %s10763 = int_to_ptr.hbm [resolvable:$true] %s10762
      %10768 = dma.vmem_to_hbm [thread:$0]  %s10761, 1536, %s10763, [#allocation5], 768, 768, 48
    $region93: #{tpu_custom_call.1} parent=1 // pred_fallthru
      _
    // Predicated region
    $region94: #{tpu_custom_call.1} parent=1 // pred_check
      _
    $region95: #{tpu_custom_call.1} parent=1 // pred_check_branch
      %10770 = sbr.rel (0) target = $region97
    $region96: #{tpu_custom_call.1} parent=1 // pred_region
      %10772 = dma.done [#allocation5], 1536
    $region97: #{tpu_custom_call.1} parent=1 // pred_fallthru
      _
    %10773 = vsyncpa [#allocation4], 1
    %10774 = vsyncpa [#allocation7], 1
    %10775 = vsyncpa [#allocation10], 1
    %10776 = vsyncpa [#allocation13], 1
    %10777 = vsyncpa [#allocation16], 1
    %10778 = vsyncpa [#allocation19], 1
    %10779 = vsyncpa [#allocation5], 1

</llo_original>
